<compile_context>
chip_gen: v7x
topology: tpu7x:2x2x1
jax: 0.10.0
libtpu: 0.0.40
codegen_flags: <defaults>
</compile_context>

<pallas_src>
import functools

import jax
import jax.numpy as jnp
from jax.experimental import pallas as pl
from jax.experimental.pallas import tpu as pltpu

TM_MAX = 128  # max M-tile (rows of the im2col matrix) for the matmul grid


def _round_up(x, m):
    return ((x + m - 1) // m) * m


# ---------------------------------------------------------------------------
# Pallas kernels
# ---------------------------------------------------------------------------
def _conv_mm_kernel(x_ref, w_ref, b_ref, o_ref, *, relu):
    """out = relu?( (x @ w_scaled) + bias )  — conv-as-matmul, BN scale folded."""
    y = jnp.dot(x_ref[...], w_ref[...], preferred_element_type=jnp.float32)
    y = y + b_ref[...]
    if relu:
        y = jnp.maximum(y, 0.0)
    o_ref[...] = y.astype(o_ref.dtype)


def _conv_mm_res_kernel(x_ref, w_ref, b_ref, r_ref, o_ref, *, relu):
    """out = relu?( (x @ w_scaled) + bias + residual ) — fused residual add."""
    y = jnp.dot(x_ref[...], w_ref[...], preferred_element_type=jnp.float32)
    y = y + b_ref[...] + r_ref[...].astype(jnp.float32)
    if relu:
        y = jnp.maximum(y, 0.0)
    o_ref[...] = y.astype(o_ref.dtype)


def _maxpool_kernel(p_ref, o_ref):
    # p_ref: [TM, kk, C] patches -> max over window axis
    o_ref[...] = jnp.max(p_ref[...], axis=1)


def _gap_fc_kernel(x_ref, w_ref, b_ref, o_ref):
    # x_ref: [N, H*W, C] -> mean over spatial axis, then tiny FC
    feat = jnp.mean(x_ref[...].astype(jnp.float32), axis=1)          # [N, C]
    o_ref[...] = jnp.dot(feat, w_ref[...],
                         preferred_element_type=jnp.float32) + b_ref[...]


# ---------------------------------------------------------------------------
# Pallas wrappers
# ---------------------------------------------------------------------------
def _pad_rows(a, mp):
    M = a.shape[0]
    if mp == M:
        return a
    return jnp.pad(a, ((0, mp - M),) + ((0, 0),) * (a.ndim - 1))


def matmul_bias_act(x2d, w2d, bias, *, relu, residual=None,
                    out_dtype=jnp.bfloat16):
    """Fused (x2d @ w2d) + bias [+ residual] [+ ReLU] via Pallas (bf16 MXU)."""
    M, K = x2d.shape
    Cout = w2d.shape[1]
    tm = min(TM_MAX, _round_up(M, 8))
    Mp = _round_up(M, tm)
    grid = (Mp // tm,)

    xp = _pad_rows(x2d, Mp).astype(jnp.bfloat16)
    wb = w2d.astype(jnp.bfloat16)
    b2 = bias.reshape(1, Cout).astype(jnp.float32)

    bytes_accessed = (Mp * K + K * Cout + Mp * Cout) * 2 + Cout * 4
    if residual is None:
        kernel = functools.partial(_conv_mm_kernel, relu=relu)
        in_specs = [
            pl.BlockSpec((tm, K), lambda i: (i, 0)),
            pl.BlockSpec((K, Cout), lambda i: (0, 0)),
            pl.BlockSpec((1, Cout), lambda i: (0, 0)),
        ]
        args = (xp, wb, b2)
    else:
        rp = _pad_rows(residual, Mp).astype(jnp.bfloat16)
        bytes_accessed += Mp * Cout * 2
        kernel = functools.partial(_conv_mm_res_kernel, relu=relu)
        in_specs = [
            pl.BlockSpec((tm, K), lambda i: (i, 0)),
            pl.BlockSpec((K, Cout), lambda i: (0, 0)),
            pl.BlockSpec((1, Cout), lambda i: (0, 0)),
            pl.BlockSpec((tm, Cout), lambda i: (i, 0)),
        ]
        args = (xp, wb, b2, rp)

    out = pl.pallas_call(
        kernel,
        out_shape=jax.ShapeDtypeStruct((Mp, Cout), out_dtype),
        grid=grid,
        in_specs=in_specs,
        out_specs=pl.BlockSpec((tm, Cout), lambda i: (i, 0)),
        compiler_params=pltpu.CompilerParams(dimension_semantics=("parallel",)),
        cost_estimate=pl.CostEstimate(flops=2 * Mp * K * Cout,
                                      transcendentals=0,
                                      bytes_accessed=bytes_accessed),
    )(*args)
    return out[:M]


def _im2col(x_nhwc, kh, kw, stride, pad):
    N, H, W, C = x_nhwc.shape
    xp = jnp.pad(x_nhwc, ((0, 0), (pad, pad), (pad, pad), (0, 0)))
    Ho = (H + 2 * pad - kh) // stride + 1
    Wo = (W + 2 * pad - kw) // stride + 1
    cols = []
    for i in range(kh):
        for j in range(kw):
            cols.append(xp[:, i:i + Ho * stride:stride, j:j + Wo * stride:stride, :])
    patches = jnp.stack(cols, axis=3)  # [N, Ho, Wo, kh*kw, C]
    return patches.reshape(N * Ho * Wo, kh * kw * C), Ho, Wo


def conv_bn_act(x_nhwc, w, scale, bias, *, stride, pad, relu,
                residual_nhwc=None):
    """Conv2d (no bias) + folded BatchNorm + optional residual + optional ReLU.

    Everything stays NHWC / bf16; BN scale is folded into the weight matrix.
    """
    Cout, Cin, kh, kw = w.shape
    N = x_nhwc.shape[0]
    patches, Ho, Wo = _im2col(x_nhwc.astype(jnp.bfloat16), kh, kw, stride, pad)
    # PyTorch weight [Cout, Cin, kh, kw] -> [kh*kw*Cin, Cout] matching patch order,
    # with the BN scale folded in (done in f32 for accuracy, then cast to bf16).
    w2d = jnp.transpose(w, (2, 3, 1, 0)).reshape(kh * kw * Cin, Cout)
    w2d = w2d * scale.reshape(1, Cout)
    res2d = None
    if residual_nhwc is not None:
        res2d = residual_nhwc.reshape(N * Ho * Wo, Cout)
    y = matmul_bias_act(patches, w2d, bias, relu=relu, residual=res2d)
    return y.reshape(N, Ho, Wo, Cout)


def maxpool2d(x_nhwc, k=3, stride=2, pad=1):
    N, H, W, C = x_nhwc.shape
    neg = jnp.asarray(-jnp.inf, x_nhwc.dtype)
    xp = jnp.pad(x_nhwc, ((0, 0), (pad, pad), (pad, pad), (0, 0)),
                 constant_values=neg)
    Ho = (H + 2 * pad - k) // stride + 1
    Wo = (W + 2 * pad - k) // stride + 1
    cols = []
    for i in range(k):
        for j in range(k):
            cols.append(xp[:, i:i + Ho * stride:stride, j:j + Wo * stride:stride, :])
    patches = jnp.stack(cols, axis=3).reshape(N * Ho * Wo, k * k, C)
    M = N * Ho * Wo
    tm = min(TM_MAX, _round_up(M, 8))
    Mp = _round_up(M, tm)
    patches = _pad_rows(patches, Mp)  # padded rows are zeros; sliced off below
    out = pl.pallas_call(
        _maxpool_kernel,
        out_shape=jax.ShapeDtypeStruct((Mp, C), x_nhwc.dtype),
        grid=(Mp // tm,),
        in_specs=[pl.BlockSpec((tm, k * k, C), lambda i: (i, 0, 0))],
        out_specs=pl.BlockSpec((tm, C), lambda i: (i, 0)),
        compiler_params=pltpu.CompilerParams(dimension_semantics=("parallel",)),
    )(patches)
    return out[:M].reshape(N, Ho, Wo, C)


def global_avg_pool_fc(x_nhwc, fc_w, fc_b):
    """Fused global-average-pool + linear classifier (single tiny kernel)."""
    N, H, W, C = x_nhwc.shape
    x = x_nhwc.reshape(N, H * W, C)
    num_classes = fc_w.shape[1]
    return pl.pallas_call(
        _gap_fc_kernel,
        out_shape=jax.ShapeDtypeStruct((N, num_classes), jnp.float32),
        grid=(1,),
        in_specs=[
            pl.BlockSpec((N, H * W, C), lambda i: (0, 0, 0)),
            pl.BlockSpec((C, num_classes), lambda i: (0, 0)),
            pl.BlockSpec((1, num_classes), lambda i: (0, 0)),
        ],
        out_specs=pl.BlockSpec((N, num_classes), lambda i: (0, 0)),
    )(x, fc_w.astype(jnp.float32), fc_b.reshape(1, num_classes).astype(jnp.float32))


# ---------------------------------------------------------------------------
# Deterministic parameter construction (resnet18-style, reduced widths)
# ---------------------------------------------------------------------------
STEM_C = 16
CHANNELS = [16, 32, 64, 128]
STRIDE_LIST = [1, 2, 2, 2]     # downsampling=32, using_pooling=True
BLOCKS_PER_STAGE = 2           # resnet18 basic-block layout
NUM_CLASSES = 2


def init_params(key):
    keys = iter(jax.random.split(key, 128))

    def he(shape):
        fan_in = shape[1] * shape[2] * shape[3]
        return jax.random.normal(next(keys), shape, jnp.float32) * jnp.sqrt(2.0 / fan_in)

    def bn(c):
        eps = 1e-5
        gamma = jnp.ones((c,), jnp.float32)
        beta = jnp.zeros((c,), jnp.float32)
        mean = jnp.zeros((c,), jnp.float32)
        var = jnp.ones((c,), jnp.float32)
        scale = gamma / jnp.sqrt(var + eps)
        bias = beta - mean * scale
        return scale, bias

    params = {"stem_w": he((STEM_C, 3, 7, 7)), "stem_bn": bn(STEM_C)}
    blocks = []
    in_c = STEM_C
    for c, st in zip(CHANNELS, STRIDE_LIST):
        for b in range(BLOCKS_PER_STAGE):
            stride = st if b == 0 else 1
            blk = {
                "stride": stride,
                "conv1_w": he((c, in_c, 3, 3)), "bn1": bn(c),
                "conv2_w": he((c, c, 3, 3)), "bn2": bn(c),
            }
            if stride != 1 or in_c != c:
                blk["down_w"] = he((c, in_c, 1, 1))
                blk["down_bn"] = bn(c)
            blocks.append(blk)
            in_c = c
    params["blocks"] = blocks
    params["fc_w"] = jax.random.normal(next(keys), (in_c, NUM_CLASSES), jnp.float32) / jnp.sqrt(float(in_c))
    params["fc_b"] = jnp.zeros((NUM_CLASSES,), jnp.float32)
    return params


# ---------------------------------------------------------------------------
# Forward pass (BasicNet.forward -> self.model(x))
# ---------------------------------------------------------------------------
def basic_net_forward(params, x_nchw):
    # Single layout conversion at the boundary: NCHW (PyTorch) -> NHWC (TPU).
    h = jnp.transpose(x_nchw, (0, 2, 3, 1)).astype(jnp.bfloat16)

    s, b = params["stem_bn"]
    h = conv_bn_act(h, params["stem_w"], s, b, stride=2, pad=3, relu=True)
    h = maxpool2d(h, k=3, stride=2, pad=1)

    for blk in params["blocks"]:
        identity = h
        s1, b1 = blk["bn1"]
        s2, b2 = blk["bn2"]
        out = conv_bn_act(h, blk["conv1_w"], s1, b1,
                          stride=blk["stride"], pad=1, relu=True)
        if "down_w" in blk:
            ds, db = blk["down_bn"]
            identity = conv_bn_act(h, blk["down_w"], ds, db,
                                   stride=blk["stride"], pad=0, relu=False)
        # residual add fused into the second conv's Pallas kernel (pre-ReLU)
        h = conv_bn_act(out, blk["conv2_w"], s2, b2,
                        stride=1, pad=1, relu=True, residual_nhwc=identity)

    logits = global_avg_pool_fc(h, params["fc_w"], params["fc_b"])
    return logits                                          # [N, num_classes] f32


if __name__ == "__main__":
    key = jax.random.PRNGKey(0)
    kx, kp = jax.random.split(key)
    x = jax.random.normal(kx, (2, 3, 32, 32), jnp.float32)  # NCHW, like PyTorch
    params = init_params(kp)

    fwd = jax.jit(lambda xx: basic_net_forward(params, xx))
    out = fwd(x)
    jax.block_until_ready(out)

    assert out.shape == (2, NUM_CLASSES), out.shape
    assert jnp.all(jnp.isfinite(out))
    print("KERNEL_OK")
</pallas_src>

<mosaic_0001>
module attributes {stable_mosaic.version = 11 : i64} {
  func.func @_conv_mm_kernel(%arg0: i32, %arg1: memref<128x147xbf16, #tpu.memory_space<vmem>>, %arg2: memref<147x16xbf16, #tpu.memory_space<vmem>>, %arg3: memref<1x16xf32, #tpu.memory_space<vmem>>, %arg4: memref<128x16xbf16, #tpu.memory_space<vmem>>) attributes {dimension_semantics = [#tpu.dimension_semantics<parallel>], iteration_bounds = array<i64: 4>, scalar_prefetch = 0 : i64, scratch_operands = 0 : i64, tpu.core_type = #tpu.core_type<tc>, window_params = [{transform_indices = @transform_0, window_bounds = array<i64: 128, 147>}, {pipeline_mode = #tpu.pipeline_mode<synchronous>, transform_indices = @transform_1, window_bounds = array<i64: 147, 16>}, {pipeline_mode = #tpu.pipeline_mode<synchronous>, transform_indices = @transform_2, window_bounds = array<i64: 1, 16>}, {transform_indices = @transform_3, window_bounds = array<i64: 128, 16>}]} {
    %c0 = arith.constant 0 : index
    %c0_0 = arith.constant 0 : index
    %0 = vector.load %arg1[%c0, %c0_0] : memref<128x147xbf16, #tpu.memory_space<vmem>>, vector<128x147xbf16>
    %c0_1 = arith.constant 0 : index
    %c0_2 = arith.constant 0 : index
    %1 = vector.load %arg2[%c0_1, %c0_2] : memref<147x16xbf16, #tpu.memory_space<vmem>>, vector<147x16xbf16>
    %cst = arith.constant dense<0.000000e+00> : vector<128x16xf32>
    %2 = tpu.matmul %0, %1, %cst {dimension_numbers = #tpu.dot_dimension_numbers<[1], [0], [0], [1], [0, 0, 1, 1], [], []>} : vector<128x147xbf16>, vector<147x16xbf16>, vector<128x16xf32> -> vector<128x16xf32>
    %c0_3 = arith.constant 0 : index
    %c0_4 = arith.constant 0 : index
    %3 = vector.load %arg3[%c0_3, %c0_4] : memref<1x16xf32, #tpu.memory_space<vmem>>, vector<1x16xf32>
    %4 = vector.broadcast %3 : vector<1x16xf32> to vector<128x16xf32>
    %5 = arith.addf %2, %4 : vector<128x16xf32>
    %cst_5 = arith.constant 0.000000e+00 : f32
    %6 = vector.broadcast %cst_5 : f32 to vector<128x16xf32>
    %7 = arith.maximumf %5, %6 : vector<128x16xf32>
    %8 = arith.truncf %7 : vector<128x16xf32> to vector<128x16xbf16>
    %c0_6 = arith.constant 0 : index
    %c0_7 = arith.constant 0 : index
    %9 = vector.load %arg4[%c0_6, %c0_7] : memref<128x16xbf16, #tpu.memory_space<vmem>>, vector<128x16xbf16>
    tpu.vector_store %arg4[%c0_6, %c0_7], %8 {strides = array<i32>} : memref<128x16xbf16, #tpu.memory_space<vmem>>, vector<128x16xbf16>,
    return
  }
  func.func @transform_0(%arg0: i32) -> (i32, i32) {
    %c0_i32 = arith.constant 0 : i32
    %c0_i32_0 = arith.constant 0 : i32
    return %arg0, %c0_i32 : i32, i32
  }
  func.func @transform_1(%arg0: i32) -> (i32, i32) {
    %c0_i32 = arith.constant 0 : i32
    %c0_i32_0 = arith.constant 0 : i32
    %c0_i32_1 = arith.constant 0 : i32
    return %c0_i32, %c0_i32_0 : i32, i32
  }
  func.func @transform_2(%arg0: i32) -> (i32, i32) {
    %c0_i32 = arith.constant 0 : i32
    %c0_i32_0 = arith.constant 0 : i32
    %c0_i32_1 = arith.constant 0 : i32
    return %c0_i32, %c0_i32_0 : i32, i32
  }
  func.func @transform_3(%arg0: i32) -> (i32, i32) {
    %c0_i32 = arith.constant 0 : i32
    %c0_i32_0 = arith.constant 0 : i32
    return %arg0, %c0_i32 : i32, i32
  }
}

module attributes {stable_mosaic.version = 11 : i64} {
  func.func @_maxpool_kernel(%arg0: i32, %arg1: memref<128x9x16xbf16, #tpu.memory_space<vmem>>, %arg2: memref<128x16xbf16, #tpu.memory_space<vmem>>) attributes {dimension_semantics = [#tpu.dimension_semantics<parallel>], iteration_bounds = array<i64: 1>, scalar_prefetch = 0 : i64, scratch_operands = 0 : i64, tpu.core_type = #tpu.core_type<tc>, window_params = [{transform_indices = @transform_0, window_bounds = array<i64: 128, 9, 16>}, {transform_indices = @transform_1, window_bounds = array<i64: 128, 16>}]} {
    %c0 = arith.constant 0 : index
    %c0_0 = arith.constant 0 : index
    %c0_1 = arith.constant 0 : index
    %0 = vector.load %arg1[%c0, %c0_0, %c0_1] : memref<128x9x16xbf16, #tpu.memory_space<vmem>>, vector<128x9x16xbf16>
    %cst = arith.constant dense<0xFF80> : vector<128x16xbf16>
    %1 = vector.multi_reduction <maximumf>, %0, %cst [1] : vector<128x9x16xbf16> to vector<128x16xbf16>
    %c0_2 = arith.constant 0 : index
    %c0_3 = arith.constant 0 : index
    %2 = vector.load %arg2[%c0_2, %c0_3] : memref<128x16xbf16, #tpu.memory_space<vmem>>, vector<128x16xbf16>
    tpu.vector_store %arg2[%c0_2, %c0_3], %1 {strides = array<i32>} : memref<128x16xbf16, #tpu.memory_space<vmem>>, vector<128x16xbf16>,
    return
  }
  func.func @transform_0(%arg0: i32) -> (i32, i32, i32) {
    %c0_i32 = arith.constant 0 : i32
    %c0_i32_0 = arith.constant 0 : i32
    %c0_i32_1 = arith.constant 0 : i32
    return %arg0, %c0_i32, %c0_i32_0 : i32, i32, i32
  }
  func.func @transform_1(%arg0: i32) -> (i32, i32) {
    %c0_i32 = arith.constant 0 : i32
    %c0_i32_0 = arith.constant 0 : i32
    return %arg0, %c0_i32 : i32, i32
  }
}

module attributes {stable_mosaic.version = 11 : i64} {
  func.func @_conv_mm_kernel(%arg0: i32, %arg1: memref<128x144xbf16, #tpu.memory_space<vmem>>, %arg2: memref<144x16xbf16, #tpu.memory_space<vmem>>, %arg3: memref<1x16xf32, #tpu.memory_space<vmem>>, %arg4: memref<128x16xbf16, #tpu.memory_space<vmem>>) attributes {dimension_semantics = [#tpu.dimension_semantics<parallel>], iteration_bounds = array<i64: 1>, scalar_prefetch = 0 : i64, scratch_operands = 0 : i64, tpu.core_type = #tpu.core_type<tc>, window_params = [{transform_indices = @transform_0, window_bounds = array<i64: 128, 144>}, {pipeline_mode = #tpu.pipeline_mode<synchronous>, transform_indices = @transform_1, window_bounds = array<i64: 144, 16>}, {pipeline_mode = #tpu.pipeline_mode<synchronous>, transform_indices = @transform_2, window_bounds = array<i64: 1, 16>}, {transform_indices = @transform_3, window_bounds = array<i64: 128, 16>}]} {
    %c0 = arith.constant 0 : index
    %c0_0 = arith.constant 0 : index
    %0 = vector.load %arg1[%c0, %c0_0] : memref<128x144xbf16, #tpu.memory_space<vmem>>, vector<128x144xbf16>
    %c0_1 = arith.constant 0 : index
    %c0_2 = arith.constant 0 : index
    %1 = vector.load %arg2[%c0_1, %c0_2] : memref<144x16xbf16, #tpu.memory_space<vmem>>, vector<144x16xbf16>
    %cst = arith.constant dense<0.000000e+00> : vector<128x16xf32>
    %2 = tpu.matmul %0, %1, %cst {dimension_numbers = #tpu.dot_dimension_numbers<[1], [0], [0], [1], [0, 0, 1, 1], [], []>} : vector<128x144xbf16>, vector<144x16xbf16>, vector<128x16xf32> -> vector<128x16xf32>
    %c0_3 = arith.constant 0 : index
    %c0_4 = arith.constant 0 : index
    %3 = vector.load %arg3[%c0_3, %c0_4] : memref<1x16xf32, #tpu.memory_space<vmem>>, vector<1x16xf32>
    %4 = vector.broadcast %3 : vector<1x16xf32> to vector<128x16xf32>
    %5 = arith.addf %2, %4 : vector<128x16xf32>
    %cst_5 = arith.constant 0.000000e+00 : f32
    %6 = vector.broadcast %cst_5 : f32 to vector<128x16xf32>
    %7 = arith.maximumf %5, %6 : vector<128x16xf32>
    %8 = arith.truncf %7 : vector<128x16xf32> to vector<128x16xbf16>
    %c0_6 = arith.constant 0 : index
    %c0_7 = arith.constant 0 : index
    %9 = vector.load %arg4[%c0_6, %c0_7] : memref<128x16xbf16, #tpu.memory_space<vmem>>, vector<128x16xbf16>
    tpu.vector_store %arg4[%c0_6, %c0_7], %8 {strides = array<i32>} : memref<128x16xbf16, #tpu.memory_space<vmem>>, vector<128x16xbf16>,
    return
  }
  func.func @transform_0(%arg0: i32) -> (i32, i32) {
    %c0_i32 = arith.constant 0 : i32
    %c0_i32_0 = arith.constant 0 : i32
    return %arg0, %c0_i32 : i32, i32
  }
  func.func @transform_1(%arg0: i32) -> (i32, i32) {
    %c0_i32 = arith.constant 0 : i32
    %c0_i32_0 = arith.constant 0 : i32
    %c0_i32_1 = arith.constant 0 : i32
    return %c0_i32, %c0_i32_0 : i32, i32
  }
  func.func @transform_2(%arg0: i32) -> (i32, i32) {
    %c0_i32 = arith.constant 0 : i32
    %c0_i32_0 = arith.constant 0 : i32
    %c0_i32_1 = arith.constant 0 : i32
    return %c0_i32, %c0_i32_0 : i32, i32
  }
  func.func @transform_3(%arg0: i32) -> (i32, i32) {
    %c0_i32 = arith.constant 0 : i32
    %c0_i32_0 = arith.constant 0 : i32
    return %arg0, %c0_i32 : i32, i32
  }
}

module attributes {stable_mosaic.version = 11 : i64} {
  func.func @_conv_mm_res_kernel(%arg0: i32, %arg1: memref<128x144xbf16, #tpu.memory_space<vmem>>, %arg2: memref<144x16xbf16, #tpu.memory_space<vmem>>, %arg3: memref<1x16xf32, #tpu.memory_space<vmem>>, %arg4: memref<128x16xbf16, #tpu.memory_space<vmem>>, %arg5: memref<128x16xbf16, #tpu.memory_space<vmem>>) attributes {dimension_semantics = [#tpu.dimension_semantics<parallel>], iteration_bounds = array<i64: 1>, scalar_prefetch = 0 : i64, scratch_operands = 0 : i64, tpu.core_type = #tpu.core_type<tc>, window_params = [{transform_indices = @transform_0, window_bounds = array<i64: 128, 144>}, {pipeline_mode = #tpu.pipeline_mode<synchronous>, transform_indices = @transform_1, window_bounds = array<i64: 144, 16>}, {pipeline_mode = #tpu.pipeline_mode<synchronous>, transform_indices = @transform_2, window_bounds = array<i64: 1, 16>}, {transform_indices = @transform_3, window_bounds = array<i64: 128, 16>}, {transform_indices = @transform_4, window_bounds = array<i64: 128, 16>}]} {
    %c0 = arith.constant 0 : index
    %c0_0 = arith.constant 0 : index
    %0 = vector.load %arg1[%c0, %c0_0] : memref<128x144xbf16, #tpu.memory_space<vmem>>, vector<128x144xbf16>
    %c0_1 = arith.constant 0 : index
    %c0_2 = arith.constant 0 : index
    %1 = vector.load %arg2[%c0_1, %c0_2] : memref<144x16xbf16, #tpu.memory_space<vmem>>, vector<144x16xbf16>
    %cst = arith.constant dense<0.000000e+00> : vector<128x16xf32>
    %2 = tpu.matmul %0, %1, %cst {dimension_numbers = #tpu.dot_dimension_numbers<[1], [0], [0], [1], [0, 0, 1, 1], [], []>} : vector<128x144xbf16>, vector<144x16xbf16>, vector<128x16xf32> -> vector<128x16xf32>
    %c0_3 = arith.constant 0 : index
    %c0_4 = arith.constant 0 : index
    %3 = vector.load %arg3[%c0_3, %c0_4] : memref<1x16xf32, #tpu.memory_space<vmem>>, vector<1x16xf32>
    %4 = vector.broadcast %3 : vector<1x16xf32> to vector<128x16xf32>
    %5 = arith.addf %2, %4 : vector<128x16xf32>
    %c0_5 = arith.constant 0 : index
    %c0_6 = arith.constant 0 : index
    %6 = vector.load %arg4[%c0_5, %c0_6] : memref<128x16xbf16, #tpu.memory_space<vmem>>, vector<128x16xbf16>
    %7 = arith.extf %6 : vector<128x16xbf16> to vector<128x16xf32>
    %8 = arith.addf %5, %7 : vector<128x16xf32>
    %cst_7 = arith.constant 0.000000e+00 : f32
    %9 = vector.broadcast %cst_7 : f32 to vector<128x16xf32>
    %10 = arith.maximumf %8, %9 : vector<128x16xf32>
    %11 = arith.truncf %10 : vector<128x16xf32> to vector<128x16xbf16>
    %c0_8 = arith.constant 0 : index
    %c0_9 = arith.constant 0 : index
    %12 = vector.load %arg5[%c0_8, %c0_9] : memref<128x16xbf16, #tpu.memory_space<vmem>>, vector<128x16xbf16>
    tpu.vector_store %arg5[%c0_8, %c0_9], %11 {strides = array<i32>} : memref<128x16xbf16, #tpu.memory_space<vmem>>, vector<128x16xbf16>,
    return
  }
  func.func @transform_0(%arg0: i32) -> (i32, i32) {
    %c0_i32 = arith.constant 0 : i32
    %c0_i32_0 = arith.constant 0 : i32
    return %arg0, %c0_i32 : i32, i32
  }
  func.func @transform_1(%arg0: i32) -> (i32, i32) {
    %c0_i32 = arith.constant 0 : i32
    %c0_i32_0 = arith.constant 0 : i32
    %c0_i32_1 = arith.constant 0 : i32
    return %c0_i32, %c0_i32_0 : i32, i32
  }
  func.func @transform_2(%arg0: i32) -> (i32, i32) {
    %c0_i32 = arith.constant 0 : i32
    %c0_i32_0 = arith.constant 0 : i32
    %c0_i32_1 = arith.constant 0 : i32
    return %c0_i32, %c0_i32_0 : i32, i32
  }
  func.func @transform_3(%arg0: i32) -> (i32, i32) {
    %c0_i32 = arith.constant 0 : i32
    %c0_i32_0 = arith.constant 0 : i32
    return %arg0, %c0_i32 : i32, i32
  }
  func.func @transform_4(%arg0: i32) -> (i32, i32) {
    %c0_i32 = arith.constant 0 : i32
    %c0_i32_0 = arith.constant 0 : i32
    return %arg0, %c0_i32 : i32, i32
  }
}

module attributes {stable_mosaic.version = 11 : i64} {
  func.func @_conv_mm_kernel(%arg0: i32, %arg1: memref<32x144xbf16, #tpu.memory_space<vmem>>, %arg2: memref<144x32xbf16, #tpu.memory_space<vmem>>, %arg3: memref<1x32xf32, #tpu.memory_space<vmem>>, %arg4: memref<32x32xbf16, #tpu.memory_space<vmem>>) attributes {dimension_semantics = [#tpu.dimension_semantics<parallel>], iteration_bounds = array<i64: 1>, scalar_prefetch = 0 : i64, scratch_operands = 0 : i64, tpu.core_type = #tpu.core_type<tc>, window_params = [{transform_indices = @transform_0, window_bounds = array<i64: 32, 144>}, {pipeline_mode = #tpu.pipeline_mode<synchronous>, transform_indices = @transform_1, window_bounds = array<i64: 144, 32>}, {pipeline_mode = #tpu.pipeline_mode<synchronous>, transform_indices = @transform_2, window_bounds = array<i64: 1, 32>}, {transform_indices = @transform_3, window_bounds = array<i64: 32, 32>}]} {
    %c0 = arith.constant 0 : index
    %c0_0 = arith.constant 0 : index
    %0 = vector.load %arg1[%c0, %c0_0] : memref<32x144xbf16, #tpu.memory_space<vmem>>, vector<32x144xbf16>
    %c0_1 = arith.constant 0 : index
    %c0_2 = arith.constant 0 : index
    %1 = vector.load %arg2[%c0_1, %c0_2] : memref<144x32xbf16, #tpu.memory_space<vmem>>, vector<144x32xbf16>
    %cst = arith.constant dense<0.000000e+00> : vector<32x32xf32>
    %2 = tpu.matmul %0, %1, %cst {dimension_numbers = #tpu.dot_dimension_numbers<[1], [0], [0], [1], [0, 0, 1, 1], [], []>} : vector<32x144xbf16>, vector<144x32xbf16>, vector<32x32xf32> -> vector<32x32xf32>
    %c0_3 = arith.constant 0 : index
    %c0_4 = arith.constant 0 : index
    %3 = vector.load %arg3[%c0_3, %c0_4] : memref<1x32xf32, #tpu.memory_space<vmem>>, vector<1x32xf32>
    %4 = vector.broadcast %3 : vector<1x32xf32> to vector<32x32xf32>
    %5 = arith.addf %2, %4 : vector<32x32xf32>
    %cst_5 = arith.constant 0.000000e+00 : f32
    %6 = vector.broadcast %cst_5 : f32 to vector<32x32xf32>
    %7 = arith.maximumf %5, %6 : vector<32x32xf32>
    %8 = arith.truncf %7 : vector<32x32xf32> to vector<32x32xbf16>
    %c0_6 = arith.constant 0 : index
    %c0_7 = arith.constant 0 : index
    %9 = vector.load %arg4[%c0_6, %c0_7] : memref<32x32xbf16, #tpu.memory_space<vmem>>, vector<32x32xbf16>
    tpu.vector_store %arg4[%c0_6, %c0_7], %8 {strides = array<i32>} : memref<32x32xbf16, #tpu.memory_space<vmem>>, vector<32x32xbf16>,
    return
  }
  func.func @transform_0(%arg0: i32) -> (i32, i32) {
    %c0_i32 = arith.constant 0 : i32
    %c0_i32_0 = arith.constant 0 : i32
    return %arg0, %c0_i32 : i32, i32
  }
  func.func @transform_1(%arg0: i32) -> (i32, i32) {
    %c0_i32 = arith.constant 0 : i32
    %c0_i32_0 = arith.constant 0 : i32
    %c0_i32_1 = arith.constant 0 : i32
    return %c0_i32, %c0_i32_0 : i32, i32
  }
  func.func @transform_2(%arg0: i32) -> (i32, i32) {
    %c0_i32 = arith.constant 0 : i32
    %c0_i32_0 = arith.constant 0 : i32
    %c0_i32_1 = arith.constant 0 : i32
    return %c0_i32, %c0_i32_0 : i32, i32
  }
  func.func @transform_3(%arg0: i32) -> (i32, i32) {
    %c0_i32 = arith.constant 0 : i32
    %c0_i32_0 = arith.constant 0 : i32
    return %arg0, %c0_i32 : i32, i32
  }
}

module attributes {stable_mosaic.version = 11 : i64} {
  func.func @_conv_mm_kernel(%arg0: i32, %arg1: memref<32x16xbf16, #tpu.memory_space<vmem>>, %arg2: memref<16x32xbf16, #tpu.memory_space<vmem>>, %arg3: memref<1x32xf32, #tpu.memory_space<vmem>>, %arg4: memref<32x32xbf16, #tpu.memory_space<vmem>>) attributes {dimension_semantics = [#tpu.dimension_semantics<parallel>], iteration_bounds = array<i64: 1>, scalar_prefetch = 0 : i64, scratch_operands = 0 : i64, tpu.core_type = #tpu.core_type<tc>, window_params = [{transform_indices = @transform_0, window_bounds = array<i64: 32, 16>}, {pipeline_mode = #tpu.pipeline_mode<synchronous>, transform_indices = @transform_1, window_bounds = array<i64: 16, 32>}, {pipeline_mode = #tpu.pipeline_mode<synchronous>, transform_indices = @transform_2, window_bounds = array<i64: 1, 32>}, {transform_indices = @transform_3, window_bounds = array<i64: 32, 32>}]} {
    %c0 = arith.constant 0 : index
    %c0_0 = arith.constant 0 : index
    %0 = vector.load %arg1[%c0, %c0_0] : memref<32x16xbf16, #tpu.memory_space<vmem>>, vector<32x16xbf16>
    %c0_1 = arith.constant 0 : index
    %c0_2 = arith.constant 0 : index
    %1 = vector.load %arg2[%c0_1, %c0_2] : memref<16x32xbf16, #tpu.memory_space<vmem>>, vector<16x32xbf16>
    %cst = arith.constant dense<0.000000e+00> : vector<32x32xf32>
    %2 = tpu.matmul %0, %1, %cst {dimension_numbers = #tpu.dot_dimension_numbers<[1], [0], [0], [1], [0, 0, 1, 1], [], []>} : vector<32x16xbf16>, vector<16x32xbf16>, vector<32x32xf32> -> vector<32x32xf32>
    %c0_3 = arith.constant 0 : index
    %c0_4 = arith.constant 0 : index
    %3 = vector.load %arg3[%c0_3, %c0_4] : memref<1x32xf32, #tpu.memory_space<vmem>>, vector<1x32xf32>
    %4 = vector.broadcast %3 : vector<1x32xf32> to vector<32x32xf32>
    %5 = arith.addf %2, %4 : vector<32x32xf32>
    %6 = arith.truncf %5 : vector<32x32xf32> to vector<32x32xbf16>
    %c0_5 = arith.constant 0 : index
    %c0_6 = arith.constant 0 : index
    %7 = vector.load %arg4[%c0_5, %c0_6] : memref<32x32xbf16, #tpu.memory_space<vmem>>, vector<32x32xbf16>
    tpu.vector_store %arg4[%c0_5, %c0_6], %6 {strides = array<i32>} : memref<32x32xbf16, #tpu.memory_space<vmem>>, vector<32x32xbf16>,
    return
  }
  func.func @transform_0(%arg0: i32) -> (i32, i32) {
    %c0_i32 = arith.constant 0 : i32
    %c0_i32_0 = arith.constant 0 : i32
    return %arg0, %c0_i32 : i32, i32
  }
  func.func @transform_1(%arg0: i32) -> (i32, i32) {
    %c0_i32 = arith.constant 0 : i32
    %c0_i32_0 = arith.constant 0 : i32
    %c0_i32_1 = arith.constant 0 : i32
    return %c0_i32, %c0_i32_0 : i32, i32
  }
  func.func @transform_2(%arg0: i32) -> (i32, i32) {
    %c0_i32 = arith.constant 0 : i32
    %c0_i32_0 = arith.constant 0 : i32
    %c0_i32_1 = arith.constant 0 : i32
    return %c0_i32, %c0_i32_0 : i32, i32
  }
  func.func @transform_3(%arg0: i32) -> (i32, i32) {
    %c0_i32 = arith.constant 0 : i32
    %c0_i32_0 = arith.constant 0 : i32
    return %arg0, %c0_i32 : i32, i32
  }
}

module attributes {stable_mosaic.version = 11 : i64} {
  func.func @_conv_mm_res_kernel(%arg0: i32, %arg1: memref<32x288xbf16, #tpu.memory_space<vmem>>, %arg2: memref<288x32xbf16, #tpu.memory_space<vmem>>, %arg3: memref<1x32xf32, #tpu.memory_space<vmem>>, %arg4: memref<32x32xbf16, #tpu.memory_space<vmem>>, %arg5: memref<32x32xbf16, #tpu.memory_space<vmem>>) attributes {dimension_semantics = [#tpu.dimension_semantics<parallel>], iteration_bounds = array<i64: 1>, scalar_prefetch = 0 : i64, scratch_operands = 0 : i64, tpu.core_type = #tpu.core_type<tc>, window_params = [{transform_indices = @transform_0, window_bounds = array<i64: 32, 288>}, {pipeline_mode = #tpu.pipeline_mode<synchronous>, transform_indices = @transform_1, window_bounds = array<i64: 288, 32>}, {pipeline_mode = #tpu.pipeline_mode<synchronous>, transform_indices = @transform_2, window_bounds = array<i64: 1, 32>}, {transform_indices = @transform_3, window_bounds = array<i64: 32, 32>}, {transform_indices = @transform_4, window_bounds = array<i64: 32, 32>}]} {
    %c0 = arith.constant 0 : index
    %c0_0 = arith.constant 0 : index
    %0 = vector.load %arg1[%c0, %c0_0] : memref<32x288xbf16, #tpu.memory_space<vmem>>, vector<32x288xbf16>
    %c0_1 = arith.constant 0 : index
    %c0_2 = arith.constant 0 : index
    %1 = vector.load %arg2[%c0_1, %c0_2] : memref<288x32xbf16, #tpu.memory_space<vmem>>, vector<288x32xbf16>
    %cst = arith.constant dense<0.000000e+00> : vector<32x32xf32>
    %2 = tpu.matmul %0, %1, %cst {dimension_numbers = #tpu.dot_dimension_numbers<[1], [0], [0], [1], [0, 0, 1, 1], [], []>} : vector<32x288xbf16>, vector<288x32xbf16>, vector<32x32xf32> -> vector<32x32xf32>
    %c0_3 = arith.constant 0 : index
    %c0_4 = arith.constant 0 : index
    %3 = vector.load %arg3[%c0_3, %c0_4] : memref<1x32xf32, #tpu.memory_space<vmem>>, vector<1x32xf32>
    %4 = vector.broadcast %3 : vector<1x32xf32> to vector<32x32xf32>
    %5 = arith.addf %2, %4 : vector<32x32xf32>
    %c0_5 = arith.constant 0 : index
    %c0_6 = arith.constant 0 : index
    %6 = vector.load %arg4[%c0_5, %c0_6] : memref<32x32xbf16, #tpu.memory_space<vmem>>, vector<32x32xbf16>
    %7 = arith.extf %6 : vector<32x32xbf16> to vector<32x32xf32>
    %8 = arith.addf %5, %7 : vector<32x32xf32>
    %cst_7 = arith.constant 0.000000e+00 : f32
    %9 = vector.broadcast %cst_7 : f32 to vector<32x32xf32>
    %10 = arith.maximumf %8, %9 : vector<32x32xf32>
    %11 = arith.truncf %10 : vector<32x32xf32> to vector<32x32xbf16>
    %c0_8 = arith.constant 0 : index
    %c0_9 = arith.constant 0 : index
    %12 = vector.load %arg5[%c0_8, %c0_9] : memref<32x32xbf16, #tpu.memory_space<vmem>>, vector<32x32xbf16>
    tpu.vector_store %arg5[%c0_8, %c0_9], %11 {strides = array<i32>} : memref<32x32xbf16, #tpu.memory_space<vmem>>, vector<32x32xbf16>,
    return
  }
  func.func @transform_0(%arg0: i32) -> (i32, i32) {
    %c0_i32 = arith.constant 0 : i32
    %c0_i32_0 = arith.constant 0 : i32
    return %arg0, %c0_i32 : i32, i32
  }
  func.func @transform_1(%arg0: i32) -> (i32, i32) {
    %c0_i32 = arith.constant 0 : i32
    %c0_i32_0 = arith.constant 0 : i32
    %c0_i32_1 = arith.constant 0 : i32
    return %c0_i32, %c0_i32_0 : i32, i32
  }
  func.func @transform_2(%arg0: i32) -> (i32, i32) {
    %c0_i32 = arith.constant 0 : i32
    %c0_i32_0 = arith.constant 0 : i32
    %c0_i32_1 = arith.constant 0 : i32
    return %c0_i32, %c0_i32_0 : i32, i32
  }
  func.func @transform_3(%arg0: i32) -> (i32, i32) {
    %c0_i32 = arith.constant 0 : i32
    %c0_i32_0 = arith.constant 0 : i32
    return %arg0, %c0_i32 : i32, i32
  }
  func.func @transform_4(%arg0: i32) -> (i32, i32) {
    %c0_i32 = arith.constant 0 : i32
    %c0_i32_0 = arith.constant 0 : i32
    return %arg0, %c0_i32 : i32, i32
  }
}

module attributes {stable_mosaic.version = 11 : i64} {
  func.func @_conv_mm_kernel(%arg0: i32, %arg1: memref<32x288xbf16, #tpu.memory_space<vmem>>, %arg2: memref<288x32xbf16, #tpu.memory_space<vmem>>, %arg3: memref<1x32xf32, #tpu.memory_space<vmem>>, %arg4: memref<32x32xbf16, #tpu.memory_space<vmem>>) attributes {dimension_semantics = [#tpu.dimension_semantics<parallel>], iteration_bounds = array<i64: 1>, scalar_prefetch = 0 : i64, scratch_operands = 0 : i64, tpu.core_type = #tpu.core_type<tc>, window_params = [{transform_indices = @transform_0, window_bounds = array<i64: 32, 288>}, {pipeline_mode = #tpu.pipeline_mode<synchronous>, transform_indices = @transform_1, window_bounds = array<i64: 288, 32>}, {pipeline_mode = #tpu.pipeline_mode<synchronous>, transform_indices = @transform_2, window_bounds = array<i64: 1, 32>}, {transform_indices = @transform_3, window_bounds = array<i64: 32, 32>}]} {
    %c0 = arith.constant 0 : index
    %c0_0 = arith.constant 0 : index
    %0 = vector.load %arg1[%c0, %c0_0] : memref<32x288xbf16, #tpu.memory_space<vmem>>, vector<32x288xbf16>
    %c0_1 = arith.constant 0 : index
    %c0_2 = arith.constant 0 : index
    %1 = vector.load %arg2[%c0_1, %c0_2] : memref<288x32xbf16, #tpu.memory_space<vmem>>, vector<288x32xbf16>
    %cst = arith.constant dense<0.000000e+00> : vector<32x32xf32>
    %2 = tpu.matmul %0, %1, %cst {dimension_numbers = #tpu.dot_dimension_numbers<[1], [0], [0], [1], [0, 0, 1, 1], [], []>} : vector<32x288xbf16>, vector<288x32xbf16>, vector<32x32xf32> -> vector<32x32xf32>
    %c0_3 = arith.constant 0 : index
    %c0_4 = arith.constant 0 : index
    %3 = vector.load %arg3[%c0_3, %c0_4] : memref<1x32xf32, #tpu.memory_space<vmem>>, vector<1x32xf32>
    %4 = vector.broadcast %3 : vector<1x32xf32> to vector<32x32xf32>
    %5 = arith.addf %2, %4 : vector<32x32xf32>
    %cst_5 = arith.constant 0.000000e+00 : f32
    %6 = vector.broadcast %cst_5 : f32 to vector<32x32xf32>
    %7 = arith.maximumf %5, %6 : vector<32x32xf32>
    %8 = arith.truncf %7 : vector<32x32xf32> to vector<32x32xbf16>
    %c0_6 = arith.constant 0 : index
    %c0_7 = arith.constant 0 : index
    %9 = vector.load %arg4[%c0_6, %c0_7] : memref<32x32xbf16, #tpu.memory_space<vmem>>, vector<32x32xbf16>
    tpu.vector_store %arg4[%c0_6, %c0_7], %8 {strides = array<i32>} : memref<32x32xbf16, #tpu.memory_space<vmem>>, vector<32x32xbf16>,
    return
  }
  func.func @transform_0(%arg0: i32) -> (i32, i32) {
    %c0_i32 = arith.constant 0 : i32
    %c0_i32_0 = arith.constant 0 : i32
    return %arg0, %c0_i32 : i32, i32
  }
  func.func @transform_1(%arg0: i32) -> (i32, i32) {
    %c0_i32 = arith.constant 0 : i32
    %c0_i32_0 = arith.constant 0 : i32
    %c0_i32_1 = arith.constant 0 : i32
    return %c0_i32, %c0_i32_0 : i32, i32
  }
  func.func @transform_2(%arg0: i32) -> (i32, i32) {
    %c0_i32 = arith.constant 0 : i32
    %c0_i32_0 = arith.constant 0 : i32
    %c0_i32_1 = arith.constant 0 : i32
    return %c0_i32, %c0_i32_0 : i32, i32
  }
  func.func @transform_3(%arg0: i32) -> (i32, i32) {
    %c0_i32 = arith.constant 0 : i32
    %c0_i32_0 = arith.constant 0 : i32
    return %arg0, %c0_i32 : i32, i32
  }
}

module attributes {stable_mosaic.version = 11 : i64} {
  func.func @_conv_mm_kernel(%arg0: i32, %arg1: memref<8x288xbf16, #tpu.memory_space<vmem>>, %arg2: memref<288x64xbf16, #tpu.memory_space<vmem>>, %arg3: memref<1x64xf32, #tpu.memory_space<vmem>>, %arg4: memref<8x64xbf16, #tpu.memory_space<vmem>>) attributes {dimension_semantics = [#tpu.dimension_semantics<parallel>], iteration_bounds = array<i64: 1>, scalar_prefetch = 0 : i64, scratch_operands = 0 : i64, tpu.core_type = #tpu.core_type<tc>, window_params = [{transform_indices = @transform_0, window_bounds = array<i64: 8, 288>}, {pipeline_mode = #tpu.pipeline_mode<synchronous>, transform_indices = @transform_1, window_bounds = array<i64: 288, 64>}, {pipeline_mode = #tpu.pipeline_mode<synchronous>, transform_indices = @transform_2, window_bounds = array<i64: 1, 64>}, {transform_indices = @transform_3, window_bounds = array<i64: 8, 64>}]} {
    %c0 = arith.constant 0 : index
    %c0_0 = arith.constant 0 : index
    %0 = vector.load %arg1[%c0, %c0_0] : memref<8x288xbf16, #tpu.memory_space<vmem>>, vector<8x288xbf16>
    %c0_1 = arith.constant 0 : index
    %c0_2 = arith.constant 0 : index
    %1 = vector.load %arg2[%c0_1, %c0_2] : memref<288x64xbf16, #tpu.memory_space<vmem>>, vector<288x64xbf16>
    %cst = arith.constant dense<0.000000e+00> : vector<8x64xf32>
    %2 = tpu.matmul %0, %1, %cst {dimension_numbers = #tpu.dot_dimension_numbers<[1], [0], [0], [1], [0, 0, 1, 1], [], []>} : vector<8x288xbf16>, vector<288x64xbf16>, vector<8x64xf32> -> vector<8x64xf32>
    %c0_3 = arith.constant 0 : index
    %c0_4 = arith.constant 0 : index
    %3 = vector.load %arg3[%c0_3, %c0_4] : memref<1x64xf32, #tpu.memory_space<vmem>>, vector<1x64xf32>
    %4 = vector.broadcast %3 : vector<1x64xf32> to vector<8x64xf32>
    %5 = arith.addf %2, %4 : vector<8x64xf32>
    %cst_5 = arith.constant 0.000000e+00 : f32
    %6 = vector.broadcast %cst_5 : f32 to vector<8x64xf32>
    %7 = arith.maximumf %5, %6 : vector<8x64xf32>
    %8 = arith.truncf %7 : vector<8x64xf32> to vector<8x64xbf16>
    %c0_6 = arith.constant 0 : index
    %c0_7 = arith.constant 0 : index
    %9 = vector.load %arg4[%c0_6, %c0_7] : memref<8x64xbf16, #tpu.memory_space<vmem>>, vector<8x64xbf16>
    tpu.vector_store %arg4[%c0_6, %c0_7], %8 {strides = array<i32>} : memref<8x64xbf16, #tpu.memory_space<vmem>>, vector<8x64xbf16>,
    return
  }
  func.func @transform_0(%arg0: i32) -> (i32, i32) {
    %c0_i32 = arith.constant 0 : i32
    %c0_i32_0 = arith.constant 0 : i32
    return %arg0, %c0_i32 : i32, i32
  }
  func.func @transform_1(%arg0: i32) -> (i32, i32) {
    %c0_i32 = arith.constant 0 : i32
    %c0_i32_0 = arith.constant 0 : i32
    %c0_i32_1 = arith.constant 0 : i32
    return %c0_i32, %c0_i32_0 : i32, i32
  }
  func.func @transform_2(%arg0: i32) -> (i32, i32) {
    %c0_i32 = arith.constant 0 : i32
    %c0_i32_0 = arith.constant 0 : i32
    %c0_i32_1 = arith.constant 0 : i32
    return %c0_i32, %c0_i32_0 : i32, i32
  }
  func.func @transform_3(%arg0: i32) -> (i32, i32) {
    %c0_i32 = arith.constant 0 : i32
    %c0_i32_0 = arith.constant 0 : i32
    return %arg0, %c0_i32 : i32, i32
  }
}

module attributes {stable_mosaic.version = 11 : i64} {
  func.func @_conv_mm_res_kernel(%arg0: i32, %arg1: memref<8x576xbf16, #tpu.memory_space<vmem>>, %arg2: memref<576x64xbf16, #tpu.memory_space<vmem>>, %arg3: memref<1x64xf32, #tpu.memory_space<vmem>>, %arg4: memref<8x64xbf16, #tpu.memory_space<vmem>>, %arg5: memref<8x64xbf16, #tpu.memory_space<vmem>>) attributes {dimension_semantics = [#tpu.dimension_semantics<parallel>], iteration_bounds = array<i64: 1>, scalar_prefetch = 0 : i64, scratch_operands = 0 : i64, tpu.core_type = #tpu.core_type<tc>, window_params = [{transform_indices = @transform_0, window_bounds = array<i64: 8, 576>}, {pipeline_mode = #tpu.pipeline_mode<synchronous>, transform_indices = @transform_1, window_bounds = array<i64: 576, 64>}, {pipeline_mode = #tpu.pipeline_mode<synchronous>, transform_indices = @transform_2, window_bounds = array<i64: 1, 64>}, {transform_indices = @transform_3, window_bounds = array<i64: 8, 64>}, {transform_indices = @transform_4, window_bounds = array<i64: 8, 64>}]} {
    %c0 = arith.constant 0 : index
    %c0_0 = arith.constant 0 : index
    %0 = vector.load %arg1[%c0, %c0_0] : memref<8x576xbf16, #tpu.memory_space<vmem>>, vector<8x576xbf16>
    %c0_1 = arith.constant 0 : index
    %c0_2 = arith.constant 0 : index
    %1 = vector.load %arg2[%c0_1, %c0_2] : memref<576x64xbf16, #tpu.memory_space<vmem>>, vector<576x64xbf16>
    %cst = arith.constant dense<0.000000e+00> : vector<8x64xf32>
    %2 = tpu.matmul %0, %1, %cst {dimension_numbers = #tpu.dot_dimension_numbers<[1], [0], [0], [1], [0, 0, 1, 1], [], []>} : vector<8x576xbf16>, vector<576x64xbf16>, vector<8x64xf32> -> vector<8x64xf32>
    %c0_3 = arith.constant 0 : index
    %c0_4 = arith.constant 0 : index
    %3 = vector.load %arg3[%c0_3, %c0_4] : memref<1x64xf32, #tpu.memory_space<vmem>>, vector<1x64xf32>
    %4 = vector.broadcast %3 : vector<1x64xf32> to vector<8x64xf32>
    %5 = arith.addf %2, %4 : vector<8x64xf32>
    %c0_5 = arith.constant 0 : index
    %c0_6 = arith.constant 0 : index
    %6 = vector.load %arg4[%c0_5, %c0_6] : memref<8x64xbf16, #tpu.memory_space<vmem>>, vector<8x64xbf16>
    %7 = arith.extf %6 : vector<8x64xbf16> to vector<8x64xf32>
    %8 = arith.addf %5, %7 : vector<8x64xf32>
    %cst_7 = arith.constant 0.000000e+00 : f32
    %9 = vector.broadcast %cst_7 : f32 to vector<8x64xf32>
    %10 = arith.maximumf %8, %9 : vector<8x64xf32>
    %11 = arith.truncf %10 : vector<8x64xf32> to vector<8x64xbf16>
    %c0_8 = arith.constant 0 : index
    %c0_9 = arith.constant 0 : index
    %12 = vector.load %arg5[%c0_8, %c0_9] : memref<8x64xbf16, #tpu.memory_space<vmem>>, vector<8x64xbf16>
    tpu.vector_store %arg5[%c0_8, %c0_9], %11 {strides = array<i32>} : memref<8x64xbf16, #tpu.memory_space<vmem>>, vector<8x64xbf16>,
    return
  }
  func.func @transform_0(%arg0: i32) -> (i32, i32) {
    %c0_i32 = arith.constant 0 : i32
    %c0_i32_0 = arith.constant 0 : i32
    return %arg0, %c0_i32 : i32, i32
  }
  func.func @transform_1(%arg0: i32) -> (i32, i32) {
    %c0_i32 = arith.constant 0 : i32
    %c0_i32_0 = arith.constant 0 : i32
    %c0_i32_1 = arith.constant 0 : i32
    return %c0_i32, %c0_i32_0 : i32, i32
  }
  func.func @transform_2(%arg0: i32) -> (i32, i32) {
    %c0_i32 = arith.constant 0 : i32
    %c0_i32_0 = arith.constant 0 : i32
    %c0_i32_1 = arith.constant 0 : i32
    return %c0_i32, %c0_i32_0 : i32, i32
  }
  func.func @transform_3(%arg0: i32) -> (i32, i32) {
    %c0_i32 = arith.constant 0 : i32
    %c0_i32_0 = arith.constant 0 : i32
    return %arg0, %c0_i32 : i32, i32
  }
  func.func @transform_4(%arg0: i32) -> (i32, i32) {
    %c0_i32 = arith.constant 0 : i32
    %c0_i32_0 = arith.constant 0 : i32
    return %arg0, %c0_i32 : i32, i32
  }
}

module attributes {stable_mosaic.version = 11 : i64} {
  func.func @_conv_mm_kernel(%arg0: i32, %arg1: memref<8x576xbf16, #tpu.memory_space<vmem>>, %arg2: memref<576x64xbf16, #tpu.memory_space<vmem>>, %arg3: memref<1x64xf32, #tpu.memory_space<vmem>>, %arg4: memref<8x64xbf16, #tpu.memory_space<vmem>>) attributes {dimension_semantics = [#tpu.dimension_semantics<parallel>], iteration_bounds = array<i64: 1>, scalar_prefetch = 0 : i64, scratch_operands = 0 : i64, tpu.core_type = #tpu.core_type<tc>, window_params = [{transform_indices = @transform_0, window_bounds = array<i64: 8, 576>}, {pipeline_mode = #tpu.pipeline_mode<synchronous>, transform_indices = @transform_1, window_bounds = array<i64: 576, 64>}, {pipeline_mode = #tpu.pipeline_mode<synchronous>, transform_indices = @transform_2, window_bounds = array<i64: 1, 64>}, {transform_indices = @transform_3, window_bounds = array<i64: 8, 64>}]} {
    %c0 = arith.constant 0 : index
    %c0_0 = arith.constant 0 : index
    %0 = vector.load %arg1[%c0, %c0_0] : memref<8x576xbf16, #tpu.memory_space<vmem>>, vector<8x576xbf16>
    %c0_1 = arith.constant 0 : index
    %c0_2 = arith.constant 0 : index
    %1 = vector.load %arg2[%c0_1, %c0_2] : memref<576x64xbf16, #tpu.memory_space<vmem>>, vector<576x64xbf16>
    %cst = arith.constant dense<0.000000e+00> : vector<8x64xf32>
    %2 = tpu.matmul %0, %1, %cst {dimension_numbers = #tpu.dot_dimension_numbers<[1], [0], [0], [1], [0, 0, 1, 1], [], []>} : vector<8x576xbf16>, vector<576x64xbf16>, vector<8x64xf32> -> vector<8x64xf32>
    %c0_3 = arith.constant 0 : index
    %c0_4 = arith.constant 0 : index
    %3 = vector.load %arg3[%c0_3, %c0_4] : memref<1x64xf32, #tpu.memory_space<vmem>>, vector<1x64xf32>
    %4 = vector.broadcast %3 : vector<1x64xf32> to vector<8x64xf32>
    %5 = arith.addf %2, %4 : vector<8x64xf32>
    %cst_5 = arith.constant 0.000000e+00 : f32
    %6 = vector.broadcast %cst_5 : f32 to vector<8x64xf32>
    %7 = arith.maximumf %5, %6 : vector<8x64xf32>
    %8 = arith.truncf %7 : vector<8x64xf32> to vector<8x64xbf16>
    %c0_6 = arith.constant 0 : index
    %c0_7 = arith.constant 0 : index
    %9 = vector.load %arg4[%c0_6, %c0_7] : memref<8x64xbf16, #tpu.memory_space<vmem>>, vector<8x64xbf16>
    tpu.vector_store %arg4[%c0_6, %c0_7], %8 {strides = array<i32>} : memref<8x64xbf16, #tpu.memory_space<vmem>>, vector<8x64xbf16>,
    return
  }
  func.func @transform_0(%arg0: i32) -> (i32, i32) {
    %c0_i32 = arith.constant 0 : i32
    %c0_i32_0 = arith.constant 0 : i32
    return %arg0, %c0_i32 : i32, i32
  }
  func.func @transform_1(%arg0: i32) -> (i32, i32) {
    %c0_i32 = arith.constant 0 : i32
    %c0_i32_0 = arith.constant 0 : i32
    %c0_i32_1 = arith.constant 0 : i32
    return %c0_i32, %c0_i32_0 : i32, i32
  }
  func.func @transform_2(%arg0: i32) -> (i32, i32) {
    %c0_i32 = arith.constant 0 : i32
    %c0_i32_0 = arith.constant 0 : i32
    %c0_i32_1 = arith.constant 0 : i32
    return %c0_i32, %c0_i32_0 : i32, i32
  }
  func.func @transform_3(%arg0: i32) -> (i32, i32) {
    %c0_i32 = arith.constant 0 : i32
    %c0_i32_0 = arith.constant 0 : i32
    return %arg0, %c0_i32 : i32, i32
  }
}

module attributes {stable_mosaic.version = 11 : i64} {
  func.func @_conv_mm_kernel(%arg0: i32, %arg1: memref<8x32xbf16, #tpu.memory_space<vmem>>, %arg2: memref<32x64xbf16, #tpu.memory_space<vmem>>, %arg3: memref<1x64xf32, #tpu.memory_space<vmem>>, %arg4: memref<8x64xbf16, #tpu.memory_space<vmem>>) attributes {dimension_semantics = [#tpu.dimension_semantics<parallel>], iteration_bounds = array<i64: 1>, scalar_prefetch = 0 : i64, scratch_operands = 0 : i64, tpu.core_type = #tpu.core_type<tc>, window_params = [{transform_indices = @transform_0, window_bounds = array<i64: 8, 32>}, {pipeline_mode = #tpu.pipeline_mode<synchronous>, transform_indices = @transform_1, window_bounds = array<i64: 32, 64>}, {pipeline_mode = #tpu.pipeline_mode<synchronous>, transform_indices = @transform_2, window_bounds = array<i64: 1, 64>}, {transform_indices = @transform_3, window_bounds = array<i64: 8, 64>}]} {
    %c0 = arith.constant 0 : index
    %c0_0 = arith.constant 0 : index
    %0 = vector.load %arg1[%c0, %c0_0] : memref<8x32xbf16, #tpu.memory_space<vmem>>, vector<8x32xbf16>
    %c0_1 = arith.constant 0 : index
    %c0_2 = arith.constant 0 : index
    %1 = vector.load %arg2[%c0_1, %c0_2] : memref<32x64xbf16, #tpu.memory_space<vmem>>, vector<32x64xbf16>
    %cst = arith.constant dense<0.000000e+00> : vector<8x64xf32>
    %2 = tpu.matmul %0, %1, %cst {dimension_numbers = #tpu.dot_dimension_numbers<[1], [0], [0], [1], [0, 0, 1, 1], [], []>} : vector<8x32xbf16>, vector<32x64xbf16>, vector<8x64xf32> -> vector<8x64xf32>
    %c0_3 = arith.constant 0 : index
    %c0_4 = arith.constant 0 : index
    %3 = vector.load %arg3[%c0_3, %c0_4] : memref<1x64xf32, #tpu.memory_space<vmem>>, vector<1x64xf32>
    %4 = vector.broadcast %3 : vector<1x64xf32> to vector<8x64xf32>
    %5 = arith.addf %2, %4 : vector<8x64xf32>
    %6 = arith.truncf %5 : vector<8x64xf32> to vector<8x64xbf16>
    %c0_5 = arith.constant 0 : index
    %c0_6 = arith.constant 0 : index
    %7 = vector.load %arg4[%c0_5, %c0_6] : memref<8x64xbf16, #tpu.memory_space<vmem>>, vector<8x64xbf16>
    tpu.vector_store %arg4[%c0_5, %c0_6], %6 {strides = array<i32>} : memref<8x64xbf16, #tpu.memory_space<vmem>>, vector<8x64xbf16>,
    return
  }
  func.func @transform_0(%arg0: i32) -> (i32, i32) {
    %c0_i32 = arith.constant 0 : i32
    %c0_i32_0 = arith.constant 0 : i32
    return %arg0, %c0_i32 : i32, i32
  }
  func.func @transform_1(%arg0: i32) -> (i32, i32) {
    %c0_i32 = arith.constant 0 : i32
    %c0_i32_0 = arith.constant 0 : i32
    %c0_i32_1 = arith.constant 0 : i32
    return %c0_i32, %c0_i32_0 : i32, i32
  }
  func.func @transform_2(%arg0: i32) -> (i32, i32) {
    %c0_i32 = arith.constant 0 : i32
    %c0_i32_0 = arith.constant 0 : i32
    %c0_i32_1 = arith.constant 0 : i32
    return %c0_i32, %c0_i32_0 : i32, i32
  }
  func.func @transform_3(%arg0: i32) -> (i32, i32) {
    %c0_i32 = arith.constant 0 : i32
    %c0_i32_0 = arith.constant 0 : i32
    return %arg0, %c0_i32 : i32, i32
  }
}

module attributes {stable_mosaic.version = 11 : i64} {
  func.func @_conv_mm_kernel(%arg0: i32, %arg1: memref<8x576xbf16, #tpu.memory_space<vmem>>, %arg2: memref<576x128xbf16, #tpu.memory_space<vmem>>, %arg3: memref<1x128xf32, #tpu.memory_space<vmem>>, %arg4: memref<8x128xbf16, #tpu.memory_space<vmem>>) attributes {dimension_semantics = [#tpu.dimension_semantics<parallel>], iteration_bounds = array<i64: 1>, scalar_prefetch = 0 : i64, scratch_operands = 0 : i64, tpu.core_type = #tpu.core_type<tc>, window_params = [{transform_indices = @transform_0, window_bounds = array<i64: 8, 576>}, {pipeline_mode = #tpu.pipeline_mode<synchronous>, transform_indices = @transform_1, window_bounds = array<i64: 576, 128>}, {pipeline_mode = #tpu.pipeline_mode<synchronous>, transform_indices = @transform_2, window_bounds = array<i64: 1, 128>}, {transform_indices = @transform_3, window_bounds = array<i64: 8, 128>}]} {
    %c0 = arith.constant 0 : index
    %c0_0 = arith.constant 0 : index
    %0 = vector.load %arg1[%c0, %c0_0] : memref<8x576xbf16, #tpu.memory_space<vmem>>, vector<8x576xbf16>
    %c0_1 = arith.constant 0 : index
    %c0_2 = arith.constant 0 : index
    %1 = vector.load %arg2[%c0_1, %c0_2] : memref<576x128xbf16, #tpu.memory_space<vmem>>, vector<576x128xbf16>
    %cst = arith.constant dense<0.000000e+00> : vector<8x128xf32>
    %2 = tpu.matmul %0, %1, %cst {dimension_numbers = #tpu.dot_dimension_numbers<[1], [0], [0], [1], [0, 0, 1, 1], [], []>} : vector<8x576xbf16>, vector<576x128xbf16>, vector<8x128xf32> -> vector<8x128xf32>
    %c0_3 = arith.constant 0 : index
    %c0_4 = arith.constant 0 : index
    %3 = vector.load %arg3[%c0_3, %c0_4] : memref<1x128xf32, #tpu.memory_space<vmem>>, vector<1x128xf32>
    %4 = vector.broadcast %3 : vector<1x128xf32> to vector<8x128xf32>
    %5 = arith.addf %2, %4 : vector<8x128xf32>
    %cst_5 = arith.constant 0.000000e+00 : f32
    %6 = vector.broadcast %cst_5 : f32 to vector<8x128xf32>
    %7 = arith.maximumf %5, %6 : vector<8x128xf32>
    %8 = arith.truncf %7 : vector<8x128xf32> to vector<8x128xbf16>
    %c0_6 = arith.constant 0 : index
    %c0_7 = arith.constant 0 : index
    %9 = vector.load %arg4[%c0_6, %c0_7] : memref<8x128xbf16, #tpu.memory_space<vmem>>, vector<8x128xbf16>
    tpu.vector_store %arg4[%c0_6, %c0_7], %8 {strides = array<i32>} : memref<8x128xbf16, #tpu.memory_space<vmem>>, vector<8x128xbf16>,
    return
  }
  func.func @transform_0(%arg0: i32) -> (i32, i32) {
    %c0_i32 = arith.constant 0 : i32
    %c0_i32_0 = arith.constant 0 : i32
    return %arg0, %c0_i32 : i32, i32
  }
  func.func @transform_1(%arg0: i32) -> (i32, i32) {
    %c0_i32 = arith.constant 0 : i32
    %c0_i32_0 = arith.constant 0 : i32
    %c0_i32_1 = arith.constant 0 : i32
    return %c0_i32, %c0_i32_0 : i32, i32
  }
  func.func @transform_2(%arg0: i32) -> (i32, i32) {
    %c0_i32 = arith.constant 0 : i32
    %c0_i32_0 = arith.constant 0 : i32
    %c0_i32_1 = arith.constant 0 : i32
    return %c0_i32, %c0_i32_0 : i32, i32
  }
  func.func @transform_3(%arg0: i32) -> (i32, i32) {
    %c0_i32 = arith.constant 0 : i32
    %c0_i32_0 = arith.constant 0 : i32
    return %arg0, %c0_i32 : i32, i32
  }
}

module attributes {stable_mosaic.version = 11 : i64} {
  func.func @_conv_mm_kernel(%arg0: i32, %arg1: memref<8x64xbf16, #tpu.memory_space<vmem>>, %arg2: memref<64x128xbf16, #tpu.memory_space<vmem>>, %arg3: memref<1x128xf32, #tpu.memory_space<vmem>>, %arg4: memref<8x128xbf16, #tpu.memory_space<vmem>>) attributes {dimension_semantics = [#tpu.dimension_semantics<parallel>], iteration_bounds = array<i64: 1>, scalar_prefetch = 0 : i64, scratch_operands = 0 : i64, tpu.core_type = #tpu.core_type<tc>, window_params = [{transform_indices = @transform_0, window_bounds = array<i64: 8, 64>}, {pipeline_mode = #tpu.pipeline_mode<synchronous>, transform_indices = @transform_1, window_bounds = array<i64: 64, 128>}, {pipeline_mode = #tpu.pipeline_mode<synchronous>, transform_indices = @transform_2, window_bounds = array<i64: 1, 128>}, {transform_indices = @transform_3, window_bounds = array<i64: 8, 128>}]} {
    %c0 = arith.constant 0 : index
    %c0_0 = arith.constant 0 : index
    %0 = vector.load %arg1[%c0, %c0_0] : memref<8x64xbf16, #tpu.memory_space<vmem>>, vector<8x64xbf16>
    %c0_1 = arith.constant 0 : index
    %c0_2 = arith.constant 0 : index
    %1 = vector.load %arg2[%c0_1, %c0_2] : memref<64x128xbf16, #tpu.memory_space<vmem>>, vector<64x128xbf16>
    %cst = arith.constant dense<0.000000e+00> : vector<8x128xf32>
    %2 = tpu.matmul %0, %1, %cst {dimension_numbers = #tpu.dot_dimension_numbers<[1], [0], [0], [1], [0, 0, 1, 1], [], []>} : vector<8x64xbf16>, vector<64x128xbf16>, vector<8x128xf32> -> vector<8x128xf32>
    %c0_3 = arith.constant 0 : index
    %c0_4 = arith.constant 0 : index
    %3 = vector.load %arg3[%c0_3, %c0_4] : memref<1x128xf32, #tpu.memory_space<vmem>>, vector<1x128xf32>
    %4 = vector.broadcast %3 : vector<1x128xf32> to vector<8x128xf32>
    %5 = arith.addf %2, %4 : vector<8x128xf32>
    %6 = arith.truncf %5 : vector<8x128xf32> to vector<8x128xbf16>
    %c0_5 = arith.constant 0 : index
    %c0_6 = arith.constant 0 : index
    %7 = vector.load %arg4[%c0_5, %c0_6] : memref<8x128xbf16, #tpu.memory_space<vmem>>, vector<8x128xbf16>
    tpu.vector_store %arg4[%c0_5, %c0_6], %6 {strides = array<i32>} : memref<8x128xbf16, #tpu.memory_space<vmem>>, vector<8x128xbf16>,
    return
  }
  func.func @transform_0(%arg0: i32) -> (i32, i32) {
    %c0_i32 = arith.constant 0 : i32
    %c0_i32_0 = arith.constant 0 : i32
    return %arg0, %c0_i32 : i32, i32
  }
  func.func @transform_1(%arg0: i32) -> (i32, i32) {
    %c0_i32 = arith.constant 0 : i32
    %c0_i32_0 = arith.constant 0 : i32
    %c0_i32_1 = arith.constant 0 : i32
    return %c0_i32, %c0_i32_0 : i32, i32
  }
  func.func @transform_2(%arg0: i32) -> (i32, i32) {
    %c0_i32 = arith.constant 0 : i32
    %c0_i32_0 = arith.constant 0 : i32
    %c0_i32_1 = arith.constant 0 : i32
    return %c0_i32, %c0_i32_0 : i32, i32
  }
  func.func @transform_3(%arg0: i32) -> (i32, i32) {
    %c0_i32 = arith.constant 0 : i32
    %c0_i32_0 = arith.constant 0 : i32
    return %arg0, %c0_i32 : i32, i32
  }
}

module attributes {stable_mosaic.version = 11 : i64} {
  func.func @_conv_mm_res_kernel(%arg0: i32, %arg1: memref<8x1152xbf16, #tpu.memory_space<vmem>>, %arg2: memref<1152x128xbf16, #tpu.memory_space<vmem>>, %arg3: memref<1x128xf32, #tpu.memory_space<vmem>>, %arg4: memref<8x128xbf16, #tpu.memory_space<vmem>>, %arg5: memref<8x128xbf16, #tpu.memory_space<vmem>>) attributes {dimension_semantics = [#tpu.dimension_semantics<parallel>], iteration_bounds = array<i64: 1>, scalar_prefetch = 0 : i64, scratch_operands = 0 : i64, tpu.core_type = #tpu.core_type<tc>, window_params = [{transform_indices = @transform_0, window_bounds = array<i64: 8, 1152>}, {pipeline_mode = #tpu.pipeline_mode<synchronous>, transform_indices = @transform_1, window_bounds = array<i64: 1152, 128>}, {pipeline_mode = #tpu.pipeline_mode<synchronous>, transform_indices = @transform_2, window_bounds = array<i64: 1, 128>}, {transform_indices = @transform_3, window_bounds = array<i64: 8, 128>}, {transform_indices = @transform_4, window_bounds = array<i64: 8, 128>}]} {
    %c0 = arith.constant 0 : index
    %c0_0 = arith.constant 0 : index
    %0 = vector.load %arg1[%c0, %c0_0] : memref<8x1152xbf16, #tpu.memory_space<vmem>>, vector<8x1152xbf16>
    %c0_1 = arith.constant 0 : index
    %c0_2 = arith.constant 0 : index
    %1 = vector.load %arg2[%c0_1, %c0_2] : memref<1152x128xbf16, #tpu.memory_space<vmem>>, vector<1152x128xbf16>
    %cst = arith.constant dense<0.000000e+00> : vector<8x128xf32>
    %2 = tpu.matmul %0, %1, %cst {dimension_numbers = #tpu.dot_dimension_numbers<[1], [0], [0], [1], [0, 0, 1, 1], [], []>} : vector<8x1152xbf16>, vector<1152x128xbf16>, vector<8x128xf32> -> vector<8x128xf32>
    %c0_3 = arith.constant 0 : index
    %c0_4 = arith.constant 0 : index
    %3 = vector.load %arg3[%c0_3, %c0_4] : memref<1x128xf32, #tpu.memory_space<vmem>>, vector<1x128xf32>
    %4 = vector.broadcast %3 : vector<1x128xf32> to vector<8x128xf32>
    %5 = arith.addf %2, %4 : vector<8x128xf32>
    %c0_5 = arith.constant 0 : index
    %c0_6 = arith.constant 0 : index
    %6 = vector.load %arg4[%c0_5, %c0_6] : memref<8x128xbf16, #tpu.memory_space<vmem>>, vector<8x128xbf16>
    %7 = arith.extf %6 : vector<8x128xbf16> to vector<8x128xf32>
    %8 = arith.addf %5, %7 : vector<8x128xf32>
    %cst_7 = arith.constant 0.000000e+00 : f32
    %9 = vector.broadcast %cst_7 : f32 to vector<8x128xf32>
    %10 = arith.maximumf %8, %9 : vector<8x128xf32>
    %11 = arith.truncf %10 : vector<8x128xf32> to vector<8x128xbf16>
    %c0_8 = arith.constant 0 : index
    %c0_9 = arith.constant 0 : index
    %12 = vector.load %arg5[%c0_8, %c0_9] : memref<8x128xbf16, #tpu.memory_space<vmem>>, vector<8x128xbf16>
    tpu.vector_store %arg5[%c0_8, %c0_9], %11 {strides = array<i32>} : memref<8x128xbf16, #tpu.memory_space<vmem>>, vector<8x128xbf16>,
    return
  }
  func.func @transform_0(%arg0: i32) -> (i32, i32) {
    %c0_i32 = arith.constant 0 : i32
    %c0_i32_0 = arith.constant 0 : i32
    return %arg0, %c0_i32 : i32, i32
  }
  func.func @transform_1(%arg0: i32) -> (i32, i32) {
    %c0_i32 = arith.constant 0 : i32
    %c0_i32_0 = arith.constant 0 : i32
    %c0_i32_1 = arith.constant 0 : i32
    return %c0_i32, %c0_i32_0 : i32, i32
  }
  func.func @transform_2(%arg0: i32) -> (i32, i32) {
    %c0_i32 = arith.constant 0 : i32
    %c0_i32_0 = arith.constant 0 : i32
    %c0_i32_1 = arith.constant 0 : i32
    return %c0_i32, %c0_i32_0 : i32, i32
  }
  func.func @transform_3(%arg0: i32) -> (i32, i32) {
    %c0_i32 = arith.constant 0 : i32
    %c0_i32_0 = arith.constant 0 : i32
    return %arg0, %c0_i32 : i32, i32
  }
  func.func @transform_4(%arg0: i32) -> (i32, i32) {
    %c0_i32 = arith.constant 0 : i32
    %c0_i32_0 = arith.constant 0 : i32
    return %arg0, %c0_i32 : i32, i32
  }
}

module attributes {stable_mosaic.version = 11 : i64} {
  func.func @_conv_mm_kernel(%arg0: i32, %arg1: memref<8x1152xbf16, #tpu.memory_space<vmem>>, %arg2: memref<1152x128xbf16, #tpu.memory_space<vmem>>, %arg3: memref<1x128xf32, #tpu.memory_space<vmem>>, %arg4: memref<8x128xbf16, #tpu.memory_space<vmem>>) attributes {dimension_semantics = [#tpu.dimension_semantics<parallel>], iteration_bounds = array<i64: 1>, scalar_prefetch = 0 : i64, scratch_operands = 0 : i64, tpu.core_type = #tpu.core_type<tc>, window_params = [{transform_indices = @transform_0, window_bounds = array<i64: 8, 1152>}, {pipeline_mode = #tpu.pipeline_mode<synchronous>, transform_indices = @transform_1, window_bounds = array<i64: 1152, 128>}, {pipeline_mode = #tpu.pipeline_mode<synchronous>, transform_indices = @transform_2, window_bounds = array<i64: 1, 128>}, {transform_indices = @transform_3, window_bounds = array<i64: 8, 128>}]} {
    %c0 = arith.constant 0 : index
    %c0_0 = arith.constant 0 : index
    %0 = vector.load %arg1[%c0, %c0_0] : memref<8x1152xbf16, #tpu.memory_space<vmem>>, vector<8x1152xbf16>
    %c0_1 = arith.constant 0 : index
    %c0_2 = arith.constant 0 : index
    %1 = vector.load %arg2[%c0_1, %c0_2] : memref<1152x128xbf16, #tpu.memory_space<vmem>>, vector<1152x128xbf16>
    %cst = arith.constant dense<0.000000e+00> : vector<8x128xf32>
    %2 = tpu.matmul %0, %1, %cst {dimension_numbers = #tpu.dot_dimension_numbers<[1], [0], [0], [1], [0, 0, 1, 1], [], []>} : vector<8x1152xbf16>, vector<1152x128xbf16>, vector<8x128xf32> -> vector<8x128xf32>
    %c0_3 = arith.constant 0 : index
    %c0_4 = arith.constant 0 : index
    %3 = vector.load %arg3[%c0_3, %c0_4] : memref<1x128xf32, #tpu.memory_space<vmem>>, vector<1x128xf32>
    %4 = vector.broadcast %3 : vector<1x128xf32> to vector<8x128xf32>
    %5 = arith.addf %2, %4 : vector<8x128xf32>
    %cst_5 = arith.constant 0.000000e+00 : f32
    %6 = vector.broadcast %cst_5 : f32 to vector<8x128xf32>
    %7 = arith.maximumf %5, %6 : vector<8x128xf32>
    %8 = arith.truncf %7 : vector<8x128xf32> to vector<8x128xbf16>
    %c0_6 = arith.constant 0 : index
    %c0_7 = arith.constant 0 : index
    %9 = vector.load %arg4[%c0_6, %c0_7] : memref<8x128xbf16, #tpu.memory_space<vmem>>, vector<8x128xbf16>
    tpu.vector_store %arg4[%c0_6, %c0_7], %8 {strides = array<i32>} : memref<8x128xbf16, #tpu.memory_space<vmem>>, vector<8x128xbf16>,
    return
  }
  func.func @transform_0(%arg0: i32) -> (i32, i32) {
    %c0_i32 = arith.constant 0 : i32
    %c0_i32_0 = arith.constant 0 : i32
    return %arg0, %c0_i32 : i32, i32
  }
  func.func @transform_1(%arg0: i32) -> (i32, i32) {
    %c0_i32 = arith.constant 0 : i32
    %c0_i32_0 = arith.constant 0 : i32
    %c0_i32_1 = arith.constant 0 : i32
    return %c0_i32, %c0_i32_0 : i32, i32
  }
  func.func @transform_2(%arg0: i32) -> (i32, i32) {
    %c0_i32 = arith.constant 0 : i32
    %c0_i32_0 = arith.constant 0 : i32
    %c0_i32_1 = arith.constant 0 : i32
    return %c0_i32, %c0_i32_0 : i32, i32
  }
  func.func @transform_3(%arg0: i32) -> (i32, i32) {
    %c0_i32 = arith.constant 0 : i32
    %c0_i32_0 = arith.constant 0 : i32
    return %arg0, %c0_i32 : i32, i32
  }
}

module attributes {stable_mosaic.version = 11 : i64} {
  func.func @_gap_fc_kernel(%arg0: i32, %arg1: memref<2x1x128xbf16, #tpu.memory_space<vmem>>, %arg2: memref<128x2xf32, #tpu.memory_space<vmem>>, %arg3: memref<1x2xf32, #tpu.memory_space<vmem>>, %arg4: memref<2x2xf32, #tpu.memory_space<vmem>>) attributes {dimension_semantics = [#tpu.dimension_semantics<arbitrary>], iteration_bounds = array<i64: 1>, scalar_prefetch = 0 : i64, scratch_operands = 0 : i64, tpu.core_type = #tpu.core_type<tc>, window_params = [{pipeline_mode = #tpu.pipeline_mode<synchronous>, transform_indices = @transform_0, window_bounds = array<i64: 2, 1, 128>}, {pipeline_mode = #tpu.pipeline_mode<synchronous>, transform_indices = @transform_1, window_bounds = array<i64: 128, 2>}, {pipeline_mode = #tpu.pipeline_mode<synchronous>, transform_indices = @transform_2, window_bounds = array<i64: 1, 2>}, {pipeline_mode = #tpu.pipeline_mode<synchronous>, transform_indices = @transform_3, window_bounds = array<i64: 2, 2>}]} {
    %c0 = arith.constant 0 : index
    %c0_0 = arith.constant 0 : index
    %c0_1 = arith.constant 0 : index
    %0 = vector.load %arg1[%c0, %c0_0, %c0_1] : memref<2x1x128xbf16, #tpu.memory_space<vmem>>, vector<2x1x128xbf16>
    %1 = arith.extf %0 : vector<2x1x128xbf16> to vector<2x1x128xf32>
    %cst = arith.constant dense<0.000000e+00> : vector<2x128xf32>
    %2 = vector.multi_reduction <add>, %1, %cst [1] : vector<2x1x128xf32> to vector<2x128xf32>
    %cst_2 = arith.constant 1.000000e+00 : f32
    %3 = vector.broadcast %cst_2 : f32 to vector<2x128xf32>
    %4 = arith.divf %2, %3 : vector<2x128xf32>
    %c0_3 = arith.constant 0 : index
    %c0_4 = arith.constant 0 : index
    %5 = vector.load %arg2[%c0_3, %c0_4] : memref<128x2xf32, #tpu.memory_space<vmem>>, vector<128x2xf32>
    %cst_5 = arith.constant dense<0.000000e+00> : vector<2x2xf32>
    %6 = tpu.matmul %4, %5, %cst_5 {dimension_numbers = #tpu.dot_dimension_numbers<[1], [0], [0], [1], [0, 0, 1, 1], [], []>} : vector<2x128xf32>, vector<128x2xf32>, vector<2x2xf32> -> vector<2x2xf32>
    %c0_6 = arith.constant 0 : index
    %c0_7 = arith.constant 0 : index
    %7 = vector.load %arg3[%c0_6, %c0_7] : memref<1x2xf32, #tpu.memory_space<vmem>>, vector<1x2xf32>
    %8 = vector.broadcast %7 : vector<1x2xf32> to vector<2x2xf32>
    %9 = arith.addf %6, %8 : vector<2x2xf32>
    %c0_8 = arith.constant 0 : index
    %c0_9 = arith.constant 0 : index
    %10 = vector.load %arg4[%c0_8, %c0_9] : memref<2x2xf32, #tpu.memory_space<vmem>>, vector<2x2xf32>
    tpu.vector_store %arg4[%c0_8, %c0_9], %9 {strides = array<i32>} : memref<2x2xf32, #tpu.memory_space<vmem>>, vector<2x2xf32>,
    return
  }
  func.func @transform_0(%arg0: i32) -> (i32, i32, i32) {
    %c0_i32 = arith.constant 0 : i32
    %c0_i32_0 = arith.constant 0 : i32
    %c0_i32_1 = arith.constant 0 : i32
    %c0_i32_2 = arith.constant 0 : i32
    return %c0_i32, %c0_i32_0, %c0_i32_1 : i32, i32, i32
  }
  func.func @transform_1(%arg0: i32) -> (i32, i32) {
    %c0_i32 = arith.constant 0 : i32
    %c0_i32_0 = arith.constant 0 : i32
    %c0_i32_1 = arith.constant 0 : i32
    return %c0_i32, %c0_i32_0 : i32, i32
  }
  func.func @transform_2(%arg0: i32) -> (i32, i32) {
    %c0_i32 = arith.constant 0 : i32
    %c0_i32_0 = arith.constant 0 : i32
    %c0_i32_1 = arith.constant 0 : i32
    return %c0_i32, %c0_i32_0 : i32, i32
  }
  func.func @transform_3(%arg0: i32) -> (i32, i32) {
    %c0_i32 = arith.constant 0 : i32
    %c0_i32_0 = arith.constant 0 : i32
    %c0_i32_1 = arith.constant 0 : i32
    return %c0_i32, %c0_i32_0 : i32, i32
  }
}

</mosaic_0001>

<llo_original>
// kernel: _lambda_.22
$region0: #{_lambda_.22}
  #allocation0 [shape = 'u32[]', space=smem, size = 0x4, offset = 0x4, fixed_abs, tag = 'smem constant byte address 0x4 - core index']
  #allocation1 [shape = 'u32[144,128]{1,0:T(1,128)}', space=vmem, size = 0x12000, scoped, tag = 'internal scratch']
  %s0 = inlined_call_operand.vmem [shape: bf16[512,147], index: 0, kind: input, shape index: {}]
  %s1 = inlined_call_operand.vmem [shape: bf16[147,16], index: 1, kind: input, shape index: {}]
  %s2 = inlined_call_operand.vmem [shape: f32[1,16], index: 2, kind: input, shape index: {}]
  %s3 = inlined_call_operand.vmem [shape: bf16[512,16], index: 3, kind: output, shape index: {}]
  %s4 = sld [smem:[#allocation0]]
  $region45: #{_lambda_.22} parent=0
    _
  %s6 = ssub.s32 1, %s4
  %s7 = scalar_select 0, %s6, %s4
  loop: start=0, step=1, limit=6
  $region2: #{_lambda_.22} parent=0 // loop_pre_header
    _
  $region3: #{_lambda_.22} parent=0 // loop_header
    %s9 = sphi 0, %s13
    %p10 = scmp.ge.s32.totalorder %s9, 6
    %s19 = sphi 0, %s21
    %s22 = sphi 0, %s19
    %s23 = sphi 0, %s22
    %s39 = sphi 0, %s23
    %s43 = sphi 0, %s43
    %s45 = sphi 0, %s43
    %s46 = sphi 0, %s45
    %s60 = sphi 0, %s46
    %s64 = sphi 0, %s64
    %s66 = sphi 0, %s64
    %s67 = sphi 0, %s66
    %s81 = sphi 0, %s67
    %s87 = sphi 0, %s89
    %s90 = sphi 0, %s87
    %s91 = sphi 0, %s90
    %s107 = sphi 0, %s91
  $region4: #{_lambda_.22} parent=0 // loop_header_branch
    %12 = sbr.rel (%p10) target = $region8
  $region5: #{_lambda_.22} parent=0 // loop_body
    %s14 = ssub.s32 %s9, 1
    %s15 = ssub.s32 %s9, 2
    %s16 = sadd.s32 %s9, 1
    %s17 = ssub.s32 %s9, %s16
    %p18 = scmp.eq.s32.totalorder %s17, 0
    %s20 = sadd.s32 %s19, 1
    %s21 = scalar_select %p18, %s19, %s20
    %p24 = pneg %p18
    %p25 = scmp.eq.s32.totalorder %s9, 3
    %p26 = por %p24, %p25
    %p27 = scmp.ne.s32.totalorder %s19, %s22
    %p28 = scmp.eq.s32.totalorder %s9, 0
    %p29 = por %p27, %p28
    %p30 = scmp.ne.s32.totalorder %s19, %s22
    %p31 = scmp.eq.s32.totalorder %s14, 3
    %p32 = por %p30, %p31
    %p33 = scmp.ne.s32.totalorder %s22, %s23
    %p34 = scmp.eq.s32.totalorder %s14, 0
    %p35 = por %p33, %p34
    %p36 = scmp.ne.s32.totalorder %s22, %s23
    %p37 = scmp.eq.s32.totalorder %s15, 3
    %p38 = por %p36, %p37
    %p40 = scmp.ne.s32.totalorder %s23, %s39
    %p41 = scmp.eq.s32.totalorder %s15, 0
    %p42 = por %p40, %p41
    %s44 = sadd.s32 %s43, 1
    %p47 = scmp.eq.s32.totalorder %s9, 3
    %p48 = scmp.ne.s32.totalorder %s43, %s45
    %p49 = scmp.eq.s32.totalorder %s9, 0
    %p50 = por %p48, %p49
    %p51 = scmp.ne.s32.totalorder %s43, %s45
    %p52 = scmp.eq.s32.totalorder %s14, 3
    %p53 = por %p51, %p52
    %p54 = scmp.ne.s32.totalorder %s45, %s46
    %p55 = scmp.eq.s32.totalorder %s14, 0
    %p56 = por %p54, %p55
    %p57 = scmp.ne.s32.totalorder %s45, %s46
    %p58 = scmp.eq.s32.totalorder %s15, 3
    %p59 = por %p57, %p58
    %p61 = scmp.ne.s32.totalorder %s46, %s60
    %p62 = scmp.eq.s32.totalorder %s15, 0
    %p63 = por %p61, %p62
    %s65 = sadd.s32 %s64, 1
    %p68 = scmp.eq.s32.totalorder %s9, 3
    %p69 = scmp.ne.s32.totalorder %s64, %s66
    %p70 = scmp.eq.s32.totalorder %s9, 0
    %p71 = por %p69, %p70
    %p72 = scmp.ne.s32.totalorder %s64, %s66
    %p73 = scmp.eq.s32.totalorder %s14, 3
    %p74 = por %p72, %p73
    %p75 = scmp.ne.s32.totalorder %s66, %s67
    %p76 = scmp.eq.s32.totalorder %s14, 0
    %p77 = por %p75, %p76
    %p78 = scmp.ne.s32.totalorder %s66, %s67
    %p79 = scmp.eq.s32.totalorder %s15, 3
    %p80 = por %p78, %p79
    %p82 = scmp.ne.s32.totalorder %s67, %s81
    %p83 = scmp.eq.s32.totalorder %s15, 0
    %p84 = por %p82, %p83
    %s85 = ssub.s32 %s9, %s16
    %p86 = scmp.eq.s32.totalorder %s85, 0
    %s88 = sadd.s32 %s87, 1
    %s89 = scalar_select %p86, %s87, %s88
    %p92 = pneg %p86
    %p93 = scmp.eq.s32.totalorder %s9, 3
    %p94 = por %p92, %p93
    %p95 = scmp.ne.s32.totalorder %s87, %s90
    %p96 = scmp.eq.s32.totalorder %s9, 0
    %p97 = por %p95, %p96
    %p98 = scmp.ne.s32.totalorder %s87, %s90
    %p99 = scmp.eq.s32.totalorder %s14, 3
    %p100 = por %p98, %p99
    %p101 = scmp.ne.s32.totalorder %s90, %s91
    %p102 = scmp.eq.s32.totalorder %s14, 0
    %p103 = por %p101, %p102
    %p104 = scmp.ne.s32.totalorder %s90, %s91
    %p105 = scmp.eq.s32.totalorder %s15, 3
    %p106 = por %p104, %p105
    %p108 = scmp.ne.s32.totalorder %s91, %s107
    %p109 = scmp.eq.s32.totalorder %s15, 0
    %p110 = por %p108, %p109
    %p111 = scmp.le.s32.totalorder 1, %s9
    %p112 = scmp.lt.s32.totalorder %s9, 5
    %p113 = pnand %p111, %p112
    %p114 = pneg %p113
    // Predicated region
    $region9: #{_lambda_.22} parent=5 // pred_check
      _
    $region10: #{_lambda_.22} parent=5 // pred_check_branch
      %116 = sbr.rel (%p113) target = $region12
    $region11: #{_lambda_.22} parent=5 // pred_region
      %s117 = ssub.s32 %s9, 1
      // Predicated region
      $region13: #{_lambda_.22} parent=11 // pred_check
        %p118 = pneg %p56
      $region14: #{_lambda_.22} parent=11 // pred_check_branch
        %120 = sbr.rel (%p118) target = $region16
      $region15: #{_lambda_.22} parent=11 // pred_region
        _
      $region16: #{_lambda_.22} parent=11 // pred_fallthru
        _
      // Predicated region
      $region17: #{_lambda_.22} parent=11 // pred_check
        %p121 = pneg %p77
      $region18: #{_lambda_.22} parent=11 // pred_check_branch
        %123 = sbr.rel (%p121) target = $region20
      $region19: #{_lambda_.22} parent=11 // pred_region
        _
      $region20: #{_lambda_.22} parent=11 // pred_fallthru
        _
    $region12: #{_lambda_.22} parent=5 // pred_fallthru
      _
    %p124 = scmp.lt.s32.totalorder %s9, 4
    // Predicated region
    $region21: #{_lambda_.22} parent=5 // pred_check
      %p125 = pneg %p124
    $region22: #{_lambda_.22} parent=5 // pred_check_branch
      %127 = sbr.rel (%p125) target = $region24
    $region23: #{_lambda_.22} parent=5 // pred_region
      // Predicated region
      $region25: #{_lambda_.22} parent=23 // pred_check
        %p128 = pneg %p29
      $region26: #{_lambda_.22} parent=23 // pred_check_branch
        %130 = sbr.rel (%p128) target = $region28
      $region27: #{_lambda_.22} parent=23 // pred_region
        %s131 = smul.u32 16, %s9
        %p132 = scmp.lt.s32.totalorder %s131, 63
        %s133 = scalar_select %p132, %s131, 63
        %s134 = smul.addr %s133, 2
        %s135 = smul.addr %s134, 4
        %s136 = scalar_lea.vmem %s0, %s135
        %s137 = smul.u32 16, %s9
      $region28: #{_lambda_.22} parent=23 // pred_fallthru
        _
    $region24: #{_lambda_.22} parent=5 // pred_fallthru
      _
    %p138 = scmp.le.s32.totalorder 1, %s9
    %p139 = scmp.lt.s32.totalorder %s9, 5
    %p140 = pnand %p138, %p139
    %p141 = pneg %p140
    // Predicated region
    $region29: #{_lambda_.22} parent=5 // pred_check
      _
    $region30: #{_lambda_.22} parent=5 // pred_check_branch
      %143 = sbr.rel (%p140) target = $region32
    $region31: #{_lambda_.22} parent=5 // pred_region
      %s144 = ssub.s32 %s9, 1
      %s145 = smul.u32 16, %s14
      %p146 = scmp.lt.s32.totalorder %s145, 63
      %s147 = scalar_select %p146, %s145, 63
      %s148 = smul.addr %s147, 2
      %s149 = smul.addr %s148, 4
      %s150 = scalar_lea.vmem %s0, %s149
      %p151 = pneg %p35
      %p152 = pneg %p32
      %p153 = pneg %p56
      %p154 = pneg %p53
      %p155 = pneg %p77
      %p156 = pneg %p74
      %p157 = pneg %p103
      %p158 = pneg %p100
      %s159 = smul.u32 16, %s14
      %p160 = scmp.lt.s32.totalorder %s159, 63
      %s161 = scalar_select %p160, %s159, 63
      %s162 = smul.addr %s161, 4
      %s163 = scalar_lea.vmem %s3, %s162
      %s164 = smul.u32 16, %s14
      %p165 = scmp.lt.s32.totalorder %s164, 63
      %s166 = scalar_select %p165, %s164, 63
      %s167 = smul.addr %s166, 2
      %s168 = smul.addr %s167, 4
      %s169 = scalar_lea.vmem %s0, %s168
      %s170 = smul.u32 16, %s14
      %s171 = smul.u32 16, %s14
      %p172 = scmp.lt.s32.totalorder %s171, 63
      %s173 = scalar_select %p172, %s171, 63
      %s174 = smul.addr %s173, 4
      %s175 = scalar_lea.vmem %s3, %s174
      %s176 = smul.u32 16, %s14
      %v178 = vld [vmem:[%s169] sm:$0xff]
      %v179 = vld [vmem:[%s169 + $0x8] sm:$0xff]
      %v180 = vld [vmem:[%s169 + $0x10] sm:$0xff]
      %v181 = vld [vmem:[%s169 + $0x18] sm:$0xff]
      %v182 = vld [vmem:[%s169 + $0x20] sm:$0xff]
      %v183 = vld [vmem:[%s169 + $0x28] sm:$0xff]
      %v184 = vld [vmem:[%s169 + $0x30] sm:$0xff]
      %v185 = vld [vmem:[%s169 + $0x38] sm:$0xff]
      %v186 = vld [vmem:[%s169 + $0x40] sm:$0xff]
      %v187 = vld [vmem:[%s169 + $0x48] sm:$0xff]
      %v188 = vld [vmem:[%s169 + $0x50] sm:$0xff]
      %v189 = vld [vmem:[%s169 + $0x58] sm:$0xff]
      %v190 = vld [vmem:[%s169 + $0x60] sm:$0xff]
      %v191 = vld [vmem:[%s169 + $0x68] sm:$0xff]
      %v192 = vld [vmem:[%s169 + $0x70] sm:$0xff]
      %v193 = vld [vmem:[%s169 + $0x78] sm:$0xff]
      %v194 = vld [vmem:[%s1] sm:$0xf]
      %v195 = vld [vmem:[%s1 + $0x4] sm:$0xf]
      %v196 = vld [vmem:[%s1 + $0x8] sm:$0xf]
      %v197 = vld [vmem:[%s1 + $0xc] sm:$0xf]
      %v198 = vld [vmem:[%s1 + $0x10] sm:$0xf]
      %v199 = vld [vmem:[%s1 + $0x14] sm:$0xf]
      %v200 = vld [vmem:[%s1 + $0x18] sm:$0xf]
      %v201 = vld [vmem:[%s1 + $0x1c] sm:$0xf]
      %v202 = vld [vmem:[%s1 + $0x20] sm:$0xf]
      %v203 = vld [vmem:[%s1 + $0x24] sm:$0xf]
      %v204 = vld [vmem:[%s1 + $0x28] sm:$0xf]
      %v205 = vld [vmem:[%s1 + $0x2c] sm:$0xf]
      %v206 = vld [vmem:[%s1 + $0x30] sm:$0xf]
      %v207 = vld [vmem:[%s1 + $0x34] sm:$0xf]
      %v208 = vld [vmem:[%s1 + $0x38] sm:$0xf]
      %v209 = vld [vmem:[%s1 + $0x3c] sm:$0xf]
      %v210 = vld [vmem:[%s1 + $0x40] sm:$0xf]
      %v211 = vld [vmem:[%s1 + $0x44] sm:$0xf]
      %v212 = vld [vmem:[%s1 + $0x48] sm:$0x3]
      %v213 = vld [vmem:[%s2] sm:$0x1]
      %v215 = vlaneseq
      %v216 = vshrl.u32 %v215, 7
      %v217 = vsub.s32 0, %v216
      %v218 = vrot.slane %v213, %v217
      %v236 = vunpack.c.l.b16 %v178
      %v237 = vunpack.c.h.b16 %v178
      %v238 = vunpack.c.l.b16 %v179
      %v239 = vunpack.c.h.b16 %v179
      %v240 = vunpack.c.l.b16 %v180
      %v241 = vunpack.c.h.b16 %v180
      %v242 = vunpack.c.l.b16 %v181
      %v243 = vunpack.c.h.b16 %v181
      %v244 = vunpack.c.l.b16 %v182
      %v245 = vunpack.c.h.b16 %v182
      %v246 = vunpack.c.l.b16 %v183
      %v247 = vunpack.c.h.b16 %v183
      %v248 = vunpack.c.l.b16 %v184
      %v249 = vunpack.c.h.b16 %v184
      %v250 = vunpack.c.l.b16 %v185
      %v251 = vunpack.c.h.b16 %v185
      %v252 = vunpack.c.l.b16 %v186
      %v253 = vunpack.c.h.b16 %v186
      %v254 = vunpack.c.l.b16 %v187
      %v255 = vunpack.c.h.b16 %v187
      %v256 = vunpack.c.l.b16 %v188
      %v257 = vunpack.c.h.b16 %v188
      %v258 = vunpack.c.l.b16 %v189
      %v259 = vunpack.c.h.b16 %v189
      %v260 = vunpack.c.l.b16 %v190
      %v261 = vunpack.c.h.b16 %v190
      %v262 = vunpack.c.l.b16 %v191
      %v263 = vunpack.c.h.b16 %v191
      %v264 = vunpack.c.l.b16 %v192
      %v265 = vunpack.c.h.b16 %v192
      %v266 = vunpack.c.l.b16 %v193
      %v267 = vunpack.c.h.b16 %v193
      %v268 = vpack.c.b16 %v238, %v236
      %v269 = vpack.c.b16 %v239, %v237
      %v270 = vpack.c.b16 %v242, %v240
      %v271 = vpack.c.b16 %v243, %v241
      %v272 = vpack.c.b16 %v246, %v244
      %v273 = vpack.c.b16 %v247, %v245
      %v274 = vpack.c.b16 %v250, %v248
      %v275 = vpack.c.b16 %v251, %v249
      %v276 = vpack.c.b16 %v254, %v252
      %v277 = vpack.c.b16 %v255, %v253
      %v278 = vpack.c.b16 %v258, %v256
      %v279 = vpack.c.b16 %v259, %v257
      %v280 = vpack.c.b16 %v262, %v260
      %v281 = vpack.c.b16 %v263, %v261
      %v282 = vpack.c.b16 %v266, %v264
      %v283 = vpack.c.b16 %v267, %v265
      %v311 = vunpack.c.l.b16 %v194
      %v312 = vunpack.c.l.b16 %v195
      %v313 = vunpack.c.l.b16 %v196
      %v314 = vunpack.c.l.b16 %v197
      %v315 = vunpack.c.l.b16 %v198
      %v316 = vunpack.c.l.b16 %v199
      %v317 = vunpack.c.l.b16 %v200
      %v318 = vunpack.c.l.b16 %v201
      %v319 = vunpack.c.l.b16 %v202
      %v320 = vunpack.c.l.b16 %v203
      %v321 = vunpack.c.l.b16 %v204
      %v322 = vunpack.c.l.b16 %v205
      %v323 = vunpack.c.l.b16 %v206
      %v324 = vunpack.c.l.b16 %v207
      %v325 = vunpack.c.l.b16 %v208
      %v326 = vunpack.c.l.b16 %v209
      %v327 = vunpack.c.l.b16 %v210
      %v328 = vunpack.c.l.b16 %v211
      %v329 = vunpack.c.l.b16 %v212
      %v330 = vpack.c.b16 %v312, %v311
      %v331 = vpack.c.b16 %v314, %v313
      %v332 = vpack.c.b16 %v316, %v315
      %v333 = vpack.c.b16 %v318, %v317
      %v334 = vpack.c.b16 %v320, %v319
      %v335 = vpack.c.b16 %v322, %v321
      %v336 = vpack.c.b16 %v324, %v323
      %v337 = vpack.c.b16 %v326, %v325
      %v338 = vpack.c.b16 %v328, %v327
      %v339 = vpack.c.b16 %v329, %v329
      %vm349 = vcmask 154624
      %v351 = vsel %vm349, %v269, 0
      %v354 = vsel %vm349, %v271, 0
      %v357 = vsel %vm349, %v273, 0
      %v360 = vsel %vm349, %v275, 0
      %v363 = vsel %vm349, %v277, 0
      %v366 = vsel %vm349, %v279, 0
      %v369 = vsel %vm349, %v281, 0
      %v372 = vsel %vm349, %v283, 0
      %vm374 = vcmask 1040384
      %vm375 = vcmask 1041408
      %v376 = vsel %vm374, 4294967295, 65535
      %v377 = vsel %vm375, %v376, 0
      %v379 = vand.u32 %v339, %v377
      %381 = vmatprep.subr.bf16.mxu0 0
      %382 = vmatpush1.bf16.msra.mxu0 %v330
      %383 = vmatprep.subr.bf16.mxu0 0
      %384 = vmatpush1.bf16.msra.mxu0 %v331
      %385 = vmatprep.subr.bf16.mxu0 0
      %386 = vmatpush1.bf16.msra.mxu0 %v332
      %387 = vmatprep.subr.bf16.mxu0 0
      %388 = vmatpush1.bf16.msra.mxu0 %v333
      %389 = vmatprep.subr.bf16.mxu0 0
      %390 = vmatpush1.bf16.msra.mxu0 %v334
      %391 = vmatprep.subr.bf16.mxu0 0
      %392 = vmatpush1.bf16.msra.mxu0 %v335
      %393 = vmatprep.subr.bf16.mxu0 0
      %394 = vmatpush1.bf16.msra.mxu0 %v336
      %395 = vmatprep.subr.bf16.mxu0 0
      %396 = vmatpush1.bf16.msra.mxu0 %v337
      %397 = vmatprep.subr.bf16.mxu0 0
      %398 = vmatpush1.bf16.msra.mxu0 %v338
      %399 = vmatprep.subr.bf16.mxu0 0
      %400 = vmatpush1.bf16.msra.mxu0 %v379
      %401 = vmatprep.subr.bf16.mxu0 0
      %402 = vmatpush1.bf16.msra.mxu0 0
      %403 = vmatprep.subr.bf16.mxu0 0
      %404 = vmatpush1.bf16.msra.mxu0 0
      %405 = vmatprep.subr.bf16.mxu0 0
      %406 = vmatpush1.bf16.msra.mxu0 0
      %407 = vmatprep.subr.bf16.mxu0 0
      %408 = vmatpush1.bf16.msra.mxu0 0
      %409 = vmatprep.subr.bf16.mxu0 0
      %410 = vmatpush1.bf16.msra.mxu0 0
      %411 = vmatprep.subr.bf16.mxu0 0
      %412 = vmatpush1.bf16.msra.mxu0 0
      %413 = vmatprep.mubr.bf16.mxu0 %v351
      %414 = vmatmul.mubr.bf16.gmra.mrb[0].mxu0 %v268
      %v415 = vpop.f32.mrb[0].mxu0
      %v416 = vadd.f32 %v218, %v415
      %v417 = vpop.f32.mrb[0].mxu0
      %v418 = vpop.f32.mrb[0].mxu0
      %v419 = vadd.f32 %v218, %v418
      %v420 = vpop.f32.mrb[0].mxu0
      %421 = vmatprep.mubr.bf16.mxu0 %v354
      %422 = vmatmul.mubr.bf16.gmra.mrb[0].mxu0 %v270
      %v423 = vpop.f32.mrb[0].mxu0
      %v424 = vadd.f32 %v218, %v423
      %v425 = vpop.f32.mrb[0].mxu0
      %v426 = vpop.f32.mrb[0].mxu0
      %v427 = vadd.f32 %v218, %v426
      %v428 = vpop.f32.mrb[0].mxu0
      %429 = vmatprep.mubr.bf16.mxu0 %v357
      %430 = vmatmul.mubr.bf16.gmra.mrb[0].mxu0 %v272
      %v431 = vpop.f32.mrb[0].mxu0
      %v432 = vadd.f32 %v218, %v431
      %v433 = vpop.f32.mrb[0].mxu0
      %v434 = vpop.f32.mrb[0].mxu0
      %v435 = vadd.f32 %v218, %v434
      %v436 = vpop.f32.mrb[0].mxu0
      %437 = vmatprep.mubr.bf16.mxu0 %v360
      %438 = vmatmul.mubr.bf16.gmra.mrb[0].mxu0 %v274
      %v439 = vpop.f32.mrb[0].mxu0
      %v440 = vadd.f32 %v218, %v439
      %v441 = vpop.f32.mrb[0].mxu0
      %v442 = vpop.f32.mrb[0].mxu0
      %v443 = vadd.f32 %v218, %v442
      %v444 = vpop.f32.mrb[0].mxu0
      %445 = vmatprep.mubr.bf16.mxu0 %v363
      %446 = vmatmul.mubr.bf16.gmra.mrb[0].mxu0 %v276
      %v447 = vpop.f32.mrb[0].mxu0
      %v448 = vadd.f32 %v218, %v447
      %v449 = vpop.f32.mrb[0].mxu0
      %v450 = vpop.f32.mrb[0].mxu0
      %v451 = vadd.f32 %v218, %v450
      %v452 = vpop.f32.mrb[0].mxu0
      %453 = vmatprep.mubr.bf16.mxu0 %v366
      %454 = vmatmul.mubr.bf16.gmra.mrb[0].mxu0 %v278
      %v455 = vpop.f32.mrb[0].mxu0
      %v456 = vadd.f32 %v218, %v455
      %v457 = vpop.f32.mrb[0].mxu0
      %v458 = vpop.f32.mrb[0].mxu0
      %v459 = vadd.f32 %v218, %v458
      %v460 = vpop.f32.mrb[0].mxu0
      %461 = vmatprep.mubr.bf16.mxu0 %v369
      %462 = vmatmul.mubr.bf16.gmra.mrb[0].mxu0 %v280
      %v463 = vpop.f32.mrb[0].mxu0
      %v464 = vadd.f32 %v218, %v463
      %v465 = vpop.f32.mrb[0].mxu0
      %v466 = vpop.f32.mrb[0].mxu0
      %v467 = vadd.f32 %v218, %v466
      %v468 = vpop.f32.mrb[0].mxu0
      %469 = vmatprep.mubr.bf16.mxu0 %v372
      %470 = vmatmul.mubr.bf16.gmra.mrb[0].mxu0 %v282
      %v471 = vpop.f32.mrb[0].mxu0
      %v472 = vadd.f32 %v218, %v471
      %v473 = vpop.f32.mrb[0].mxu0
      %v474 = vpop.f32.mrb[0].mxu0
      %v475 = vadd.f32 %v218, %v474
      %v476 = vpop.f32.mrb[0].mxu0
      %477 = vdwg.mxu0
      %v478 = vmax.f32 %v416, 0.0
      %v479 = vmax.f32 %v419, 0.0
      %v480 = vmax.f32 %v424, 0.0
      %v481 = vmax.f32 %v427, 0.0
      %v482 = vmax.f32 %v432, 0.0
      %v483 = vmax.f32 %v435, 0.0
      %v484 = vmax.f32 %v440, 0.0
      %v485 = vmax.f32 %v443, 0.0
      %v486 = vmax.f32 %v448, 0.0
      %v487 = vmax.f32 %v451, 0.0
      %v488 = vmax.f32 %v456, 0.0
      %v489 = vmax.f32 %v459, 0.0
      %v490 = vmax.f32 %v464, 0.0
      %v491 = vmax.f32 %v467, 0.0
      %v492 = vmax.f32 %v472, 0.0
      %v493 = vmax.f32 %v475, 0.0
      %v494 = vpack.c.bf16 %v479, %v478
      %v495 = vpack.c.bf16 %v481, %v480
      %v496 = vpack.c.bf16 %v483, %v482
      %v497 = vpack.c.bf16 %v485, %v484
      %v498 = vpack.c.bf16 %v487, %v486
      %v499 = vpack.c.bf16 %v489, %v488
      %v500 = vpack.c.bf16 %v491, %v490
      %v501 = vpack.c.bf16 %v493, %v492
      %v510 = vunpack.c.l.b16 %v494
      %v511 = vunpack.c.h.b16 %v494
      %v512 = vunpack.c.l.b16 %v495
      %v513 = vunpack.c.h.b16 %v495
      %v514 = vunpack.c.l.b16 %v496
      %v515 = vunpack.c.h.b16 %v496
      %v516 = vunpack.c.l.b16 %v497
      %v517 = vunpack.c.h.b16 %v497
      %v518 = vunpack.c.l.b16 %v498
      %v519 = vunpack.c.h.b16 %v498
      %v520 = vunpack.c.l.b16 %v499
      %v521 = vunpack.c.h.b16 %v499
      %v522 = vunpack.c.l.b16 %v500
      %v523 = vunpack.c.h.b16 %v500
      %v524 = vunpack.c.l.b16 %v501
      %v525 = vunpack.c.h.b16 %v501
      %v526 = vpack.c.b16 %v510, %v510
      %v527 = vpack.c.b16 %v511, %v511
      %v528 = vpack.c.b16 %v512, %v512
      %v529 = vpack.c.b16 %v513, %v513
      %v530 = vpack.c.b16 %v514, %v514
      %v531 = vpack.c.b16 %v515, %v515
      %v532 = vpack.c.b16 %v516, %v516
      %v533 = vpack.c.b16 %v517, %v517
      %v534 = vpack.c.b16 %v518, %v518
      %v535 = vpack.c.b16 %v519, %v519
      %v536 = vpack.c.b16 %v520, %v520
      %v537 = vpack.c.b16 %v521, %v521
      %v538 = vpack.c.b16 %v522, %v522
      %v539 = vpack.c.b16 %v523, %v523
      %v540 = vpack.c.b16 %v524, %v524
      %v541 = vpack.c.b16 %v525, %v525
      %vm558 = vcmask 125952
      %559 = vst.msk [vmem:[%s175] sm:$0xf] %vm558, %v526
      %560 = vst.msk [vmem:[%s175 + $0x4] sm:$0xf] %vm558, %v527
      %561 = vst.msk [vmem:[%s175 + $0x8] sm:$0xf] %vm558, %v528
      %562 = vst.msk [vmem:[%s175 + $0xc] sm:$0xf] %vm558, %v529
      %563 = vst.msk [vmem:[%s175 + $0x10] sm:$0xf] %vm558, %v530
      %564 = vst.msk [vmem:[%s175 + $0x14] sm:$0xf] %vm558, %v531
      %565 = vst.msk [vmem:[%s175 + $0x18] sm:$0xf] %vm558, %v532
      %566 = vst.msk [vmem:[%s175 + $0x1c] sm:$0xf] %vm558, %v533
      %567 = vst.msk [vmem:[%s175 + $0x20] sm:$0xf] %vm558, %v534
      %568 = vst.msk [vmem:[%s175 + $0x24] sm:$0xf] %vm558, %v535
      %569 = vst.msk [vmem:[%s175 + $0x28] sm:$0xf] %vm558, %v536
      %570 = vst.msk [vmem:[%s175 + $0x2c] sm:$0xf] %vm558, %v537
      %571 = vst.msk [vmem:[%s175 + $0x30] sm:$0xf] %vm558, %v538
      %572 = vst.msk [vmem:[%s175 + $0x34] sm:$0xf] %vm558, %v539
      %573 = vst.msk [vmem:[%s175 + $0x38] sm:$0xf] %vm558, %v540
      %574 = vst.msk [vmem:[%s175 + $0x3c] sm:$0xf] %vm558, %v541
      %s575 = smul.u32 16, %s14
      %p576 = scmp.lt.s32.totalorder %s575, 63
      %s577 = scalar_select %p576, %s575, 63
      %s578 = smul.addr %s577, 4
      %s579 = scalar_lea.vmem %s3, %s578
      // Predicated region
      $region33: #{_lambda_.22} parent=31 // pred_check
        %p580 = pneg %p100
      $region34: #{_lambda_.22} parent=31 // pred_check_branch
        %582 = sbr.rel (%p580) target = $region36
      $region35: #{_lambda_.22} parent=31 // pred_region
        %s583 = smul.u32 16, %s14
      $region36: #{_lambda_.22} parent=31 // pred_fallthru
        _
    $region32: #{_lambda_.22} parent=5 // pred_fallthru
      _
    %p584 = scmp.le.s32.totalorder 2, %s9
    // Predicated region
    $region37: #{_lambda_.22} parent=5 // pred_check
      %p585 = pneg %p584
    $region38: #{_lambda_.22} parent=5 // pred_check_branch
      %587 = sbr.rel (%p585) target = $region40
    $region39: #{_lambda_.22} parent=5 // pred_region
      %s588 = ssub.s32 %s9, 2
      // Predicated region
      $region41: #{_lambda_.22} parent=39 // pred_check
        %p589 = pneg %p106
      $region42: #{_lambda_.22} parent=39 // pred_check_branch
        %591 = sbr.rel (%p589) target = $region44
      $region43: #{_lambda_.22} parent=39 // pred_region
        %s592 = smul.u32 16, %s15
        %p593 = scmp.lt.s32.totalorder %s592, 63
        %s594 = scalar_select %p593, %s592, 63
        %s595 = smul.addr %s594, 4
        %s596 = scalar_lea.vmem %s3, %s595
      $region44: #{_lambda_.22} parent=39 // pred_fallthru
        _
    $region40: #{_lambda_.22} parent=5 // pred_fallthru
      _
  $region6: #{_lambda_.22} parent=0 // loop_footer
    %s13 = sadd.s32 1, %s9
  $region7: #{_lambda_.22} parent=0 // loop_footer_branch
    %8 = sbr.rel target = $region3
  $region8: #{_lambda_.22} parent=0 // loop_exit
    _

// kernel: _lambda_.23
$region0: #{_lambda_.23}
  #allocation0 [shape = 'u32[]', space=smem, size = 0x4, offset = 0x4, fixed_abs, tag = 'smem constant byte address 0x4 - core index']
  #allocation1 [shape = 'u32[144,128]{1,0:T(1,128)}', space=vmem, size = 0x12000, scoped, tag = 'internal scratch']
  %s0 = inlined_call_operand.vmem [shape: bf16[128,9,16], index: 0, kind: input, shape index: {}]
  %s1 = inlined_call_operand.vmem [shape: bf16[128,16], index: 1, kind: output, shape index: {}]
  %s2 = sld [smem:[#allocation0]]
  $region14: #{_lambda_.23} parent=0
    _
  %s4 = ssub.s32 1, %s2
  %s5 = scalar_select 0, %s4, %s2
  // Predicated region
  $region2: #{_lambda_.23} parent=0 // pred_check
    _
  $region3: #{_lambda_.23} parent=0 // pred_check_branch
    %7 = sbr.rel (0) target = $region5
  $region4: #{_lambda_.23} parent=0 // pred_region
    _
  $region5: #{_lambda_.23} parent=0 // pred_fallthru
    _
  %v9 = vld [vmem:[%s0] sm:$0xf]
  %v10 = vld [vmem:[%s0 + $0x4] sm:$0x1]
  %v11 = vld [vmem:[%s0 + $0x8] sm:$0xf]
  %v12 = vld [vmem:[%s0 + $0xc] sm:$0x1]
  %v13 = vld [vmem:[%s0 + $0x10] sm:$0xf]
  %v14 = vld [vmem:[%s0 + $0x14] sm:$0x1]
  %v15 = vld [vmem:[%s0 + $0x18] sm:$0xf]
  %v16 = vld [vmem:[%s0 + $0x1c] sm:$0x1]
  %v17 = vld [vmem:[%s0 + $0x20] sm:$0xf]
  %v18 = vld [vmem:[%s0 + $0x24] sm:$0x1]
  %v19 = vld [vmem:[%s0 + $0x28] sm:$0xf]
  %v20 = vld [vmem:[%s0 + $0x2c] sm:$0x1]
  %v21 = vld [vmem:[%s0 + $0x30] sm:$0xf]
  %v22 = vld [vmem:[%s0 + $0x34] sm:$0x1]
  %v23 = vld [vmem:[%s0 + $0x38] sm:$0xf]
  %v24 = vld [vmem:[%s0 + $0x3c] sm:$0x1]
  %v25 = vld [vmem:[%s0 + $0x40] sm:$0xf]
  %v26 = vld [vmem:[%s0 + $0x44] sm:$0x1]
  %v27 = vld [vmem:[%s0 + $0x48] sm:$0xf]
  %v28 = vld [vmem:[%s0 + $0x4c] sm:$0x1]
  %v29 = vld [vmem:[%s0 + $0x50] sm:$0xf]
  %v30 = vld [vmem:[%s0 + $0x54] sm:$0x1]
  %v31 = vld [vmem:[%s0 + $0x58] sm:$0xf]
  %v32 = vld [vmem:[%s0 + $0x5c] sm:$0x1]
  %v33 = vld [vmem:[%s0 + $0x60] sm:$0xf]
  %v34 = vld [vmem:[%s0 + $0x64] sm:$0x1]
  %v35 = vld [vmem:[%s0 + $0x68] sm:$0xf]
  %v36 = vld [vmem:[%s0 + $0x6c] sm:$0x1]
  %v37 = vld [vmem:[%s0 + $0x70] sm:$0xf]
  %v38 = vld [vmem:[%s0 + $0x74] sm:$0x1]
  %v39 = vld [vmem:[%s0 + $0x78] sm:$0xf]
  %v40 = vld [vmem:[%s0 + $0x7c] sm:$0x1]
  %v41 = vld [vmem:[%s0 + $0x80] sm:$0xf]
  %v42 = vld [vmem:[%s0 + $0x84] sm:$0x1]
  %v43 = vld [vmem:[%s0 + $0x88] sm:$0xf]
  %v44 = vld [vmem:[%s0 + $0x8c] sm:$0x1]
  %v45 = vld [vmem:[%s0 + $0x90] sm:$0xf]
  %v46 = vld [vmem:[%s0 + $0x94] sm:$0x1]
  %v47 = vld [vmem:[%s0 + $0x98] sm:$0xf]
  %v48 = vld [vmem:[%s0 + $0x9c] sm:$0x1]
  %v49 = vld [vmem:[%s0 + $0xa0] sm:$0xf]
  %v50 = vld [vmem:[%s0 + $0xa4] sm:$0x1]
  %v51 = vld [vmem:[%s0 + $0xa8] sm:$0xf]
  %v52 = vld [vmem:[%s0 + $0xac] sm:$0x1]
  %v53 = vld [vmem:[%s0 + $0xb0] sm:$0xf]
  %v54 = vld [vmem:[%s0 + $0xb4] sm:$0x1]
  %v55 = vld [vmem:[%s0 + $0xb8] sm:$0xf]
  %v56 = vld [vmem:[%s0 + $0xbc] sm:$0x1]
  %v57 = vld [vmem:[%s0 + $0xc0] sm:$0xf]
  %v58 = vld [vmem:[%s0 + $0xc4] sm:$0x1]
  %v59 = vld [vmem:[%s0 + $0xc8] sm:$0xf]
  %v60 = vld [vmem:[%s0 + $0xcc] sm:$0x1]
  %v61 = vld [vmem:[%s0 + $0xd0] sm:$0xf]
  %v62 = vld [vmem:[%s0 + $0xd4] sm:$0x1]
  %v63 = vld [vmem:[%s0 + $0xd8] sm:$0xf]
  %v64 = vld [vmem:[%s0 + $0xdc] sm:$0x1]
  %v65 = vld [vmem:[%s0 + $0xe0] sm:$0xf]
  %v66 = vld [vmem:[%s0 + $0xe4] sm:$0x1]
  %v67 = vld [vmem:[%s0 + $0xe8] sm:$0xf]
  %v68 = vld [vmem:[%s0 + $0xec] sm:$0x1]
  %v69 = vld [vmem:[%s0 + $0xf0] sm:$0xf]
  %v70 = vld [vmem:[%s0 + $0xf4] sm:$0x1]
  %v71 = vld [vmem:[%s0 + $0xf8] sm:$0xf]
  %v72 = vld [vmem:[%s0 + $0xfc] sm:$0x1]
  %v73 = vld [vmem:[%s0 + $0x100] sm:$0xf]
  %v74 = vld [vmem:[%s0 + $0x104] sm:$0x1]
  %v75 = vld [vmem:[%s0 + $0x108] sm:$0xf]
  %v76 = vld [vmem:[%s0 + $0x10c] sm:$0x1]
  %v77 = vld [vmem:[%s0 + $0x110] sm:$0xf]
  %v78 = vld [vmem:[%s0 + $0x114] sm:$0x1]
  %v79 = vld [vmem:[%s0 + $0x118] sm:$0xf]
  %v80 = vld [vmem:[%s0 + $0x11c] sm:$0x1]
  %v81 = vld [vmem:[%s0 + $0x120] sm:$0xf]
  %v82 = vld [vmem:[%s0 + $0x124] sm:$0x1]
  %v83 = vld [vmem:[%s0 + $0x128] sm:$0xf]
  %v84 = vld [vmem:[%s0 + $0x12c] sm:$0x1]
  %v85 = vld [vmem:[%s0 + $0x130] sm:$0xf]
  %v86 = vld [vmem:[%s0 + $0x134] sm:$0x1]
  %v87 = vld [vmem:[%s0 + $0x138] sm:$0xf]
  %v88 = vld [vmem:[%s0 + $0x13c] sm:$0x1]
  %v89 = vld [vmem:[%s0 + $0x140] sm:$0xf]
  %v90 = vld [vmem:[%s0 + $0x144] sm:$0x1]
  %v91 = vld [vmem:[%s0 + $0x148] sm:$0xf]
  %v92 = vld [vmem:[%s0 + $0x14c] sm:$0x1]
  %v93 = vld [vmem:[%s0 + $0x150] sm:$0xf]
  %v94 = vld [vmem:[%s0 + $0x154] sm:$0x1]
  %v95 = vld [vmem:[%s0 + $0x158] sm:$0xf]
  %v96 = vld [vmem:[%s0 + $0x15c] sm:$0x1]
  %v97 = vld [vmem:[%s0 + $0x160] sm:$0xf]
  %v98 = vld [vmem:[%s0 + $0x164] sm:$0x1]
  %v99 = vld [vmem:[%s0 + $0x168] sm:$0xf]
  %v100 = vld [vmem:[%s0 + $0x16c] sm:$0x1]
  %v101 = vld [vmem:[%s0 + $0x170] sm:$0xf]
  %v102 = vld [vmem:[%s0 + $0x174] sm:$0x1]
  %v103 = vld [vmem:[%s0 + $0x178] sm:$0xf]
  %v104 = vld [vmem:[%s0 + $0x17c] sm:$0x1]
  %v105 = vld [vmem:[%s0 + $0x180] sm:$0xf]
  %v106 = vld [vmem:[%s0 + $0x184] sm:$0x1]
  %v107 = vld [vmem:[%s0 + $0x188] sm:$0xf]
  %v108 = vld [vmem:[%s0 + $0x18c] sm:$0x1]
  %v109 = vld [vmem:[%s0 + $0x190] sm:$0xf]
  %v110 = vld [vmem:[%s0 + $0x194] sm:$0x1]
  %v111 = vld [vmem:[%s0 + $0x198] sm:$0xf]
  %v112 = vld [vmem:[%s0 + $0x19c] sm:$0x1]
  %v113 = vld [vmem:[%s0 + $0x1a0] sm:$0xf]
  %v114 = vld [vmem:[%s0 + $0x1a4] sm:$0x1]
  %v115 = vld [vmem:[%s0 + $0x1a8] sm:$0xf]
  %v116 = vld [vmem:[%s0 + $0x1ac] sm:$0x1]
  %v117 = vld [vmem:[%s0 + $0x1b0] sm:$0xf]
  %v118 = vld [vmem:[%s0 + $0x1b4] sm:$0x1]
  %v119 = vld [vmem:[%s0 + $0x1b8] sm:$0xf]
  %v120 = vld [vmem:[%s0 + $0x1bc] sm:$0x1]
  %v121 = vld [vmem:[%s0 + $0x1c0] sm:$0xf]
  %v122 = vld [vmem:[%s0 + $0x1c4] sm:$0x1]
  %v123 = vld [vmem:[%s0 + $0x1c8] sm:$0xf]
  %v124 = vld [vmem:[%s0 + $0x1cc] sm:$0x1]
  %v125 = vld [vmem:[%s0 + $0x1d0] sm:$0xf]
  %v126 = vld [vmem:[%s0 + $0x1d4] sm:$0x1]
  %v127 = vld [vmem:[%s0 + $0x1d8] sm:$0xf]
  %v128 = vld [vmem:[%s0 + $0x1dc] sm:$0x1]
  %v129 = vld [vmem:[%s0 + $0x1e0] sm:$0xf]
  %v130 = vld [vmem:[%s0 + $0x1e4] sm:$0x1]
  %v131 = vld [vmem:[%s0 + $0x1e8] sm:$0xf]
  %v132 = vld [vmem:[%s0 + $0x1ec] sm:$0x1]
  %v133 = vld [vmem:[%s0 + $0x1f0] sm:$0xf]
  %v134 = vld [vmem:[%s0 + $0x1f4] sm:$0x1]
  %v135 = vld [vmem:[%s0 + $0x1f8] sm:$0xf]
  %v136 = vld [vmem:[%s0 + $0x1fc] sm:$0x1]
  %v137 = vld [vmem:[%s0 + $0x200] sm:$0xf]
  %v138 = vld [vmem:[%s0 + $0x204] sm:$0x1]
  %v139 = vld [vmem:[%s0 + $0x208] sm:$0xf]
  %v140 = vld [vmem:[%s0 + $0x20c] sm:$0x1]
  %v141 = vld [vmem:[%s0 + $0x210] sm:$0xf]
  %v142 = vld [vmem:[%s0 + $0x214] sm:$0x1]
  %v143 = vld [vmem:[%s0 + $0x218] sm:$0xf]
  %v144 = vld [vmem:[%s0 + $0x21c] sm:$0x1]
  %v145 = vld [vmem:[%s0 + $0x220] sm:$0xf]
  %v146 = vld [vmem:[%s0 + $0x224] sm:$0x1]
  %v147 = vld [vmem:[%s0 + $0x228] sm:$0xf]
  %v148 = vld [vmem:[%s0 + $0x22c] sm:$0x1]
  %v149 = vld [vmem:[%s0 + $0x230] sm:$0xf]
  %v150 = vld [vmem:[%s0 + $0x234] sm:$0x1]
  %v151 = vld [vmem:[%s0 + $0x238] sm:$0xf]
  %v152 = vld [vmem:[%s0 + $0x23c] sm:$0x1]
  %v153 = vld [vmem:[%s0 + $0x240] sm:$0xf]
  %v154 = vld [vmem:[%s0 + $0x244] sm:$0x1]
  %v155 = vld [vmem:[%s0 + $0x248] sm:$0xf]
  %v156 = vld [vmem:[%s0 + $0x24c] sm:$0x1]
  %v157 = vld [vmem:[%s0 + $0x250] sm:$0xf]
  %v158 = vld [vmem:[%s0 + $0x254] sm:$0x1]
  %v159 = vld [vmem:[%s0 + $0x258] sm:$0xf]
  %v160 = vld [vmem:[%s0 + $0x25c] sm:$0x1]
  %v161 = vld [vmem:[%s0 + $0x260] sm:$0xf]
  %v162 = vld [vmem:[%s0 + $0x264] sm:$0x1]
  %v163 = vld [vmem:[%s0 + $0x268] sm:$0xf]
  %v164 = vld [vmem:[%s0 + $0x26c] sm:$0x1]
  %v165 = vld [vmem:[%s0 + $0x270] sm:$0xf]
  %v166 = vld [vmem:[%s0 + $0x274] sm:$0x1]
  %v167 = vld [vmem:[%s0 + $0x278] sm:$0xf]
  %v168 = vld [vmem:[%s0 + $0x27c] sm:$0x1]
  %v169 = vld [vmem:[%s0 + $0x280] sm:$0xf]
  %v170 = vld [vmem:[%s0 + $0x284] sm:$0x1]
  %v171 = vld [vmem:[%s0 + $0x288] sm:$0xf]
  %v172 = vld [vmem:[%s0 + $0x28c] sm:$0x1]
  %v173 = vld [vmem:[%s0 + $0x290] sm:$0xf]
  %v174 = vld [vmem:[%s0 + $0x294] sm:$0x1]
  %v175 = vld [vmem:[%s0 + $0x298] sm:$0xf]
  %v176 = vld [vmem:[%s0 + $0x29c] sm:$0x1]
  %v177 = vld [vmem:[%s0 + $0x2a0] sm:$0xf]
  %v178 = vld [vmem:[%s0 + $0x2a4] sm:$0x1]
  %v179 = vld [vmem:[%s0 + $0x2a8] sm:$0xf]
  %v180 = vld [vmem:[%s0 + $0x2ac] sm:$0x1]
  %v181 = vld [vmem:[%s0 + $0x2b0] sm:$0xf]
  %v182 = vld [vmem:[%s0 + $0x2b4] sm:$0x1]
  %v183 = vld [vmem:[%s0 + $0x2b8] sm:$0xf]
  %v184 = vld [vmem:[%s0 + $0x2bc] sm:$0x1]
  %v185 = vld [vmem:[%s0 + $0x2c0] sm:$0xf]
  %v186 = vld [vmem:[%s0 + $0x2c4] sm:$0x1]
  %v187 = vld [vmem:[%s0 + $0x2c8] sm:$0xf]
  %v188 = vld [vmem:[%s0 + $0x2cc] sm:$0x1]
  %v189 = vld [vmem:[%s0 + $0x2d0] sm:$0xf]
  %v190 = vld [vmem:[%s0 + $0x2d4] sm:$0x1]
  %v191 = vld [vmem:[%s0 + $0x2d8] sm:$0xf]
  %v192 = vld [vmem:[%s0 + $0x2dc] sm:$0x1]
  %v193 = vld [vmem:[%s0 + $0x2e0] sm:$0xf]
  %v194 = vld [vmem:[%s0 + $0x2e4] sm:$0x1]
  %v195 = vld [vmem:[%s0 + $0x2e8] sm:$0xf]
  %v196 = vld [vmem:[%s0 + $0x2ec] sm:$0x1]
  %v197 = vld [vmem:[%s0 + $0x2f0] sm:$0xf]
  %v198 = vld [vmem:[%s0 + $0x2f4] sm:$0x1]
  %v199 = vld [vmem:[%s0 + $0x2f8] sm:$0xf]
  %v200 = vld [vmem:[%s0 + $0x2fc] sm:$0x1]
  %v201 = vld [vmem:[%s0 + $0x300] sm:$0xf]
  %v202 = vld [vmem:[%s0 + $0x304] sm:$0x1]
  %v203 = vld [vmem:[%s0 + $0x308] sm:$0xf]
  %v204 = vld [vmem:[%s0 + $0x30c] sm:$0x1]
  %v205 = vld [vmem:[%s0 + $0x310] sm:$0xf]
  %v206 = vld [vmem:[%s0 + $0x314] sm:$0x1]
  %v207 = vld [vmem:[%s0 + $0x318] sm:$0xf]
  %v208 = vld [vmem:[%s0 + $0x31c] sm:$0x1]
  %v209 = vld [vmem:[%s0 + $0x320] sm:$0xf]
  %v210 = vld [vmem:[%s0 + $0x324] sm:$0x1]
  %v211 = vld [vmem:[%s0 + $0x328] sm:$0xf]
  %v212 = vld [vmem:[%s0 + $0x32c] sm:$0x1]
  %v213 = vld [vmem:[%s0 + $0x330] sm:$0xf]
  %v214 = vld [vmem:[%s0 + $0x334] sm:$0x1]
  %v215 = vld [vmem:[%s0 + $0x338] sm:$0xf]
  %v216 = vld [vmem:[%s0 + $0x33c] sm:$0x1]
  %v217 = vld [vmem:[%s0 + $0x340] sm:$0xf]
  %v218 = vld [vmem:[%s0 + $0x344] sm:$0x1]
  %v219 = vld [vmem:[%s0 + $0x348] sm:$0xf]
  %v220 = vld [vmem:[%s0 + $0x34c] sm:$0x1]
  %v221 = vld [vmem:[%s0 + $0x350] sm:$0xf]
  %v222 = vld [vmem:[%s0 + $0x354] sm:$0x1]
  %v223 = vld [vmem:[%s0 + $0x358] sm:$0xf]
  %v224 = vld [vmem:[%s0 + $0x35c] sm:$0x1]
  %v225 = vld [vmem:[%s0 + $0x360] sm:$0xf]
  %v226 = vld [vmem:[%s0 + $0x364] sm:$0x1]
  %v227 = vld [vmem:[%s0 + $0x368] sm:$0xf]
  %v228 = vld [vmem:[%s0 + $0x36c] sm:$0x1]
  %v229 = vld [vmem:[%s0 + $0x370] sm:$0xf]
  %v230 = vld [vmem:[%s0 + $0x374] sm:$0x1]
  %v231 = vld [vmem:[%s0 + $0x378] sm:$0xf]
  %v232 = vld [vmem:[%s0 + $0x37c] sm:$0x1]
  %v233 = vld [vmem:[%s0 + $0x380] sm:$0xf]
  %v234 = vld [vmem:[%s0 + $0x384] sm:$0x1]
  %v235 = vld [vmem:[%s0 + $0x388] sm:$0xf]
  %v236 = vld [vmem:[%s0 + $0x38c] sm:$0x1]
  %v237 = vld [vmem:[%s0 + $0x390] sm:$0xf]
  %v238 = vld [vmem:[%s0 + $0x394] sm:$0x1]
  %v239 = vld [vmem:[%s0 + $0x398] sm:$0xf]
  %v240 = vld [vmem:[%s0 + $0x39c] sm:$0x1]
  %v241 = vld [vmem:[%s0 + $0x3a0] sm:$0xf]
  %v242 = vld [vmem:[%s0 + $0x3a4] sm:$0x1]
  %v243 = vld [vmem:[%s0 + $0x3a8] sm:$0xf]
  %v244 = vld [vmem:[%s0 + $0x3ac] sm:$0x1]
  %v245 = vld [vmem:[%s0 + $0x3b0] sm:$0xf]
  %v246 = vld [vmem:[%s0 + $0x3b4] sm:$0x1]
  %v247 = vld [vmem:[%s0 + $0x3b8] sm:$0xf]
  %v248 = vld [vmem:[%s0 + $0x3bc] sm:$0x1]
  %v249 = vld [vmem:[%s0 + $0x3c0] sm:$0xf]
  %v250 = vld [vmem:[%s0 + $0x3c4] sm:$0x1]
  %v251 = vld [vmem:[%s0 + $0x3c8] sm:$0xf]
  %v252 = vld [vmem:[%s0 + $0x3cc] sm:$0x1]
  %v253 = vld [vmem:[%s0 + $0x3d0] sm:$0xf]
  %v254 = vld [vmem:[%s0 + $0x3d4] sm:$0x1]
  %v255 = vld [vmem:[%s0 + $0x3d8] sm:$0xf]
  %v256 = vld [vmem:[%s0 + $0x3dc] sm:$0x1]
  %v257 = vld [vmem:[%s0 + $0x3e0] sm:$0xf]
  %v258 = vld [vmem:[%s0 + $0x3e4] sm:$0x1]
  %v259 = vld [vmem:[%s0 + $0x3e8] sm:$0xf]
  %v260 = vld [vmem:[%s0 + $0x3ec] sm:$0x1]
  %v261 = vld [vmem:[%s0 + $0x3f0] sm:$0xf]
  %v262 = vld [vmem:[%s0 + $0x3f4] sm:$0x1]
  %v263 = vld [vmem:[%s0 + $0x3f8] sm:$0xf]
  %v264 = vld [vmem:[%s0 + $0x3fc] sm:$0x1]
  %v521 = vunpack.c.l.b16 %v9
  %v522 = vunpack.c.l.b16 %v10
  %v523 = vunpack.c.l.b16 %v11
  %v524 = vunpack.c.l.b16 %v12
  %v525 = vunpack.c.l.b16 %v13
  %v526 = vunpack.c.l.b16 %v14
  %v527 = vunpack.c.l.b16 %v15
  %v528 = vunpack.c.l.b16 %v16
  %v529 = vunpack.c.l.b16 %v17
  %v530 = vunpack.c.l.b16 %v18
  %v531 = vunpack.c.l.b16 %v19
  %v532 = vunpack.c.l.b16 %v20
  %v533 = vunpack.c.l.b16 %v21
  %v534 = vunpack.c.l.b16 %v22
  %v535 = vunpack.c.l.b16 %v23
  %v536 = vunpack.c.l.b16 %v24
  %v537 = vunpack.c.l.b16 %v25
  %v538 = vunpack.c.l.b16 %v26
  %v539 = vunpack.c.l.b16 %v27
  %v540 = vunpack.c.l.b16 %v28
  %v541 = vunpack.c.l.b16 %v29
  %v542 = vunpack.c.l.b16 %v30
  %v543 = vunpack.c.l.b16 %v31
  %v544 = vunpack.c.l.b16 %v32
  %v545 = vunpack.c.l.b16 %v33
  %v546 = vunpack.c.l.b16 %v34
  %v547 = vunpack.c.l.b16 %v35
  %v548 = vunpack.c.l.b16 %v36
  %v549 = vunpack.c.l.b16 %v37
  %v550 = vunpack.c.l.b16 %v38
  %v551 = vunpack.c.l.b16 %v39
  %v552 = vunpack.c.l.b16 %v40
  %v553 = vunpack.c.l.b16 %v41
  %v554 = vunpack.c.l.b16 %v42
  %v555 = vunpack.c.l.b16 %v43
  %v556 = vunpack.c.l.b16 %v44
  %v557 = vunpack.c.l.b16 %v45
  %v558 = vunpack.c.l.b16 %v46
  %v559 = vunpack.c.l.b16 %v47
  %v560 = vunpack.c.l.b16 %v48
  %v561 = vunpack.c.l.b16 %v49
  %v562 = vunpack.c.l.b16 %v50
  %v563 = vunpack.c.l.b16 %v51
  %v564 = vunpack.c.l.b16 %v52
  %v565 = vunpack.c.l.b16 %v53
  %v566 = vunpack.c.l.b16 %v54
  %v567 = vunpack.c.l.b16 %v55
  %v568 = vunpack.c.l.b16 %v56
  %v569 = vunpack.c.l.b16 %v57
  %v570 = vunpack.c.l.b16 %v58
  %v571 = vunpack.c.l.b16 %v59
  %v572 = vunpack.c.l.b16 %v60
  %v573 = vunpack.c.l.b16 %v61
  %v574 = vunpack.c.l.b16 %v62
  %v575 = vunpack.c.l.b16 %v63
  %v576 = vunpack.c.l.b16 %v64
  %v577 = vunpack.c.l.b16 %v65
  %v578 = vunpack.c.l.b16 %v66
  %v579 = vunpack.c.l.b16 %v67
  %v580 = vunpack.c.l.b16 %v68
  %v581 = vunpack.c.l.b16 %v69
  %v582 = vunpack.c.l.b16 %v70
  %v583 = vunpack.c.l.b16 %v71
  %v584 = vunpack.c.l.b16 %v72
  %v585 = vunpack.c.l.b16 %v73
  %v586 = vunpack.c.l.b16 %v74
  %v587 = vunpack.c.l.b16 %v75
  %v588 = vunpack.c.l.b16 %v76
  %v589 = vunpack.c.l.b16 %v77
  %v590 = vunpack.c.l.b16 %v78
  %v591 = vunpack.c.l.b16 %v79
  %v592 = vunpack.c.l.b16 %v80
  %v593 = vunpack.c.l.b16 %v81
  %v594 = vunpack.c.l.b16 %v82
  %v595 = vunpack.c.l.b16 %v83
  %v596 = vunpack.c.l.b16 %v84
  %v597 = vunpack.c.l.b16 %v85
  %v598 = vunpack.c.l.b16 %v86
  %v599 = vunpack.c.l.b16 %v87
  %v600 = vunpack.c.l.b16 %v88
  %v601 = vunpack.c.l.b16 %v89
  %v602 = vunpack.c.l.b16 %v90
  %v603 = vunpack.c.l.b16 %v91
  %v604 = vunpack.c.l.b16 %v92
  %v605 = vunpack.c.l.b16 %v93
  %v606 = vunpack.c.l.b16 %v94
  %v607 = vunpack.c.l.b16 %v95
  %v608 = vunpack.c.l.b16 %v96
  %v609 = vunpack.c.l.b16 %v97
  %v610 = vunpack.c.l.b16 %v98
  %v611 = vunpack.c.l.b16 %v99
  %v612 = vunpack.c.l.b16 %v100
  %v613 = vunpack.c.l.b16 %v101
  %v614 = vunpack.c.l.b16 %v102
  %v615 = vunpack.c.l.b16 %v103
  %v616 = vunpack.c.l.b16 %v104
  %v617 = vunpack.c.l.b16 %v105
  %v618 = vunpack.c.l.b16 %v106
  %v619 = vunpack.c.l.b16 %v107
  %v620 = vunpack.c.l.b16 %v108
  %v621 = vunpack.c.l.b16 %v109
  %v622 = vunpack.c.l.b16 %v110
  %v623 = vunpack.c.l.b16 %v111
  %v624 = vunpack.c.l.b16 %v112
  %v625 = vunpack.c.l.b16 %v113
  %v626 = vunpack.c.l.b16 %v114
  %v627 = vunpack.c.l.b16 %v115
  %v628 = vunpack.c.l.b16 %v116
  %v629 = vunpack.c.l.b16 %v117
  %v630 = vunpack.c.l.b16 %v118
  %v631 = vunpack.c.l.b16 %v119
  %v632 = vunpack.c.l.b16 %v120
  %v633 = vunpack.c.l.b16 %v121
  %v634 = vunpack.c.l.b16 %v122
  %v635 = vunpack.c.l.b16 %v123
  %v636 = vunpack.c.l.b16 %v124
  %v637 = vunpack.c.l.b16 %v125
  %v638 = vunpack.c.l.b16 %v126
  %v639 = vunpack.c.l.b16 %v127
  %v640 = vunpack.c.l.b16 %v128
  %v641 = vunpack.c.l.b16 %v129
  %v642 = vunpack.c.l.b16 %v130
  %v643 = vunpack.c.l.b16 %v131
  %v644 = vunpack.c.l.b16 %v132
  %v645 = vunpack.c.l.b16 %v133
  %v646 = vunpack.c.l.b16 %v134
  %v647 = vunpack.c.l.b16 %v135
  %v648 = vunpack.c.l.b16 %v136
  %v649 = vunpack.c.l.b16 %v137
  %v650 = vunpack.c.l.b16 %v138
  %v651 = vunpack.c.l.b16 %v139
  %v652 = vunpack.c.l.b16 %v140
  %v653 = vunpack.c.l.b16 %v141
  %v654 = vunpack.c.l.b16 %v142
  %v655 = vunpack.c.l.b16 %v143
  %v656 = vunpack.c.l.b16 %v144
  %v657 = vunpack.c.l.b16 %v145
  %v658 = vunpack.c.l.b16 %v146
  %v659 = vunpack.c.l.b16 %v147
  %v660 = vunpack.c.l.b16 %v148
  %v661 = vunpack.c.l.b16 %v149
  %v662 = vunpack.c.l.b16 %v150
  %v663 = vunpack.c.l.b16 %v151
  %v664 = vunpack.c.l.b16 %v152
  %v665 = vunpack.c.l.b16 %v153
  %v666 = vunpack.c.l.b16 %v154
  %v667 = vunpack.c.l.b16 %v155
  %v668 = vunpack.c.l.b16 %v156
  %v669 = vunpack.c.l.b16 %v157
  %v670 = vunpack.c.l.b16 %v158
  %v671 = vunpack.c.l.b16 %v159
  %v672 = vunpack.c.l.b16 %v160
  %v673 = vunpack.c.l.b16 %v161
  %v674 = vunpack.c.l.b16 %v162
  %v675 = vunpack.c.l.b16 %v163
  %v676 = vunpack.c.l.b16 %v164
  %v677 = vunpack.c.l.b16 %v165
  %v678 = vunpack.c.l.b16 %v166
  %v679 = vunpack.c.l.b16 %v167
  %v680 = vunpack.c.l.b16 %v168
  %v681 = vunpack.c.l.b16 %v169
  %v682 = vunpack.c.l.b16 %v170
  %v683 = vunpack.c.l.b16 %v171
  %v684 = vunpack.c.l.b16 %v172
  %v685 = vunpack.c.l.b16 %v173
  %v686 = vunpack.c.l.b16 %v174
  %v687 = vunpack.c.l.b16 %v175
  %v688 = vunpack.c.l.b16 %v176
  %v689 = vunpack.c.l.b16 %v177
  %v690 = vunpack.c.l.b16 %v178
  %v691 = vunpack.c.l.b16 %v179
  %v692 = vunpack.c.l.b16 %v180
  %v693 = vunpack.c.l.b16 %v181
  %v694 = vunpack.c.l.b16 %v182
  %v695 = vunpack.c.l.b16 %v183
  %v696 = vunpack.c.l.b16 %v184
  %v697 = vunpack.c.l.b16 %v185
  %v698 = vunpack.c.l.b16 %v186
  %v699 = vunpack.c.l.b16 %v187
  %v700 = vunpack.c.l.b16 %v188
  %v701 = vunpack.c.l.b16 %v189
  %v702 = vunpack.c.l.b16 %v190
  %v703 = vunpack.c.l.b16 %v191
  %v704 = vunpack.c.l.b16 %v192
  %v705 = vunpack.c.l.b16 %v193
  %v706 = vunpack.c.l.b16 %v194
  %v707 = vunpack.c.l.b16 %v195
  %v708 = vunpack.c.l.b16 %v196
  %v709 = vunpack.c.l.b16 %v197
  %v710 = vunpack.c.l.b16 %v198
  %v711 = vunpack.c.l.b16 %v199
  %v712 = vunpack.c.l.b16 %v200
  %v713 = vunpack.c.l.b16 %v201
  %v714 = vunpack.c.l.b16 %v202
  %v715 = vunpack.c.l.b16 %v203
  %v716 = vunpack.c.l.b16 %v204
  %v717 = vunpack.c.l.b16 %v205
  %v718 = vunpack.c.l.b16 %v206
  %v719 = vunpack.c.l.b16 %v207
  %v720 = vunpack.c.l.b16 %v208
  %v721 = vunpack.c.l.b16 %v209
  %v722 = vunpack.c.l.b16 %v210
  %v723 = vunpack.c.l.b16 %v211
  %v724 = vunpack.c.l.b16 %v212
  %v725 = vunpack.c.l.b16 %v213
  %v726 = vunpack.c.l.b16 %v214
  %v727 = vunpack.c.l.b16 %v215
  %v728 = vunpack.c.l.b16 %v216
  %v729 = vunpack.c.l.b16 %v217
  %v730 = vunpack.c.l.b16 %v218
  %v731 = vunpack.c.l.b16 %v219
  %v732 = vunpack.c.l.b16 %v220
  %v733 = vunpack.c.l.b16 %v221
  %v734 = vunpack.c.l.b16 %v222
  %v735 = vunpack.c.l.b16 %v223
  %v736 = vunpack.c.l.b16 %v224
  %v737 = vunpack.c.l.b16 %v225
  %v738 = vunpack.c.l.b16 %v226
  %v739 = vunpack.c.l.b16 %v227
  %v740 = vunpack.c.l.b16 %v228
  %v741 = vunpack.c.l.b16 %v229
  %v742 = vunpack.c.l.b16 %v230
  %v743 = vunpack.c.l.b16 %v231
  %v744 = vunpack.c.l.b16 %v232
  %v745 = vunpack.c.l.b16 %v233
  %v746 = vunpack.c.l.b16 %v234
  %v747 = vunpack.c.l.b16 %v235
  %v748 = vunpack.c.l.b16 %v236
  %v749 = vunpack.c.l.b16 %v237
  %v750 = vunpack.c.l.b16 %v238
  %v751 = vunpack.c.l.b16 %v239
  %v752 = vunpack.c.l.b16 %v240
  %v753 = vunpack.c.l.b16 %v241
  %v754 = vunpack.c.l.b16 %v242
  %v755 = vunpack.c.l.b16 %v243
  %v756 = vunpack.c.l.b16 %v244
  %v757 = vunpack.c.l.b16 %v245
  %v758 = vunpack.c.l.b16 %v246
  %v759 = vunpack.c.l.b16 %v247
  %v760 = vunpack.c.l.b16 %v248
  %v761 = vunpack.c.l.b16 %v249
  %v762 = vunpack.c.l.b16 %v250
  %v763 = vunpack.c.l.b16 %v251
  %v764 = vunpack.c.l.b16 %v252
  %v765 = vunpack.c.l.b16 %v253
  %v766 = vunpack.c.l.b16 %v254
  %v767 = vunpack.c.l.b16 %v255
  %v768 = vunpack.c.l.b16 %v256
  %v769 = vunpack.c.l.b16 %v257
  %v770 = vunpack.c.l.b16 %v258
  %v771 = vunpack.c.l.b16 %v259
  %v772 = vunpack.c.l.b16 %v260
  %v773 = vunpack.c.l.b16 %v261
  %v774 = vunpack.c.l.b16 %v262
  %v775 = vunpack.c.l.b16 %v263
  %v776 = vunpack.c.l.b16 %v264
  %v777 = vpack.c.b16 %v522, %v521
  %v778 = vpack.c.b16 %v524, %v523
  %v779 = vpack.c.b16 %v526, %v525
  %v780 = vpack.c.b16 %v528, %v527
  %v781 = vpack.c.b16 %v530, %v529
  %v782 = vpack.c.b16 %v532, %v531
  %v783 = vpack.c.b16 %v534, %v533
  %v784 = vpack.c.b16 %v536, %v535
  %v785 = vpack.c.b16 %v538, %v537
  %v786 = vpack.c.b16 %v540, %v539
  %v787 = vpack.c.b16 %v542, %v541
  %v788 = vpack.c.b16 %v544, %v543
  %v789 = vpack.c.b16 %v546, %v545
  %v790 = vpack.c.b16 %v548, %v547
  %v791 = vpack.c.b16 %v550, %v549
  %v792 = vpack.c.b16 %v552, %v551
  %v793 = vpack.c.b16 %v554, %v553
  %v794 = vpack.c.b16 %v556, %v555
  %v795 = vpack.c.b16 %v558, %v557
  %v796 = vpack.c.b16 %v560, %v559
  %v797 = vpack.c.b16 %v562, %v561
  %v798 = vpack.c.b16 %v564, %v563
  %v799 = vpack.c.b16 %v566, %v565
  %v800 = vpack.c.b16 %v568, %v567
  %v801 = vpack.c.b16 %v570, %v569
  %v802 = vpack.c.b16 %v572, %v571
  %v803 = vpack.c.b16 %v574, %v573
  %v804 = vpack.c.b16 %v576, %v575
  %v805 = vpack.c.b16 %v578, %v577
  %v806 = vpack.c.b16 %v580, %v579
  %v807 = vpack.c.b16 %v582, %v581
  %v808 = vpack.c.b16 %v584, %v583
  %v809 = vpack.c.b16 %v586, %v585
  %v810 = vpack.c.b16 %v588, %v587
  %v811 = vpack.c.b16 %v590, %v589
  %v812 = vpack.c.b16 %v592, %v591
  %v813 = vpack.c.b16 %v594, %v593
  %v814 = vpack.c.b16 %v596, %v595
  %v815 = vpack.c.b16 %v598, %v597
  %v816 = vpack.c.b16 %v600, %v599
  %v817 = vpack.c.b16 %v602, %v601
  %v818 = vpack.c.b16 %v604, %v603
  %v819 = vpack.c.b16 %v606, %v605
  %v820 = vpack.c.b16 %v608, %v607
  %v821 = vpack.c.b16 %v610, %v609
  %v822 = vpack.c.b16 %v612, %v611
  %v823 = vpack.c.b16 %v614, %v613
  %v824 = vpack.c.b16 %v616, %v615
  %v825 = vpack.c.b16 %v618, %v617
  %v826 = vpack.c.b16 %v620, %v619
  %v827 = vpack.c.b16 %v622, %v621
  %v828 = vpack.c.b16 %v624, %v623
  %v829 = vpack.c.b16 %v626, %v625
  %v830 = vpack.c.b16 %v628, %v627
  %v831 = vpack.c.b16 %v630, %v629
  %v832 = vpack.c.b16 %v632, %v631
  %v833 = vpack.c.b16 %v634, %v633
  %v834 = vpack.c.b16 %v636, %v635
  %v835 = vpack.c.b16 %v638, %v637
  %v836 = vpack.c.b16 %v640, %v639
  %v837 = vpack.c.b16 %v642, %v641
  %v838 = vpack.c.b16 %v644, %v643
  %v839 = vpack.c.b16 %v646, %v645
  %v840 = vpack.c.b16 %v648, %v647
  %v841 = vpack.c.b16 %v650, %v649
  %v842 = vpack.c.b16 %v652, %v651
  %v843 = vpack.c.b16 %v654, %v653
  %v844 = vpack.c.b16 %v656, %v655
  %v845 = vpack.c.b16 %v658, %v657
  %v846 = vpack.c.b16 %v660, %v659
  %v847 = vpack.c.b16 %v662, %v661
  %v848 = vpack.c.b16 %v664, %v663
  %v849 = vpack.c.b16 %v666, %v665
  %v850 = vpack.c.b16 %v668, %v667
  %v851 = vpack.c.b16 %v670, %v669
  %v852 = vpack.c.b16 %v672, %v671
  %v853 = vpack.c.b16 %v674, %v673
  %v854 = vpack.c.b16 %v676, %v675
  %v855 = vpack.c.b16 %v678, %v677
  %v856 = vpack.c.b16 %v680, %v679
  %v857 = vpack.c.b16 %v682, %v681
  %v858 = vpack.c.b16 %v684, %v683
  %v859 = vpack.c.b16 %v686, %v685
  %v860 = vpack.c.b16 %v688, %v687
  %v861 = vpack.c.b16 %v690, %v689
  %v862 = vpack.c.b16 %v692, %v691
  %v863 = vpack.c.b16 %v694, %v693
  %v864 = vpack.c.b16 %v696, %v695
  %v865 = vpack.c.b16 %v698, %v697
  %v866 = vpack.c.b16 %v700, %v699
  %v867 = vpack.c.b16 %v702, %v701
  %v868 = vpack.c.b16 %v704, %v703
  %v869 = vpack.c.b16 %v706, %v705
  %v870 = vpack.c.b16 %v708, %v707
  %v871 = vpack.c.b16 %v710, %v709
  %v872 = vpack.c.b16 %v712, %v711
  %v873 = vpack.c.b16 %v714, %v713
  %v874 = vpack.c.b16 %v716, %v715
  %v875 = vpack.c.b16 %v718, %v717
  %v876 = vpack.c.b16 %v720, %v719
  %v877 = vpack.c.b16 %v722, %v721
  %v878 = vpack.c.b16 %v724, %v723
  %v879 = vpack.c.b16 %v726, %v725
  %v880 = vpack.c.b16 %v728, %v727
  %v881 = vpack.c.b16 %v730, %v729
  %v882 = vpack.c.b16 %v732, %v731
  %v883 = vpack.c.b16 %v734, %v733
  %v884 = vpack.c.b16 %v736, %v735
  %v885 = vpack.c.b16 %v738, %v737
  %v886 = vpack.c.b16 %v740, %v739
  %v887 = vpack.c.b16 %v742, %v741
  %v888 = vpack.c.b16 %v744, %v743
  %v889 = vpack.c.b16 %v746, %v745
  %v890 = vpack.c.b16 %v748, %v747
  %v891 = vpack.c.b16 %v750, %v749
  %v892 = vpack.c.b16 %v752, %v751
  %v893 = vpack.c.b16 %v754, %v753
  %v894 = vpack.c.b16 %v756, %v755
  %v895 = vpack.c.b16 %v758, %v757
  %v896 = vpack.c.b16 %v760, %v759
  %v897 = vpack.c.b16 %v762, %v761
  %v898 = vpack.c.b16 %v764, %v763
  %v899 = vpack.c.b16 %v766, %v765
  %v900 = vpack.c.b16 %v768, %v767
  %v901 = vpack.c.b16 %v770, %v769
  %v902 = vpack.c.b16 %v772, %v771
  %v903 = vpack.c.b16 %v774, %v773
  %v904 = vpack.c.b16 %v776, %v775
  %vm1033 = vcmask 126976
  %vm1034 = vsmask.f32 4352
  %vm1035 = vmand %vm1033, %vm1034
  %v1036 = vsel %vm1035, %v777, 4286644096
  %v1037 = vunpack.i.l.bf16 %v1036
  %v1038 = vunpack.i.h.bf16 %v1036
  %v1039 = vmax.f32 %v1037, %v1038
  %v1040 = vrot.slane %v1039, 4
  %v1041 = vmax.f32 %v1039, %v1040
  %v1042 = vrot.slane %v1041, 2
  %v1043 = vmax.f32 %v1041, %v1042
  %v1044 = vrot.slane %v1043, 1
  %v1045 = vmax.f32 %v1043, %v1044
  %v1046 = vpack.i.bf16 %v1045, %v1045
  %v1047 = vsel %vm1035, %v778, 4286644096
  %v1048 = vunpack.i.l.bf16 %v1047
  %v1049 = vunpack.i.h.bf16 %v1047
  %v1050 = vmax.f32 %v1048, %v1049
  %v1051 = vrot.slane %v1050, 4
  %v1052 = vmax.f32 %v1050, %v1051
  %v1053 = vrot.slane %v1052, 2
  %v1054 = vmax.f32 %v1052, %v1053
  %v1055 = vrot.slane %v1054, 1
  %v1056 = vmax.f32 %v1054, %v1055
  %v1057 = vpack.i.bf16 %v1056, %v1056
  %v1058 = vsel %vm1035, %v779, 4286644096
  %v1059 = vunpack.i.l.bf16 %v1058
  %v1060 = vunpack.i.h.bf16 %v1058
  %v1061 = vmax.f32 %v1059, %v1060
  %v1062 = vrot.slane %v1061, 4
  %v1063 = vmax.f32 %v1061, %v1062
  %v1064 = vrot.slane %v1063, 2
  %v1065 = vmax.f32 %v1063, %v1064
  %v1066 = vrot.slane %v1065, 1
  %v1067 = vmax.f32 %v1065, %v1066
  %v1068 = vpack.i.bf16 %v1067, %v1067
  %v1069 = vsel %vm1035, %v780, 4286644096
  %v1070 = vunpack.i.l.bf16 %v1069
  %v1071 = vunpack.i.h.bf16 %v1069
  %v1072 = vmax.f32 %v1070, %v1071
  %v1073 = vrot.slane %v1072, 4
  %v1074 = vmax.f32 %v1072, %v1073
  %v1075 = vrot.slane %v1074, 2
  %v1076 = vmax.f32 %v1074, %v1075
  %v1077 = vrot.slane %v1076, 1
  %v1078 = vmax.f32 %v1076, %v1077
  %v1079 = vpack.i.bf16 %v1078, %v1078
  %v1080 = vsel %vm1035, %v781, 4286644096
  %v1081 = vunpack.i.l.bf16 %v1080
  %v1082 = vunpack.i.h.bf16 %v1080
  %v1083 = vmax.f32 %v1081, %v1082
  %v1084 = vrot.slane %v1083, 4
  %v1085 = vmax.f32 %v1083, %v1084
  %v1086 = vrot.slane %v1085, 2
  %v1087 = vmax.f32 %v1085, %v1086
  %v1088 = vrot.slane %v1087, 1
  %v1089 = vmax.f32 %v1087, %v1088
  %v1090 = vpack.i.bf16 %v1089, %v1089
  %v1091 = vsel %vm1035, %v782, 4286644096
  %v1092 = vunpack.i.l.bf16 %v1091
  %v1093 = vunpack.i.h.bf16 %v1091
  %v1094 = vmax.f32 %v1092, %v1093
  %v1095 = vrot.slane %v1094, 4
  %v1096 = vmax.f32 %v1094, %v1095
  %v1097 = vrot.slane %v1096, 2
  %v1098 = vmax.f32 %v1096, %v1097
  %v1099 = vrot.slane %v1098, 1
  %v1100 = vmax.f32 %v1098, %v1099
  %v1101 = vpack.i.bf16 %v1100, %v1100
  %v1102 = vsel %vm1035, %v783, 4286644096
  %v1103 = vunpack.i.l.bf16 %v1102
  %v1104 = vunpack.i.h.bf16 %v1102
  %v1105 = vmax.f32 %v1103, %v1104
  %v1106 = vrot.slane %v1105, 4
  %v1107 = vmax.f32 %v1105, %v1106
  %v1108 = vrot.slane %v1107, 2
  %v1109 = vmax.f32 %v1107, %v1108
  %v1110 = vrot.slane %v1109, 1
  %v1111 = vmax.f32 %v1109, %v1110
  %v1112 = vpack.i.bf16 %v1111, %v1111
  %v1113 = vsel %vm1035, %v784, 4286644096
  %v1114 = vunpack.i.l.bf16 %v1113
  %v1115 = vunpack.i.h.bf16 %v1113
  %v1116 = vmax.f32 %v1114, %v1115
  %v1117 = vrot.slane %v1116, 4
  %v1118 = vmax.f32 %v1116, %v1117
  %v1119 = vrot.slane %v1118, 2
  %v1120 = vmax.f32 %v1118, %v1119
  %v1121 = vrot.slane %v1120, 1
  %v1122 = vmax.f32 %v1120, %v1121
  %v1123 = vpack.i.bf16 %v1122, %v1122
  %v1124 = vsel %vm1035, %v785, 4286644096
  %v1125 = vunpack.i.l.bf16 %v1124
  %v1126 = vunpack.i.h.bf16 %v1124
  %v1127 = vmax.f32 %v1125, %v1126
  %v1128 = vrot.slane %v1127, 4
  %v1129 = vmax.f32 %v1127, %v1128
  %v1130 = vrot.slane %v1129, 2
  %v1131 = vmax.f32 %v1129, %v1130
  %v1132 = vrot.slane %v1131, 1
  %v1133 = vmax.f32 %v1131, %v1132
  %v1134 = vpack.i.bf16 %v1133, %v1133
  %v1135 = vsel %vm1035, %v786, 4286644096
  %v1136 = vunpack.i.l.bf16 %v1135
  %v1137 = vunpack.i.h.bf16 %v1135
  %v1138 = vmax.f32 %v1136, %v1137
  %v1139 = vrot.slane %v1138, 4
  %v1140 = vmax.f32 %v1138, %v1139
  %v1141 = vrot.slane %v1140, 2
  %v1142 = vmax.f32 %v1140, %v1141
  %v1143 = vrot.slane %v1142, 1
  %v1144 = vmax.f32 %v1142, %v1143
  %v1145 = vpack.i.bf16 %v1144, %v1144
  %v1146 = vsel %vm1035, %v787, 4286644096
  %v1147 = vunpack.i.l.bf16 %v1146
  %v1148 = vunpack.i.h.bf16 %v1146
  %v1149 = vmax.f32 %v1147, %v1148
  %v1150 = vrot.slane %v1149, 4
  %v1151 = vmax.f32 %v1149, %v1150
  %v1152 = vrot.slane %v1151, 2
  %v1153 = vmax.f32 %v1151, %v1152
  %v1154 = vrot.slane %v1153, 1
  %v1155 = vmax.f32 %v1153, %v1154
  %v1156 = vpack.i.bf16 %v1155, %v1155
  %v1157 = vsel %vm1035, %v788, 4286644096
  %v1158 = vunpack.i.l.bf16 %v1157
  %v1159 = vunpack.i.h.bf16 %v1157
  %v1160 = vmax.f32 %v1158, %v1159
  %v1161 = vrot.slane %v1160, 4
  %v1162 = vmax.f32 %v1160, %v1161
  %v1163 = vrot.slane %v1162, 2
  %v1164 = vmax.f32 %v1162, %v1163
  %v1165 = vrot.slane %v1164, 1
  %v1166 = vmax.f32 %v1164, %v1165
  %v1167 = vpack.i.bf16 %v1166, %v1166
  %v1168 = vsel %vm1035, %v789, 4286644096
  %v1169 = vunpack.i.l.bf16 %v1168
  %v1170 = vunpack.i.h.bf16 %v1168
  %v1171 = vmax.f32 %v1169, %v1170
  %v1172 = vrot.slane %v1171, 4
  %v1173 = vmax.f32 %v1171, %v1172
  %v1174 = vrot.slane %v1173, 2
  %v1175 = vmax.f32 %v1173, %v1174
  %v1176 = vrot.slane %v1175, 1
  %v1177 = vmax.f32 %v1175, %v1176
  %v1178 = vpack.i.bf16 %v1177, %v1177
  %v1179 = vsel %vm1035, %v790, 4286644096
  %v1180 = vunpack.i.l.bf16 %v1179
  %v1181 = vunpack.i.h.bf16 %v1179
  %v1182 = vmax.f32 %v1180, %v1181
  %v1183 = vrot.slane %v1182, 4
  %v1184 = vmax.f32 %v1182, %v1183
  %v1185 = vrot.slane %v1184, 2
  %v1186 = vmax.f32 %v1184, %v1185
  %v1187 = vrot.slane %v1186, 1
  %v1188 = vmax.f32 %v1186, %v1187
  %v1189 = vpack.i.bf16 %v1188, %v1188
  %v1190 = vsel %vm1035, %v791, 4286644096
  %v1191 = vunpack.i.l.bf16 %v1190
  %v1192 = vunpack.i.h.bf16 %v1190
  %v1193 = vmax.f32 %v1191, %v1192
  %v1194 = vrot.slane %v1193, 4
  %v1195 = vmax.f32 %v1193, %v1194
  %v1196 = vrot.slane %v1195, 2
  %v1197 = vmax.f32 %v1195, %v1196
  %v1198 = vrot.slane %v1197, 1
  %v1199 = vmax.f32 %v1197, %v1198
  %v1200 = vpack.i.bf16 %v1199, %v1199
  %v1201 = vsel %vm1035, %v792, 4286644096
  %v1202 = vunpack.i.l.bf16 %v1201
  %v1203 = vunpack.i.h.bf16 %v1201
  %v1204 = vmax.f32 %v1202, %v1203
  %v1205 = vrot.slane %v1204, 4
  %v1206 = vmax.f32 %v1204, %v1205
  %v1207 = vrot.slane %v1206, 2
  %v1208 = vmax.f32 %v1206, %v1207
  %v1209 = vrot.slane %v1208, 1
  %v1210 = vmax.f32 %v1208, %v1209
  %v1211 = vpack.i.bf16 %v1210, %v1210
  %v1212 = vsel %vm1035, %v793, 4286644096
  %v1213 = vunpack.i.l.bf16 %v1212
  %v1214 = vunpack.i.h.bf16 %v1212
  %v1215 = vmax.f32 %v1213, %v1214
  %v1216 = vrot.slane %v1215, 4
  %v1217 = vmax.f32 %v1215, %v1216
  %v1218 = vrot.slane %v1217, 2
  %v1219 = vmax.f32 %v1217, %v1218
  %v1220 = vrot.slane %v1219, 1
  %v1221 = vmax.f32 %v1219, %v1220
  %v1222 = vpack.i.bf16 %v1221, %v1221
  %v1223 = vsel %vm1035, %v794, 4286644096
  %v1224 = vunpack.i.l.bf16 %v1223
  %v1225 = vunpack.i.h.bf16 %v1223
  %v1226 = vmax.f32 %v1224, %v1225
  %v1227 = vrot.slane %v1226, 4
  %v1228 = vmax.f32 %v1226, %v1227
  %v1229 = vrot.slane %v1228, 2
  %v1230 = vmax.f32 %v1228, %v1229
  %v1231 = vrot.slane %v1230, 1
  %v1232 = vmax.f32 %v1230, %v1231
  %v1233 = vpack.i.bf16 %v1232, %v1232
  %v1234 = vsel %vm1035, %v795, 4286644096
  %v1235 = vunpack.i.l.bf16 %v1234
  %v1236 = vunpack.i.h.bf16 %v1234
  %v1237 = vmax.f32 %v1235, %v1236
  %v1238 = vrot.slane %v1237, 4
  %v1239 = vmax.f32 %v1237, %v1238
  %v1240 = vrot.slane %v1239, 2
  %v1241 = vmax.f32 %v1239, %v1240
  %v1242 = vrot.slane %v1241, 1
  %v1243 = vmax.f32 %v1241, %v1242
  %v1244 = vpack.i.bf16 %v1243, %v1243
  %v1245 = vsel %vm1035, %v796, 4286644096
  %v1246 = vunpack.i.l.bf16 %v1245
  %v1247 = vunpack.i.h.bf16 %v1245
  %v1248 = vmax.f32 %v1246, %v1247
  %v1249 = vrot.slane %v1248, 4
  %v1250 = vmax.f32 %v1248, %v1249
  %v1251 = vrot.slane %v1250, 2
  %v1252 = vmax.f32 %v1250, %v1251
  %v1253 = vrot.slane %v1252, 1
  %v1254 = vmax.f32 %v1252, %v1253
  %v1255 = vpack.i.bf16 %v1254, %v1254
  %v1256 = vsel %vm1035, %v797, 4286644096
  %v1257 = vunpack.i.l.bf16 %v1256
  %v1258 = vunpack.i.h.bf16 %v1256
  %v1259 = vmax.f32 %v1257, %v1258
  %v1260 = vrot.slane %v1259, 4
  %v1261 = vmax.f32 %v1259, %v1260
  %v1262 = vrot.slane %v1261, 2
  %v1263 = vmax.f32 %v1261, %v1262
  %v1264 = vrot.slane %v1263, 1
  %v1265 = vmax.f32 %v1263, %v1264
  %v1266 = vpack.i.bf16 %v1265, %v1265
  %v1267 = vsel %vm1035, %v798, 4286644096
  %v1268 = vunpack.i.l.bf16 %v1267
  %v1269 = vunpack.i.h.bf16 %v1267
  %v1270 = vmax.f32 %v1268, %v1269
  %v1271 = vrot.slane %v1270, 4
  %v1272 = vmax.f32 %v1270, %v1271
  %v1273 = vrot.slane %v1272, 2
  %v1274 = vmax.f32 %v1272, %v1273
  %v1275 = vrot.slane %v1274, 1
  %v1276 = vmax.f32 %v1274, %v1275
  %v1277 = vpack.i.bf16 %v1276, %v1276
  %v1278 = vsel %vm1035, %v799, 4286644096
  %v1279 = vunpack.i.l.bf16 %v1278
  %v1280 = vunpack.i.h.bf16 %v1278
  %v1281 = vmax.f32 %v1279, %v1280
  %v1282 = vrot.slane %v1281, 4
  %v1283 = vmax.f32 %v1281, %v1282
  %v1284 = vrot.slane %v1283, 2
  %v1285 = vmax.f32 %v1283, %v1284
  %v1286 = vrot.slane %v1285, 1
  %v1287 = vmax.f32 %v1285, %v1286
  %v1288 = vpack.i.bf16 %v1287, %v1287
  %v1289 = vsel %vm1035, %v800, 4286644096
  %v1290 = vunpack.i.l.bf16 %v1289
  %v1291 = vunpack.i.h.bf16 %v1289
  %v1292 = vmax.f32 %v1290, %v1291
  %v1293 = vrot.slane %v1292, 4
  %v1294 = vmax.f32 %v1292, %v1293
  %v1295 = vrot.slane %v1294, 2
  %v1296 = vmax.f32 %v1294, %v1295
  %v1297 = vrot.slane %v1296, 1
  %v1298 = vmax.f32 %v1296, %v1297
  %v1299 = vpack.i.bf16 %v1298, %v1298
  %v1300 = vsel %vm1035, %v801, 4286644096
  %v1301 = vunpack.i.l.bf16 %v1300
  %v1302 = vunpack.i.h.bf16 %v1300
  %v1303 = vmax.f32 %v1301, %v1302
  %v1304 = vrot.slane %v1303, 4
  %v1305 = vmax.f32 %v1303, %v1304
  %v1306 = vrot.slane %v1305, 2
  %v1307 = vmax.f32 %v1305, %v1306
  %v1308 = vrot.slane %v1307, 1
  %v1309 = vmax.f32 %v1307, %v1308
  %v1310 = vpack.i.bf16 %v1309, %v1309
  %v1311 = vsel %vm1035, %v802, 4286644096
  %v1312 = vunpack.i.l.bf16 %v1311
  %v1313 = vunpack.i.h.bf16 %v1311
  %v1314 = vmax.f32 %v1312, %v1313
  %v1315 = vrot.slane %v1314, 4
  %v1316 = vmax.f32 %v1314, %v1315
  %v1317 = vrot.slane %v1316, 2
  %v1318 = vmax.f32 %v1316, %v1317
  %v1319 = vrot.slane %v1318, 1
  %v1320 = vmax.f32 %v1318, %v1319
  %v1321 = vpack.i.bf16 %v1320, %v1320
  %v1322 = vsel %vm1035, %v803, 4286644096
  %v1323 = vunpack.i.l.bf16 %v1322
  %v1324 = vunpack.i.h.bf16 %v1322
  %v1325 = vmax.f32 %v1323, %v1324
  %v1326 = vrot.slane %v1325, 4
  %v1327 = vmax.f32 %v1325, %v1326
  %v1328 = vrot.slane %v1327, 2
  %v1329 = vmax.f32 %v1327, %v1328
  %v1330 = vrot.slane %v1329, 1
  %v1331 = vmax.f32 %v1329, %v1330
  %v1332 = vpack.i.bf16 %v1331, %v1331
  %v1333 = vsel %vm1035, %v804, 4286644096
  %v1334 = vunpack.i.l.bf16 %v1333
  %v1335 = vunpack.i.h.bf16 %v1333
  %v1336 = vmax.f32 %v1334, %v1335
  %v1337 = vrot.slane %v1336, 4
  %v1338 = vmax.f32 %v1336, %v1337
  %v1339 = vrot.slane %v1338, 2
  %v1340 = vmax.f32 %v1338, %v1339
  %v1341 = vrot.slane %v1340, 1
  %v1342 = vmax.f32 %v1340, %v1341
  %v1343 = vpack.i.bf16 %v1342, %v1342
  %v1344 = vsel %vm1035, %v805, 4286644096
  %v1345 = vunpack.i.l.bf16 %v1344
  %v1346 = vunpack.i.h.bf16 %v1344
  %v1347 = vmax.f32 %v1345, %v1346
  %v1348 = vrot.slane %v1347, 4
  %v1349 = vmax.f32 %v1347, %v1348
  %v1350 = vrot.slane %v1349, 2
  %v1351 = vmax.f32 %v1349, %v1350
  %v1352 = vrot.slane %v1351, 1
  %v1353 = vmax.f32 %v1351, %v1352
  %v1354 = vpack.i.bf16 %v1353, %v1353
  %v1355 = vsel %vm1035, %v806, 4286644096
  %v1356 = vunpack.i.l.bf16 %v1355
  %v1357 = vunpack.i.h.bf16 %v1355
  %v1358 = vmax.f32 %v1356, %v1357
  %v1359 = vrot.slane %v1358, 4
  %v1360 = vmax.f32 %v1358, %v1359
  %v1361 = vrot.slane %v1360, 2
  %v1362 = vmax.f32 %v1360, %v1361
  %v1363 = vrot.slane %v1362, 1
  %v1364 = vmax.f32 %v1362, %v1363
  %v1365 = vpack.i.bf16 %v1364, %v1364
  %v1366 = vsel %vm1035, %v807, 4286644096
  %v1367 = vunpack.i.l.bf16 %v1366
  %v1368 = vunpack.i.h.bf16 %v1366
  %v1369 = vmax.f32 %v1367, %v1368
  %v1370 = vrot.slane %v1369, 4
  %v1371 = vmax.f32 %v1369, %v1370
  %v1372 = vrot.slane %v1371, 2
  %v1373 = vmax.f32 %v1371, %v1372
  %v1374 = vrot.slane %v1373, 1
  %v1375 = vmax.f32 %v1373, %v1374
  %v1376 = vpack.i.bf16 %v1375, %v1375
  %v1377 = vsel %vm1035, %v808, 4286644096
  %v1378 = vunpack.i.l.bf16 %v1377
  %v1379 = vunpack.i.h.bf16 %v1377
  %v1380 = vmax.f32 %v1378, %v1379
  %v1381 = vrot.slane %v1380, 4
  %v1382 = vmax.f32 %v1380, %v1381
  %v1383 = vrot.slane %v1382, 2
  %v1384 = vmax.f32 %v1382, %v1383
  %v1385 = vrot.slane %v1384, 1
  %v1386 = vmax.f32 %v1384, %v1385
  %v1387 = vpack.i.bf16 %v1386, %v1386
  %v1388 = vsel %vm1035, %v809, 4286644096
  %v1389 = vunpack.i.l.bf16 %v1388
  %v1390 = vunpack.i.h.bf16 %v1388
  %v1391 = vmax.f32 %v1389, %v1390
  %v1392 = vrot.slane %v1391, 4
  %v1393 = vmax.f32 %v1391, %v1392
  %v1394 = vrot.slane %v1393, 2
  %v1395 = vmax.f32 %v1393, %v1394
  %v1396 = vrot.slane %v1395, 1
  %v1397 = vmax.f32 %v1395, %v1396
  %v1398 = vpack.i.bf16 %v1397, %v1397
  %v1399 = vsel %vm1035, %v810, 4286644096
  %v1400 = vunpack.i.l.bf16 %v1399
  %v1401 = vunpack.i.h.bf16 %v1399
  %v1402 = vmax.f32 %v1400, %v1401
  %v1403 = vrot.slane %v1402, 4
  %v1404 = vmax.f32 %v1402, %v1403
  %v1405 = vrot.slane %v1404, 2
  %v1406 = vmax.f32 %v1404, %v1405
  %v1407 = vrot.slane %v1406, 1
  %v1408 = vmax.f32 %v1406, %v1407
  %v1409 = vpack.i.bf16 %v1408, %v1408
  %v1410 = vsel %vm1035, %v811, 4286644096
  %v1411 = vunpack.i.l.bf16 %v1410
  %v1412 = vunpack.i.h.bf16 %v1410
  %v1413 = vmax.f32 %v1411, %v1412
  %v1414 = vrot.slane %v1413, 4
  %v1415 = vmax.f32 %v1413, %v1414
  %v1416 = vrot.slane %v1415, 2
  %v1417 = vmax.f32 %v1415, %v1416
  %v1418 = vrot.slane %v1417, 1
  %v1419 = vmax.f32 %v1417, %v1418
  %v1420 = vpack.i.bf16 %v1419, %v1419
  %v1421 = vsel %vm1035, %v812, 4286644096
  %v1422 = vunpack.i.l.bf16 %v1421
  %v1423 = vunpack.i.h.bf16 %v1421
  %v1424 = vmax.f32 %v1422, %v1423
  %v1425 = vrot.slane %v1424, 4
  %v1426 = vmax.f32 %v1424, %v1425
  %v1427 = vrot.slane %v1426, 2
  %v1428 = vmax.f32 %v1426, %v1427
  %v1429 = vrot.slane %v1428, 1
  %v1430 = vmax.f32 %v1428, %v1429
  %v1431 = vpack.i.bf16 %v1430, %v1430
  %v1432 = vsel %vm1035, %v813, 4286644096
  %v1433 = vunpack.i.l.bf16 %v1432
  %v1434 = vunpack.i.h.bf16 %v1432
  %v1435 = vmax.f32 %v1433, %v1434
  %v1436 = vrot.slane %v1435, 4
  %v1437 = vmax.f32 %v1435, %v1436
  %v1438 = vrot.slane %v1437, 2
  %v1439 = vmax.f32 %v1437, %v1438
  %v1440 = vrot.slane %v1439, 1
  %v1441 = vmax.f32 %v1439, %v1440
  %v1442 = vpack.i.bf16 %v1441, %v1441
  %v1443 = vsel %vm1035, %v814, 4286644096
  %v1444 = vunpack.i.l.bf16 %v1443
  %v1445 = vunpack.i.h.bf16 %v1443
  %v1446 = vmax.f32 %v1444, %v1445
  %v1447 = vrot.slane %v1446, 4
  %v1448 = vmax.f32 %v1446, %v1447
  %v1449 = vrot.slane %v1448, 2
  %v1450 = vmax.f32 %v1448, %v1449
  %v1451 = vrot.slane %v1450, 1
  %v1452 = vmax.f32 %v1450, %v1451
  %v1453 = vpack.i.bf16 %v1452, %v1452
  %v1454 = vsel %vm1035, %v815, 4286644096
  %v1455 = vunpack.i.l.bf16 %v1454
  %v1456 = vunpack.i.h.bf16 %v1454
  %v1457 = vmax.f32 %v1455, %v1456
  %v1458 = vrot.slane %v1457, 4
  %v1459 = vmax.f32 %v1457, %v1458
  %v1460 = vrot.slane %v1459, 2
  %v1461 = vmax.f32 %v1459, %v1460
  %v1462 = vrot.slane %v1461, 1
  %v1463 = vmax.f32 %v1461, %v1462
  %v1464 = vpack.i.bf16 %v1463, %v1463
  %v1465 = vsel %vm1035, %v816, 4286644096
  %v1466 = vunpack.i.l.bf16 %v1465
  %v1467 = vunpack.i.h.bf16 %v1465
  %v1468 = vmax.f32 %v1466, %v1467
  %v1469 = vrot.slane %v1468, 4
  %v1470 = vmax.f32 %v1468, %v1469
  %v1471 = vrot.slane %v1470, 2
  %v1472 = vmax.f32 %v1470, %v1471
  %v1473 = vrot.slane %v1472, 1
  %v1474 = vmax.f32 %v1472, %v1473
  %v1475 = vpack.i.bf16 %v1474, %v1474
  %v1476 = vsel %vm1035, %v817, 4286644096
  %v1477 = vunpack.i.l.bf16 %v1476
  %v1478 = vunpack.i.h.bf16 %v1476
  %v1479 = vmax.f32 %v1477, %v1478
  %v1480 = vrot.slane %v1479, 4
  %v1481 = vmax.f32 %v1479, %v1480
  %v1482 = vrot.slane %v1481, 2
  %v1483 = vmax.f32 %v1481, %v1482
  %v1484 = vrot.slane %v1483, 1
  %v1485 = vmax.f32 %v1483, %v1484
  %v1486 = vpack.i.bf16 %v1485, %v1485
  %v1487 = vsel %vm1035, %v818, 4286644096
  %v1488 = vunpack.i.l.bf16 %v1487
  %v1489 = vunpack.i.h.bf16 %v1487
  %v1490 = vmax.f32 %v1488, %v1489
  %v1491 = vrot.slane %v1490, 4
  %v1492 = vmax.f32 %v1490, %v1491
  %v1493 = vrot.slane %v1492, 2
  %v1494 = vmax.f32 %v1492, %v1493
  %v1495 = vrot.slane %v1494, 1
  %v1496 = vmax.f32 %v1494, %v1495
  %v1497 = vpack.i.bf16 %v1496, %v1496
  %v1498 = vsel %vm1035, %v819, 4286644096
  %v1499 = vunpack.i.l.bf16 %v1498
  %v1500 = vunpack.i.h.bf16 %v1498
  %v1501 = vmax.f32 %v1499, %v1500
  %v1502 = vrot.slane %v1501, 4
  %v1503 = vmax.f32 %v1501, %v1502
  %v1504 = vrot.slane %v1503, 2
  %v1505 = vmax.f32 %v1503, %v1504
  %v1506 = vrot.slane %v1505, 1
  %v1507 = vmax.f32 %v1505, %v1506
  %v1508 = vpack.i.bf16 %v1507, %v1507
  %v1509 = vsel %vm1035, %v820, 4286644096
  %v1510 = vunpack.i.l.bf16 %v1509
  %v1511 = vunpack.i.h.bf16 %v1509
  %v1512 = vmax.f32 %v1510, %v1511
  %v1513 = vrot.slane %v1512, 4
  %v1514 = vmax.f32 %v1512, %v1513
  %v1515 = vrot.slane %v1514, 2
  %v1516 = vmax.f32 %v1514, %v1515
  %v1517 = vrot.slane %v1516, 1
  %v1518 = vmax.f32 %v1516, %v1517
  %v1519 = vpack.i.bf16 %v1518, %v1518
  %v1520 = vsel %vm1035, %v821, 4286644096
  %v1521 = vunpack.i.l.bf16 %v1520
  %v1522 = vunpack.i.h.bf16 %v1520
  %v1523 = vmax.f32 %v1521, %v1522
  %v1524 = vrot.slane %v1523, 4
  %v1525 = vmax.f32 %v1523, %v1524
  %v1526 = vrot.slane %v1525, 2
  %v1527 = vmax.f32 %v1525, %v1526
  %v1528 = vrot.slane %v1527, 1
  %v1529 = vmax.f32 %v1527, %v1528
  %v1530 = vpack.i.bf16 %v1529, %v1529
  %v1531 = vsel %vm1035, %v822, 4286644096
  %v1532 = vunpack.i.l.bf16 %v1531
  %v1533 = vunpack.i.h.bf16 %v1531
  %v1534 = vmax.f32 %v1532, %v1533
  %v1535 = vrot.slane %v1534, 4
  %v1536 = vmax.f32 %v1534, %v1535
  %v1537 = vrot.slane %v1536, 2
  %v1538 = vmax.f32 %v1536, %v1537
  %v1539 = vrot.slane %v1538, 1
  %v1540 = vmax.f32 %v1538, %v1539
  %v1541 = vpack.i.bf16 %v1540, %v1540
  %v1542 = vsel %vm1035, %v823, 4286644096
  %v1543 = vunpack.i.l.bf16 %v1542
  %v1544 = vunpack.i.h.bf16 %v1542
  %v1545 = vmax.f32 %v1543, %v1544
  %v1546 = vrot.slane %v1545, 4
  %v1547 = vmax.f32 %v1545, %v1546
  %v1548 = vrot.slane %v1547, 2
  %v1549 = vmax.f32 %v1547, %v1548
  %v1550 = vrot.slane %v1549, 1
  %v1551 = vmax.f32 %v1549, %v1550
  %v1552 = vpack.i.bf16 %v1551, %v1551
  %v1553 = vsel %vm1035, %v824, 4286644096
  %v1554 = vunpack.i.l.bf16 %v1553
  %v1555 = vunpack.i.h.bf16 %v1553
  %v1556 = vmax.f32 %v1554, %v1555
  %v1557 = vrot.slane %v1556, 4
  %v1558 = vmax.f32 %v1556, %v1557
  %v1559 = vrot.slane %v1558, 2
  %v1560 = vmax.f32 %v1558, %v1559
  %v1561 = vrot.slane %v1560, 1
  %v1562 = vmax.f32 %v1560, %v1561
  %v1563 = vpack.i.bf16 %v1562, %v1562
  %v1564 = vsel %vm1035, %v825, 4286644096
  %v1565 = vunpack.i.l.bf16 %v1564
  %v1566 = vunpack.i.h.bf16 %v1564
  %v1567 = vmax.f32 %v1565, %v1566
  %v1568 = vrot.slane %v1567, 4
  %v1569 = vmax.f32 %v1567, %v1568
  %v1570 = vrot.slane %v1569, 2
  %v1571 = vmax.f32 %v1569, %v1570
  %v1572 = vrot.slane %v1571, 1
  %v1573 = vmax.f32 %v1571, %v1572
  %v1574 = vpack.i.bf16 %v1573, %v1573
  %v1575 = vsel %vm1035, %v826, 4286644096
  %v1576 = vunpack.i.l.bf16 %v1575
  %v1577 = vunpack.i.h.bf16 %v1575
  %v1578 = vmax.f32 %v1576, %v1577
  %v1579 = vrot.slane %v1578, 4
  %v1580 = vmax.f32 %v1578, %v1579
  %v1581 = vrot.slane %v1580, 2
  %v1582 = vmax.f32 %v1580, %v1581
  %v1583 = vrot.slane %v1582, 1
  %v1584 = vmax.f32 %v1582, %v1583
  %v1585 = vpack.i.bf16 %v1584, %v1584
  %v1586 = vsel %vm1035, %v827, 4286644096
  %v1587 = vunpack.i.l.bf16 %v1586
  %v1588 = vunpack.i.h.bf16 %v1586
  %v1589 = vmax.f32 %v1587, %v1588
  %v1590 = vrot.slane %v1589, 4
  %v1591 = vmax.f32 %v1589, %v1590
  %v1592 = vrot.slane %v1591, 2
  %v1593 = vmax.f32 %v1591, %v1592
  %v1594 = vrot.slane %v1593, 1
  %v1595 = vmax.f32 %v1593, %v1594
  %v1596 = vpack.i.bf16 %v1595, %v1595
  %v1597 = vsel %vm1035, %v828, 4286644096
  %v1598 = vunpack.i.l.bf16 %v1597
  %v1599 = vunpack.i.h.bf16 %v1597
  %v1600 = vmax.f32 %v1598, %v1599
  %v1601 = vrot.slane %v1600, 4
  %v1602 = vmax.f32 %v1600, %v1601
  %v1603 = vrot.slane %v1602, 2
  %v1604 = vmax.f32 %v1602, %v1603
  %v1605 = vrot.slane %v1604, 1
  %v1606 = vmax.f32 %v1604, %v1605
  %v1607 = vpack.i.bf16 %v1606, %v1606
  %v1608 = vsel %vm1035, %v829, 4286644096
  %v1609 = vunpack.i.l.bf16 %v1608
  %v1610 = vunpack.i.h.bf16 %v1608
  %v1611 = vmax.f32 %v1609, %v1610
  %v1612 = vrot.slane %v1611, 4
  %v1613 = vmax.f32 %v1611, %v1612
  %v1614 = vrot.slane %v1613, 2
  %v1615 = vmax.f32 %v1613, %v1614
  %v1616 = vrot.slane %v1615, 1
  %v1617 = vmax.f32 %v1615, %v1616
  %v1618 = vpack.i.bf16 %v1617, %v1617
  %v1619 = vsel %vm1035, %v830, 4286644096
  %v1620 = vunpack.i.l.bf16 %v1619
  %v1621 = vunpack.i.h.bf16 %v1619
  %v1622 = vmax.f32 %v1620, %v1621
  %v1623 = vrot.slane %v1622, 4
  %v1624 = vmax.f32 %v1622, %v1623
  %v1625 = vrot.slane %v1624, 2
  %v1626 = vmax.f32 %v1624, %v1625
  %v1627 = vrot.slane %v1626, 1
  %v1628 = vmax.f32 %v1626, %v1627
  %v1629 = vpack.i.bf16 %v1628, %v1628
  %v1630 = vsel %vm1035, %v831, 4286644096
  %v1631 = vunpack.i.l.bf16 %v1630
  %v1632 = vunpack.i.h.bf16 %v1630
  %v1633 = vmax.f32 %v1631, %v1632
  %v1634 = vrot.slane %v1633, 4
  %v1635 = vmax.f32 %v1633, %v1634
  %v1636 = vrot.slane %v1635, 2
  %v1637 = vmax.f32 %v1635, %v1636
  %v1638 = vrot.slane %v1637, 1
  %v1639 = vmax.f32 %v1637, %v1638
  %v1640 = vpack.i.bf16 %v1639, %v1639
  %v1641 = vsel %vm1035, %v832, 4286644096
  %v1642 = vunpack.i.l.bf16 %v1641
  %v1643 = vunpack.i.h.bf16 %v1641
  %v1644 = vmax.f32 %v1642, %v1643
  %v1645 = vrot.slane %v1644, 4
  %v1646 = vmax.f32 %v1644, %v1645
  %v1647 = vrot.slane %v1646, 2
  %v1648 = vmax.f32 %v1646, %v1647
  %v1649 = vrot.slane %v1648, 1
  %v1650 = vmax.f32 %v1648, %v1649
  %v1651 = vpack.i.bf16 %v1650, %v1650
  %v1652 = vsel %vm1035, %v833, 4286644096
  %v1653 = vunpack.i.l.bf16 %v1652
  %v1654 = vunpack.i.h.bf16 %v1652
  %v1655 = vmax.f32 %v1653, %v1654
  %v1656 = vrot.slane %v1655, 4
  %v1657 = vmax.f32 %v1655, %v1656
  %v1658 = vrot.slane %v1657, 2
  %v1659 = vmax.f32 %v1657, %v1658
  %v1660 = vrot.slane %v1659, 1
  %v1661 = vmax.f32 %v1659, %v1660
  %v1662 = vpack.i.bf16 %v1661, %v1661
  %v1663 = vsel %vm1035, %v834, 4286644096
  %v1664 = vunpack.i.l.bf16 %v1663
  %v1665 = vunpack.i.h.bf16 %v1663
  %v1666 = vmax.f32 %v1664, %v1665
  %v1667 = vrot.slane %v1666, 4
  %v1668 = vmax.f32 %v1666, %v1667
  %v1669 = vrot.slane %v1668, 2
  %v1670 = vmax.f32 %v1668, %v1669
  %v1671 = vrot.slane %v1670, 1
  %v1672 = vmax.f32 %v1670, %v1671
  %v1673 = vpack.i.bf16 %v1672, %v1672
  %v1674 = vsel %vm1035, %v835, 4286644096
  %v1675 = vunpack.i.l.bf16 %v1674
  %v1676 = vunpack.i.h.bf16 %v1674
  %v1677 = vmax.f32 %v1675, %v1676
  %v1678 = vrot.slane %v1677, 4
  %v1679 = vmax.f32 %v1677, %v1678
  %v1680 = vrot.slane %v1679, 2
  %v1681 = vmax.f32 %v1679, %v1680
  %v1682 = vrot.slane %v1681, 1
  %v1683 = vmax.f32 %v1681, %v1682
  %v1684 = vpack.i.bf16 %v1683, %v1683
  %v1685 = vsel %vm1035, %v836, 4286644096
  %v1686 = vunpack.i.l.bf16 %v1685
  %v1687 = vunpack.i.h.bf16 %v1685
  %v1688 = vmax.f32 %v1686, %v1687
  %v1689 = vrot.slane %v1688, 4
  %v1690 = vmax.f32 %v1688, %v1689
  %v1691 = vrot.slane %v1690, 2
  %v1692 = vmax.f32 %v1690, %v1691
  %v1693 = vrot.slane %v1692, 1
  %v1694 = vmax.f32 %v1692, %v1693
  %v1695 = vpack.i.bf16 %v1694, %v1694
  %v1696 = vsel %vm1035, %v837, 4286644096
  %v1697 = vunpack.i.l.bf16 %v1696
  %v1698 = vunpack.i.h.bf16 %v1696
  %v1699 = vmax.f32 %v1697, %v1698
  %v1700 = vrot.slane %v1699, 4
  %v1701 = vmax.f32 %v1699, %v1700
  %v1702 = vrot.slane %v1701, 2
  %v1703 = vmax.f32 %v1701, %v1702
  %v1704 = vrot.slane %v1703, 1
  %v1705 = vmax.f32 %v1703, %v1704
  %v1706 = vpack.i.bf16 %v1705, %v1705
  %v1707 = vsel %vm1035, %v838, 4286644096
  %v1708 = vunpack.i.l.bf16 %v1707
  %v1709 = vunpack.i.h.bf16 %v1707
  %v1710 = vmax.f32 %v1708, %v1709
  %v1711 = vrot.slane %v1710, 4
  %v1712 = vmax.f32 %v1710, %v1711
  %v1713 = vrot.slane %v1712, 2
  %v1714 = vmax.f32 %v1712, %v1713
  %v1715 = vrot.slane %v1714, 1
  %v1716 = vmax.f32 %v1714, %v1715
  %v1717 = vpack.i.bf16 %v1716, %v1716
  %v1718 = vsel %vm1035, %v839, 4286644096
  %v1719 = vunpack.i.l.bf16 %v1718
  %v1720 = vunpack.i.h.bf16 %v1718
  %v1721 = vmax.f32 %v1719, %v1720
  %v1722 = vrot.slane %v1721, 4
  %v1723 = vmax.f32 %v1721, %v1722
  %v1724 = vrot.slane %v1723, 2
  %v1725 = vmax.f32 %v1723, %v1724
  %v1726 = vrot.slane %v1725, 1
  %v1727 = vmax.f32 %v1725, %v1726
  %v1728 = vpack.i.bf16 %v1727, %v1727
  %v1729 = vsel %vm1035, %v840, 4286644096
  %v1730 = vunpack.i.l.bf16 %v1729
  %v1731 = vunpack.i.h.bf16 %v1729
  %v1732 = vmax.f32 %v1730, %v1731
  %v1733 = vrot.slane %v1732, 4
  %v1734 = vmax.f32 %v1732, %v1733
  %v1735 = vrot.slane %v1734, 2
  %v1736 = vmax.f32 %v1734, %v1735
  %v1737 = vrot.slane %v1736, 1
  %v1738 = vmax.f32 %v1736, %v1737
  %v1739 = vpack.i.bf16 %v1738, %v1738
  %v1740 = vsel %vm1035, %v841, 4286644096
  %v1741 = vunpack.i.l.bf16 %v1740
  %v1742 = vunpack.i.h.bf16 %v1740
  %v1743 = vmax.f32 %v1741, %v1742
  %v1744 = vrot.slane %v1743, 4
  %v1745 = vmax.f32 %v1743, %v1744
  %v1746 = vrot.slane %v1745, 2
  %v1747 = vmax.f32 %v1745, %v1746
  %v1748 = vrot.slane %v1747, 1
  %v1749 = vmax.f32 %v1747, %v1748
  %v1750 = vpack.i.bf16 %v1749, %v1749
  %v1751 = vsel %vm1035, %v842, 4286644096
  %v1752 = vunpack.i.l.bf16 %v1751
  %v1753 = vunpack.i.h.bf16 %v1751
  %v1754 = vmax.f32 %v1752, %v1753
  %v1755 = vrot.slane %v1754, 4
  %v1756 = vmax.f32 %v1754, %v1755
  %v1757 = vrot.slane %v1756, 2
  %v1758 = vmax.f32 %v1756, %v1757
  %v1759 = vrot.slane %v1758, 1
  %v1760 = vmax.f32 %v1758, %v1759
  %v1761 = vpack.i.bf16 %v1760, %v1760
  %v1762 = vsel %vm1035, %v843, 4286644096
  %v1763 = vunpack.i.l.bf16 %v1762
  %v1764 = vunpack.i.h.bf16 %v1762
  %v1765 = vmax.f32 %v1763, %v1764
  %v1766 = vrot.slane %v1765, 4
  %v1767 = vmax.f32 %v1765, %v1766
  %v1768 = vrot.slane %v1767, 2
  %v1769 = vmax.f32 %v1767, %v1768
  %v1770 = vrot.slane %v1769, 1
  %v1771 = vmax.f32 %v1769, %v1770
  %v1772 = vpack.i.bf16 %v1771, %v1771
  %v1773 = vsel %vm1035, %v844, 4286644096
  %v1774 = vunpack.i.l.bf16 %v1773
  %v1775 = vunpack.i.h.bf16 %v1773
  %v1776 = vmax.f32 %v1774, %v1775
  %v1777 = vrot.slane %v1776, 4
  %v1778 = vmax.f32 %v1776, %v1777
  %v1779 = vrot.slane %v1778, 2
  %v1780 = vmax.f32 %v1778, %v1779
  %v1781 = vrot.slane %v1780, 1
  %v1782 = vmax.f32 %v1780, %v1781
  %v1783 = vpack.i.bf16 %v1782, %v1782
  %v1784 = vsel %vm1035, %v845, 4286644096
  %v1785 = vunpack.i.l.bf16 %v1784
  %v1786 = vunpack.i.h.bf16 %v1784
  %v1787 = vmax.f32 %v1785, %v1786
  %v1788 = vrot.slane %v1787, 4
  %v1789 = vmax.f32 %v1787, %v1788
  %v1790 = vrot.slane %v1789, 2
  %v1791 = vmax.f32 %v1789, %v1790
  %v1792 = vrot.slane %v1791, 1
  %v1793 = vmax.f32 %v1791, %v1792
  %v1794 = vpack.i.bf16 %v1793, %v1793
  %v1795 = vsel %vm1035, %v846, 4286644096
  %v1796 = vunpack.i.l.bf16 %v1795
  %v1797 = vunpack.i.h.bf16 %v1795
  %v1798 = vmax.f32 %v1796, %v1797
  %v1799 = vrot.slane %v1798, 4
  %v1800 = vmax.f32 %v1798, %v1799
  %v1801 = vrot.slane %v1800, 2
  %v1802 = vmax.f32 %v1800, %v1801
  %v1803 = vrot.slane %v1802, 1
  %v1804 = vmax.f32 %v1802, %v1803
  %v1805 = vpack.i.bf16 %v1804, %v1804
  %v1806 = vsel %vm1035, %v847, 4286644096
  %v1807 = vunpack.i.l.bf16 %v1806
  %v1808 = vunpack.i.h.bf16 %v1806
  %v1809 = vmax.f32 %v1807, %v1808
  %v1810 = vrot.slane %v1809, 4
  %v1811 = vmax.f32 %v1809, %v1810
  %v1812 = vrot.slane %v1811, 2
  %v1813 = vmax.f32 %v1811, %v1812
  %v1814 = vrot.slane %v1813, 1
  %v1815 = vmax.f32 %v1813, %v1814
  %v1816 = vpack.i.bf16 %v1815, %v1815
  %v1817 = vsel %vm1035, %v848, 4286644096
  %v1818 = vunpack.i.l.bf16 %v1817
  %v1819 = vunpack.i.h.bf16 %v1817
  %v1820 = vmax.f32 %v1818, %v1819
  %v1821 = vrot.slane %v1820, 4
  %v1822 = vmax.f32 %v1820, %v1821
  %v1823 = vrot.slane %v1822, 2
  %v1824 = vmax.f32 %v1822, %v1823
  %v1825 = vrot.slane %v1824, 1
  %v1826 = vmax.f32 %v1824, %v1825
  %v1827 = vpack.i.bf16 %v1826, %v1826
  %v1828 = vsel %vm1035, %v849, 4286644096
  %v1829 = vunpack.i.l.bf16 %v1828
  %v1830 = vunpack.i.h.bf16 %v1828
  %v1831 = vmax.f32 %v1829, %v1830
  %v1832 = vrot.slane %v1831, 4
  %v1833 = vmax.f32 %v1831, %v1832
  %v1834 = vrot.slane %v1833, 2
  %v1835 = vmax.f32 %v1833, %v1834
  %v1836 = vrot.slane %v1835, 1
  %v1837 = vmax.f32 %v1835, %v1836
  %v1838 = vpack.i.bf16 %v1837, %v1837
  %v1839 = vsel %vm1035, %v850, 4286644096
  %v1840 = vunpack.i.l.bf16 %v1839
  %v1841 = vunpack.i.h.bf16 %v1839
  %v1842 = vmax.f32 %v1840, %v1841
  %v1843 = vrot.slane %v1842, 4
  %v1844 = vmax.f32 %v1842, %v1843
  %v1845 = vrot.slane %v1844, 2
  %v1846 = vmax.f32 %v1844, %v1845
  %v1847 = vrot.slane %v1846, 1
  %v1848 = vmax.f32 %v1846, %v1847
  %v1849 = vpack.i.bf16 %v1848, %v1848
  %v1850 = vsel %vm1035, %v851, 4286644096
  %v1851 = vunpack.i.l.bf16 %v1850
  %v1852 = vunpack.i.h.bf16 %v1850
  %v1853 = vmax.f32 %v1851, %v1852
  %v1854 = vrot.slane %v1853, 4
  %v1855 = vmax.f32 %v1853, %v1854
  %v1856 = vrot.slane %v1855, 2
  %v1857 = vmax.f32 %v1855, %v1856
  %v1858 = vrot.slane %v1857, 1
  %v1859 = vmax.f32 %v1857, %v1858
  %v1860 = vpack.i.bf16 %v1859, %v1859
  %v1861 = vsel %vm1035, %v852, 4286644096
  %v1862 = vunpack.i.l.bf16 %v1861
  %v1863 = vunpack.i.h.bf16 %v1861
  %v1864 = vmax.f32 %v1862, %v1863
  %v1865 = vrot.slane %v1864, 4
  %v1866 = vmax.f32 %v1864, %v1865
  %v1867 = vrot.slane %v1866, 2
  %v1868 = vmax.f32 %v1866, %v1867
  %v1869 = vrot.slane %v1868, 1
  %v1870 = vmax.f32 %v1868, %v1869
  %v1871 = vpack.i.bf16 %v1870, %v1870
  %v1872 = vsel %vm1035, %v853, 4286644096
  %v1873 = vunpack.i.l.bf16 %v1872
  %v1874 = vunpack.i.h.bf16 %v1872
  %v1875 = vmax.f32 %v1873, %v1874
  %v1876 = vrot.slane %v1875, 4
  %v1877 = vmax.f32 %v1875, %v1876
  %v1878 = vrot.slane %v1877, 2
  %v1879 = vmax.f32 %v1877, %v1878
  %v1880 = vrot.slane %v1879, 1
  %v1881 = vmax.f32 %v1879, %v1880
  %v1882 = vpack.i.bf16 %v1881, %v1881
  %v1883 = vsel %vm1035, %v854, 4286644096
  %v1884 = vunpack.i.l.bf16 %v1883
  %v1885 = vunpack.i.h.bf16 %v1883
  %v1886 = vmax.f32 %v1884, %v1885
  %v1887 = vrot.slane %v1886, 4
  %v1888 = vmax.f32 %v1886, %v1887
  %v1889 = vrot.slane %v1888, 2
  %v1890 = vmax.f32 %v1888, %v1889
  %v1891 = vrot.slane %v1890, 1
  %v1892 = vmax.f32 %v1890, %v1891
  %v1893 = vpack.i.bf16 %v1892, %v1892
  %v1894 = vsel %vm1035, %v855, 4286644096
  %v1895 = vunpack.i.l.bf16 %v1894
  %v1896 = vunpack.i.h.bf16 %v1894
  %v1897 = vmax.f32 %v1895, %v1896
  %v1898 = vrot.slane %v1897, 4
  %v1899 = vmax.f32 %v1897, %v1898
  %v1900 = vrot.slane %v1899, 2
  %v1901 = vmax.f32 %v1899, %v1900
  %v1902 = vrot.slane %v1901, 1
  %v1903 = vmax.f32 %v1901, %v1902
  %v1904 = vpack.i.bf16 %v1903, %v1903
  %v1905 = vsel %vm1035, %v856, 4286644096
  %v1906 = vunpack.i.l.bf16 %v1905
  %v1907 = vunpack.i.h.bf16 %v1905
  %v1908 = vmax.f32 %v1906, %v1907
  %v1909 = vrot.slane %v1908, 4
  %v1910 = vmax.f32 %v1908, %v1909
  %v1911 = vrot.slane %v1910, 2
  %v1912 = vmax.f32 %v1910, %v1911
  %v1913 = vrot.slane %v1912, 1
  %v1914 = vmax.f32 %v1912, %v1913
  %v1915 = vpack.i.bf16 %v1914, %v1914
  %v1916 = vsel %vm1035, %v857, 4286644096
  %v1917 = vunpack.i.l.bf16 %v1916
  %v1918 = vunpack.i.h.bf16 %v1916
  %v1919 = vmax.f32 %v1917, %v1918
  %v1920 = vrot.slane %v1919, 4
  %v1921 = vmax.f32 %v1919, %v1920
  %v1922 = vrot.slane %v1921, 2
  %v1923 = vmax.f32 %v1921, %v1922
  %v1924 = vrot.slane %v1923, 1
  %v1925 = vmax.f32 %v1923, %v1924
  %v1926 = vpack.i.bf16 %v1925, %v1925
  %v1927 = vsel %vm1035, %v858, 4286644096
  %v1928 = vunpack.i.l.bf16 %v1927
  %v1929 = vunpack.i.h.bf16 %v1927
  %v1930 = vmax.f32 %v1928, %v1929
  %v1931 = vrot.slane %v1930, 4
  %v1932 = vmax.f32 %v1930, %v1931
  %v1933 = vrot.slane %v1932, 2
  %v1934 = vmax.f32 %v1932, %v1933
  %v1935 = vrot.slane %v1934, 1
  %v1936 = vmax.f32 %v1934, %v1935
  %v1937 = vpack.i.bf16 %v1936, %v1936
  %v1938 = vsel %vm1035, %v859, 4286644096
  %v1939 = vunpack.i.l.bf16 %v1938
  %v1940 = vunpack.i.h.bf16 %v1938
  %v1941 = vmax.f32 %v1939, %v1940
  %v1942 = vrot.slane %v1941, 4
  %v1943 = vmax.f32 %v1941, %v1942
  %v1944 = vrot.slane %v1943, 2
  %v1945 = vmax.f32 %v1943, %v1944
  %v1946 = vrot.slane %v1945, 1
  %v1947 = vmax.f32 %v1945, %v1946
  %v1948 = vpack.i.bf16 %v1947, %v1947
  %v1949 = vsel %vm1035, %v860, 4286644096
  %v1950 = vunpack.i.l.bf16 %v1949
  %v1951 = vunpack.i.h.bf16 %v1949
  %v1952 = vmax.f32 %v1950, %v1951
  %v1953 = vrot.slane %v1952, 4
  %v1954 = vmax.f32 %v1952, %v1953
  %v1955 = vrot.slane %v1954, 2
  %v1956 = vmax.f32 %v1954, %v1955
  %v1957 = vrot.slane %v1956, 1
  %v1958 = vmax.f32 %v1956, %v1957
  %v1959 = vpack.i.bf16 %v1958, %v1958
  %v1960 = vsel %vm1035, %v861, 4286644096
  %v1961 = vunpack.i.l.bf16 %v1960
  %v1962 = vunpack.i.h.bf16 %v1960
  %v1963 = vmax.f32 %v1961, %v1962
  %v1964 = vrot.slane %v1963, 4
  %v1965 = vmax.f32 %v1963, %v1964
  %v1966 = vrot.slane %v1965, 2
  %v1967 = vmax.f32 %v1965, %v1966
  %v1968 = vrot.slane %v1967, 1
  %v1969 = vmax.f32 %v1967, %v1968
  %v1970 = vpack.i.bf16 %v1969, %v1969
  %v1971 = vsel %vm1035, %v862, 4286644096
  %v1972 = vunpack.i.l.bf16 %v1971
  %v1973 = vunpack.i.h.bf16 %v1971
  %v1974 = vmax.f32 %v1972, %v1973
  %v1975 = vrot.slane %v1974, 4
  %v1976 = vmax.f32 %v1974, %v1975
  %v1977 = vrot.slane %v1976, 2
  %v1978 = vmax.f32 %v1976, %v1977
  %v1979 = vrot.slane %v1978, 1
  %v1980 = vmax.f32 %v1978, %v1979
  %v1981 = vpack.i.bf16 %v1980, %v1980
  %v1982 = vsel %vm1035, %v863, 4286644096
  %v1983 = vunpack.i.l.bf16 %v1982
  %v1984 = vunpack.i.h.bf16 %v1982
  %v1985 = vmax.f32 %v1983, %v1984
  %v1986 = vrot.slane %v1985, 4
  %v1987 = vmax.f32 %v1985, %v1986
  %v1988 = vrot.slane %v1987, 2
  %v1989 = vmax.f32 %v1987, %v1988
  %v1990 = vrot.slane %v1989, 1
  %v1991 = vmax.f32 %v1989, %v1990
  %v1992 = vpack.i.bf16 %v1991, %v1991
  %v1993 = vsel %vm1035, %v864, 4286644096
  %v1994 = vunpack.i.l.bf16 %v1993
  %v1995 = vunpack.i.h.bf16 %v1993
  %v1996 = vmax.f32 %v1994, %v1995
  %v1997 = vrot.slane %v1996, 4
  %v1998 = vmax.f32 %v1996, %v1997
  %v1999 = vrot.slane %v1998, 2
  %v2000 = vmax.f32 %v1998, %v1999
  %v2001 = vrot.slane %v2000, 1
  %v2002 = vmax.f32 %v2000, %v2001
  %v2003 = vpack.i.bf16 %v2002, %v2002
  %v2004 = vsel %vm1035, %v865, 4286644096
  %v2005 = vunpack.i.l.bf16 %v2004
  %v2006 = vunpack.i.h.bf16 %v2004
  %v2007 = vmax.f32 %v2005, %v2006
  %v2008 = vrot.slane %v2007, 4
  %v2009 = vmax.f32 %v2007, %v2008
  %v2010 = vrot.slane %v2009, 2
  %v2011 = vmax.f32 %v2009, %v2010
  %v2012 = vrot.slane %v2011, 1
  %v2013 = vmax.f32 %v2011, %v2012
  %v2014 = vpack.i.bf16 %v2013, %v2013
  %v2015 = vsel %vm1035, %v866, 4286644096
  %v2016 = vunpack.i.l.bf16 %v2015
  %v2017 = vunpack.i.h.bf16 %v2015
  %v2018 = vmax.f32 %v2016, %v2017
  %v2019 = vrot.slane %v2018, 4
  %v2020 = vmax.f32 %v2018, %v2019
  %v2021 = vrot.slane %v2020, 2
  %v2022 = vmax.f32 %v2020, %v2021
  %v2023 = vrot.slane %v2022, 1
  %v2024 = vmax.f32 %v2022, %v2023
  %v2025 = vpack.i.bf16 %v2024, %v2024
  %v2026 = vsel %vm1035, %v867, 4286644096
  %v2027 = vunpack.i.l.bf16 %v2026
  %v2028 = vunpack.i.h.bf16 %v2026
  %v2029 = vmax.f32 %v2027, %v2028
  %v2030 = vrot.slane %v2029, 4
  %v2031 = vmax.f32 %v2029, %v2030
  %v2032 = vrot.slane %v2031, 2
  %v2033 = vmax.f32 %v2031, %v2032
  %v2034 = vrot.slane %v2033, 1
  %v2035 = vmax.f32 %v2033, %v2034
  %v2036 = vpack.i.bf16 %v2035, %v2035
  %v2037 = vsel %vm1035, %v868, 4286644096
  %v2038 = vunpack.i.l.bf16 %v2037
  %v2039 = vunpack.i.h.bf16 %v2037
  %v2040 = vmax.f32 %v2038, %v2039
  %v2041 = vrot.slane %v2040, 4
  %v2042 = vmax.f32 %v2040, %v2041
  %v2043 = vrot.slane %v2042, 2
  %v2044 = vmax.f32 %v2042, %v2043
  %v2045 = vrot.slane %v2044, 1
  %v2046 = vmax.f32 %v2044, %v2045
  %v2047 = vpack.i.bf16 %v2046, %v2046
  %v2048 = vsel %vm1035, %v869, 4286644096
  %v2049 = vunpack.i.l.bf16 %v2048
  %v2050 = vunpack.i.h.bf16 %v2048
  %v2051 = vmax.f32 %v2049, %v2050
  %v2052 = vrot.slane %v2051, 4
  %v2053 = vmax.f32 %v2051, %v2052
  %v2054 = vrot.slane %v2053, 2
  %v2055 = vmax.f32 %v2053, %v2054
  %v2056 = vrot.slane %v2055, 1
  %v2057 = vmax.f32 %v2055, %v2056
  %v2058 = vpack.i.bf16 %v2057, %v2057
  %v2059 = vsel %vm1035, %v870, 4286644096
  %v2060 = vunpack.i.l.bf16 %v2059
  %v2061 = vunpack.i.h.bf16 %v2059
  %v2062 = vmax.f32 %v2060, %v2061
  %v2063 = vrot.slane %v2062, 4
  %v2064 = vmax.f32 %v2062, %v2063
  %v2065 = vrot.slane %v2064, 2
  %v2066 = vmax.f32 %v2064, %v2065
  %v2067 = vrot.slane %v2066, 1
  %v2068 = vmax.f32 %v2066, %v2067
  %v2069 = vpack.i.bf16 %v2068, %v2068
  %v2070 = vsel %vm1035, %v871, 4286644096
  %v2071 = vunpack.i.l.bf16 %v2070
  %v2072 = vunpack.i.h.bf16 %v2070
  %v2073 = vmax.f32 %v2071, %v2072
  %v2074 = vrot.slane %v2073, 4
  %v2075 = vmax.f32 %v2073, %v2074
  %v2076 = vrot.slane %v2075, 2
  %v2077 = vmax.f32 %v2075, %v2076
  %v2078 = vrot.slane %v2077, 1
  %v2079 = vmax.f32 %v2077, %v2078
  %v2080 = vpack.i.bf16 %v2079, %v2079
  %v2081 = vsel %vm1035, %v872, 4286644096
  %v2082 = vunpack.i.l.bf16 %v2081
  %v2083 = vunpack.i.h.bf16 %v2081
  %v2084 = vmax.f32 %v2082, %v2083
  %v2085 = vrot.slane %v2084, 4
  %v2086 = vmax.f32 %v2084, %v2085
  %v2087 = vrot.slane %v2086, 2
  %v2088 = vmax.f32 %v2086, %v2087
  %v2089 = vrot.slane %v2088, 1
  %v2090 = vmax.f32 %v2088, %v2089
  %v2091 = vpack.i.bf16 %v2090, %v2090
  %v2092 = vsel %vm1035, %v873, 4286644096
  %v2093 = vunpack.i.l.bf16 %v2092
  %v2094 = vunpack.i.h.bf16 %v2092
  %v2095 = vmax.f32 %v2093, %v2094
  %v2096 = vrot.slane %v2095, 4
  %v2097 = vmax.f32 %v2095, %v2096
  %v2098 = vrot.slane %v2097, 2
  %v2099 = vmax.f32 %v2097, %v2098
  %v2100 = vrot.slane %v2099, 1
  %v2101 = vmax.f32 %v2099, %v2100
  %v2102 = vpack.i.bf16 %v2101, %v2101
  %v2103 = vsel %vm1035, %v874, 4286644096
  %v2104 = vunpack.i.l.bf16 %v2103
  %v2105 = vunpack.i.h.bf16 %v2103
  %v2106 = vmax.f32 %v2104, %v2105
  %v2107 = vrot.slane %v2106, 4
  %v2108 = vmax.f32 %v2106, %v2107
  %v2109 = vrot.slane %v2108, 2
  %v2110 = vmax.f32 %v2108, %v2109
  %v2111 = vrot.slane %v2110, 1
  %v2112 = vmax.f32 %v2110, %v2111
  %v2113 = vpack.i.bf16 %v2112, %v2112
  %v2114 = vsel %vm1035, %v875, 4286644096
  %v2115 = vunpack.i.l.bf16 %v2114
  %v2116 = vunpack.i.h.bf16 %v2114
  %v2117 = vmax.f32 %v2115, %v2116
  %v2118 = vrot.slane %v2117, 4
  %v2119 = vmax.f32 %v2117, %v2118
  %v2120 = vrot.slane %v2119, 2
  %v2121 = vmax.f32 %v2119, %v2120
  %v2122 = vrot.slane %v2121, 1
  %v2123 = vmax.f32 %v2121, %v2122
  %v2124 = vpack.i.bf16 %v2123, %v2123
  %v2125 = vsel %vm1035, %v876, 4286644096
  %v2126 = vunpack.i.l.bf16 %v2125
  %v2127 = vunpack.i.h.bf16 %v2125
  %v2128 = vmax.f32 %v2126, %v2127
  %v2129 = vrot.slane %v2128, 4
  %v2130 = vmax.f32 %v2128, %v2129
  %v2131 = vrot.slane %v2130, 2
  %v2132 = vmax.f32 %v2130, %v2131
  %v2133 = vrot.slane %v2132, 1
  %v2134 = vmax.f32 %v2132, %v2133
  %v2135 = vpack.i.bf16 %v2134, %v2134
  %v2136 = vsel %vm1035, %v877, 4286644096
  %v2137 = vunpack.i.l.bf16 %v2136
  %v2138 = vunpack.i.h.bf16 %v2136
  %v2139 = vmax.f32 %v2137, %v2138
  %v2140 = vrot.slane %v2139, 4
  %v2141 = vmax.f32 %v2139, %v2140
  %v2142 = vrot.slane %v2141, 2
  %v2143 = vmax.f32 %v2141, %v2142
  %v2144 = vrot.slane %v2143, 1
  %v2145 = vmax.f32 %v2143, %v2144
  %v2146 = vpack.i.bf16 %v2145, %v2145
  %v2147 = vsel %vm1035, %v878, 4286644096
  %v2148 = vunpack.i.l.bf16 %v2147
  %v2149 = vunpack.i.h.bf16 %v2147
  %v2150 = vmax.f32 %v2148, %v2149
  %v2151 = vrot.slane %v2150, 4
  %v2152 = vmax.f32 %v2150, %v2151
  %v2153 = vrot.slane %v2152, 2
  %v2154 = vmax.f32 %v2152, %v2153
  %v2155 = vrot.slane %v2154, 1
  %v2156 = vmax.f32 %v2154, %v2155
  %v2157 = vpack.i.bf16 %v2156, %v2156
  %v2158 = vsel %vm1035, %v879, 4286644096
  %v2159 = vunpack.i.l.bf16 %v2158
  %v2160 = vunpack.i.h.bf16 %v2158
  %v2161 = vmax.f32 %v2159, %v2160
  %v2162 = vrot.slane %v2161, 4
  %v2163 = vmax.f32 %v2161, %v2162
  %v2164 = vrot.slane %v2163, 2
  %v2165 = vmax.f32 %v2163, %v2164
  %v2166 = vrot.slane %v2165, 1
  %v2167 = vmax.f32 %v2165, %v2166
  %v2168 = vpack.i.bf16 %v2167, %v2167
  %v2169 = vsel %vm1035, %v880, 4286644096
  %v2170 = vunpack.i.l.bf16 %v2169
  %v2171 = vunpack.i.h.bf16 %v2169
  %v2172 = vmax.f32 %v2170, %v2171
  %v2173 = vrot.slane %v2172, 4
  %v2174 = vmax.f32 %v2172, %v2173
  %v2175 = vrot.slane %v2174, 2
  %v2176 = vmax.f32 %v2174, %v2175
  %v2177 = vrot.slane %v2176, 1
  %v2178 = vmax.f32 %v2176, %v2177
  %v2179 = vpack.i.bf16 %v2178, %v2178
  %v2180 = vsel %vm1035, %v881, 4286644096
  %v2181 = vunpack.i.l.bf16 %v2180
  %v2182 = vunpack.i.h.bf16 %v2180
  %v2183 = vmax.f32 %v2181, %v2182
  %v2184 = vrot.slane %v2183, 4
  %v2185 = vmax.f32 %v2183, %v2184
  %v2186 = vrot.slane %v2185, 2
  %v2187 = vmax.f32 %v2185, %v2186
  %v2188 = vrot.slane %v2187, 1
  %v2189 = vmax.f32 %v2187, %v2188
  %v2190 = vpack.i.bf16 %v2189, %v2189
  %v2191 = vsel %vm1035, %v882, 4286644096
  %v2192 = vunpack.i.l.bf16 %v2191
  %v2193 = vunpack.i.h.bf16 %v2191
  %v2194 = vmax.f32 %v2192, %v2193
  %v2195 = vrot.slane %v2194, 4
  %v2196 = vmax.f32 %v2194, %v2195
  %v2197 = vrot.slane %v2196, 2
  %v2198 = vmax.f32 %v2196, %v2197
  %v2199 = vrot.slane %v2198, 1
  %v2200 = vmax.f32 %v2198, %v2199
  %v2201 = vpack.i.bf16 %v2200, %v2200
  %v2202 = vsel %vm1035, %v883, 4286644096
  %v2203 = vunpack.i.l.bf16 %v2202
  %v2204 = vunpack.i.h.bf16 %v2202
  %v2205 = vmax.f32 %v2203, %v2204
  %v2206 = vrot.slane %v2205, 4
  %v2207 = vmax.f32 %v2205, %v2206
  %v2208 = vrot.slane %v2207, 2
  %v2209 = vmax.f32 %v2207, %v2208
  %v2210 = vrot.slane %v2209, 1
  %v2211 = vmax.f32 %v2209, %v2210
  %v2212 = vpack.i.bf16 %v2211, %v2211
  %v2213 = vsel %vm1035, %v884, 4286644096
  %v2214 = vunpack.i.l.bf16 %v2213
  %v2215 = vunpack.i.h.bf16 %v2213
  %v2216 = vmax.f32 %v2214, %v2215
  %v2217 = vrot.slane %v2216, 4
  %v2218 = vmax.f32 %v2216, %v2217
  %v2219 = vrot.slane %v2218, 2
  %v2220 = vmax.f32 %v2218, %v2219
  %v2221 = vrot.slane %v2220, 1
  %v2222 = vmax.f32 %v2220, %v2221
  %v2223 = vpack.i.bf16 %v2222, %v2222
  %v2224 = vsel %vm1035, %v885, 4286644096
  %v2225 = vunpack.i.l.bf16 %v2224
  %v2226 = vunpack.i.h.bf16 %v2224
  %v2227 = vmax.f32 %v2225, %v2226
  %v2228 = vrot.slane %v2227, 4
  %v2229 = vmax.f32 %v2227, %v2228
  %v2230 = vrot.slane %v2229, 2
  %v2231 = vmax.f32 %v2229, %v2230
  %v2232 = vrot.slane %v2231, 1
  %v2233 = vmax.f32 %v2231, %v2232
  %v2234 = vpack.i.bf16 %v2233, %v2233
  %v2235 = vsel %vm1035, %v886, 4286644096
  %v2236 = vunpack.i.l.bf16 %v2235
  %v2237 = vunpack.i.h.bf16 %v2235
  %v2238 = vmax.f32 %v2236, %v2237
  %v2239 = vrot.slane %v2238, 4
  %v2240 = vmax.f32 %v2238, %v2239
  %v2241 = vrot.slane %v2240, 2
  %v2242 = vmax.f32 %v2240, %v2241
  %v2243 = vrot.slane %v2242, 1
  %v2244 = vmax.f32 %v2242, %v2243
  %v2245 = vpack.i.bf16 %v2244, %v2244
  %v2246 = vsel %vm1035, %v887, 4286644096
  %v2247 = vunpack.i.l.bf16 %v2246
  %v2248 = vunpack.i.h.bf16 %v2246
  %v2249 = vmax.f32 %v2247, %v2248
  %v2250 = vrot.slane %v2249, 4
  %v2251 = vmax.f32 %v2249, %v2250
  %v2252 = vrot.slane %v2251, 2
  %v2253 = vmax.f32 %v2251, %v2252
  %v2254 = vrot.slane %v2253, 1
  %v2255 = vmax.f32 %v2253, %v2254
  %v2256 = vpack.i.bf16 %v2255, %v2255
  %v2257 = vsel %vm1035, %v888, 4286644096
  %v2258 = vunpack.i.l.bf16 %v2257
  %v2259 = vunpack.i.h.bf16 %v2257
  %v2260 = vmax.f32 %v2258, %v2259
  %v2261 = vrot.slane %v2260, 4
  %v2262 = vmax.f32 %v2260, %v2261
  %v2263 = vrot.slane %v2262, 2
  %v2264 = vmax.f32 %v2262, %v2263
  %v2265 = vrot.slane %v2264, 1
  %v2266 = vmax.f32 %v2264, %v2265
  %v2267 = vpack.i.bf16 %v2266, %v2266
  %v2268 = vsel %vm1035, %v889, 4286644096
  %v2269 = vunpack.i.l.bf16 %v2268
  %v2270 = vunpack.i.h.bf16 %v2268
  %v2271 = vmax.f32 %v2269, %v2270
  %v2272 = vrot.slane %v2271, 4
  %v2273 = vmax.f32 %v2271, %v2272
  %v2274 = vrot.slane %v2273, 2
  %v2275 = vmax.f32 %v2273, %v2274
  %v2276 = vrot.slane %v2275, 1
  %v2277 = vmax.f32 %v2275, %v2276
  %v2278 = vpack.i.bf16 %v2277, %v2277
  %v2279 = vsel %vm1035, %v890, 4286644096
  %v2280 = vunpack.i.l.bf16 %v2279
  %v2281 = vunpack.i.h.bf16 %v2279
  %v2282 = vmax.f32 %v2280, %v2281
  %v2283 = vrot.slane %v2282, 4
  %v2284 = vmax.f32 %v2282, %v2283
  %v2285 = vrot.slane %v2284, 2
  %v2286 = vmax.f32 %v2284, %v2285
  %v2287 = vrot.slane %v2286, 1
  %v2288 = vmax.f32 %v2286, %v2287
  %v2289 = vpack.i.bf16 %v2288, %v2288
  %v2290 = vsel %vm1035, %v891, 4286644096
  %v2291 = vunpack.i.l.bf16 %v2290
  %v2292 = vunpack.i.h.bf16 %v2290
  %v2293 = vmax.f32 %v2291, %v2292
  %v2294 = vrot.slane %v2293, 4
  %v2295 = vmax.f32 %v2293, %v2294
  %v2296 = vrot.slane %v2295, 2
  %v2297 = vmax.f32 %v2295, %v2296
  %v2298 = vrot.slane %v2297, 1
  %v2299 = vmax.f32 %v2297, %v2298
  %v2300 = vpack.i.bf16 %v2299, %v2299
  %v2301 = vsel %vm1035, %v892, 4286644096
  %v2302 = vunpack.i.l.bf16 %v2301
  %v2303 = vunpack.i.h.bf16 %v2301
  %v2304 = vmax.f32 %v2302, %v2303
  %v2305 = vrot.slane %v2304, 4
  %v2306 = vmax.f32 %v2304, %v2305
  %v2307 = vrot.slane %v2306, 2
  %v2308 = vmax.f32 %v2306, %v2307
  %v2309 = vrot.slane %v2308, 1
  %v2310 = vmax.f32 %v2308, %v2309
  %v2311 = vpack.i.bf16 %v2310, %v2310
  %v2312 = vsel %vm1035, %v893, 4286644096
  %v2313 = vunpack.i.l.bf16 %v2312
  %v2314 = vunpack.i.h.bf16 %v2312
  %v2315 = vmax.f32 %v2313, %v2314
  %v2316 = vrot.slane %v2315, 4
  %v2317 = vmax.f32 %v2315, %v2316
  %v2318 = vrot.slane %v2317, 2
  %v2319 = vmax.f32 %v2317, %v2318
  %v2320 = vrot.slane %v2319, 1
  %v2321 = vmax.f32 %v2319, %v2320
  %v2322 = vpack.i.bf16 %v2321, %v2321
  %v2323 = vsel %vm1035, %v894, 4286644096
  %v2324 = vunpack.i.l.bf16 %v2323
  %v2325 = vunpack.i.h.bf16 %v2323
  %v2326 = vmax.f32 %v2324, %v2325
  %v2327 = vrot.slane %v2326, 4
  %v2328 = vmax.f32 %v2326, %v2327
  %v2329 = vrot.slane %v2328, 2
  %v2330 = vmax.f32 %v2328, %v2329
  %v2331 = vrot.slane %v2330, 1
  %v2332 = vmax.f32 %v2330, %v2331
  %v2333 = vpack.i.bf16 %v2332, %v2332
  %v2334 = vsel %vm1035, %v895, 4286644096
  %v2335 = vunpack.i.l.bf16 %v2334
  %v2336 = vunpack.i.h.bf16 %v2334
  %v2337 = vmax.f32 %v2335, %v2336
  %v2338 = vrot.slane %v2337, 4
  %v2339 = vmax.f32 %v2337, %v2338
  %v2340 = vrot.slane %v2339, 2
  %v2341 = vmax.f32 %v2339, %v2340
  %v2342 = vrot.slane %v2341, 1
  %v2343 = vmax.f32 %v2341, %v2342
  %v2344 = vpack.i.bf16 %v2343, %v2343
  %v2345 = vsel %vm1035, %v896, 4286644096
  %v2346 = vunpack.i.l.bf16 %v2345
  %v2347 = vunpack.i.h.bf16 %v2345
  %v2348 = vmax.f32 %v2346, %v2347
  %v2349 = vrot.slane %v2348, 4
  %v2350 = vmax.f32 %v2348, %v2349
  %v2351 = vrot.slane %v2350, 2
  %v2352 = vmax.f32 %v2350, %v2351
  %v2353 = vrot.slane %v2352, 1
  %v2354 = vmax.f32 %v2352, %v2353
  %v2355 = vpack.i.bf16 %v2354, %v2354
  %v2356 = vsel %vm1035, %v897, 4286644096
  %v2357 = vunpack.i.l.bf16 %v2356
  %v2358 = vunpack.i.h.bf16 %v2356
  %v2359 = vmax.f32 %v2357, %v2358
  %v2360 = vrot.slane %v2359, 4
  %v2361 = vmax.f32 %v2359, %v2360
  %v2362 = vrot.slane %v2361, 2
  %v2363 = vmax.f32 %v2361, %v2362
  %v2364 = vrot.slane %v2363, 1
  %v2365 = vmax.f32 %v2363, %v2364
  %v2366 = vpack.i.bf16 %v2365, %v2365
  %v2367 = vsel %vm1035, %v898, 4286644096
  %v2368 = vunpack.i.l.bf16 %v2367
  %v2369 = vunpack.i.h.bf16 %v2367
  %v2370 = vmax.f32 %v2368, %v2369
  %v2371 = vrot.slane %v2370, 4
  %v2372 = vmax.f32 %v2370, %v2371
  %v2373 = vrot.slane %v2372, 2
  %v2374 = vmax.f32 %v2372, %v2373
  %v2375 = vrot.slane %v2374, 1
  %v2376 = vmax.f32 %v2374, %v2375
  %v2377 = vpack.i.bf16 %v2376, %v2376
  %v2378 = vsel %vm1035, %v899, 4286644096
  %v2379 = vunpack.i.l.bf16 %v2378
  %v2380 = vunpack.i.h.bf16 %v2378
  %v2381 = vmax.f32 %v2379, %v2380
  %v2382 = vrot.slane %v2381, 4
  %v2383 = vmax.f32 %v2381, %v2382
  %v2384 = vrot.slane %v2383, 2
  %v2385 = vmax.f32 %v2383, %v2384
  %v2386 = vrot.slane %v2385, 1
  %v2387 = vmax.f32 %v2385, %v2386
  %v2388 = vpack.i.bf16 %v2387, %v2387
  %v2389 = vsel %vm1035, %v900, 4286644096
  %v2390 = vunpack.i.l.bf16 %v2389
  %v2391 = vunpack.i.h.bf16 %v2389
  %v2392 = vmax.f32 %v2390, %v2391
  %v2393 = vrot.slane %v2392, 4
  %v2394 = vmax.f32 %v2392, %v2393
  %v2395 = vrot.slane %v2394, 2
  %v2396 = vmax.f32 %v2394, %v2395
  %v2397 = vrot.slane %v2396, 1
  %v2398 = vmax.f32 %v2396, %v2397
  %v2399 = vpack.i.bf16 %v2398, %v2398
  %v2400 = vsel %vm1035, %v901, 4286644096
  %v2401 = vunpack.i.l.bf16 %v2400
  %v2402 = vunpack.i.h.bf16 %v2400
  %v2403 = vmax.f32 %v2401, %v2402
  %v2404 = vrot.slane %v2403, 4
  %v2405 = vmax.f32 %v2403, %v2404
  %v2406 = vrot.slane %v2405, 2
  %v2407 = vmax.f32 %v2405, %v2406
  %v2408 = vrot.slane %v2407, 1
  %v2409 = vmax.f32 %v2407, %v2408
  %v2410 = vpack.i.bf16 %v2409, %v2409
  %v2411 = vsel %vm1035, %v902, 4286644096
  %v2412 = vunpack.i.l.bf16 %v2411
  %v2413 = vunpack.i.h.bf16 %v2411
  %v2414 = vmax.f32 %v2412, %v2413
  %v2415 = vrot.slane %v2414, 4
  %v2416 = vmax.f32 %v2414, %v2415
  %v2417 = vrot.slane %v2416, 2
  %v2418 = vmax.f32 %v2416, %v2417
  %v2419 = vrot.slane %v2418, 1
  %v2420 = vmax.f32 %v2418, %v2419
  %v2421 = vpack.i.bf16 %v2420, %v2420
  %v2422 = vsel %vm1035, %v903, 4286644096
  %v2423 = vunpack.i.l.bf16 %v2422
  %v2424 = vunpack.i.h.bf16 %v2422
  %v2425 = vmax.f32 %v2423, %v2424
  %v2426 = vrot.slane %v2425, 4
  %v2427 = vmax.f32 %v2425, %v2426
  %v2428 = vrot.slane %v2427, 2
  %v2429 = vmax.f32 %v2427, %v2428
  %v2430 = vrot.slane %v2429, 1
  %v2431 = vmax.f32 %v2429, %v2430
  %v2432 = vpack.i.bf16 %v2431, %v2431
  %v2433 = vsel %vm1035, %v904, 4286644096
  %v2434 = vunpack.i.l.bf16 %v2433
  %v2435 = vunpack.i.h.bf16 %v2433
  %v2436 = vmax.f32 %v2434, %v2435
  %v2437 = vrot.slane %v2436, 4
  %v2438 = vmax.f32 %v2436, %v2437
  %v2439 = vrot.slane %v2438, 2
  %v2440 = vmax.f32 %v2438, %v2439
  %v2441 = vrot.slane %v2440, 1
  %v2442 = vmax.f32 %v2440, %v2441
  %v2443 = vpack.i.bf16 %v2442, %v2442
  %v2572 = vunpack.c.l.b16 %v1046
  %v2573 = vunpack.c.l.b16 %v1057
  %v2574 = vunpack.c.l.b16 %v1068
  %v2575 = vunpack.c.l.b16 %v1079
  %v2576 = vunpack.c.l.b16 %v1090
  %v2577 = vunpack.c.l.b16 %v1101
  %v2578 = vunpack.c.l.b16 %v1112
  %v2579 = vunpack.c.l.b16 %v1123
  %v2580 = vunpack.c.l.b16 %v1134
  %v2581 = vunpack.c.l.b16 %v1145
  %v2582 = vunpack.c.l.b16 %v1156
  %v2583 = vunpack.c.l.b16 %v1167
  %v2584 = vunpack.c.l.b16 %v1178
  %v2585 = vunpack.c.l.b16 %v1189
  %v2586 = vunpack.c.l.b16 %v1200
  %v2587 = vunpack.c.l.b16 %v1211
  %v2588 = vunpack.c.l.b16 %v1222
  %v2589 = vunpack.c.l.b16 %v1233
  %v2590 = vunpack.c.l.b16 %v1244
  %v2591 = vunpack.c.l.b16 %v1255
  %v2592 = vunpack.c.l.b16 %v1266
  %v2593 = vunpack.c.l.b16 %v1277
  %v2594 = vunpack.c.l.b16 %v1288
  %v2595 = vunpack.c.l.b16 %v1299
  %v2596 = vunpack.c.l.b16 %v1310
  %v2597 = vunpack.c.l.b16 %v1321
  %v2598 = vunpack.c.l.b16 %v1332
  %v2599 = vunpack.c.l.b16 %v1343
  %v2600 = vunpack.c.l.b16 %v1354
  %v2601 = vunpack.c.l.b16 %v1365
  %v2602 = vunpack.c.l.b16 %v1376
  %v2603 = vunpack.c.l.b16 %v1387
  %v2604 = vunpack.c.l.b16 %v1398
  %v2605 = vunpack.c.l.b16 %v1409
  %v2606 = vunpack.c.l.b16 %v1420
  %v2607 = vunpack.c.l.b16 %v1431
  %v2608 = vunpack.c.l.b16 %v1442
  %v2609 = vunpack.c.l.b16 %v1453
  %v2610 = vunpack.c.l.b16 %v1464
  %v2611 = vunpack.c.l.b16 %v1475
  %v2612 = vunpack.c.l.b16 %v1486
  %v2613 = vunpack.c.l.b16 %v1497
  %v2614 = vunpack.c.l.b16 %v1508
  %v2615 = vunpack.c.l.b16 %v1519
  %v2616 = vunpack.c.l.b16 %v1530
  %v2617 = vunpack.c.l.b16 %v1541
  %v2618 = vunpack.c.l.b16 %v1552
  %v2619 = vunpack.c.l.b16 %v1563
  %v2620 = vunpack.c.l.b16 %v1574
  %v2621 = vunpack.c.l.b16 %v1585
  %v2622 = vunpack.c.l.b16 %v1596
  %v2623 = vunpack.c.l.b16 %v1607
  %v2624 = vunpack.c.l.b16 %v1618
  %v2625 = vunpack.c.l.b16 %v1629
  %v2626 = vunpack.c.l.b16 %v1640
  %v2627 = vunpack.c.l.b16 %v1651
  %v2628 = vunpack.c.l.b16 %v1662
  %v2629 = vunpack.c.l.b16 %v1673
  %v2630 = vunpack.c.l.b16 %v1684
  %v2631 = vunpack.c.l.b16 %v1695
  %v2632 = vunpack.c.l.b16 %v1706
  %v2633 = vunpack.c.l.b16 %v1717
  %v2634 = vunpack.c.l.b16 %v1728
  %v2635 = vunpack.c.l.b16 %v1739
  %v2636 = vunpack.c.l.b16 %v1750
  %v2637 = vunpack.c.l.b16 %v1761
  %v2638 = vunpack.c.l.b16 %v1772
  %v2639 = vunpack.c.l.b16 %v1783
  %v2640 = vunpack.c.l.b16 %v1794
  %v2641 = vunpack.c.l.b16 %v1805
  %v2642 = vunpack.c.l.b16 %v1816
  %v2643 = vunpack.c.l.b16 %v1827
  %v2644 = vunpack.c.l.b16 %v1838
  %v2645 = vunpack.c.l.b16 %v1849
  %v2646 = vunpack.c.l.b16 %v1860
  %v2647 = vunpack.c.l.b16 %v1871
  %v2648 = vunpack.c.l.b16 %v1882
  %v2649 = vunpack.c.l.b16 %v1893
  %v2650 = vunpack.c.l.b16 %v1904
  %v2651 = vunpack.c.l.b16 %v1915
  %v2652 = vunpack.c.l.b16 %v1926
  %v2653 = vunpack.c.l.b16 %v1937
  %v2654 = vunpack.c.l.b16 %v1948
  %v2655 = vunpack.c.l.b16 %v1959
  %v2656 = vunpack.c.l.b16 %v1970
  %v2657 = vunpack.c.l.b16 %v1981
  %v2658 = vunpack.c.l.b16 %v1992
  %v2659 = vunpack.c.l.b16 %v2003
  %v2660 = vunpack.c.l.b16 %v2014
  %v2661 = vunpack.c.l.b16 %v2025
  %v2662 = vunpack.c.l.b16 %v2036
  %v2663 = vunpack.c.l.b16 %v2047
  %v2664 = vunpack.c.l.b16 %v2058
  %v2665 = vunpack.c.l.b16 %v2069
  %v2666 = vunpack.c.l.b16 %v2080
  %v2667 = vunpack.c.l.b16 %v2091
  %v2668 = vunpack.c.l.b16 %v2102
  %v2669 = vunpack.c.l.b16 %v2113
  %v2670 = vunpack.c.l.b16 %v2124
  %v2671 = vunpack.c.l.b16 %v2135
  %v2672 = vunpack.c.l.b16 %v2146
  %v2673 = vunpack.c.l.b16 %v2157
  %v2674 = vunpack.c.l.b16 %v2168
  %v2675 = vunpack.c.l.b16 %v2179
  %v2676 = vunpack.c.l.b16 %v2190
  %v2677 = vunpack.c.l.b16 %v2201
  %v2678 = vunpack.c.l.b16 %v2212
  %v2679 = vunpack.c.l.b16 %v2223
  %v2680 = vunpack.c.l.b16 %v2234
  %v2681 = vunpack.c.l.b16 %v2245
  %v2682 = vunpack.c.l.b16 %v2256
  %v2683 = vunpack.c.l.b16 %v2267
  %v2684 = vunpack.c.l.b16 %v2278
  %v2685 = vunpack.c.l.b16 %v2289
  %v2686 = vunpack.c.l.b16 %v2300
  %v2687 = vunpack.c.l.b16 %v2311
  %v2688 = vunpack.c.l.b16 %v2322
  %v2689 = vunpack.c.l.b16 %v2333
  %v2690 = vunpack.c.l.b16 %v2344
  %v2691 = vunpack.c.l.b16 %v2355
  %v2692 = vunpack.c.l.b16 %v2366
  %v2693 = vunpack.c.l.b16 %v2377
  %v2694 = vunpack.c.l.b16 %v2388
  %v2695 = vunpack.c.l.b16 %v2399
  %v2696 = vunpack.c.l.b16 %v2410
  %v2697 = vunpack.c.l.b16 %v2421
  %v2698 = vunpack.c.l.b16 %v2432
  %v2699 = vunpack.c.l.b16 %v2443
  %v2700 = vpack.c.b16 %v2572, %v2572
  %v2701 = vpack.c.b16 %v2573, %v2573
  %v2702 = vpack.c.b16 %v2574, %v2574
  %v2703 = vpack.c.b16 %v2575, %v2575
  %v2704 = vpack.c.b16 %v2576, %v2576
  %v2705 = vpack.c.b16 %v2577, %v2577
  %v2706 = vpack.c.b16 %v2578, %v2578
  %v2707 = vpack.c.b16 %v2579, %v2579
  %v2708 = vpack.c.b16 %v2580, %v2580
  %v2709 = vpack.c.b16 %v2581, %v2581
  %v2710 = vpack.c.b16 %v2582, %v2582
  %v2711 = vpack.c.b16 %v2583, %v2583
  %v2712 = vpack.c.b16 %v2584, %v2584
  %v2713 = vpack.c.b16 %v2585, %v2585
  %v2714 = vpack.c.b16 %v2586, %v2586
  %v2715 = vpack.c.b16 %v2587, %v2587
  %v2716 = vpack.c.b16 %v2588, %v2588
  %v2717 = vpack.c.b16 %v2589, %v2589
  %v2718 = vpack.c.b16 %v2590, %v2590
  %v2719 = vpack.c.b16 %v2591, %v2591
  %v2720 = vpack.c.b16 %v2592, %v2592
  %v2721 = vpack.c.b16 %v2593, %v2593
  %v2722 = vpack.c.b16 %v2594, %v2594
  %v2723 = vpack.c.b16 %v2595, %v2595
  %v2724 = vpack.c.b16 %v2596, %v2596
  %v2725 = vpack.c.b16 %v2597, %v2597
  %v2726 = vpack.c.b16 %v2598, %v2598
  %v2727 = vpack.c.b16 %v2599, %v2599
  %v2728 = vpack.c.b16 %v2600, %v2600
  %v2729 = vpack.c.b16 %v2601, %v2601
  %v2730 = vpack.c.b16 %v2602, %v2602
  %v2731 = vpack.c.b16 %v2603, %v2603
  %v2732 = vpack.c.b16 %v2604, %v2604
  %v2733 = vpack.c.b16 %v2605, %v2605
  %v2734 = vpack.c.b16 %v2606, %v2606
  %v2735 = vpack.c.b16 %v2607, %v2607
  %v2736 = vpack.c.b16 %v2608, %v2608
  %v2737 = vpack.c.b16 %v2609, %v2609
  %v2738 = vpack.c.b16 %v2610, %v2610
  %v2739 = vpack.c.b16 %v2611, %v2611
  %v2740 = vpack.c.b16 %v2612, %v2612
  %v2741 = vpack.c.b16 %v2613, %v2613
  %v2742 = vpack.c.b16 %v2614, %v2614
  %v2743 = vpack.c.b16 %v2615, %v2615
  %v2744 = vpack.c.b16 %v2616, %v2616
  %v2745 = vpack.c.b16 %v2617, %v2617
  %v2746 = vpack.c.b16 %v2618, %v2618
  %v2747 = vpack.c.b16 %v2619, %v2619
  %v2748 = vpack.c.b16 %v2620, %v2620
  %v2749 = vpack.c.b16 %v2621, %v2621
  %v2750 = vpack.c.b16 %v2622, %v2622
  %v2751 = vpack.c.b16 %v2623, %v2623
  %v2752 = vpack.c.b16 %v2624, %v2624
  %v2753 = vpack.c.b16 %v2625, %v2625
  %v2754 = vpack.c.b16 %v2626, %v2626
  %v2755 = vpack.c.b16 %v2627, %v2627
  %v2756 = vpack.c.b16 %v2628, %v2628
  %v2757 = vpack.c.b16 %v2629, %v2629
  %v2758 = vpack.c.b16 %v2630, %v2630
  %v2759 = vpack.c.b16 %v2631, %v2631
  %v2760 = vpack.c.b16 %v2632, %v2632
  %v2761 = vpack.c.b16 %v2633, %v2633
  %v2762 = vpack.c.b16 %v2634, %v2634
  %v2763 = vpack.c.b16 %v2635, %v2635
  %v2764 = vpack.c.b16 %v2636, %v2636
  %v2765 = vpack.c.b16 %v2637, %v2637
  %v2766 = vpack.c.b16 %v2638, %v2638
  %v2767 = vpack.c.b16 %v2639, %v2639
  %v2768 = vpack.c.b16 %v2640, %v2640
  %v2769 = vpack.c.b16 %v2641, %v2641
  %v2770 = vpack.c.b16 %v2642, %v2642
  %v2771 = vpack.c.b16 %v2643, %v2643
  %v2772 = vpack.c.b16 %v2644, %v2644
  %v2773 = vpack.c.b16 %v2645, %v2645
  %v2774 = vpack.c.b16 %v2646, %v2646
  %v2775 = vpack.c.b16 %v2647, %v2647
  %v2776 = vpack.c.b16 %v2648, %v2648
  %v2777 = vpack.c.b16 %v2649, %v2649
  %v2778 = vpack.c.b16 %v2650, %v2650
  %v2779 = vpack.c.b16 %v2651, %v2651
  %v2780 = vpack.c.b16 %v2652, %v2652
  %v2781 = vpack.c.b16 %v2653, %v2653
  %v2782 = vpack.c.b16 %v2654, %v2654
  %v2783 = vpack.c.b16 %v2655, %v2655
  %v2784 = vpack.c.b16 %v2656, %v2656
  %v2785 = vpack.c.b16 %v2657, %v2657
  %v2786 = vpack.c.b16 %v2658, %v2658
  %v2787 = vpack.c.b16 %v2659, %v2659
  %v2788 = vpack.c.b16 %v2660, %v2660
  %v2789 = vpack.c.b16 %v2661, %v2661
  %v2790 = vpack.c.b16 %v2662, %v2662
  %v2791 = vpack.c.b16 %v2663, %v2663
  %v2792 = vpack.c.b16 %v2664, %v2664
  %v2793 = vpack.c.b16 %v2665, %v2665
  %v2794 = vpack.c.b16 %v2666, %v2666
  %v2795 = vpack.c.b16 %v2667, %v2667
  %v2796 = vpack.c.b16 %v2668, %v2668
  %v2797 = vpack.c.b16 %v2669, %v2669
  %v2798 = vpack.c.b16 %v2670, %v2670
  %v2799 = vpack.c.b16 %v2671, %v2671
  %v2800 = vpack.c.b16 %v2672, %v2672
  %v2801 = vpack.c.b16 %v2673, %v2673
  %v2802 = vpack.c.b16 %v2674, %v2674
  %v2803 = vpack.c.b16 %v2675, %v2675
  %v2804 = vpack.c.b16 %v2676, %v2676
  %v2805 = vpack.c.b16 %v2677, %v2677
  %v2806 = vpack.c.b16 %v2678, %v2678
  %v2807 = vpack.c.b16 %v2679, %v2679
  %v2808 = vpack.c.b16 %v2680, %v2680
  %v2809 = vpack.c.b16 %v2681, %v2681
  %v2810 = vpack.c.b16 %v2682, %v2682
  %v2811 = vpack.c.b16 %v2683, %v2683
  %v2812 = vpack.c.b16 %v2684, %v2684
  %v2813 = vpack.c.b16 %v2685, %v2685
  %v2814 = vpack.c.b16 %v2686, %v2686
  %v2815 = vpack.c.b16 %v2687, %v2687
  %v2816 = vpack.c.b16 %v2688, %v2688
  %v2817 = vpack.c.b16 %v2689, %v2689
  %v2818 = vpack.c.b16 %v2690, %v2690
  %v2819 = vpack.c.b16 %v2691, %v2691
  %v2820 = vpack.c.b16 %v2692, %v2692
  %v2821 = vpack.c.b16 %v2693, %v2693
  %v2822 = vpack.c.b16 %v2694, %v2694
  %v2823 = vpack.c.b16 %v2695, %v2695
  %v2824 = vpack.c.b16 %v2696, %v2696
  %v2825 = vpack.c.b16 %v2697, %v2697
  %v2826 = vpack.c.b16 %v2698, %v2698
  %v2827 = vpack.c.b16 %v2699, %v2699
  %v2828 = vunpack.c.l.b16 %v2700
  %v2829 = vunpack.c.l.b16 %v2701
  %v2830 = vunpack.c.l.b16 %v2702
  %v2831 = vunpack.c.l.b16 %v2703
  %v2832 = vunpack.c.l.b16 %v2704
  %v2833 = vunpack.c.l.b16 %v2705
  %v2834 = vunpack.c.l.b16 %v2706
  %v2835 = vunpack.c.l.b16 %v2707
  %v2836 = vunpack.c.l.b16 %v2708
  %v2837 = vunpack.c.l.b16 %v2709
  %v2838 = vunpack.c.l.b16 %v2710
  %v2839 = vunpack.c.l.b16 %v2711
  %v2840 = vunpack.c.l.b16 %v2712
  %v2841 = vunpack.c.l.b16 %v2713
  %v2842 = vunpack.c.l.b16 %v2714
  %v2843 = vunpack.c.l.b16 %v2715
  %v2844 = vunpack.c.l.b16 %v2716
  %v2845 = vunpack.c.l.b16 %v2717
  %v2846 = vunpack.c.l.b16 %v2718
  %v2847 = vunpack.c.l.b16 %v2719
  %v2848 = vunpack.c.l.b16 %v2720
  %v2849 = vunpack.c.l.b16 %v2721
  %v2850 = vunpack.c.l.b16 %v2722
  %v2851 = vunpack.c.l.b16 %v2723
  %v2852 = vunpack.c.l.b16 %v2724
  %v2853 = vunpack.c.l.b16 %v2725
  %v2854 = vunpack.c.l.b16 %v2726
  %v2855 = vunpack.c.l.b16 %v2727
  %v2856 = vunpack.c.l.b16 %v2728
  %v2857 = vunpack.c.l.b16 %v2729
  %v2858 = vunpack.c.l.b16 %v2730
  %v2859 = vunpack.c.l.b16 %v2731
  %v2860 = vunpack.c.l.b16 %v2732
  %v2861 = vunpack.c.l.b16 %v2733
  %v2862 = vunpack.c.l.b16 %v2734
  %v2863 = vunpack.c.l.b16 %v2735
  %v2864 = vunpack.c.l.b16 %v2736
  %v2865 = vunpack.c.l.b16 %v2737
  %v2866 = vunpack.c.l.b16 %v2738
  %v2867 = vunpack.c.l.b16 %v2739
  %v2868 = vunpack.c.l.b16 %v2740
  %v2869 = vunpack.c.l.b16 %v2741
  %v2870 = vunpack.c.l.b16 %v2742
  %v2871 = vunpack.c.l.b16 %v2743
  %v2872 = vunpack.c.l.b16 %v2744
  %v2873 = vunpack.c.l.b16 %v2745
  %v2874 = vunpack.c.l.b16 %v2746
  %v2875 = vunpack.c.l.b16 %v2747
  %v2876 = vunpack.c.l.b16 %v2748
  %v2877 = vunpack.c.l.b16 %v2749
  %v2878 = vunpack.c.l.b16 %v2750
  %v2879 = vunpack.c.l.b16 %v2751
  %v2880 = vunpack.c.l.b16 %v2752
  %v2881 = vunpack.c.l.b16 %v2753
  %v2882 = vunpack.c.l.b16 %v2754
  %v2883 = vunpack.c.l.b16 %v2755
  %v2884 = vunpack.c.l.b16 %v2756
  %v2885 = vunpack.c.l.b16 %v2757
  %v2886 = vunpack.c.l.b16 %v2758
  %v2887 = vunpack.c.l.b16 %v2759
  %v2888 = vunpack.c.l.b16 %v2760
  %v2889 = vunpack.c.l.b16 %v2761
  %v2890 = vunpack.c.l.b16 %v2762
  %v2891 = vunpack.c.l.b16 %v2763
  %v2892 = vunpack.c.l.b16 %v2764
  %v2893 = vunpack.c.l.b16 %v2765
  %v2894 = vunpack.c.l.b16 %v2766
  %v2895 = vunpack.c.l.b16 %v2767
  %v2896 = vunpack.c.l.b16 %v2768
  %v2897 = vunpack.c.l.b16 %v2769
  %v2898 = vunpack.c.l.b16 %v2770
  %v2899 = vunpack.c.l.b16 %v2771
  %v2900 = vunpack.c.l.b16 %v2772
  %v2901 = vunpack.c.l.b16 %v2773
  %v2902 = vunpack.c.l.b16 %v2774
  %v2903 = vunpack.c.l.b16 %v2775
  %v2904 = vunpack.c.l.b16 %v2776
  %v2905 = vunpack.c.l.b16 %v2777
  %v2906 = vunpack.c.l.b16 %v2778
  %v2907 = vunpack.c.l.b16 %v2779
  %v2908 = vunpack.c.l.b16 %v2780
  %v2909 = vunpack.c.l.b16 %v2781
  %v2910 = vunpack.c.l.b16 %v2782
  %v2911 = vunpack.c.l.b16 %v2783
  %v2912 = vunpack.c.l.b16 %v2784
  %v2913 = vunpack.c.l.b16 %v2785
  %v2914 = vunpack.c.l.b16 %v2786
  %v2915 = vunpack.c.l.b16 %v2787
  %v2916 = vunpack.c.l.b16 %v2788
  %v2917 = vunpack.c.l.b16 %v2789
  %v2918 = vunpack.c.l.b16 %v2790
  %v2919 = vunpack.c.l.b16 %v2791
  %v2920 = vunpack.c.l.b16 %v2792
  %v2921 = vunpack.c.l.b16 %v2793
  %v2922 = vunpack.c.l.b16 %v2794
  %v2923 = vunpack.c.l.b16 %v2795
  %v2924 = vunpack.c.l.b16 %v2796
  %v2925 = vunpack.c.l.b16 %v2797
  %v2926 = vunpack.c.l.b16 %v2798
  %v2927 = vunpack.c.l.b16 %v2799
  %v2928 = vunpack.c.l.b16 %v2800
  %v2929 = vunpack.c.l.b16 %v2801
  %v2930 = vunpack.c.l.b16 %v2802
  %v2931 = vunpack.c.l.b16 %v2803
  %v2932 = vunpack.c.l.b16 %v2804
  %v2933 = vunpack.c.l.b16 %v2805
  %v2934 = vunpack.c.l.b16 %v2806
  %v2935 = vunpack.c.l.b16 %v2807
  %v2936 = vunpack.c.l.b16 %v2808
  %v2937 = vunpack.c.l.b16 %v2809
  %v2938 = vunpack.c.l.b16 %v2810
  %v2939 = vunpack.c.l.b16 %v2811
  %v2940 = vunpack.c.l.b16 %v2812
  %v2941 = vunpack.c.l.b16 %v2813
  %v2942 = vunpack.c.l.b16 %v2814
  %v2943 = vunpack.c.l.b16 %v2815
  %v2944 = vunpack.c.l.b16 %v2816
  %v2945 = vunpack.c.l.b16 %v2817
  %v2946 = vunpack.c.l.b16 %v2818
  %v2947 = vunpack.c.l.b16 %v2819
  %v2948 = vunpack.c.l.b16 %v2820
  %v2949 = vunpack.c.l.b16 %v2821
  %v2950 = vunpack.c.l.b16 %v2822
  %v2951 = vunpack.c.l.b16 %v2823
  %v2952 = vunpack.c.l.b16 %v2824
  %v2953 = vunpack.c.l.b16 %v2825
  %v2954 = vunpack.c.l.b16 %v2826
  %v2955 = vunpack.c.l.b16 %v2827
  %vm2956 = vcmask 1041409
  %v2957 = vsel %vm2956, %v2829, %v2828
  %vm2958 = vcmask 1042434
  %v2959 = vsel %vm2958, %v2830, %v2957
  %vm2960 = vcmask 1043459
  %v2961 = vsel %vm2960, %v2831, %v2959
  %vm2962 = vcmask 1044484
  %v2963 = vsel %vm2962, %v2832, %v2961
  %vm2964 = vcmask 1045509
  %v2965 = vsel %vm2964, %v2833, %v2963
  %vm2966 = vcmask 1046534
  %v2967 = vsel %vm2966, %v2834, %v2965
  %vm2968 = vcmask 1047559
  %v2969 = vsel %vm2968, %v2835, %v2967
  %v2970 = vsel %vm2956, %v2837, %v2836
  %v2971 = vsel %vm2958, %v2838, %v2970
  %v2972 = vsel %vm2960, %v2839, %v2971
  %v2973 = vsel %vm2962, %v2840, %v2972
  %v2974 = vsel %vm2964, %v2841, %v2973
  %v2975 = vsel %vm2966, %v2842, %v2974
  %v2976 = vsel %vm2968, %v2843, %v2975
  %v2977 = vsel %vm2956, %v2845, %v2844
  %v2978 = vsel %vm2958, %v2846, %v2977
  %v2979 = vsel %vm2960, %v2847, %v2978
  %v2980 = vsel %vm2962, %v2848, %v2979
  %v2981 = vsel %vm2964, %v2849, %v2980
  %v2982 = vsel %vm2966, %v2850, %v2981
  %v2983 = vsel %vm2968, %v2851, %v2982
  %v2984 = vsel %vm2956, %v2853, %v2852
  %v2985 = vsel %vm2958, %v2854, %v2984
  %v2986 = vsel %vm2960, %v2855, %v2985
  %v2987 = vsel %vm2962, %v2856, %v2986
  %v2988 = vsel %vm2964, %v2857, %v2987
  %v2989 = vsel %vm2966, %v2858, %v2988
  %v2990 = vsel %vm2968, %v2859, %v2989
  %v2991 = vsel %vm2956, %v2861, %v2860
  %v2992 = vsel %vm2958, %v2862, %v2991
  %v2993 = vsel %vm2960, %v2863, %v2992
  %v2994 = vsel %vm2962, %v2864, %v2993
  %v2995 = vsel %vm2964, %v2865, %v2994
  %v2996 = vsel %vm2966, %v2866, %v2995
  %v2997 = vsel %vm2968, %v2867, %v2996
  %v2998 = vsel %vm2956, %v2869, %v2868
  %v2999 = vsel %vm2958, %v2870, %v2998
  %v3000 = vsel %vm2960, %v2871, %v2999
  %v3001 = vsel %vm2962, %v2872, %v3000
  %v3002 = vsel %vm2964, %v2873, %v3001
  %v3003 = vsel %vm2966, %v2874, %v3002
  %v3004 = vsel %vm2968, %v2875, %v3003
  %v3005 = vsel %vm2956, %v2877, %v2876
  %v3006 = vsel %vm2958, %v2878, %v3005
  %v3007 = vsel %vm2960, %v2879, %v3006
  %v3008 = vsel %vm2962, %v2880, %v3007
  %v3009 = vsel %vm2964, %v2881, %v3008
  %v3010 = vsel %vm2966, %v2882, %v3009
  %v3011 = vsel %vm2968, %v2883, %v3010
  %v3012 = vsel %vm2956, %v2885, %v2884
  %v3013 = vsel %vm2958, %v2886, %v3012
  %v3014 = vsel %vm2960, %v2887, %v3013
  %v3015 = vsel %vm2962, %v2888, %v3014
  %v3016 = vsel %vm2964, %v2889, %v3015
  %v3017 = vsel %vm2966, %v2890, %v3016
  %v3018 = vsel %vm2968, %v2891, %v3017
  %v3019 = vsel %vm2956, %v2893, %v2892
  %v3020 = vsel %vm2958, %v2894, %v3019
  %v3021 = vsel %vm2960, %v2895, %v3020
  %v3022 = vsel %vm2962, %v2896, %v3021
  %v3023 = vsel %vm2964, %v2897, %v3022
  %v3024 = vsel %vm2966, %v2898, %v3023
  %v3025 = vsel %vm2968, %v2899, %v3024
  %v3026 = vsel %vm2956, %v2901, %v2900
  %v3027 = vsel %vm2958, %v2902, %v3026
  %v3028 = vsel %vm2960, %v2903, %v3027
  %v3029 = vsel %vm2962, %v2904, %v3028
  %v3030 = vsel %vm2964, %v2905, %v3029
  %v3031 = vsel %vm2966, %v2906, %v3030
  %v3032 = vsel %vm2968, %v2907, %v3031
  %v3033 = vsel %vm2956, %v2909, %v2908
  %v3034 = vsel %vm2958, %v2910, %v3033
  %v3035 = vsel %vm2960, %v2911, %v3034
  %v3036 = vsel %vm2962, %v2912, %v3035
  %v3037 = vsel %vm2964, %v2913, %v3036
  %v3038 = vsel %vm2966, %v2914, %v3037
  %v3039 = vsel %vm2968, %v2915, %v3038
  %v3040 = vsel %vm2956, %v2917, %v2916
  %v3041 = vsel %vm2958, %v2918, %v3040
  %v3042 = vsel %vm2960, %v2919, %v3041
  %v3043 = vsel %vm2962, %v2920, %v3042
  %v3044 = vsel %vm2964, %v2921, %v3043
  %v3045 = vsel %vm2966, %v2922, %v3044
  %v3046 = vsel %vm2968, %v2923, %v3045
  %v3047 = vsel %vm2956, %v2925, %v2924
  %v3048 = vsel %vm2958, %v2926, %v3047
  %v3049 = vsel %vm2960, %v2927, %v3048
  %v3050 = vsel %vm2962, %v2928, %v3049
  %v3051 = vsel %vm2964, %v2929, %v3050
  %v3052 = vsel %vm2966, %v2930, %v3051
  %v3053 = vsel %vm2968, %v2931, %v3052
  %v3054 = vsel %vm2956, %v2933, %v2932
  %v3055 = vsel %vm2958, %v2934, %v3054
  %v3056 = vsel %vm2960, %v2935, %v3055
  %v3057 = vsel %vm2962, %v2936, %v3056
  %v3058 = vsel %vm2964, %v2937, %v3057
  %v3059 = vsel %vm2966, %v2938, %v3058
  %v3060 = vsel %vm2968, %v2939, %v3059
  %v3061 = vsel %vm2956, %v2941, %v2940
  %v3062 = vsel %vm2958, %v2942, %v3061
  %v3063 = vsel %vm2960, %v2943, %v3062
  %v3064 = vsel %vm2962, %v2944, %v3063
  %v3065 = vsel %vm2964, %v2945, %v3064
  %v3066 = vsel %vm2966, %v2946, %v3065
  %v3067 = vsel %vm2968, %v2947, %v3066
  %v3068 = vsel %vm2956, %v2949, %v2948
  %v3069 = vsel %vm2958, %v2950, %v3068
  %v3070 = vsel %vm2960, %v2951, %v3069
  %v3071 = vsel %vm2962, %v2952, %v3070
  %v3072 = vsel %vm2964, %v2953, %v3071
  %v3073 = vsel %vm2966, %v2954, %v3072
  %v3074 = vsel %vm2968, %v2955, %v3073
  %v3075 = vpack.c.b16 %v2969, %v2969
  %v3076 = vpack.c.b16 %v2976, %v2976
  %v3077 = vpack.c.b16 %v2983, %v2983
  %v3078 = vpack.c.b16 %v2990, %v2990
  %v3079 = vpack.c.b16 %v2997, %v2997
  %v3080 = vpack.c.b16 %v3004, %v3004
  %v3081 = vpack.c.b16 %v3011, %v3011
  %v3082 = vpack.c.b16 %v3018, %v3018
  %v3083 = vpack.c.b16 %v3025, %v3025
  %v3084 = vpack.c.b16 %v3032, %v3032
  %v3085 = vpack.c.b16 %v3039, %v3039
  %v3086 = vpack.c.b16 %v3046, %v3046
  %v3087 = vpack.c.b16 %v3053, %v3053
  %v3088 = vpack.c.b16 %v3060, %v3060
  %v3089 = vpack.c.b16 %v3067, %v3067
  %v3090 = vpack.c.b16 %v3074, %v3074
  %vm3107 = vcmask 125952
  %3108 = vst.msk [vmem:[%s1] sm:$0xf] %vm3107, %v3075
  %3109 = vst.msk [vmem:[%s1 + $0x4] sm:$0xf] %vm3107, %v3076
  %3110 = vst.msk [vmem:[%s1 + $0x8] sm:$0xf] %vm3107, %v3077
  %3111 = vst.msk [vmem:[%s1 + $0xc] sm:$0xf] %vm3107, %v3078
  %3112 = vst.msk [vmem:[%s1 + $0x10] sm:$0xf] %vm3107, %v3079
  %3113 = vst.msk [vmem:[%s1 + $0x14] sm:$0xf] %vm3107, %v3080
  %3114 = vst.msk [vmem:[%s1 + $0x18] sm:$0xf] %vm3107, %v3081
  %3115 = vst.msk [vmem:[%s1 + $0x1c] sm:$0xf] %vm3107, %v3082
  %3116 = vst.msk [vmem:[%s1 + $0x20] sm:$0xf] %vm3107, %v3083
  %3117 = vst.msk [vmem:[%s1 + $0x24] sm:$0xf] %vm3107, %v3084
  %3118 = vst.msk [vmem:[%s1 + $0x28] sm:$0xf] %vm3107, %v3085
  %3119 = vst.msk [vmem:[%s1 + $0x2c] sm:$0xf] %vm3107, %v3086
  %3120 = vst.msk [vmem:[%s1 + $0x30] sm:$0xf] %vm3107, %v3087
  %3121 = vst.msk [vmem:[%s1 + $0x34] sm:$0xf] %vm3107, %v3088
  %3122 = vst.msk [vmem:[%s1 + $0x38] sm:$0xf] %vm3107, %v3089
  %3123 = vst.msk [vmem:[%s1 + $0x3c] sm:$0xf] %vm3107, %v3090
  // Predicated region
  $region6: #{_lambda_.23} parent=0 // pred_check
    _
  $region7: #{_lambda_.23} parent=0 // pred_check_branch
    %3125 = sbr.rel (0) target = $region9
  $region8: #{_lambda_.23} parent=0 // pred_region
    _
  $region9: #{_lambda_.23} parent=0 // pred_fallthru
    _
  // Predicated region
  $region10: #{_lambda_.23} parent=0 // pred_check
    _
  $region11: #{_lambda_.23} parent=0 // pred_check_branch
    %3127 = sbr.rel (0) target = $region13
  $region12: #{_lambda_.23} parent=0 // pred_region
    _
  $region13: #{_lambda_.23} parent=0 // pred_fallthru
    _

// kernel: _lambda_.24
$region0: #{_lambda_.24}
  #allocation0 [shape = 'u32[]', space=smem, size = 0x4, offset = 0x4, fixed_abs, tag = 'smem constant byte address 0x4 - core index']
  #allocation1 [shape = 'u32[144,128]{1,0:T(1,128)}', space=vmem, size = 0x12000, scoped, tag = 'internal scratch']
  %s0 = inlined_call_operand.vmem [shape: bf16[128,144], index: 0, kind: input, shape index: {}]
  %s1 = inlined_call_operand.vmem [shape: bf16[144,16], index: 1, kind: input, shape index: {}]
  %s2 = inlined_call_operand.vmem [shape: f32[1,16], index: 2, kind: input, shape index: {}]
  %s3 = inlined_call_operand.vmem [shape: bf16[128,16], index: 3, kind: output, shape index: {}]
  %s4 = sld [smem:[#allocation0]]
  $region22: #{_lambda_.24} parent=0
    _
  %s6 = ssub.s32 1, %s4
  %s7 = scalar_select 0, %s6, %s4
  // Predicated region
  $region2: #{_lambda_.24} parent=0 // pred_check
    _
  $region3: #{_lambda_.24} parent=0 // pred_check_branch
    %9 = sbr.rel (0) target = $region5
  $region4: #{_lambda_.24} parent=0 // pred_region
    _
  $region5: #{_lambda_.24} parent=0 // pred_fallthru
    _
  // Predicated region
  $region6: #{_lambda_.24} parent=0 // pred_check
    _
  $region7: #{_lambda_.24} parent=0 // pred_check_branch
    %11 = sbr.rel (0) target = $region9
  $region8: #{_lambda_.24} parent=0 // pred_region
    _
  $region9: #{_lambda_.24} parent=0 // pred_fallthru
    _
  // Predicated region
  $region10: #{_lambda_.24} parent=0 // pred_check
    _
  $region11: #{_lambda_.24} parent=0 // pred_check_branch
    %13 = sbr.rel (0) target = $region13
  $region12: #{_lambda_.24} parent=0 // pred_region
    _
  $region13: #{_lambda_.24} parent=0 // pred_fallthru
    _
  %v15 = vld [vmem:[%s0] sm:$0xff]
  %v16 = vld [vmem:[%s0 + $0x8] sm:$0xff]
  %v17 = vld [vmem:[%s0 + $0x10] sm:$0xff]
  %v18 = vld [vmem:[%s0 + $0x18] sm:$0xff]
  %v19 = vld [vmem:[%s0 + $0x20] sm:$0xff]
  %v20 = vld [vmem:[%s0 + $0x28] sm:$0xff]
  %v21 = vld [vmem:[%s0 + $0x30] sm:$0xff]
  %v22 = vld [vmem:[%s0 + $0x38] sm:$0xff]
  %v23 = vld [vmem:[%s0 + $0x40] sm:$0xff]
  %v24 = vld [vmem:[%s0 + $0x48] sm:$0xff]
  %v25 = vld [vmem:[%s0 + $0x50] sm:$0xff]
  %v26 = vld [vmem:[%s0 + $0x58] sm:$0xff]
  %v27 = vld [vmem:[%s0 + $0x60] sm:$0xff]
  %v28 = vld [vmem:[%s0 + $0x68] sm:$0xff]
  %v29 = vld [vmem:[%s0 + $0x70] sm:$0xff]
  %v30 = vld [vmem:[%s0 + $0x78] sm:$0xff]
  %v31 = vld [vmem:[%s1] sm:$0xf]
  %v32 = vld [vmem:[%s1 + $0x4] sm:$0xf]
  %v33 = vld [vmem:[%s1 + $0x8] sm:$0xf]
  %v34 = vld [vmem:[%s1 + $0xc] sm:$0xf]
  %v35 = vld [vmem:[%s1 + $0x10] sm:$0xf]
  %v36 = vld [vmem:[%s1 + $0x14] sm:$0xf]
  %v37 = vld [vmem:[%s1 + $0x18] sm:$0xf]
  %v38 = vld [vmem:[%s1 + $0x1c] sm:$0xf]
  %v39 = vld [vmem:[%s1 + $0x20] sm:$0xf]
  %v40 = vld [vmem:[%s1 + $0x24] sm:$0xf]
  %v41 = vld [vmem:[%s1 + $0x28] sm:$0xf]
  %v42 = vld [vmem:[%s1 + $0x2c] sm:$0xf]
  %v43 = vld [vmem:[%s1 + $0x30] sm:$0xf]
  %v44 = vld [vmem:[%s1 + $0x34] sm:$0xf]
  %v45 = vld [vmem:[%s1 + $0x38] sm:$0xf]
  %v46 = vld [vmem:[%s1 + $0x3c] sm:$0xf]
  %v47 = vld [vmem:[%s1 + $0x40] sm:$0xf]
  %v48 = vld [vmem:[%s1 + $0x44] sm:$0xf]
  %v49 = vld [vmem:[%s2] sm:$0x1]
  %v51 = vlaneseq
  %v52 = vshrl.u32 %v51, 7
  %v53 = vsub.s32 0, %v52
  %v54 = vrot.slane %v49, %v53
  %v72 = vunpack.c.l.b16 %v15
  %v73 = vunpack.c.h.b16 %v15
  %v74 = vunpack.c.l.b16 %v16
  %v75 = vunpack.c.h.b16 %v16
  %v76 = vunpack.c.l.b16 %v17
  %v77 = vunpack.c.h.b16 %v17
  %v78 = vunpack.c.l.b16 %v18
  %v79 = vunpack.c.h.b16 %v18
  %v80 = vunpack.c.l.b16 %v19
  %v81 = vunpack.c.h.b16 %v19
  %v82 = vunpack.c.l.b16 %v20
  %v83 = vunpack.c.h.b16 %v20
  %v84 = vunpack.c.l.b16 %v21
  %v85 = vunpack.c.h.b16 %v21
  %v86 = vunpack.c.l.b16 %v22
  %v87 = vunpack.c.h.b16 %v22
  %v88 = vunpack.c.l.b16 %v23
  %v89 = vunpack.c.h.b16 %v23
  %v90 = vunpack.c.l.b16 %v24
  %v91 = vunpack.c.h.b16 %v24
  %v92 = vunpack.c.l.b16 %v25
  %v93 = vunpack.c.h.b16 %v25
  %v94 = vunpack.c.l.b16 %v26
  %v95 = vunpack.c.h.b16 %v26
  %v96 = vunpack.c.l.b16 %v27
  %v97 = vunpack.c.h.b16 %v27
  %v98 = vunpack.c.l.b16 %v28
  %v99 = vunpack.c.h.b16 %v28
  %v100 = vunpack.c.l.b16 %v29
  %v101 = vunpack.c.h.b16 %v29
  %v102 = vunpack.c.l.b16 %v30
  %v103 = vunpack.c.h.b16 %v30
  %v104 = vpack.c.b16 %v74, %v72
  %v105 = vpack.c.b16 %v75, %v73
  %v106 = vpack.c.b16 %v78, %v76
  %v107 = vpack.c.b16 %v79, %v77
  %v108 = vpack.c.b16 %v82, %v80
  %v109 = vpack.c.b16 %v83, %v81
  %v110 = vpack.c.b16 %v86, %v84
  %v111 = vpack.c.b16 %v87, %v85
  %v112 = vpack.c.b16 %v90, %v88
  %v113 = vpack.c.b16 %v91, %v89
  %v114 = vpack.c.b16 %v94, %v92
  %v115 = vpack.c.b16 %v95, %v93
  %v116 = vpack.c.b16 %v98, %v96
  %v117 = vpack.c.b16 %v99, %v97
  %v118 = vpack.c.b16 %v102, %v100
  %v119 = vpack.c.b16 %v103, %v101
  %v146 = vunpack.c.l.b16 %v31
  %v147 = vunpack.c.l.b16 %v32
  %v148 = vunpack.c.l.b16 %v33
  %v149 = vunpack.c.l.b16 %v34
  %v150 = vunpack.c.l.b16 %v35
  %v151 = vunpack.c.l.b16 %v36
  %v152 = vunpack.c.l.b16 %v37
  %v153 = vunpack.c.l.b16 %v38
  %v154 = vunpack.c.l.b16 %v39
  %v155 = vunpack.c.l.b16 %v40
  %v156 = vunpack.c.l.b16 %v41
  %v157 = vunpack.c.l.b16 %v42
  %v158 = vunpack.c.l.b16 %v43
  %v159 = vunpack.c.l.b16 %v44
  %v160 = vunpack.c.l.b16 %v45
  %v161 = vunpack.c.l.b16 %v46
  %v162 = vunpack.c.l.b16 %v47
  %v163 = vunpack.c.l.b16 %v48
  %v164 = vpack.c.b16 %v147, %v146
  %v165 = vpack.c.b16 %v149, %v148
  %v166 = vpack.c.b16 %v151, %v150
  %v167 = vpack.c.b16 %v153, %v152
  %v168 = vpack.c.b16 %v155, %v154
  %v169 = vpack.c.b16 %v157, %v156
  %v170 = vpack.c.b16 %v159, %v158
  %v171 = vpack.c.b16 %v161, %v160
  %v172 = vpack.c.b16 %v163, %v162
  %vm182 = vcmask 130048
  %v184 = vsel %vm182, %v105, 0
  %v187 = vsel %vm182, %v107, 0
  %v190 = vsel %vm182, %v109, 0
  %v193 = vsel %vm182, %v111, 0
  %v196 = vsel %vm182, %v113, 0
  %v199 = vsel %vm182, %v115, 0
  %v202 = vsel %vm182, %v117, 0
  %v205 = vsel %vm182, %v119, 0
  %207 = vmatprep.subr.bf16.mxu0 0
  %208 = vmatpush1.bf16.msra.mxu0 %v164
  %209 = vmatprep.subr.bf16.mxu0 0
  %210 = vmatpush1.bf16.msra.mxu0 %v165
  %211 = vmatprep.subr.bf16.mxu0 0
  %212 = vmatpush1.bf16.msra.mxu0 %v166
  %213 = vmatprep.subr.bf16.mxu0 0
  %214 = vmatpush1.bf16.msra.mxu0 %v167
  %215 = vmatprep.subr.bf16.mxu0 0
  %216 = vmatpush1.bf16.msra.mxu0 %v168
  %217 = vmatprep.subr.bf16.mxu0 0
  %218 = vmatpush1.bf16.msra.mxu0 %v169
  %219 = vmatprep.subr.bf16.mxu0 0
  %220 = vmatpush1.bf16.msra.mxu0 %v170
  %221 = vmatprep.subr.bf16.mxu0 0
  %222 = vmatpush1.bf16.msra.mxu0 %v171
  %223 = vmatprep.subr.bf16.mxu0 0
  %224 = vmatpush1.bf16.msra.mxu0 %v172
  %225 = vmatprep.subr.bf16.mxu0 0
  %226 = vmatpush1.bf16.msra.mxu0 0
  %227 = vmatprep.subr.bf16.mxu0 0
  %228 = vmatpush1.bf16.msra.mxu0 0
  %229 = vmatprep.subr.bf16.mxu0 0
  %230 = vmatpush1.bf16.msra.mxu0 0
  %231 = vmatprep.subr.bf16.mxu0 0
  %232 = vmatpush1.bf16.msra.mxu0 0
  %233 = vmatprep.subr.bf16.mxu0 0
  %234 = vmatpush1.bf16.msra.mxu0 0
  %235 = vmatprep.subr.bf16.mxu0 0
  %236 = vmatpush1.bf16.msra.mxu0 0
  %237 = vmatprep.subr.bf16.mxu0 0
  %238 = vmatpush1.bf16.msra.mxu0 0
  %239 = vmatprep.mubr.bf16.mxu0 %v184
  %240 = vmatmul.mubr.bf16.gmra.mrb[0].mxu0 %v104
  %v241 = vpop.f32.mrb[0].mxu0
  %v242 = vadd.f32 %v54, %v241
  %v243 = vpop.f32.mrb[0].mxu0
  %v244 = vpop.f32.mrb[0].mxu0
  %v245 = vadd.f32 %v54, %v244
  %v246 = vpop.f32.mrb[0].mxu0
  %247 = vmatprep.mubr.bf16.mxu0 %v187
  %248 = vmatmul.mubr.bf16.gmra.mrb[0].mxu0 %v106
  %v249 = vpop.f32.mrb[0].mxu0
  %v250 = vadd.f32 %v54, %v249
  %v251 = vpop.f32.mrb[0].mxu0
  %v252 = vpop.f32.mrb[0].mxu0
  %v253 = vadd.f32 %v54, %v252
  %v254 = vpop.f32.mrb[0].mxu0
  %255 = vmatprep.mubr.bf16.mxu0 %v190
  %256 = vmatmul.mubr.bf16.gmra.mrb[0].mxu0 %v108
  %v257 = vpop.f32.mrb[0].mxu0
  %v258 = vadd.f32 %v54, %v257
  %v259 = vpop.f32.mrb[0].mxu0
  %v260 = vpop.f32.mrb[0].mxu0
  %v261 = vadd.f32 %v54, %v260
  %v262 = vpop.f32.mrb[0].mxu0
  %263 = vmatprep.mubr.bf16.mxu0 %v193
  %264 = vmatmul.mubr.bf16.gmra.mrb[0].mxu0 %v110
  %v265 = vpop.f32.mrb[0].mxu0
  %v266 = vadd.f32 %v54, %v265
  %v267 = vpop.f32.mrb[0].mxu0
  %v268 = vpop.f32.mrb[0].mxu0
  %v269 = vadd.f32 %v54, %v268
  %v270 = vpop.f32.mrb[0].mxu0
  %271 = vmatprep.mubr.bf16.mxu0 %v196
  %272 = vmatmul.mubr.bf16.gmra.mrb[0].mxu0 %v112
  %v273 = vpop.f32.mrb[0].mxu0
  %v274 = vadd.f32 %v54, %v273
  %v275 = vpop.f32.mrb[0].mxu0
  %v276 = vpop.f32.mrb[0].mxu0
  %v277 = vadd.f32 %v54, %v276
  %v278 = vpop.f32.mrb[0].mxu0
  %279 = vmatprep.mubr.bf16.mxu0 %v199
  %280 = vmatmul.mubr.bf16.gmra.mrb[0].mxu0 %v114
  %v281 = vpop.f32.mrb[0].mxu0
  %v282 = vadd.f32 %v54, %v281
  %v283 = vpop.f32.mrb[0].mxu0
  %v284 = vpop.f32.mrb[0].mxu0
  %v285 = vadd.f32 %v54, %v284
  %v286 = vpop.f32.mrb[0].mxu0
  %287 = vmatprep.mubr.bf16.mxu0 %v202
  %288 = vmatmul.mubr.bf16.gmra.mrb[0].mxu0 %v116
  %v289 = vpop.f32.mrb[0].mxu0
  %v290 = vadd.f32 %v54, %v289
  %v291 = vpop.f32.mrb[0].mxu0
  %v292 = vpop.f32.mrb[0].mxu0
  %v293 = vadd.f32 %v54, %v292
  %v294 = vpop.f32.mrb[0].mxu0
  %295 = vmatprep.mubr.bf16.mxu0 %v205
  %296 = vmatmul.mubr.bf16.gmra.mrb[0].mxu0 %v118
  %v297 = vpop.f32.mrb[0].mxu0
  %v298 = vadd.f32 %v54, %v297
  %v299 = vpop.f32.mrb[0].mxu0
  %v300 = vpop.f32.mrb[0].mxu0
  %v301 = vadd.f32 %v54, %v300
  %v302 = vpop.f32.mrb[0].mxu0
  %303 = vdwg.mxu0
  %v304 = vmax.f32 %v242, 0.0
  %v305 = vmax.f32 %v245, 0.0
  %v306 = vmax.f32 %v250, 0.0
  %v307 = vmax.f32 %v253, 0.0
  %v308 = vmax.f32 %v258, 0.0
  %v309 = vmax.f32 %v261, 0.0
  %v310 = vmax.f32 %v266, 0.0
  %v311 = vmax.f32 %v269, 0.0
  %v312 = vmax.f32 %v274, 0.0
  %v313 = vmax.f32 %v277, 0.0
  %v314 = vmax.f32 %v282, 0.0
  %v315 = vmax.f32 %v285, 0.0
  %v316 = vmax.f32 %v290, 0.0
  %v317 = vmax.f32 %v293, 0.0
  %v318 = vmax.f32 %v298, 0.0
  %v319 = vmax.f32 %v301, 0.0
  %v320 = vpack.c.bf16 %v305, %v304
  %v321 = vpack.c.bf16 %v307, %v306
  %v322 = vpack.c.bf16 %v309, %v308
  %v323 = vpack.c.bf16 %v311, %v310
  %v324 = vpack.c.bf16 %v313, %v312
  %v325 = vpack.c.bf16 %v315, %v314
  %v326 = vpack.c.bf16 %v317, %v316
  %v327 = vpack.c.bf16 %v319, %v318
  %v336 = vunpack.c.l.b16 %v320
  %v337 = vunpack.c.h.b16 %v320
  %v338 = vunpack.c.l.b16 %v321
  %v339 = vunpack.c.h.b16 %v321
  %v340 = vunpack.c.l.b16 %v322
  %v341 = vunpack.c.h.b16 %v322
  %v342 = vunpack.c.l.b16 %v323
  %v343 = vunpack.c.h.b16 %v323
  %v344 = vunpack.c.l.b16 %v324
  %v345 = vunpack.c.h.b16 %v324
  %v346 = vunpack.c.l.b16 %v325
  %v347 = vunpack.c.h.b16 %v325
  %v348 = vunpack.c.l.b16 %v326
  %v349 = vunpack.c.h.b16 %v326
  %v350 = vunpack.c.l.b16 %v327
  %v351 = vunpack.c.h.b16 %v327
  %v352 = vpack.c.b16 %v336, %v336
  %v353 = vpack.c.b16 %v337, %v337
  %v354 = vpack.c.b16 %v338, %v338
  %v355 = vpack.c.b16 %v339, %v339
  %v356 = vpack.c.b16 %v340, %v340
  %v357 = vpack.c.b16 %v341, %v341
  %v358 = vpack.c.b16 %v342, %v342
  %v359 = vpack.c.b16 %v343, %v343
  %v360 = vpack.c.b16 %v344, %v344
  %v361 = vpack.c.b16 %v345, %v345
  %v362 = vpack.c.b16 %v346, %v346
  %v363 = vpack.c.b16 %v347, %v347
  %v364 = vpack.c.b16 %v348, %v348
  %v365 = vpack.c.b16 %v349, %v349
  %v366 = vpack.c.b16 %v350, %v350
  %v367 = vpack.c.b16 %v351, %v351
  %vm384 = vcmask 125952
  %385 = vst.msk [vmem:[%s3] sm:$0xf] %vm384, %v352
  %386 = vst.msk [vmem:[%s3 + $0x4] sm:$0xf] %vm384, %v353
  %387 = vst.msk [vmem:[%s3 + $0x8] sm:$0xf] %vm384, %v354
  %388 = vst.msk [vmem:[%s3 + $0xc] sm:$0xf] %vm384, %v355
  %389 = vst.msk [vmem:[%s3 + $0x10] sm:$0xf] %vm384, %v356
  %390 = vst.msk [vmem:[%s3 + $0x14] sm:$0xf] %vm384, %v357
  %391 = vst.msk [vmem:[%s3 + $0x18] sm:$0xf] %vm384, %v358
  %392 = vst.msk [vmem:[%s3 + $0x1c] sm:$0xf] %vm384, %v359
  %393 = vst.msk [vmem:[%s3 + $0x20] sm:$0xf] %vm384, %v360
  %394 = vst.msk [vmem:[%s3 + $0x24] sm:$0xf] %vm384, %v361
  %395 = vst.msk [vmem:[%s3 + $0x28] sm:$0xf] %vm384, %v362
  %396 = vst.msk [vmem:[%s3 + $0x2c] sm:$0xf] %vm384, %v363
  %397 = vst.msk [vmem:[%s3 + $0x30] sm:$0xf] %vm384, %v364
  %398 = vst.msk [vmem:[%s3 + $0x34] sm:$0xf] %vm384, %v365
  %399 = vst.msk [vmem:[%s3 + $0x38] sm:$0xf] %vm384, %v366
  %400 = vst.msk [vmem:[%s3 + $0x3c] sm:$0xf] %vm384, %v367
  // Predicated region
  $region14: #{_lambda_.24} parent=0 // pred_check
    _
  $region15: #{_lambda_.24} parent=0 // pred_check_branch
    %402 = sbr.rel (0) target = $region17
  $region16: #{_lambda_.24} parent=0 // pred_region
    _
  $region17: #{_lambda_.24} parent=0 // pred_fallthru
    _
  // Predicated region
  $region18: #{_lambda_.24} parent=0 // pred_check
    _
  $region19: #{_lambda_.24} parent=0 // pred_check_branch
    %404 = sbr.rel (0) target = $region21
  $region20: #{_lambda_.24} parent=0 // pred_region
    _
  $region21: #{_lambda_.24} parent=0 // pred_fallthru
    _

// kernel: _lambda_.25
$region0: #{_lambda_.25}
  #allocation0 [shape = 'u32[]', space=smem, size = 0x4, offset = 0x4, fixed_abs, tag = 'smem constant byte address 0x4 - core index']
  #allocation1 [shape = 'u32[144,128]{1,0:T(1,128)}', space=vmem, size = 0x12000, scoped, tag = 'internal scratch']
  %s0 = inlined_call_operand.vmem [shape: bf16[128,144], index: 0, kind: input, shape index: {}]
  %s1 = inlined_call_operand.vmem [shape: bf16[144,16], index: 1, kind: input, shape index: {}]
  %s2 = inlined_call_operand.vmem [shape: f32[1,16], index: 2, kind: input, shape index: {}]
  %s3 = inlined_call_operand.vmem [shape: bf16[128,16], index: 3, kind: input, shape index: {}]
  %s4 = inlined_call_operand.vmem [shape: bf16[128,16], index: 4, kind: output, shape index: {}]
  %s5 = sld [smem:[#allocation0]]
  $region26: #{_lambda_.25} parent=0
    _
  %s7 = ssub.s32 1, %s5
  %s8 = scalar_select 0, %s7, %s5
  // Predicated region
  $region2: #{_lambda_.25} parent=0 // pred_check
    _
  $region3: #{_lambda_.25} parent=0 // pred_check_branch
    %10 = sbr.rel (0) target = $region5
  $region4: #{_lambda_.25} parent=0 // pred_region
    _
  $region5: #{_lambda_.25} parent=0 // pred_fallthru
    _
  // Predicated region
  $region6: #{_lambda_.25} parent=0 // pred_check
    _
  $region7: #{_lambda_.25} parent=0 // pred_check_branch
    %12 = sbr.rel (0) target = $region9
  $region8: #{_lambda_.25} parent=0 // pred_region
    _
  $region9: #{_lambda_.25} parent=0 // pred_fallthru
    _
  // Predicated region
  $region10: #{_lambda_.25} parent=0 // pred_check
    _
  $region11: #{_lambda_.25} parent=0 // pred_check_branch
    %14 = sbr.rel (0) target = $region13
  $region12: #{_lambda_.25} parent=0 // pred_region
    _
  $region13: #{_lambda_.25} parent=0 // pred_fallthru
    _
  // Predicated region
  $region14: #{_lambda_.25} parent=0 // pred_check
    _
  $region15: #{_lambda_.25} parent=0 // pred_check_branch
    %16 = sbr.rel (0) target = $region17
  $region16: #{_lambda_.25} parent=0 // pred_region
    _
  $region17: #{_lambda_.25} parent=0 // pred_fallthru
    _
  %v18 = vld [vmem:[%s0] sm:$0xff]
  %v19 = vld [vmem:[%s0 + $0x8] sm:$0xff]
  %v20 = vld [vmem:[%s0 + $0x10] sm:$0xff]
  %v21 = vld [vmem:[%s0 + $0x18] sm:$0xff]
  %v22 = vld [vmem:[%s0 + $0x20] sm:$0xff]
  %v23 = vld [vmem:[%s0 + $0x28] sm:$0xff]
  %v24 = vld [vmem:[%s0 + $0x30] sm:$0xff]
  %v25 = vld [vmem:[%s0 + $0x38] sm:$0xff]
  %v26 = vld [vmem:[%s0 + $0x40] sm:$0xff]
  %v27 = vld [vmem:[%s0 + $0x48] sm:$0xff]
  %v28 = vld [vmem:[%s0 + $0x50] sm:$0xff]
  %v29 = vld [vmem:[%s0 + $0x58] sm:$0xff]
  %v30 = vld [vmem:[%s0 + $0x60] sm:$0xff]
  %v31 = vld [vmem:[%s0 + $0x68] sm:$0xff]
  %v32 = vld [vmem:[%s0 + $0x70] sm:$0xff]
  %v33 = vld [vmem:[%s0 + $0x78] sm:$0xff]
  %v34 = vld [vmem:[%s1] sm:$0xf]
  %v35 = vld [vmem:[%s1 + $0x4] sm:$0xf]
  %v36 = vld [vmem:[%s1 + $0x8] sm:$0xf]
  %v37 = vld [vmem:[%s1 + $0xc] sm:$0xf]
  %v38 = vld [vmem:[%s1 + $0x10] sm:$0xf]
  %v39 = vld [vmem:[%s1 + $0x14] sm:$0xf]
  %v40 = vld [vmem:[%s1 + $0x18] sm:$0xf]
  %v41 = vld [vmem:[%s1 + $0x1c] sm:$0xf]
  %v42 = vld [vmem:[%s1 + $0x20] sm:$0xf]
  %v43 = vld [vmem:[%s1 + $0x24] sm:$0xf]
  %v44 = vld [vmem:[%s1 + $0x28] sm:$0xf]
  %v45 = vld [vmem:[%s1 + $0x2c] sm:$0xf]
  %v46 = vld [vmem:[%s1 + $0x30] sm:$0xf]
  %v47 = vld [vmem:[%s1 + $0x34] sm:$0xf]
  %v48 = vld [vmem:[%s1 + $0x38] sm:$0xf]
  %v49 = vld [vmem:[%s1 + $0x3c] sm:$0xf]
  %v50 = vld [vmem:[%s1 + $0x40] sm:$0xf]
  %v51 = vld [vmem:[%s1 + $0x44] sm:$0xf]
  %v52 = vld [vmem:[%s2] sm:$0x1]
  %v54 = vlaneseq
  %v55 = vshrl.u32 %v54, 7
  %v56 = vsub.s32 0, %v55
  %v57 = vrot.slane %v52, %v56
  %v75 = vunpack.c.l.b16 %v18
  %v76 = vunpack.c.h.b16 %v18
  %v77 = vunpack.c.l.b16 %v19
  %v78 = vunpack.c.h.b16 %v19
  %v79 = vunpack.c.l.b16 %v20
  %v80 = vunpack.c.h.b16 %v20
  %v81 = vunpack.c.l.b16 %v21
  %v82 = vunpack.c.h.b16 %v21
  %v83 = vunpack.c.l.b16 %v22
  %v84 = vunpack.c.h.b16 %v22
  %v85 = vunpack.c.l.b16 %v23
  %v86 = vunpack.c.h.b16 %v23
  %v87 = vunpack.c.l.b16 %v24
  %v88 = vunpack.c.h.b16 %v24
  %v89 = vunpack.c.l.b16 %v25
  %v90 = vunpack.c.h.b16 %v25
  %v91 = vunpack.c.l.b16 %v26
  %v92 = vunpack.c.h.b16 %v26
  %v93 = vunpack.c.l.b16 %v27
  %v94 = vunpack.c.h.b16 %v27
  %v95 = vunpack.c.l.b16 %v28
  %v96 = vunpack.c.h.b16 %v28
  %v97 = vunpack.c.l.b16 %v29
  %v98 = vunpack.c.h.b16 %v29
  %v99 = vunpack.c.l.b16 %v30
  %v100 = vunpack.c.h.b16 %v30
  %v101 = vunpack.c.l.b16 %v31
  %v102 = vunpack.c.h.b16 %v31
  %v103 = vunpack.c.l.b16 %v32
  %v104 = vunpack.c.h.b16 %v32
  %v105 = vunpack.c.l.b16 %v33
  %v106 = vunpack.c.h.b16 %v33
  %v107 = vpack.c.b16 %v77, %v75
  %v108 = vpack.c.b16 %v78, %v76
  %v109 = vpack.c.b16 %v81, %v79
  %v110 = vpack.c.b16 %v82, %v80
  %v111 = vpack.c.b16 %v85, %v83
  %v112 = vpack.c.b16 %v86, %v84
  %v113 = vpack.c.b16 %v89, %v87
  %v114 = vpack.c.b16 %v90, %v88
  %v115 = vpack.c.b16 %v93, %v91
  %v116 = vpack.c.b16 %v94, %v92
  %v117 = vpack.c.b16 %v97, %v95
  %v118 = vpack.c.b16 %v98, %v96
  %v119 = vpack.c.b16 %v101, %v99
  %v120 = vpack.c.b16 %v102, %v100
  %v121 = vpack.c.b16 %v105, %v103
  %v122 = vpack.c.b16 %v106, %v104
  %v149 = vunpack.c.l.b16 %v34
  %v150 = vunpack.c.l.b16 %v35
  %v151 = vunpack.c.l.b16 %v36
  %v152 = vunpack.c.l.b16 %v37
  %v153 = vunpack.c.l.b16 %v38
  %v154 = vunpack.c.l.b16 %v39
  %v155 = vunpack.c.l.b16 %v40
  %v156 = vunpack.c.l.b16 %v41
  %v157 = vunpack.c.l.b16 %v42
  %v158 = vunpack.c.l.b16 %v43
  %v159 = vunpack.c.l.b16 %v44
  %v160 = vunpack.c.l.b16 %v45
  %v161 = vunpack.c.l.b16 %v46
  %v162 = vunpack.c.l.b16 %v47
  %v163 = vunpack.c.l.b16 %v48
  %v164 = vunpack.c.l.b16 %v49
  %v165 = vunpack.c.l.b16 %v50
  %v166 = vunpack.c.l.b16 %v51
  %v167 = vpack.c.b16 %v150, %v149
  %v168 = vpack.c.b16 %v152, %v151
  %v169 = vpack.c.b16 %v154, %v153
  %v170 = vpack.c.b16 %v156, %v155
  %v171 = vpack.c.b16 %v158, %v157
  %v172 = vpack.c.b16 %v160, %v159
  %v173 = vpack.c.b16 %v162, %v161
  %v174 = vpack.c.b16 %v164, %v163
  %v175 = vpack.c.b16 %v166, %v165
  %vm185 = vcmask 130048
  %v187 = vsel %vm185, %v108, 0
  %v190 = vsel %vm185, %v110, 0
  %v193 = vsel %vm185, %v112, 0
  %v196 = vsel %vm185, %v114, 0
  %v199 = vsel %vm185, %v116, 0
  %v202 = vsel %vm185, %v118, 0
  %v205 = vsel %vm185, %v120, 0
  %v208 = vsel %vm185, %v122, 0
  %210 = vmatprep.subr.bf16.mxu0 0
  %211 = vmatpush1.bf16.msra.mxu0 %v167
  %212 = vmatprep.subr.bf16.mxu0 0
  %213 = vmatpush1.bf16.msra.mxu0 %v168
  %214 = vmatprep.subr.bf16.mxu0 0
  %215 = vmatpush1.bf16.msra.mxu0 %v169
  %216 = vmatprep.subr.bf16.mxu0 0
  %217 = vmatpush1.bf16.msra.mxu0 %v170
  %218 = vmatprep.subr.bf16.mxu0 0
  %219 = vmatpush1.bf16.msra.mxu0 %v171
  %220 = vmatprep.subr.bf16.mxu0 0
  %221 = vmatpush1.bf16.msra.mxu0 %v172
  %222 = vmatprep.subr.bf16.mxu0 0
  %223 = vmatpush1.bf16.msra.mxu0 %v173
  %224 = vmatprep.subr.bf16.mxu0 0
  %225 = vmatpush1.bf16.msra.mxu0 %v174
  %226 = vmatprep.subr.bf16.mxu0 0
  %227 = vmatpush1.bf16.msra.mxu0 %v175
  %228 = vmatprep.subr.bf16.mxu0 0
  %229 = vmatpush1.bf16.msra.mxu0 0
  %230 = vmatprep.subr.bf16.mxu0 0
  %231 = vmatpush1.bf16.msra.mxu0 0
  %232 = vmatprep.subr.bf16.mxu0 0
  %233 = vmatpush1.bf16.msra.mxu0 0
  %234 = vmatprep.subr.bf16.mxu0 0
  %235 = vmatpush1.bf16.msra.mxu0 0
  %236 = vmatprep.subr.bf16.mxu0 0
  %237 = vmatpush1.bf16.msra.mxu0 0
  %238 = vmatprep.subr.bf16.mxu0 0
  %239 = vmatpush1.bf16.msra.mxu0 0
  %240 = vmatprep.subr.bf16.mxu0 0
  %241 = vmatpush1.bf16.msra.mxu0 0
  %242 = vmatprep.mubr.bf16.mxu0 %v187
  %243 = vmatmul.mubr.bf16.gmra.mrb[0].mxu0 %v107
  %v244 = vpop.f32.mrb[0].mxu0
  %v245 = vadd.f32 %v57, %v244
  %v246 = vpop.f32.mrb[0].mxu0
  %v247 = vpop.f32.mrb[0].mxu0
  %v248 = vadd.f32 %v57, %v247
  %v249 = vpop.f32.mrb[0].mxu0
  %250 = vmatprep.mubr.bf16.mxu0 %v190
  %251 = vmatmul.mubr.bf16.gmra.mrb[0].mxu0 %v109
  %v252 = vpop.f32.mrb[0].mxu0
  %v253 = vadd.f32 %v57, %v252
  %v254 = vpop.f32.mrb[0].mxu0
  %v255 = vpop.f32.mrb[0].mxu0
  %v256 = vadd.f32 %v57, %v255
  %v257 = vpop.f32.mrb[0].mxu0
  %258 = vmatprep.mubr.bf16.mxu0 %v193
  %259 = vmatmul.mubr.bf16.gmra.mrb[0].mxu0 %v111
  %v260 = vpop.f32.mrb[0].mxu0
  %v261 = vadd.f32 %v57, %v260
  %v262 = vpop.f32.mrb[0].mxu0
  %v263 = vpop.f32.mrb[0].mxu0
  %v264 = vadd.f32 %v57, %v263
  %v265 = vpop.f32.mrb[0].mxu0
  %266 = vmatprep.mubr.bf16.mxu0 %v196
  %267 = vmatmul.mubr.bf16.gmra.mrb[0].mxu0 %v113
  %v268 = vpop.f32.mrb[0].mxu0
  %v269 = vadd.f32 %v57, %v268
  %v270 = vpop.f32.mrb[0].mxu0
  %v271 = vpop.f32.mrb[0].mxu0
  %v272 = vadd.f32 %v57, %v271
  %v273 = vpop.f32.mrb[0].mxu0
  %274 = vmatprep.mubr.bf16.mxu0 %v199
  %275 = vmatmul.mubr.bf16.gmra.mrb[0].mxu0 %v115
  %v276 = vpop.f32.mrb[0].mxu0
  %v277 = vadd.f32 %v57, %v276
  %v278 = vpop.f32.mrb[0].mxu0
  %v279 = vpop.f32.mrb[0].mxu0
  %v280 = vadd.f32 %v57, %v279
  %v281 = vpop.f32.mrb[0].mxu0
  %282 = vmatprep.mubr.bf16.mxu0 %v202
  %283 = vmatmul.mubr.bf16.gmra.mrb[0].mxu0 %v117
  %v284 = vpop.f32.mrb[0].mxu0
  %v285 = vadd.f32 %v57, %v284
  %v286 = vpop.f32.mrb[0].mxu0
  %v287 = vpop.f32.mrb[0].mxu0
  %v288 = vadd.f32 %v57, %v287
  %v289 = vpop.f32.mrb[0].mxu0
  %290 = vmatprep.mubr.bf16.mxu0 %v205
  %291 = vmatmul.mubr.bf16.gmra.mrb[0].mxu0 %v119
  %v292 = vpop.f32.mrb[0].mxu0
  %v293 = vadd.f32 %v57, %v292
  %v294 = vpop.f32.mrb[0].mxu0
  %v295 = vpop.f32.mrb[0].mxu0
  %v296 = vadd.f32 %v57, %v295
  %v297 = vpop.f32.mrb[0].mxu0
  %298 = vmatprep.mubr.bf16.mxu0 %v208
  %299 = vmatmul.mubr.bf16.gmra.mrb[0].mxu0 %v121
  %v300 = vpop.f32.mrb[0].mxu0
  %v301 = vadd.f32 %v57, %v300
  %v302 = vpop.f32.mrb[0].mxu0
  %v303 = vpop.f32.mrb[0].mxu0
  %v304 = vadd.f32 %v57, %v303
  %v305 = vpop.f32.mrb[0].mxu0
  %306 = vdwg.mxu0
  %v307 = vld [vmem:[%s3] sm:$0xf]
  %v308 = vld [vmem:[%s3 + $0x4] sm:$0xf]
  %v309 = vld [vmem:[%s3 + $0x8] sm:$0xf]
  %v310 = vld [vmem:[%s3 + $0xc] sm:$0xf]
  %v311 = vld [vmem:[%s3 + $0x10] sm:$0xf]
  %v312 = vld [vmem:[%s3 + $0x14] sm:$0xf]
  %v313 = vld [vmem:[%s3 + $0x18] sm:$0xf]
  %v314 = vld [vmem:[%s3 + $0x1c] sm:$0xf]
  %v315 = vld [vmem:[%s3 + $0x20] sm:$0xf]
  %v316 = vld [vmem:[%s3 + $0x24] sm:$0xf]
  %v317 = vld [vmem:[%s3 + $0x28] sm:$0xf]
  %v318 = vld [vmem:[%s3 + $0x2c] sm:$0xf]
  %v319 = vld [vmem:[%s3 + $0x30] sm:$0xf]
  %v320 = vld [vmem:[%s3 + $0x34] sm:$0xf]
  %v321 = vld [vmem:[%s3 + $0x38] sm:$0xf]
  %v322 = vld [vmem:[%s3 + $0x3c] sm:$0xf]
  %v323 = vunpack.c.l.bf16 %v307
  %v324 = vunpack.c.l.bf16 %v308
  %v325 = vunpack.c.l.bf16 %v309
  %v326 = vunpack.c.l.bf16 %v310
  %v327 = vunpack.c.l.bf16 %v311
  %v328 = vunpack.c.l.bf16 %v312
  %v329 = vunpack.c.l.bf16 %v313
  %v330 = vunpack.c.l.bf16 %v314
  %v331 = vunpack.c.l.bf16 %v315
  %v332 = vunpack.c.l.bf16 %v316
  %v333 = vunpack.c.l.bf16 %v317
  %v334 = vunpack.c.l.bf16 %v318
  %v335 = vunpack.c.l.bf16 %v319
  %v336 = vunpack.c.l.bf16 %v320
  %v337 = vunpack.c.l.bf16 %v321
  %v338 = vunpack.c.l.bf16 %v322
  %v339 = vadd.f32 %v245, %v323
  %v340 = vadd.f32 %v248, %v324
  %v341 = vadd.f32 %v253, %v325
  %v342 = vadd.f32 %v256, %v326
  %v343 = vadd.f32 %v261, %v327
  %v344 = vadd.f32 %v264, %v328
  %v345 = vadd.f32 %v269, %v329
  %v346 = vadd.f32 %v272, %v330
  %v347 = vadd.f32 %v277, %v331
  %v348 = vadd.f32 %v280, %v332
  %v349 = vadd.f32 %v285, %v333
  %v350 = vadd.f32 %v288, %v334
  %v351 = vadd.f32 %v293, %v335
  %v352 = vadd.f32 %v296, %v336
  %v353 = vadd.f32 %v301, %v337
  %v354 = vadd.f32 %v304, %v338
  %v355 = vmax.f32 %v339, 0.0
  %v356 = vmax.f32 %v340, 0.0
  %v357 = vmax.f32 %v341, 0.0
  %v358 = vmax.f32 %v342, 0.0
  %v359 = vmax.f32 %v343, 0.0
  %v360 = vmax.f32 %v344, 0.0
  %v361 = vmax.f32 %v345, 0.0
  %v362 = vmax.f32 %v346, 0.0
  %v363 = vmax.f32 %v347, 0.0
  %v364 = vmax.f32 %v348, 0.0
  %v365 = vmax.f32 %v349, 0.0
  %v366 = vmax.f32 %v350, 0.0
  %v367 = vmax.f32 %v351, 0.0
  %v368 = vmax.f32 %v352, 0.0
  %v369 = vmax.f32 %v353, 0.0
  %v370 = vmax.f32 %v354, 0.0
  %v371 = vpack.c.bf16 %v356, %v355
  %v372 = vpack.c.bf16 %v358, %v357
  %v373 = vpack.c.bf16 %v360, %v359
  %v374 = vpack.c.bf16 %v362, %v361
  %v375 = vpack.c.bf16 %v364, %v363
  %v376 = vpack.c.bf16 %v366, %v365
  %v377 = vpack.c.bf16 %v368, %v367
  %v378 = vpack.c.bf16 %v370, %v369
  %v387 = vunpack.c.l.b16 %v371
  %v388 = vunpack.c.h.b16 %v371
  %v389 = vunpack.c.l.b16 %v372
  %v390 = vunpack.c.h.b16 %v372
  %v391 = vunpack.c.l.b16 %v373
  %v392 = vunpack.c.h.b16 %v373
  %v393 = vunpack.c.l.b16 %v374
  %v394 = vunpack.c.h.b16 %v374
  %v395 = vunpack.c.l.b16 %v375
  %v396 = vunpack.c.h.b16 %v375
  %v397 = vunpack.c.l.b16 %v376
  %v398 = vunpack.c.h.b16 %v376
  %v399 = vunpack.c.l.b16 %v377
  %v400 = vunpack.c.h.b16 %v377
  %v401 = vunpack.c.l.b16 %v378
  %v402 = vunpack.c.h.b16 %v378
  %v403 = vpack.c.b16 %v387, %v387
  %v404 = vpack.c.b16 %v388, %v388
  %v405 = vpack.c.b16 %v389, %v389
  %v406 = vpack.c.b16 %v390, %v390
  %v407 = vpack.c.b16 %v391, %v391
  %v408 = vpack.c.b16 %v392, %v392
  %v409 = vpack.c.b16 %v393, %v393
  %v410 = vpack.c.b16 %v394, %v394
  %v411 = vpack.c.b16 %v395, %v395
  %v412 = vpack.c.b16 %v396, %v396
  %v413 = vpack.c.b16 %v397, %v397
  %v414 = vpack.c.b16 %v398, %v398
  %v415 = vpack.c.b16 %v399, %v399
  %v416 = vpack.c.b16 %v400, %v400
  %v417 = vpack.c.b16 %v401, %v401
  %v418 = vpack.c.b16 %v402, %v402
  %vm435 = vcmask 125952
  %436 = vst.msk [vmem:[%s4] sm:$0xf] %vm435, %v403
  %437 = vst.msk [vmem:[%s4 + $0x4] sm:$0xf] %vm435, %v404
  %438 = vst.msk [vmem:[%s4 + $0x8] sm:$0xf] %vm435, %v405
  %439 = vst.msk [vmem:[%s4 + $0xc] sm:$0xf] %vm435, %v406
  %440 = vst.msk [vmem:[%s4 + $0x10] sm:$0xf] %vm435, %v407
  %441 = vst.msk [vmem:[%s4 + $0x14] sm:$0xf] %vm435, %v408
  %442 = vst.msk [vmem:[%s4 + $0x18] sm:$0xf] %vm435, %v409
  %443 = vst.msk [vmem:[%s4 + $0x1c] sm:$0xf] %vm435, %v410
  %444 = vst.msk [vmem:[%s4 + $0x20] sm:$0xf] %vm435, %v411
  %445 = vst.msk [vmem:[%s4 + $0x24] sm:$0xf] %vm435, %v412
  %446 = vst.msk [vmem:[%s4 + $0x28] sm:$0xf] %vm435, %v413
  %447 = vst.msk [vmem:[%s4 + $0x2c] sm:$0xf] %vm435, %v414
  %448 = vst.msk [vmem:[%s4 + $0x30] sm:$0xf] %vm435, %v415
  %449 = vst.msk [vmem:[%s4 + $0x34] sm:$0xf] %vm435, %v416
  %450 = vst.msk [vmem:[%s4 + $0x38] sm:$0xf] %vm435, %v417
  %451 = vst.msk [vmem:[%s4 + $0x3c] sm:$0xf] %vm435, %v418
  // Predicated region
  $region18: #{_lambda_.25} parent=0 // pred_check
    _
  $region19: #{_lambda_.25} parent=0 // pred_check_branch
    %453 = sbr.rel (0) target = $region21
  $region20: #{_lambda_.25} parent=0 // pred_region
    _
  $region21: #{_lambda_.25} parent=0 // pred_fallthru
    _
  // Predicated region
  $region22: #{_lambda_.25} parent=0 // pred_check
    _
  $region23: #{_lambda_.25} parent=0 // pred_check_branch
    %455 = sbr.rel (0) target = $region25
  $region24: #{_lambda_.25} parent=0 // pred_region
    _
  $region25: #{_lambda_.25} parent=0 // pred_fallthru
    _

// kernel: _lambda_.28
$region0: #{_lambda_.28}
  #allocation0 [shape = 'u32[]', space=smem, size = 0x4, offset = 0x4, fixed_abs, tag = 'smem constant byte address 0x4 - core index']
  #allocation1 [shape = 'u32[144,128]{1,0:T(1,128)}', space=vmem, size = 0x12000, scoped, tag = 'internal scratch']
  %s0 = inlined_call_operand.vmem [shape: bf16[32,144], index: 0, kind: input, shape index: {}]
  %s1 = inlined_call_operand.vmem [shape: bf16[144,32], index: 1, kind: input, shape index: {}]
  %s2 = inlined_call_operand.vmem [shape: f32[1,32], index: 2, kind: input, shape index: {}]
  %s3 = inlined_call_operand.vmem [shape: bf16[32,32], index: 3, kind: output, shape index: {}]
  %s4 = sld [smem:[#allocation0]]
  $region22: #{_lambda_.28} parent=0
    _
  %s6 = ssub.s32 1, %s4
  %s7 = scalar_select 0, %s6, %s4
  // Predicated region
  $region2: #{_lambda_.28} parent=0 // pred_check
    _
  $region3: #{_lambda_.28} parent=0 // pred_check_branch
    %9 = sbr.rel (0) target = $region5
  $region4: #{_lambda_.28} parent=0 // pred_region
    _
  $region5: #{_lambda_.28} parent=0 // pred_fallthru
    _
  // Predicated region
  $region6: #{_lambda_.28} parent=0 // pred_check
    _
  $region7: #{_lambda_.28} parent=0 // pred_check_branch
    %11 = sbr.rel (0) target = $region9
  $region8: #{_lambda_.28} parent=0 // pred_region
    _
  $region9: #{_lambda_.28} parent=0 // pred_fallthru
    _
  // Predicated region
  $region10: #{_lambda_.28} parent=0 // pred_check
    _
  $region11: #{_lambda_.28} parent=0 // pred_check_branch
    %13 = sbr.rel (0) target = $region13
  $region12: #{_lambda_.28} parent=0 // pred_region
    _
  $region13: #{_lambda_.28} parent=0 // pred_fallthru
    _
  %v15 = vld [vmem:[%s0] sm:$0xff]
  %v16 = vld [vmem:[%s0 + $0x8] sm:$0xff]
  %v17 = vld [vmem:[%s0 + $0x10] sm:$0xff]
  %v18 = vld [vmem:[%s0 + $0x18] sm:$0xff]
  %v19 = vld [vmem:[%s1] sm:$0xf]
  %v20 = vld [vmem:[%s1 + $0x4] sm:$0xf]
  %v21 = vld [vmem:[%s1 + $0x8] sm:$0xf]
  %v22 = vld [vmem:[%s1 + $0xc] sm:$0xf]
  %v23 = vld [vmem:[%s1 + $0x10] sm:$0xf]
  %v24 = vld [vmem:[%s1 + $0x14] sm:$0xf]
  %v25 = vld [vmem:[%s1 + $0x18] sm:$0xf]
  %v26 = vld [vmem:[%s1 + $0x1c] sm:$0xf]
  %v27 = vld [vmem:[%s1 + $0x20] sm:$0xf]
  %v28 = vld [vmem:[%s1 + $0x24] sm:$0xf]
  %v29 = vld [vmem:[%s1 + $0x28] sm:$0xf]
  %v30 = vld [vmem:[%s1 + $0x2c] sm:$0xf]
  %v31 = vld [vmem:[%s1 + $0x30] sm:$0xf]
  %v32 = vld [vmem:[%s1 + $0x34] sm:$0xf]
  %v33 = vld [vmem:[%s1 + $0x38] sm:$0xf]
  %v34 = vld [vmem:[%s1 + $0x3c] sm:$0xf]
  %v35 = vld [vmem:[%s1 + $0x40] sm:$0xf]
  %v36 = vld [vmem:[%s1 + $0x44] sm:$0xf]
  %v37 = vld [vmem:[%s2] sm:$0x1]
  %v39 = vlaneseq
  %v40 = vshrl.u32 %v39, 7
  %v41 = vsub.s32 0, %v40
  %v42 = vrot.slane %v37, %v41
  %v48 = vunpack.c.l.b16 %v15
  %v49 = vunpack.c.h.b16 %v15
  %v50 = vunpack.c.l.b16 %v16
  %v51 = vunpack.c.h.b16 %v16
  %v52 = vunpack.c.l.b16 %v17
  %v53 = vunpack.c.h.b16 %v17
  %v54 = vunpack.c.l.b16 %v18
  %v55 = vunpack.c.h.b16 %v18
  %v56 = vpack.c.b16 %v50, %v48
  %v57 = vpack.c.b16 %v51, %v49
  %v58 = vpack.c.b16 %v54, %v52
  %v59 = vpack.c.b16 %v55, %v53
  %v80 = vunpack.c.l.b16 %v19
  %v81 = vunpack.c.l.b16 %v20
  %v82 = vunpack.c.l.b16 %v21
  %v83 = vunpack.c.l.b16 %v22
  %v84 = vunpack.c.l.b16 %v23
  %v85 = vunpack.c.l.b16 %v24
  %v86 = vunpack.c.l.b16 %v25
  %v87 = vunpack.c.l.b16 %v26
  %v88 = vunpack.c.l.b16 %v27
  %v89 = vunpack.c.l.b16 %v28
  %v90 = vunpack.c.l.b16 %v29
  %v91 = vunpack.c.l.b16 %v30
  %v92 = vunpack.c.l.b16 %v31
  %v93 = vunpack.c.l.b16 %v32
  %v94 = vunpack.c.l.b16 %v33
  %v95 = vunpack.c.l.b16 %v34
  %v96 = vunpack.c.l.b16 %v35
  %v97 = vunpack.c.l.b16 %v36
  %v98 = vpack.c.b16 %v81, %v80
  %v99 = vpack.c.b16 %v83, %v82
  %v100 = vpack.c.b16 %v85, %v84
  %v101 = vpack.c.b16 %v87, %v86
  %v102 = vpack.c.b16 %v89, %v88
  %v103 = vpack.c.b16 %v91, %v90
  %v104 = vpack.c.b16 %v93, %v92
  %v105 = vpack.c.b16 %v95, %v94
  %v106 = vpack.c.b16 %v97, %v96
  %vm116 = vcmask 130048
  %v118 = vsel %vm116, %v57, 0
  %v121 = vsel %vm116, %v59, 0
  %123 = vmatprep.subr.bf16.mxu0 0
  %124 = vmatpush1.bf16.msra.mxu0 %v98
  %125 = vmatprep.subr.bf16.mxu0 0
  %126 = vmatpush1.bf16.msra.mxu0 %v99
  %127 = vmatprep.subr.bf16.mxu0 0
  %128 = vmatpush1.bf16.msra.mxu0 %v100
  %129 = vmatprep.subr.bf16.mxu0 0
  %130 = vmatpush1.bf16.msra.mxu0 %v101
  %131 = vmatprep.subr.bf16.mxu0 0
  %132 = vmatpush1.bf16.msra.mxu0 %v102
  %133 = vmatprep.subr.bf16.mxu0 0
  %134 = vmatpush1.bf16.msra.mxu0 %v103
  %135 = vmatprep.subr.bf16.mxu0 0
  %136 = vmatpush1.bf16.msra.mxu0 %v104
  %137 = vmatprep.subr.bf16.mxu0 0
  %138 = vmatpush1.bf16.msra.mxu0 %v105
  %139 = vmatprep.subr.bf16.mxu0 0
  %140 = vmatpush1.bf16.msra.mxu0 %v106
  %141 = vmatprep.subr.bf16.mxu0 0
  %142 = vmatpush1.bf16.msra.mxu0 0
  %143 = vmatprep.subr.bf16.mxu0 0
  %144 = vmatpush1.bf16.msra.mxu0 0
  %145 = vmatprep.subr.bf16.mxu0 0
  %146 = vmatpush1.bf16.msra.mxu0 0
  %147 = vmatprep.subr.bf16.mxu0 0
  %148 = vmatpush1.bf16.msra.mxu0 0
  %149 = vmatprep.subr.bf16.mxu0 0
  %150 = vmatpush1.bf16.msra.mxu0 0
  %151 = vmatprep.subr.bf16.mxu0 0
  %152 = vmatpush1.bf16.msra.mxu0 0
  %153 = vmatprep.subr.bf16.mxu0 0
  %154 = vmatpush1.bf16.msra.mxu0 0
  %155 = vmatprep.mubr.bf16.mxu0 %v118
  %156 = vmatmul.mubr.bf16.gmra.mrb[0].mxu0 %v56
  %v157 = vpop.f32.mrb[0].mxu0
  %v158 = vadd.f32 %v42, %v157
  %v159 = vpop.f32.mrb[0].mxu0
  %v160 = vpop.f32.mrb[0].mxu0
  %v161 = vadd.f32 %v42, %v160
  %v162 = vpop.f32.mrb[0].mxu0
  %163 = vmatprep.mubr.bf16.mxu0 %v121
  %164 = vmatmul.mubr.bf16.gmra.mrb[0].mxu0 %v58
  %v165 = vpop.f32.mrb[0].mxu0
  %v166 = vadd.f32 %v42, %v165
  %v167 = vpop.f32.mrb[0].mxu0
  %v168 = vpop.f32.mrb[0].mxu0
  %v169 = vadd.f32 %v42, %v168
  %v170 = vpop.f32.mrb[0].mxu0
  %171 = vdwg.mxu0
  %v172 = vmax.f32 %v158, 0.0
  %v173 = vmax.f32 %v161, 0.0
  %v174 = vmax.f32 %v166, 0.0
  %v175 = vmax.f32 %v169, 0.0
  %v176 = vpack.c.bf16 %v173, %v172
  %v177 = vpack.c.bf16 %v175, %v174
  %v180 = vunpack.c.l.b16 %v176
  %v181 = vunpack.c.h.b16 %v176
  %v182 = vunpack.c.l.b16 %v177
  %v183 = vunpack.c.h.b16 %v177
  %v184 = vpack.c.b16 %v180, %v180
  %v185 = vpack.c.b16 %v181, %v181
  %v186 = vpack.c.b16 %v182, %v182
  %v187 = vpack.c.b16 %v183, %v183
  %vm192 = vcmask 257024
  %193 = vst.msk [vmem:[%s3] sm:$0xf] %vm192, %v184
  %194 = vst.msk [vmem:[%s3 + $0x4] sm:$0xf] %vm192, %v185
  %195 = vst.msk [vmem:[%s3 + $0x8] sm:$0xf] %vm192, %v186
  %196 = vst.msk [vmem:[%s3 + $0xc] sm:$0xf] %vm192, %v187
  // Predicated region
  $region14: #{_lambda_.28} parent=0 // pred_check
    _
  $region15: #{_lambda_.28} parent=0 // pred_check_branch
    %198 = sbr.rel (0) target = $region17
  $region16: #{_lambda_.28} parent=0 // pred_region
    _
  $region17: #{_lambda_.28} parent=0 // pred_fallthru
    _
  // Predicated region
  $region18: #{_lambda_.28} parent=0 // pred_check
    _
  $region19: #{_lambda_.28} parent=0 // pred_check_branch
    %200 = sbr.rel (0) target = $region21
  $region20: #{_lambda_.28} parent=0 // pred_region
    _
  $region21: #{_lambda_.28} parent=0 // pred_fallthru
    _

// kernel: _lambda_.29
$region0: #{_lambda_.29}
  #allocation0 [shape = 'u32[]', space=smem, size = 0x4, offset = 0x4, fixed_abs, tag = 'smem constant byte address 0x4 - core index']
  #allocation1 [shape = 'u32[144,128]{1,0:T(1,128)}', space=vmem, size = 0x12000, scoped, tag = 'internal scratch']
  %s0 = inlined_call_operand.vmem [shape: bf16[32,16], index: 0, kind: input, shape index: {}]
  %s1 = inlined_call_operand.vmem [shape: bf16[16,32], index: 1, kind: input, shape index: {}]
  %s2 = inlined_call_operand.vmem [shape: f32[1,32], index: 2, kind: input, shape index: {}]
  %s3 = inlined_call_operand.vmem [shape: bf16[32,32], index: 3, kind: output, shape index: {}]
  %s4 = sld [smem:[#allocation0]]
  $region22: #{_lambda_.29} parent=0
    _
  %s6 = ssub.s32 1, %s4
  %s7 = scalar_select 0, %s6, %s4
  // Predicated region
  $region2: #{_lambda_.29} parent=0 // pred_check
    _
  $region3: #{_lambda_.29} parent=0 // pred_check_branch
    %9 = sbr.rel (0) target = $region5
  $region4: #{_lambda_.29} parent=0 // pred_region
    _
  $region5: #{_lambda_.29} parent=0 // pred_fallthru
    _
  // Predicated region
  $region6: #{_lambda_.29} parent=0 // pred_check
    _
  $region7: #{_lambda_.29} parent=0 // pred_check_branch
    %11 = sbr.rel (0) target = $region9
  $region8: #{_lambda_.29} parent=0 // pred_region
    _
  $region9: #{_lambda_.29} parent=0 // pred_fallthru
    _
  // Predicated region
  $region10: #{_lambda_.29} parent=0 // pred_check
    _
  $region11: #{_lambda_.29} parent=0 // pred_check_branch
    %13 = sbr.rel (0) target = $region13
  $region12: #{_lambda_.29} parent=0 // pred_region
    _
  $region13: #{_lambda_.29} parent=0 // pred_fallthru
    _
  %v15 = vld [vmem:[%s0] sm:$0xf]
  %v16 = vld [vmem:[%s0 + $0x4] sm:$0xf]
  %v17 = vld [vmem:[%s0 + $0x8] sm:$0xf]
  %v18 = vld [vmem:[%s0 + $0xc] sm:$0xf]
  %v19 = vld [vmem:[%s1] sm:$0xf]
  %v20 = vld [vmem:[%s1 + $0x4] sm:$0xf]
  %v21 = vld [vmem:[%s2] sm:$0x1]
  %v23 = vlaneseq
  %v24 = vshrl.u32 %v23, 7
  %v25 = vsub.s32 0, %v24
  %v26 = vrot.slane %v21, %v25
  %v32 = vunpack.c.l.b16 %v15
  %v33 = vunpack.c.l.b16 %v16
  %v34 = vunpack.c.l.b16 %v17
  %v35 = vunpack.c.l.b16 %v18
  %v36 = vpack.c.b16 %v33, %v32
  %v37 = vpack.c.b16 %v35, %v34
  %v40 = vunpack.c.l.b16 %v19
  %v41 = vunpack.c.l.b16 %v20
  %v42 = vpack.c.b16 %v41, %v40
  %vm44 = vcmask 130048
  %v46 = vsel %vm44, %v36, 0
  %v49 = vsel %vm44, %v37, 0
  %51 = vmatprep.subr.bf16.mxu0 0
  %52 = vmatpush1.bf16.msra.mxu0 %v42
  %53 = vmatprep.subr.bf16.mxu0 0
  %54 = vmatpush1.bf16.msra.mxu0 0
  %55 = vmatprep.subr.bf16.mxu0 0
  %56 = vmatpush1.bf16.msra.mxu0 0
  %57 = vmatprep.subr.bf16.mxu0 0
  %58 = vmatpush1.bf16.msra.mxu0 0
  %59 = vmatprep.subr.bf16.mxu0 0
  %60 = vmatpush1.bf16.msra.mxu0 0
  %61 = vmatprep.subr.bf16.mxu0 0
  %62 = vmatpush1.bf16.msra.mxu0 0
  %63 = vmatprep.subr.bf16.mxu0 0
  %64 = vmatpush1.bf16.msra.mxu0 0
  %65 = vmatprep.subr.bf16.mxu0 0
  %66 = vmatpush1.bf16.msra.mxu0 0
  %67 = vmatprep.subr.bf16.mxu0 0
  %68 = vmatpush1.bf16.msra.mxu0 0
  %69 = vmatprep.subr.bf16.mxu0 0
  %70 = vmatpush1.bf16.msra.mxu0 0
  %71 = vmatprep.subr.bf16.mxu0 0
  %72 = vmatpush1.bf16.msra.mxu0 0
  %73 = vmatprep.subr.bf16.mxu0 0
  %74 = vmatpush1.bf16.msra.mxu0 0
  %75 = vmatprep.subr.bf16.mxu0 0
  %76 = vmatpush1.bf16.msra.mxu0 0
  %77 = vmatprep.subr.bf16.mxu0 0
  %78 = vmatpush1.bf16.msra.mxu0 0
  %79 = vmatprep.subr.bf16.mxu0 0
  %80 = vmatpush1.bf16.msra.mxu0 0
  %81 = vmatprep.subr.bf16.mxu0 0
  %82 = vmatpush1.bf16.msra.mxu0 0
  %83 = vmatprep.mubr.bf16.mxu0 0
  %84 = vmatmul.mubr.bf16.gmra.mrb[0].mxu0 %v46
  %v85 = vpop.f32.mrb[0].mxu0
  %v86 = vadd.f32 %v26, %v85
  %v87 = vpop.f32.mrb[0].mxu0
  %v88 = vpop.f32.mrb[0].mxu0
  %v89 = vadd.f32 %v26, %v88
  %v90 = vpop.f32.mrb[0].mxu0
  %91 = vmatprep.mubr.bf16.mxu0 0
  %92 = vmatmul.mubr.bf16.gmra.mrb[0].mxu0 %v49
  %v93 = vpop.f32.mrb[0].mxu0
  %v94 = vadd.f32 %v26, %v93
  %v95 = vpop.f32.mrb[0].mxu0
  %v96 = vpop.f32.mrb[0].mxu0
  %v97 = vadd.f32 %v26, %v96
  %v98 = vpop.f32.mrb[0].mxu0
  %99 = vdwg.mxu0
  %v100 = vpack.c.bf16 %v89, %v86
  %v101 = vpack.c.bf16 %v97, %v94
  %v104 = vunpack.c.l.b16 %v100
  %v105 = vunpack.c.h.b16 %v100
  %v106 = vunpack.c.l.b16 %v101
  %v107 = vunpack.c.h.b16 %v101
  %v108 = vpack.c.b16 %v104, %v104
  %v109 = vpack.c.b16 %v105, %v105
  %v110 = vpack.c.b16 %v106, %v106
  %v111 = vpack.c.b16 %v107, %v107
  %vm116 = vcmask 257024
  %117 = vst.msk [vmem:[%s3] sm:$0xf] %vm116, %v108
  %118 = vst.msk [vmem:[%s3 + $0x4] sm:$0xf] %vm116, %v109
  %119 = vst.msk [vmem:[%s3 + $0x8] sm:$0xf] %vm116, %v110
  %120 = vst.msk [vmem:[%s3 + $0xc] sm:$0xf] %vm116, %v111
  // Predicated region
  $region14: #{_lambda_.29} parent=0 // pred_check
    _
  $region15: #{_lambda_.29} parent=0 // pred_check_branch
    %122 = sbr.rel (0) target = $region17
  $region16: #{_lambda_.29} parent=0 // pred_region
    _
  $region17: #{_lambda_.29} parent=0 // pred_fallthru
    _
  // Predicated region
  $region18: #{_lambda_.29} parent=0 // pred_check
    _
  $region19: #{_lambda_.29} parent=0 // pred_check_branch
    %124 = sbr.rel (0) target = $region21
  $region20: #{_lambda_.29} parent=0 // pred_region
    _
  $region21: #{_lambda_.29} parent=0 // pred_fallthru
    _

// kernel: _lambda_.30
$region0: #{_lambda_.30}
  #allocation0 [shape = 'u32[]', space=smem, size = 0x4, offset = 0x4, fixed_abs, tag = 'smem constant byte address 0x4 - core index']
  #allocation1 [shape = 'u32[144,128]{1,0:T(1,128)}', space=vmem, size = 0x12000, scoped, tag = 'internal scratch']
  %s0 = inlined_call_operand.vmem [shape: bf16[32,288], index: 0, kind: input, shape index: {}]
  %s1 = inlined_call_operand.vmem [shape: bf16[288,32], index: 1, kind: input, shape index: {}]
  %s2 = inlined_call_operand.vmem [shape: f32[1,32], index: 2, kind: input, shape index: {}]
  %s3 = inlined_call_operand.vmem [shape: bf16[32,32], index: 3, kind: input, shape index: {}]
  %s4 = inlined_call_operand.vmem [shape: bf16[32,32], index: 4, kind: output, shape index: {}]
  %s5 = sld [smem:[#allocation0]]
  $region26: #{_lambda_.30} parent=0
    _
  %s7 = ssub.s32 1, %s5
  %s8 = scalar_select 0, %s7, %s5
  // Predicated region
  $region2: #{_lambda_.30} parent=0 // pred_check
    _
  $region3: #{_lambda_.30} parent=0 // pred_check_branch
    %10 = sbr.rel (0) target = $region5
  $region4: #{_lambda_.30} parent=0 // pred_region
    _
  $region5: #{_lambda_.30} parent=0 // pred_fallthru
    _
  // Predicated region
  $region6: #{_lambda_.30} parent=0 // pred_check
    _
  $region7: #{_lambda_.30} parent=0 // pred_check_branch
    %12 = sbr.rel (0) target = $region9
  $region8: #{_lambda_.30} parent=0 // pred_region
    _
  $region9: #{_lambda_.30} parent=0 // pred_fallthru
    _
  // Predicated region
  $region10: #{_lambda_.30} parent=0 // pred_check
    _
  $region11: #{_lambda_.30} parent=0 // pred_check_branch
    %14 = sbr.rel (0) target = $region13
  $region12: #{_lambda_.30} parent=0 // pred_region
    _
  $region13: #{_lambda_.30} parent=0 // pred_fallthru
    _
  // Predicated region
  $region14: #{_lambda_.30} parent=0 // pred_check
    _
  $region15: #{_lambda_.30} parent=0 // pred_check_branch
    %16 = sbr.rel (0) target = $region17
  $region16: #{_lambda_.30} parent=0 // pred_region
    _
  $region17: #{_lambda_.30} parent=0 // pred_fallthru
    _
  %v18 = vld [vmem:[%s0] sm:$0xff]
  %v19 = vld [vmem:[%s0 + $0x8] sm:$0xf]
  %v20 = vld [vmem:[%s0 + $0xc] sm:$0xff]
  %v21 = vld [vmem:[%s0 + $0x14] sm:$0xf]
  %v22 = vld [vmem:[%s0 + $0x18] sm:$0xff]
  %v23 = vld [vmem:[%s0 + $0x20] sm:$0xf]
  %v24 = vld [vmem:[%s0 + $0x24] sm:$0xff]
  %v25 = vld [vmem:[%s0 + $0x2c] sm:$0xf]
  %v26 = vld [vmem:[%s1] sm:$0xf]
  %v27 = vld [vmem:[%s1 + $0x4] sm:$0xf]
  %v28 = vld [vmem:[%s1 + $0x8] sm:$0xf]
  %v29 = vld [vmem:[%s1 + $0xc] sm:$0xf]
  %v30 = vld [vmem:[%s1 + $0x10] sm:$0xf]
  %v31 = vld [vmem:[%s1 + $0x14] sm:$0xf]
  %v32 = vld [vmem:[%s1 + $0x18] sm:$0xf]
  %v33 = vld [vmem:[%s1 + $0x1c] sm:$0xf]
  %v34 = vld [vmem:[%s1 + $0x20] sm:$0xf]
  %v35 = vld [vmem:[%s1 + $0x24] sm:$0xf]
  %v36 = vld [vmem:[%s1 + $0x28] sm:$0xf]
  %v37 = vld [vmem:[%s1 + $0x2c] sm:$0xf]
  %v38 = vld [vmem:[%s1 + $0x30] sm:$0xf]
  %v39 = vld [vmem:[%s1 + $0x34] sm:$0xf]
  %v40 = vld [vmem:[%s1 + $0x38] sm:$0xf]
  %v41 = vld [vmem:[%s1 + $0x3c] sm:$0xf]
  %v42 = vld [vmem:[%s1 + $0x40] sm:$0xf]
  %v43 = vld [vmem:[%s1 + $0x44] sm:$0xf]
  %v44 = vld [vmem:[%s1 + $0x48] sm:$0xf]
  %v45 = vld [vmem:[%s1 + $0x4c] sm:$0xf]
  %v46 = vld [vmem:[%s1 + $0x50] sm:$0xf]
  %v47 = vld [vmem:[%s1 + $0x54] sm:$0xf]
  %v48 = vld [vmem:[%s1 + $0x58] sm:$0xf]
  %v49 = vld [vmem:[%s1 + $0x5c] sm:$0xf]
  %v50 = vld [vmem:[%s1 + $0x60] sm:$0xf]
  %v51 = vld [vmem:[%s1 + $0x64] sm:$0xf]
  %v52 = vld [vmem:[%s1 + $0x68] sm:$0xf]
  %v53 = vld [vmem:[%s1 + $0x6c] sm:$0xf]
  %v54 = vld [vmem:[%s1 + $0x70] sm:$0xf]
  %v55 = vld [vmem:[%s1 + $0x74] sm:$0xf]
  %v56 = vld [vmem:[%s1 + $0x78] sm:$0xf]
  %v57 = vld [vmem:[%s1 + $0x7c] sm:$0xf]
  %v58 = vld [vmem:[%s1 + $0x80] sm:$0xf]
  %v59 = vld [vmem:[%s1 + $0x84] sm:$0xf]
  %v60 = vld [vmem:[%s1 + $0x88] sm:$0xf]
  %v61 = vld [vmem:[%s1 + $0x8c] sm:$0xf]
  %v62 = vld [vmem:[%s2] sm:$0x1]
  %v64 = vlaneseq
  %v65 = vshrl.u32 %v64, 7
  %v66 = vsub.s32 0, %v65
  %v67 = vrot.slane %v62, %v66
  %v77 = vunpack.c.l.b16 %v18
  %v78 = vunpack.c.h.b16 %v18
  %v79 = vunpack.c.l.b16 %v19
  %v80 = vunpack.c.l.b16 %v20
  %v81 = vunpack.c.h.b16 %v20
  %v82 = vunpack.c.l.b16 %v21
  %v83 = vunpack.c.l.b16 %v22
  %v84 = vunpack.c.h.b16 %v22
  %v85 = vunpack.c.l.b16 %v23
  %v86 = vunpack.c.l.b16 %v24
  %v87 = vunpack.c.h.b16 %v24
  %v88 = vunpack.c.l.b16 %v25
  %v89 = vpack.c.b16 %v80, %v77
  %v90 = vpack.c.b16 %v81, %v78
  %v91 = vpack.c.b16 %v82, %v79
  %v92 = vpack.c.b16 %v86, %v83
  %v93 = vpack.c.b16 %v87, %v84
  %v94 = vpack.c.b16 %v88, %v85
  %v135 = vunpack.c.l.b16 %v26
  %v136 = vunpack.c.l.b16 %v27
  %v137 = vunpack.c.l.b16 %v28
  %v138 = vunpack.c.l.b16 %v29
  %v139 = vunpack.c.l.b16 %v30
  %v140 = vunpack.c.l.b16 %v31
  %v141 = vunpack.c.l.b16 %v32
  %v142 = vunpack.c.l.b16 %v33
  %v143 = vunpack.c.l.b16 %v34
  %v144 = vunpack.c.l.b16 %v35
  %v145 = vunpack.c.l.b16 %v36
  %v146 = vunpack.c.l.b16 %v37
  %v147 = vunpack.c.l.b16 %v38
  %v148 = vunpack.c.l.b16 %v39
  %v149 = vunpack.c.l.b16 %v40
  %v150 = vunpack.c.l.b16 %v41
  %v151 = vunpack.c.l.b16 %v42
  %v152 = vunpack.c.l.b16 %v43
  %v153 = vunpack.c.l.b16 %v44
  %v154 = vunpack.c.l.b16 %v45
  %v155 = vunpack.c.l.b16 %v46
  %v156 = vunpack.c.l.b16 %v47
  %v157 = vunpack.c.l.b16 %v48
  %v158 = vunpack.c.l.b16 %v49
  %v159 = vunpack.c.l.b16 %v50
  %v160 = vunpack.c.l.b16 %v51
  %v161 = vunpack.c.l.b16 %v52
  %v162 = vunpack.c.l.b16 %v53
  %v163 = vunpack.c.l.b16 %v54
  %v164 = vunpack.c.l.b16 %v55
  %v165 = vunpack.c.l.b16 %v56
  %v166 = vunpack.c.l.b16 %v57
  %v167 = vunpack.c.l.b16 %v58
  %v168 = vunpack.c.l.b16 %v59
  %v169 = vunpack.c.l.b16 %v60
  %v170 = vunpack.c.l.b16 %v61
  %v171 = vpack.c.b16 %v136, %v135
  %v172 = vpack.c.b16 %v138, %v137
  %v173 = vpack.c.b16 %v140, %v139
  %v174 = vpack.c.b16 %v142, %v141
  %v175 = vpack.c.b16 %v144, %v143
  %v176 = vpack.c.b16 %v146, %v145
  %v177 = vpack.c.b16 %v148, %v147
  %v178 = vpack.c.b16 %v150, %v149
  %v179 = vpack.c.b16 %v152, %v151
  %v180 = vpack.c.b16 %v154, %v153
  %v181 = vpack.c.b16 %v156, %v155
  %v182 = vpack.c.b16 %v158, %v157
  %v183 = vpack.c.b16 %v160, %v159
  %v184 = vpack.c.b16 %v162, %v161
  %v185 = vpack.c.b16 %v164, %v163
  %v186 = vpack.c.b16 %v166, %v165
  %v187 = vpack.c.b16 %v168, %v167
  %v188 = vpack.c.b16 %v170, %v169
  %vm207 = vcmask 261120
  %v209 = vsel %vm207, %v91, 0
  %v212 = vsel %vm207, %v94, 0
  %214 = vmatprep.subr.bf16.mxu0 0
  %215 = vmatpush1.bf16.msra.mxu0 %v171
  %216 = vmatprep.subr.bf16.mxu0 0
  %217 = vmatpush1.bf16.msra.mxu0 %v172
  %218 = vmatprep.subr.bf16.mxu0 0
  %219 = vmatpush1.bf16.msra.mxu0 %v173
  %220 = vmatprep.subr.bf16.mxu0 0
  %221 = vmatpush1.bf16.msra.mxu0 %v174
  %222 = vmatprep.subr.bf16.mxu0 0
  %223 = vmatpush1.bf16.msra.mxu0 %v175
  %224 = vmatprep.subr.bf16.mxu0 0
  %225 = vmatpush1.bf16.msra.mxu0 %v176
  %226 = vmatprep.subr.bf16.mxu0 0
  %227 = vmatpush1.bf16.msra.mxu0 %v177
  %228 = vmatprep.subr.bf16.mxu0 0
  %229 = vmatpush1.bf16.msra.mxu0 %v178
  %230 = vmatprep.subr.bf16.mxu0 0
  %231 = vmatpush1.bf16.msra.mxu0 %v179
  %232 = vmatprep.subr.bf16.mxu0 0
  %233 = vmatpush1.bf16.msra.mxu0 %v180
  %234 = vmatprep.subr.bf16.mxu0 0
  %235 = vmatpush1.bf16.msra.mxu0 %v181
  %236 = vmatprep.subr.bf16.mxu0 0
  %237 = vmatpush1.bf16.msra.mxu0 %v182
  %238 = vmatprep.subr.bf16.mxu0 0
  %239 = vmatpush1.bf16.msra.mxu0 %v183
  %240 = vmatprep.subr.bf16.mxu0 0
  %241 = vmatpush1.bf16.msra.mxu0 %v184
  %242 = vmatprep.subr.bf16.mxu0 0
  %243 = vmatpush1.bf16.msra.mxu0 %v185
  %244 = vmatprep.subr.bf16.mxu0 0
  %245 = vmatpush1.bf16.msra.mxu0 %v186
  %246 = vmatprep.mubr.bf16.mxu0 %v90
  %247 = vmatmul.mubr.bf16.gmra.mrb[0].mxu0 %v89
  %v248 = vpop.f32.mrb[0].mxu0
  %v249 = vadd.f32 %v67, %v248
  %v250 = vpop.f32.mrb[0].mxu0
  %v251 = vpop.f32.mrb[0].mxu0
  %v252 = vadd.f32 %v67, %v251
  %v253 = vpop.f32.mrb[0].mxu0
  %254 = vmatprep.mubr.bf16.mxu0 %v93
  %255 = vmatmul.mubr.bf16.gmra.mrb[0].mxu0 %v92
  %v256 = vpop.f32.mrb[0].mxu0
  %v257 = vadd.f32 %v67, %v256
  %v258 = vpop.f32.mrb[0].mxu0
  %v259 = vpop.f32.mrb[0].mxu0
  %v260 = vadd.f32 %v67, %v259
  %v261 = vpop.f32.mrb[0].mxu0
  %262 = vdwg.mxu0
  %263 = vmatprep.subr.bf16.mxu0 0
  %264 = vmatpush1.bf16.msra.mxu0 %v187
  %265 = vmatprep.subr.bf16.mxu0 0
  %266 = vmatpush1.bf16.msra.mxu0 %v188
  %267 = vmatprep.subr.bf16.mxu0 0
  %268 = vmatpush1.bf16.msra.mxu0 0
  %269 = vmatprep.subr.bf16.mxu0 0
  %270 = vmatpush1.bf16.msra.mxu0 0
  %271 = vmatprep.subr.bf16.mxu0 0
  %272 = vmatpush1.bf16.msra.mxu0 0
  %273 = vmatprep.subr.bf16.mxu0 0
  %274 = vmatpush1.bf16.msra.mxu0 0
  %275 = vmatprep.subr.bf16.mxu0 0
  %276 = vmatpush1.bf16.msra.mxu0 0
  %277 = vmatprep.subr.bf16.mxu0 0
  %278 = vmatpush1.bf16.msra.mxu0 0
  %279 = vmatprep.subr.bf16.mxu0 0
  %280 = vmatpush1.bf16.msra.mxu0 0
  %281 = vmatprep.subr.bf16.mxu0 0
  %282 = vmatpush1.bf16.msra.mxu0 0
  %283 = vmatprep.subr.bf16.mxu0 0
  %284 = vmatpush1.bf16.msra.mxu0 0
  %285 = vmatprep.subr.bf16.mxu0 0
  %286 = vmatpush1.bf16.msra.mxu0 0
  %287 = vmatprep.subr.bf16.mxu0 0
  %288 = vmatpush1.bf16.msra.mxu0 0
  %289 = vmatprep.subr.bf16.mxu0 0
  %290 = vmatpush1.bf16.msra.mxu0 0
  %291 = vmatprep.subr.bf16.mxu0 0
  %292 = vmatpush1.bf16.msra.mxu0 0
  %293 = vmatprep.subr.bf16.mxu0 0
  %294 = vmatpush1.bf16.msra.mxu0 0
  %295 = vmatprep.mubr.bf16.mxu0 0
  %296 = vmatmul.mubr.bf16.gmra.mrb[0].mxu0 %v209
  %v297 = vpop.f32.mrb[0].mxu0
  %v298 = vadd.f32 %v249, %v297
  %v299 = vpop.f32.mrb[0].mxu0
  %v300 = vpop.f32.mrb[0].mxu0
  %v301 = vadd.f32 %v252, %v300
  %v302 = vpop.f32.mrb[0].mxu0
  %303 = vmatprep.mubr.bf16.mxu0 0
  %304 = vmatmul.mubr.bf16.gmra.mrb[0].mxu0 %v212
  %v305 = vpop.f32.mrb[0].mxu0
  %v306 = vadd.f32 %v257, %v305
  %v307 = vpop.f32.mrb[0].mxu0
  %v308 = vpop.f32.mrb[0].mxu0
  %v309 = vadd.f32 %v260, %v308
  %v310 = vpop.f32.mrb[0].mxu0
  %311 = vdwg.mxu0
  %v312 = vld [vmem:[%s3] sm:$0xf]
  %v313 = vld [vmem:[%s3 + $0x4] sm:$0xf]
  %v314 = vld [vmem:[%s3 + $0x8] sm:$0xf]
  %v315 = vld [vmem:[%s3 + $0xc] sm:$0xf]
  %v316 = vunpack.c.l.bf16 %v312
  %v317 = vunpack.c.l.bf16 %v313
  %v318 = vunpack.c.l.bf16 %v314
  %v319 = vunpack.c.l.bf16 %v315
  %v320 = vadd.f32 %v298, %v316
  %v321 = vadd.f32 %v301, %v317
  %v322 = vadd.f32 %v306, %v318
  %v323 = vadd.f32 %v309, %v319
  %v324 = vmax.f32 %v320, 0.0
  %v325 = vmax.f32 %v321, 0.0
  %v326 = vmax.f32 %v322, 0.0
  %v327 = vmax.f32 %v323, 0.0
  %v328 = vpack.c.bf16 %v325, %v324
  %v329 = vpack.c.bf16 %v327, %v326
  %v332 = vunpack.c.l.b16 %v328
  %v333 = vunpack.c.h.b16 %v328
  %v334 = vunpack.c.l.b16 %v329
  %v335 = vunpack.c.h.b16 %v329
  %v336 = vpack.c.b16 %v332, %v332
  %v337 = vpack.c.b16 %v333, %v333
  %v338 = vpack.c.b16 %v334, %v334
  %v339 = vpack.c.b16 %v335, %v335
  %vm344 = vcmask 257024
  %345 = vst.msk [vmem:[%s4] sm:$0xf] %vm344, %v336
  %346 = vst.msk [vmem:[%s4 + $0x4] sm:$0xf] %vm344, %v337
  %347 = vst.msk [vmem:[%s4 + $0x8] sm:$0xf] %vm344, %v338
  %348 = vst.msk [vmem:[%s4 + $0xc] sm:$0xf] %vm344, %v339
  // Predicated region
  $region18: #{_lambda_.30} parent=0 // pred_check
    _
  $region19: #{_lambda_.30} parent=0 // pred_check_branch
    %350 = sbr.rel (0) target = $region21
  $region20: #{_lambda_.30} parent=0 // pred_region
    _
  $region21: #{_lambda_.30} parent=0 // pred_fallthru
    _
  // Predicated region
  $region22: #{_lambda_.30} parent=0 // pred_check
    _
  $region23: #{_lambda_.30} parent=0 // pred_check_branch
    %352 = sbr.rel (0) target = $region25
  $region24: #{_lambda_.30} parent=0 // pred_region
    _
  $region25: #{_lambda_.30} parent=0 // pred_fallthru
    _

// kernel: _lambda_.31
$region0: #{_lambda_.31}
  #allocation0 [shape = 'u32[]', space=smem, size = 0x4, offset = 0x4, fixed_abs, tag = 'smem constant byte address 0x4 - core index']
  #allocation1 [shape = 'u32[144,128]{1,0:T(1,128)}', space=vmem, size = 0x12000, scoped, tag = 'internal scratch']
  %s0 = inlined_call_operand.vmem [shape: bf16[32,288], index: 0, kind: input, shape index: {}]
  %s1 = inlined_call_operand.vmem [shape: bf16[288,32], index: 1, kind: input, shape index: {}]
  %s2 = inlined_call_operand.vmem [shape: f32[1,32], index: 2, kind: input, shape index: {}]
  %s3 = inlined_call_operand.vmem [shape: bf16[32,32], index: 3, kind: output, shape index: {}]
  %s4 = sld [smem:[#allocation0]]
  $region22: #{_lambda_.31} parent=0
    _
  %s6 = ssub.s32 1, %s4
  %s7 = scalar_select 0, %s6, %s4
  // Predicated region
  $region2: #{_lambda_.31} parent=0 // pred_check
    _
  $region3: #{_lambda_.31} parent=0 // pred_check_branch
    %9 = sbr.rel (0) target = $region5
  $region4: #{_lambda_.31} parent=0 // pred_region
    _
  $region5: #{_lambda_.31} parent=0 // pred_fallthru
    _
  // Predicated region
  $region6: #{_lambda_.31} parent=0 // pred_check
    _
  $region7: #{_lambda_.31} parent=0 // pred_check_branch
    %11 = sbr.rel (0) target = $region9
  $region8: #{_lambda_.31} parent=0 // pred_region
    _
  $region9: #{_lambda_.31} parent=0 // pred_fallthru
    _
  // Predicated region
  $region10: #{_lambda_.31} parent=0 // pred_check
    _
  $region11: #{_lambda_.31} parent=0 // pred_check_branch
    %13 = sbr.rel (0) target = $region13
  $region12: #{_lambda_.31} parent=0 // pred_region
    _
  $region13: #{_lambda_.31} parent=0 // pred_fallthru
    _
  %v15 = vld [vmem:[%s0] sm:$0xff]
  %v16 = vld [vmem:[%s0 + $0x8] sm:$0xf]
  %v17 = vld [vmem:[%s0 + $0xc] sm:$0xff]
  %v18 = vld [vmem:[%s0 + $0x14] sm:$0xf]
  %v19 = vld [vmem:[%s0 + $0x18] sm:$0xff]
  %v20 = vld [vmem:[%s0 + $0x20] sm:$0xf]
  %v21 = vld [vmem:[%s0 + $0x24] sm:$0xff]
  %v22 = vld [vmem:[%s0 + $0x2c] sm:$0xf]
  %v23 = vld [vmem:[%s1] sm:$0xf]
  %v24 = vld [vmem:[%s1 + $0x4] sm:$0xf]
  %v25 = vld [vmem:[%s1 + $0x8] sm:$0xf]
  %v26 = vld [vmem:[%s1 + $0xc] sm:$0xf]
  %v27 = vld [vmem:[%s1 + $0x10] sm:$0xf]
  %v28 = vld [vmem:[%s1 + $0x14] sm:$0xf]
  %v29 = vld [vmem:[%s1 + $0x18] sm:$0xf]
  %v30 = vld [vmem:[%s1 + $0x1c] sm:$0xf]
  %v31 = vld [vmem:[%s1 + $0x20] sm:$0xf]
  %v32 = vld [vmem:[%s1 + $0x24] sm:$0xf]
  %v33 = vld [vmem:[%s1 + $0x28] sm:$0xf]
  %v34 = vld [vmem:[%s1 + $0x2c] sm:$0xf]
  %v35 = vld [vmem:[%s1 + $0x30] sm:$0xf]
  %v36 = vld [vmem:[%s1 + $0x34] sm:$0xf]
  %v37 = vld [vmem:[%s1 + $0x38] sm:$0xf]
  %v38 = vld [vmem:[%s1 + $0x3c] sm:$0xf]
  %v39 = vld [vmem:[%s1 + $0x40] sm:$0xf]
  %v40 = vld [vmem:[%s1 + $0x44] sm:$0xf]
  %v41 = vld [vmem:[%s1 + $0x48] sm:$0xf]
  %v42 = vld [vmem:[%s1 + $0x4c] sm:$0xf]
  %v43 = vld [vmem:[%s1 + $0x50] sm:$0xf]
  %v44 = vld [vmem:[%s1 + $0x54] sm:$0xf]
  %v45 = vld [vmem:[%s1 + $0x58] sm:$0xf]
  %v46 = vld [vmem:[%s1 + $0x5c] sm:$0xf]
  %v47 = vld [vmem:[%s1 + $0x60] sm:$0xf]
  %v48 = vld [vmem:[%s1 + $0x64] sm:$0xf]
  %v49 = vld [vmem:[%s1 + $0x68] sm:$0xf]
  %v50 = vld [vmem:[%s1 + $0x6c] sm:$0xf]
  %v51 = vld [vmem:[%s1 + $0x70] sm:$0xf]
  %v52 = vld [vmem:[%s1 + $0x74] sm:$0xf]
  %v53 = vld [vmem:[%s1 + $0x78] sm:$0xf]
  %v54 = vld [vmem:[%s1 + $0x7c] sm:$0xf]
  %v55 = vld [vmem:[%s1 + $0x80] sm:$0xf]
  %v56 = vld [vmem:[%s1 + $0x84] sm:$0xf]
  %v57 = vld [vmem:[%s1 + $0x88] sm:$0xf]
  %v58 = vld [vmem:[%s1 + $0x8c] sm:$0xf]
  %v59 = vld [vmem:[%s2] sm:$0x1]
  %v61 = vlaneseq
  %v62 = vshrl.u32 %v61, 7
  %v63 = vsub.s32 0, %v62
  %v64 = vrot.slane %v59, %v63
  %v74 = vunpack.c.l.b16 %v15
  %v75 = vunpack.c.h.b16 %v15
  %v76 = vunpack.c.l.b16 %v16
  %v77 = vunpack.c.l.b16 %v17
  %v78 = vunpack.c.h.b16 %v17
  %v79 = vunpack.c.l.b16 %v18
  %v80 = vunpack.c.l.b16 %v19
  %v81 = vunpack.c.h.b16 %v19
  %v82 = vunpack.c.l.b16 %v20
  %v83 = vunpack.c.l.b16 %v21
  %v84 = vunpack.c.h.b16 %v21
  %v85 = vunpack.c.l.b16 %v22
  %v86 = vpack.c.b16 %v77, %v74
  %v87 = vpack.c.b16 %v78, %v75
  %v88 = vpack.c.b16 %v79, %v76
  %v89 = vpack.c.b16 %v83, %v80
  %v90 = vpack.c.b16 %v84, %v81
  %v91 = vpack.c.b16 %v85, %v82
  %v132 = vunpack.c.l.b16 %v23
  %v133 = vunpack.c.l.b16 %v24
  %v134 = vunpack.c.l.b16 %v25
  %v135 = vunpack.c.l.b16 %v26
  %v136 = vunpack.c.l.b16 %v27
  %v137 = vunpack.c.l.b16 %v28
  %v138 = vunpack.c.l.b16 %v29
  %v139 = vunpack.c.l.b16 %v30
  %v140 = vunpack.c.l.b16 %v31
  %v141 = vunpack.c.l.b16 %v32
  %v142 = vunpack.c.l.b16 %v33
  %v143 = vunpack.c.l.b16 %v34
  %v144 = vunpack.c.l.b16 %v35
  %v145 = vunpack.c.l.b16 %v36
  %v146 = vunpack.c.l.b16 %v37
  %v147 = vunpack.c.l.b16 %v38
  %v148 = vunpack.c.l.b16 %v39
  %v149 = vunpack.c.l.b16 %v40
  %v150 = vunpack.c.l.b16 %v41
  %v151 = vunpack.c.l.b16 %v42
  %v152 = vunpack.c.l.b16 %v43
  %v153 = vunpack.c.l.b16 %v44
  %v154 = vunpack.c.l.b16 %v45
  %v155 = vunpack.c.l.b16 %v46
  %v156 = vunpack.c.l.b16 %v47
  %v157 = vunpack.c.l.b16 %v48
  %v158 = vunpack.c.l.b16 %v49
  %v159 = vunpack.c.l.b16 %v50
  %v160 = vunpack.c.l.b16 %v51
  %v161 = vunpack.c.l.b16 %v52
  %v162 = vunpack.c.l.b16 %v53
  %v163 = vunpack.c.l.b16 %v54
  %v164 = vunpack.c.l.b16 %v55
  %v165 = vunpack.c.l.b16 %v56
  %v166 = vunpack.c.l.b16 %v57
  %v167 = vunpack.c.l.b16 %v58
  %v168 = vpack.c.b16 %v133, %v132
  %v169 = vpack.c.b16 %v135, %v134
  %v170 = vpack.c.b16 %v137, %v136
  %v171 = vpack.c.b16 %v139, %v138
  %v172 = vpack.c.b16 %v141, %v140
  %v173 = vpack.c.b16 %v143, %v142
  %v174 = vpack.c.b16 %v145, %v144
  %v175 = vpack.c.b16 %v147, %v146
  %v176 = vpack.c.b16 %v149, %v148
  %v177 = vpack.c.b16 %v151, %v150
  %v178 = vpack.c.b16 %v153, %v152
  %v179 = vpack.c.b16 %v155, %v154
  %v180 = vpack.c.b16 %v157, %v156
  %v181 = vpack.c.b16 %v159, %v158
  %v182 = vpack.c.b16 %v161, %v160
  %v183 = vpack.c.b16 %v163, %v162
  %v184 = vpack.c.b16 %v165, %v164
  %v185 = vpack.c.b16 %v167, %v166
  %vm204 = vcmask 261120
  %v206 = vsel %vm204, %v88, 0
  %v209 = vsel %vm204, %v91, 0
  %211 = vmatprep.subr.bf16.mxu0 0
  %212 = vmatpush1.bf16.msra.mxu0 %v168
  %213 = vmatprep.subr.bf16.mxu0 0
  %214 = vmatpush1.bf16.msra.mxu0 %v169
  %215 = vmatprep.subr.bf16.mxu0 0
  %216 = vmatpush1.bf16.msra.mxu0 %v170
  %217 = vmatprep.subr.bf16.mxu0 0
  %218 = vmatpush1.bf16.msra.mxu0 %v171
  %219 = vmatprep.subr.bf16.mxu0 0
  %220 = vmatpush1.bf16.msra.mxu0 %v172
  %221 = vmatprep.subr.bf16.mxu0 0
  %222 = vmatpush1.bf16.msra.mxu0 %v173
  %223 = vmatprep.subr.bf16.mxu0 0
  %224 = vmatpush1.bf16.msra.mxu0 %v174
  %225 = vmatprep.subr.bf16.mxu0 0
  %226 = vmatpush1.bf16.msra.mxu0 %v175
  %227 = vmatprep.subr.bf16.mxu0 0
  %228 = vmatpush1.bf16.msra.mxu0 %v176
  %229 = vmatprep.subr.bf16.mxu0 0
  %230 = vmatpush1.bf16.msra.mxu0 %v177
  %231 = vmatprep.subr.bf16.mxu0 0
  %232 = vmatpush1.bf16.msra.mxu0 %v178
  %233 = vmatprep.subr.bf16.mxu0 0
  %234 = vmatpush1.bf16.msra.mxu0 %v179
  %235 = vmatprep.subr.bf16.mxu0 0
  %236 = vmatpush1.bf16.msra.mxu0 %v180
  %237 = vmatprep.subr.bf16.mxu0 0
  %238 = vmatpush1.bf16.msra.mxu0 %v181
  %239 = vmatprep.subr.bf16.mxu0 0
  %240 = vmatpush1.bf16.msra.mxu0 %v182
  %241 = vmatprep.subr.bf16.mxu0 0
  %242 = vmatpush1.bf16.msra.mxu0 %v183
  %243 = vmatprep.mubr.bf16.mxu0 %v87
  %244 = vmatmul.mubr.bf16.gmra.mrb[0].mxu0 %v86
  %v245 = vpop.f32.mrb[0].mxu0
  %v246 = vadd.f32 %v64, %v245
  %v247 = vpop.f32.mrb[0].mxu0
  %v248 = vpop.f32.mrb[0].mxu0
  %v249 = vadd.f32 %v64, %v248
  %v250 = vpop.f32.mrb[0].mxu0
  %251 = vmatprep.mubr.bf16.mxu0 %v90
  %252 = vmatmul.mubr.bf16.gmra.mrb[0].mxu0 %v89
  %v253 = vpop.f32.mrb[0].mxu0
  %v254 = vadd.f32 %v64, %v253
  %v255 = vpop.f32.mrb[0].mxu0
  %v256 = vpop.f32.mrb[0].mxu0
  %v257 = vadd.f32 %v64, %v256
  %v258 = vpop.f32.mrb[0].mxu0
  %259 = vdwg.mxu0
  %260 = vmatprep.subr.bf16.mxu0 0
  %261 = vmatpush1.bf16.msra.mxu0 %v184
  %262 = vmatprep.subr.bf16.mxu0 0
  %263 = vmatpush1.bf16.msra.mxu0 %v185
  %264 = vmatprep.subr.bf16.mxu0 0
  %265 = vmatpush1.bf16.msra.mxu0 0
  %266 = vmatprep.subr.bf16.mxu0 0
  %267 = vmatpush1.bf16.msra.mxu0 0
  %268 = vmatprep.subr.bf16.mxu0 0
  %269 = vmatpush1.bf16.msra.mxu0 0
  %270 = vmatprep.subr.bf16.mxu0 0
  %271 = vmatpush1.bf16.msra.mxu0 0
  %272 = vmatprep.subr.bf16.mxu0 0
  %273 = vmatpush1.bf16.msra.mxu0 0
  %274 = vmatprep.subr.bf16.mxu0 0
  %275 = vmatpush1.bf16.msra.mxu0 0
  %276 = vmatprep.subr.bf16.mxu0 0
  %277 = vmatpush1.bf16.msra.mxu0 0
  %278 = vmatprep.subr.bf16.mxu0 0
  %279 = vmatpush1.bf16.msra.mxu0 0
  %280 = vmatprep.subr.bf16.mxu0 0
  %281 = vmatpush1.bf16.msra.mxu0 0
  %282 = vmatprep.subr.bf16.mxu0 0
  %283 = vmatpush1.bf16.msra.mxu0 0
  %284 = vmatprep.subr.bf16.mxu0 0
  %285 = vmatpush1.bf16.msra.mxu0 0
  %286 = vmatprep.subr.bf16.mxu0 0
  %287 = vmatpush1.bf16.msra.mxu0 0
  %288 = vmatprep.subr.bf16.mxu0 0
  %289 = vmatpush1.bf16.msra.mxu0 0
  %290 = vmatprep.subr.bf16.mxu0 0
  %291 = vmatpush1.bf16.msra.mxu0 0
  %292 = vmatprep.mubr.bf16.mxu0 0
  %293 = vmatmul.mubr.bf16.gmra.mrb[0].mxu0 %v206
  %v294 = vpop.f32.mrb[0].mxu0
  %v295 = vadd.f32 %v246, %v294
  %v296 = vpop.f32.mrb[0].mxu0
  %v297 = vpop.f32.mrb[0].mxu0
  %v298 = vadd.f32 %v249, %v297
  %v299 = vpop.f32.mrb[0].mxu0
  %300 = vmatprep.mubr.bf16.mxu0 0
  %301 = vmatmul.mubr.bf16.gmra.mrb[0].mxu0 %v209
  %v302 = vpop.f32.mrb[0].mxu0
  %v303 = vadd.f32 %v254, %v302
  %v304 = vpop.f32.mrb[0].mxu0
  %v305 = vpop.f32.mrb[0].mxu0
  %v306 = vadd.f32 %v257, %v305
  %v307 = vpop.f32.mrb[0].mxu0
  %308 = vdwg.mxu0
  %v309 = vmax.f32 %v295, 0.0
  %v310 = vmax.f32 %v298, 0.0
  %v311 = vmax.f32 %v303, 0.0
  %v312 = vmax.f32 %v306, 0.0
  %v313 = vpack.c.bf16 %v310, %v309
  %v314 = vpack.c.bf16 %v312, %v311
  %v317 = vunpack.c.l.b16 %v313
  %v318 = vunpack.c.h.b16 %v313
  %v319 = vunpack.c.l.b16 %v314
  %v320 = vunpack.c.h.b16 %v314
  %v321 = vpack.c.b16 %v317, %v317
  %v322 = vpack.c.b16 %v318, %v318
  %v323 = vpack.c.b16 %v319, %v319
  %v324 = vpack.c.b16 %v320, %v320
  %vm329 = vcmask 257024
  %330 = vst.msk [vmem:[%s3] sm:$0xf] %vm329, %v321
  %331 = vst.msk [vmem:[%s3 + $0x4] sm:$0xf] %vm329, %v322
  %332 = vst.msk [vmem:[%s3 + $0x8] sm:$0xf] %vm329, %v323
  %333 = vst.msk [vmem:[%s3 + $0xc] sm:$0xf] %vm329, %v324
  // Predicated region
  $region14: #{_lambda_.31} parent=0 // pred_check
    _
  $region15: #{_lambda_.31} parent=0 // pred_check_branch
    %335 = sbr.rel (0) target = $region17
  $region16: #{_lambda_.31} parent=0 // pred_region
    _
  $region17: #{_lambda_.31} parent=0 // pred_fallthru
    _
  // Predicated region
  $region18: #{_lambda_.31} parent=0 // pred_check
    _
  $region19: #{_lambda_.31} parent=0 // pred_check_branch
    %337 = sbr.rel (0) target = $region21
  $region20: #{_lambda_.31} parent=0 // pred_region
    _
  $region21: #{_lambda_.31} parent=0 // pred_fallthru
    _

// kernel: _lambda_.33
$region0: #{_lambda_.33}
  #allocation0 [shape = 'u32[]', space=smem, size = 0x4, offset = 0x4, fixed_abs, tag = 'smem constant byte address 0x4 - core index']
  #allocation1 [shape = 'u32[144,128]{1,0:T(1,128)}', space=vmem, size = 0x12000, scoped, tag = 'internal scratch']
  %s0 = inlined_call_operand.vmem [shape: bf16[8,288], index: 0, kind: input, shape index: {}]
  %s1 = inlined_call_operand.vmem [shape: bf16[288,64], index: 1, kind: input, shape index: {}]
  %s2 = inlined_call_operand.vmem [shape: f32[1,64], index: 2, kind: input, shape index: {}]
  %s3 = inlined_call_operand.vmem [shape: bf16[8,64], index: 3, kind: output, shape index: {}]
  %s4 = sld [smem:[#allocation0]]
  $region22: #{_lambda_.33} parent=0
    _
  %s6 = ssub.s32 1, %s4
  %s7 = scalar_select 0, %s6, %s4
  // Predicated region
  $region2: #{_lambda_.33} parent=0 // pred_check
    _
  $region3: #{_lambda_.33} parent=0 // pred_check_branch
    %9 = sbr.rel (0) target = $region5
  $region4: #{_lambda_.33} parent=0 // pred_region
    _
  $region5: #{_lambda_.33} parent=0 // pred_fallthru
    _
  // Predicated region
  $region6: #{_lambda_.33} parent=0 // pred_check
    _
  $region7: #{_lambda_.33} parent=0 // pred_check_branch
    %11 = sbr.rel (0) target = $region9
  $region8: #{_lambda_.33} parent=0 // pred_region
    _
  $region9: #{_lambda_.33} parent=0 // pred_fallthru
    _
  // Predicated region
  $region10: #{_lambda_.33} parent=0 // pred_check
    _
  $region11: #{_lambda_.33} parent=0 // pred_check_branch
    %13 = sbr.rel (0) target = $region13
  $region12: #{_lambda_.33} parent=0 // pred_region
    _
  $region13: #{_lambda_.33} parent=0 // pred_fallthru
    _
  %v15 = vld [vmem:[%s0] sm:$0xff]
  %v16 = vld [vmem:[%s0 + $0x8] sm:$0xf]
  %v17 = vld [vmem:[%s1] sm:$0xf]
  %v18 = vld [vmem:[%s1 + $0x4] sm:$0xf]
  %v19 = vld [vmem:[%s1 + $0x8] sm:$0xf]
  %v20 = vld [vmem:[%s1 + $0xc] sm:$0xf]
  %v21 = vld [vmem:[%s1 + $0x10] sm:$0xf]
  %v22 = vld [vmem:[%s1 + $0x14] sm:$0xf]
  %v23 = vld [vmem:[%s1 + $0x18] sm:$0xf]
  %v24 = vld [vmem:[%s1 + $0x1c] sm:$0xf]
  %v25 = vld [vmem:[%s1 + $0x20] sm:$0xf]
  %v26 = vld [vmem:[%s1 + $0x24] sm:$0xf]
  %v27 = vld [vmem:[%s1 + $0x28] sm:$0xf]
  %v28 = vld [vmem:[%s1 + $0x2c] sm:$0xf]
  %v29 = vld [vmem:[%s1 + $0x30] sm:$0xf]
  %v30 = vld [vmem:[%s1 + $0x34] sm:$0xf]
  %v31 = vld [vmem:[%s1 + $0x38] sm:$0xf]
  %v32 = vld [vmem:[%s1 + $0x3c] sm:$0xf]
  %v33 = vld [vmem:[%s1 + $0x40] sm:$0xf]
  %v34 = vld [vmem:[%s1 + $0x44] sm:$0xf]
  %v35 = vld [vmem:[%s1 + $0x48] sm:$0xf]
  %v36 = vld [vmem:[%s1 + $0x4c] sm:$0xf]
  %v37 = vld [vmem:[%s1 + $0x50] sm:$0xf]
  %v38 = vld [vmem:[%s1 + $0x54] sm:$0xf]
  %v39 = vld [vmem:[%s1 + $0x58] sm:$0xf]
  %v40 = vld [vmem:[%s1 + $0x5c] sm:$0xf]
  %v41 = vld [vmem:[%s1 + $0x60] sm:$0xf]
  %v42 = vld [vmem:[%s1 + $0x64] sm:$0xf]
  %v43 = vld [vmem:[%s1 + $0x68] sm:$0xf]
  %v44 = vld [vmem:[%s1 + $0x6c] sm:$0xf]
  %v45 = vld [vmem:[%s1 + $0x70] sm:$0xf]
  %v46 = vld [vmem:[%s1 + $0x74] sm:$0xf]
  %v47 = vld [vmem:[%s1 + $0x78] sm:$0xf]
  %v48 = vld [vmem:[%s1 + $0x7c] sm:$0xf]
  %v49 = vld [vmem:[%s1 + $0x80] sm:$0xf]
  %v50 = vld [vmem:[%s1 + $0x84] sm:$0xf]
  %v51 = vld [vmem:[%s1 + $0x88] sm:$0xf]
  %v52 = vld [vmem:[%s1 + $0x8c] sm:$0xf]
  %v53 = vld [vmem:[%s2] sm:$0x1]
  %v55 = vlaneseq
  %v56 = vshrl.u32 %v55, 7
  %v57 = vsub.s32 0, %v56
  %v58 = vrot.slane %v53, %v57
  %v62 = vunpack.c.l.b16 %v15
  %v63 = vunpack.c.h.b16 %v15
  %v64 = vunpack.c.l.b16 %v16
  %v65 = vpack.c.b16 %v62, %v62
  %v66 = vpack.c.b16 %v63, %v63
  %v67 = vpack.c.b16 %v64, %v64
  %v106 = vunpack.c.l.b16 %v17
  %v107 = vunpack.c.l.b16 %v18
  %v108 = vunpack.c.l.b16 %v19
  %v109 = vunpack.c.l.b16 %v20
  %v110 = vunpack.c.l.b16 %v21
  %v111 = vunpack.c.l.b16 %v22
  %v112 = vunpack.c.l.b16 %v23
  %v113 = vunpack.c.l.b16 %v24
  %v114 = vunpack.c.l.b16 %v25
  %v115 = vunpack.c.l.b16 %v26
  %v116 = vunpack.c.l.b16 %v27
  %v117 = vunpack.c.l.b16 %v28
  %v118 = vunpack.c.l.b16 %v29
  %v119 = vunpack.c.l.b16 %v30
  %v120 = vunpack.c.l.b16 %v31
  %v121 = vunpack.c.l.b16 %v32
  %v122 = vunpack.c.l.b16 %v33
  %v123 = vunpack.c.l.b16 %v34
  %v124 = vunpack.c.l.b16 %v35
  %v125 = vunpack.c.l.b16 %v36
  %v126 = vunpack.c.l.b16 %v37
  %v127 = vunpack.c.l.b16 %v38
  %v128 = vunpack.c.l.b16 %v39
  %v129 = vunpack.c.l.b16 %v40
  %v130 = vunpack.c.l.b16 %v41
  %v131 = vunpack.c.l.b16 %v42
  %v132 = vunpack.c.l.b16 %v43
  %v133 = vunpack.c.l.b16 %v44
  %v134 = vunpack.c.l.b16 %v45
  %v135 = vunpack.c.l.b16 %v46
  %v136 = vunpack.c.l.b16 %v47
  %v137 = vunpack.c.l.b16 %v48
  %v138 = vunpack.c.l.b16 %v49
  %v139 = vunpack.c.l.b16 %v50
  %v140 = vunpack.c.l.b16 %v51
  %v141 = vunpack.c.l.b16 %v52
  %v142 = vpack.c.b16 %v107, %v106
  %v143 = vpack.c.b16 %v109, %v108
  %v144 = vpack.c.b16 %v111, %v110
  %v145 = vpack.c.b16 %v113, %v112
  %v146 = vpack.c.b16 %v115, %v114
  %v147 = vpack.c.b16 %v117, %v116
  %v148 = vpack.c.b16 %v119, %v118
  %v149 = vpack.c.b16 %v121, %v120
  %v150 = vpack.c.b16 %v123, %v122
  %v151 = vpack.c.b16 %v125, %v124
  %v152 = vpack.c.b16 %v127, %v126
  %v153 = vpack.c.b16 %v129, %v128
  %v154 = vpack.c.b16 %v131, %v130
  %v155 = vpack.c.b16 %v133, %v132
  %v156 = vpack.c.b16 %v135, %v134
  %v157 = vpack.c.b16 %v137, %v136
  %v158 = vpack.c.b16 %v139, %v138
  %v159 = vpack.c.b16 %v141, %v140
  %vm178 = vcmask 261120
  %v180 = vsel %vm178, %v67, 0
  %182 = vmatprep.subr.bf16.mxu0 0
  %183 = vmatpush1.bf16.msra.mxu0 %v142
  %184 = vmatprep.subr.bf16.mxu0 0
  %185 = vmatpush1.bf16.msra.mxu0 %v143
  %186 = vmatprep.subr.bf16.mxu0 0
  %187 = vmatpush1.bf16.msra.mxu0 %v144
  %188 = vmatprep.subr.bf16.mxu0 0
  %189 = vmatpush1.bf16.msra.mxu0 %v145
  %190 = vmatprep.subr.bf16.mxu0 0
  %191 = vmatpush1.bf16.msra.mxu0 %v146
  %192 = vmatprep.subr.bf16.mxu0 0
  %193 = vmatpush1.bf16.msra.mxu0 %v147
  %194 = vmatprep.subr.bf16.mxu0 0
  %195 = vmatpush1.bf16.msra.mxu0 %v148
  %196 = vmatprep.subr.bf16.mxu0 0
  %197 = vmatpush1.bf16.msra.mxu0 %v149
  %198 = vmatprep.subr.bf16.mxu0 0
  %199 = vmatpush1.bf16.msra.mxu0 %v150
  %200 = vmatprep.subr.bf16.mxu0 0
  %201 = vmatpush1.bf16.msra.mxu0 %v151
  %202 = vmatprep.subr.bf16.mxu0 0
  %203 = vmatpush1.bf16.msra.mxu0 %v152
  %204 = vmatprep.subr.bf16.mxu0 0
  %205 = vmatpush1.bf16.msra.mxu0 %v153
  %206 = vmatprep.subr.bf16.mxu0 0
  %207 = vmatpush1.bf16.msra.mxu0 %v154
  %208 = vmatprep.subr.bf16.mxu0 0
  %209 = vmatpush1.bf16.msra.mxu0 %v155
  %210 = vmatprep.subr.bf16.mxu0 0
  %211 = vmatpush1.bf16.msra.mxu0 %v156
  %212 = vmatprep.subr.bf16.mxu0 0
  %213 = vmatpush1.bf16.msra.mxu0 %v157
  %214 = vmatprep.mubr.bf16.mxu0 %v66
  %215 = vmatmul.mubr.bf16.gmra.mrb[0].mxu0 %v65
  %v216 = vpop.f32.mrb[0].mxu0
  %v217 = vadd.f32 %v58, %v216
  %v218 = vpop.f32.mrb[0].mxu0
  %v219 = vpop.f32.mrb[0].mxu0
  %v220 = vpop.f32.mrb[0].mxu0
  %221 = vdwg.mxu0
  %222 = vmatprep.subr.bf16.mxu0 0
  %223 = vmatpush1.bf16.msra.mxu0 %v158
  %224 = vmatprep.subr.bf16.mxu0 0
  %225 = vmatpush1.bf16.msra.mxu0 %v159
  %226 = vmatprep.subr.bf16.mxu0 0
  %227 = vmatpush1.bf16.msra.mxu0 0
  %228 = vmatprep.subr.bf16.mxu0 0
  %229 = vmatpush1.bf16.msra.mxu0 0
  %230 = vmatprep.subr.bf16.mxu0 0
  %231 = vmatpush1.bf16.msra.mxu0 0
  %232 = vmatprep.subr.bf16.mxu0 0
  %233 = vmatpush1.bf16.msra.mxu0 0
  %234 = vmatprep.subr.bf16.mxu0 0
  %235 = vmatpush1.bf16.msra.mxu0 0
  %236 = vmatprep.subr.bf16.mxu0 0
  %237 = vmatpush1.bf16.msra.mxu0 0
  %238 = vmatprep.subr.bf16.mxu0 0
  %239 = vmatpush1.bf16.msra.mxu0 0
  %240 = vmatprep.subr.bf16.mxu0 0
  %241 = vmatpush1.bf16.msra.mxu0 0
  %242 = vmatprep.subr.bf16.mxu0 0
  %243 = vmatpush1.bf16.msra.mxu0 0
  %244 = vmatprep.subr.bf16.mxu0 0
  %245 = vmatpush1.bf16.msra.mxu0 0
  %246 = vmatprep.subr.bf16.mxu0 0
  %247 = vmatpush1.bf16.msra.mxu0 0
  %248 = vmatprep.subr.bf16.mxu0 0
  %249 = vmatpush1.bf16.msra.mxu0 0
  %250 = vmatprep.subr.bf16.mxu0 0
  %251 = vmatpush1.bf16.msra.mxu0 0
  %252 = vmatprep.subr.bf16.mxu0 0
  %253 = vmatpush1.bf16.msra.mxu0 0
  %254 = vmatprep.mubr.bf16.mxu0 0
  %255 = vmatmul.mubr.bf16.gmra.mrb[0].mxu0 %v180
  %v256 = vpop.f32.mrb[0].mxu0
  %v257 = vadd.f32 %v217, %v256
  %v258 = vpop.f32.mrb[0].mxu0
  %v259 = vpop.f32.mrb[0].mxu0
  %v260 = vpop.f32.mrb[0].mxu0
  %261 = vdwg.mxu0
  %v262 = vmax.f32 %v257, 0.0
  %v263 = vpack.c.bf16 %v262, %v262
  %vm264 = vcmask 519168
  %265 = vst.msk [vmem:[%s3] sm:$0xf] %vm264, %v263
  // Predicated region
  $region14: #{_lambda_.33} parent=0 // pred_check
    _
  $region15: #{_lambda_.33} parent=0 // pred_check_branch
    %267 = sbr.rel (0) target = $region17
  $region16: #{_lambda_.33} parent=0 // pred_region
    _
  $region17: #{_lambda_.33} parent=0 // pred_fallthru
    _
  // Predicated region
  $region18: #{_lambda_.33} parent=0 // pred_check
    _
  $region19: #{_lambda_.33} parent=0 // pred_check_branch
    %269 = sbr.rel (0) target = $region21
  $region20: #{_lambda_.33} parent=0 // pred_region
    _
  $region21: #{_lambda_.33} parent=0 // pred_fallthru
    _

// kernel: _lambda_.34
$region0: #{_lambda_.34}
  #allocation0 [shape = 'u32[]', space=smem, size = 0x4, offset = 0x4, fixed_abs, tag = 'smem constant byte address 0x4 - core index']
  #allocation1 [shape = 'u32[144,128]{1,0:T(1,128)}', space=vmem, size = 0x12000, scoped, tag = 'internal scratch']
  %s0 = inlined_call_operand.vmem [shape: bf16[8,32], index: 0, kind: input, shape index: {}]
  %s1 = inlined_call_operand.vmem [shape: bf16[32,64], index: 1, kind: input, shape index: {}]
  %s2 = inlined_call_operand.vmem [shape: f32[1,64], index: 2, kind: input, shape index: {}]
  %s3 = inlined_call_operand.vmem [shape: bf16[8,64], index: 3, kind: output, shape index: {}]
  %s4 = sld [smem:[#allocation0]]
  $region22: #{_lambda_.34} parent=0
    _
  %s6 = ssub.s32 1, %s4
  %s7 = scalar_select 0, %s6, %s4
  // Predicated region
  $region2: #{_lambda_.34} parent=0 // pred_check
    _
  $region3: #{_lambda_.34} parent=0 // pred_check_branch
    %9 = sbr.rel (0) target = $region5
  $region4: #{_lambda_.34} parent=0 // pred_region
    _
  $region5: #{_lambda_.34} parent=0 // pred_fallthru
    _
  // Predicated region
  $region6: #{_lambda_.34} parent=0 // pred_check
    _
  $region7: #{_lambda_.34} parent=0 // pred_check_branch
    %11 = sbr.rel (0) target = $region9
  $region8: #{_lambda_.34} parent=0 // pred_region
    _
  $region9: #{_lambda_.34} parent=0 // pred_fallthru
    _
  // Predicated region
  $region10: #{_lambda_.34} parent=0 // pred_check
    _
  $region11: #{_lambda_.34} parent=0 // pred_check_branch
    %13 = sbr.rel (0) target = $region13
  $region12: #{_lambda_.34} parent=0 // pred_region
    _
  $region13: #{_lambda_.34} parent=0 // pred_fallthru
    _
  %v15 = vld [vmem:[%s0] sm:$0xf]
  %v16 = vld [vmem:[%s1] sm:$0xf]
  %v17 = vld [vmem:[%s1 + $0x4] sm:$0xf]
  %v18 = vld [vmem:[%s1 + $0x8] sm:$0xf]
  %v19 = vld [vmem:[%s1 + $0xc] sm:$0xf]
  %v20 = vld [vmem:[%s2] sm:$0x1]
  %v22 = vlaneseq
  %v23 = vshrl.u32 %v22, 7
  %v24 = vsub.s32 0, %v23
  %v25 = vrot.slane %v20, %v24
  %v31 = vunpack.c.l.b16 %v16
  %v32 = vunpack.c.l.b16 %v17
  %v33 = vunpack.c.l.b16 %v18
  %v34 = vunpack.c.l.b16 %v19
  %v35 = vpack.c.b16 %v32, %v31
  %v36 = vpack.c.b16 %v34, %v33
  %vm39 = vcmask 261120
  %v41 = vsel %vm39, %v15, 0
  %43 = vmatprep.subr.bf16.mxu0 0
  %44 = vmatpush1.bf16.msra.mxu0 %v35
  %45 = vmatprep.subr.bf16.mxu0 0
  %46 = vmatpush1.bf16.msra.mxu0 %v36
  %47 = vmatprep.subr.bf16.mxu0 0
  %48 = vmatpush1.bf16.msra.mxu0 0
  %49 = vmatprep.subr.bf16.mxu0 0
  %50 = vmatpush1.bf16.msra.mxu0 0
  %51 = vmatprep.subr.bf16.mxu0 0
  %52 = vmatpush1.bf16.msra.mxu0 0
  %53 = vmatprep.subr.bf16.mxu0 0
  %54 = vmatpush1.bf16.msra.mxu0 0
  %55 = vmatprep.subr.bf16.mxu0 0
  %56 = vmatpush1.bf16.msra.mxu0 0
  %57 = vmatprep.subr.bf16.mxu0 0
  %58 = vmatpush1.bf16.msra.mxu0 0
  %59 = vmatprep.subr.bf16.mxu0 0
  %60 = vmatpush1.bf16.msra.mxu0 0
  %61 = vmatprep.subr.bf16.mxu0 0
  %62 = vmatpush1.bf16.msra.mxu0 0
  %63 = vmatprep.subr.bf16.mxu0 0
  %64 = vmatpush1.bf16.msra.mxu0 0
  %65 = vmatprep.subr.bf16.mxu0 0
  %66 = vmatpush1.bf16.msra.mxu0 0
  %67 = vmatprep.subr.bf16.mxu0 0
  %68 = vmatpush1.bf16.msra.mxu0 0
  %69 = vmatprep.subr.bf16.mxu0 0
  %70 = vmatpush1.bf16.msra.mxu0 0
  %71 = vmatprep.subr.bf16.mxu0 0
  %72 = vmatpush1.bf16.msra.mxu0 0
  %73 = vmatprep.subr.bf16.mxu0 0
  %74 = vmatpush1.bf16.msra.mxu0 0
  %75 = vmatprep.mubr.bf16.mxu0 0
  %76 = vmatmul.mubr.bf16.gmra.mrb[0].mxu0 %v41
  %v77 = vpop.f32.mrb[0].mxu0
  %v78 = vadd.f32 %v25, %v77
  %v79 = vpop.f32.mrb[0].mxu0
  %v80 = vpop.f32.mrb[0].mxu0
  %v81 = vpop.f32.mrb[0].mxu0
  %82 = vdwg.mxu0
  %v83 = vpack.c.bf16 %v78, %v78
  %vm84 = vcmask 519168
  %85 = vst.msk [vmem:[%s3] sm:$0xf] %vm84, %v83
  // Predicated region
  $region14: #{_lambda_.34} parent=0 // pred_check
    _
  $region15: #{_lambda_.34} parent=0 // pred_check_branch
    %87 = sbr.rel (0) target = $region17
  $region16: #{_lambda_.34} parent=0 // pred_region
    _
  $region17: #{_lambda_.34} parent=0 // pred_fallthru
    _
  // Predicated region
  $region18: #{_lambda_.34} parent=0 // pred_check
    _
  $region19: #{_lambda_.34} parent=0 // pred_check_branch
    %89 = sbr.rel (0) target = $region21
  $region20: #{_lambda_.34} parent=0 // pred_region
    _
  $region21: #{_lambda_.34} parent=0 // pred_fallthru
    _

// kernel: _lambda_.36
$region0: #{_lambda_.36}
  #allocation0 [shape = 'u32[]', space=smem, size = 0x4, offset = 0x4, fixed_abs, tag = 'smem constant byte address 0x4 - core index']
  #allocation1 [shape = 'u32[144,128]{1,0:T(1,128)}', space=vmem, size = 0x12000, scoped, tag = 'internal scratch']
  %s0 = inlined_call_operand.vmem [shape: bf16[8,576], index: 0, kind: input, shape index: {}]
  %s1 = inlined_call_operand.vmem [shape: bf16[576,64], index: 1, kind: input, shape index: {}]
  %s2 = inlined_call_operand.vmem [shape: f32[1,64], index: 2, kind: input, shape index: {}]
  %s3 = inlined_call_operand.vmem [shape: bf16[8,64], index: 3, kind: output, shape index: {}]
  %s4 = sld [smem:[#allocation0]]
  $region22: #{_lambda_.36} parent=0
    _
  %s6 = ssub.s32 1, %s4
  %s7 = scalar_select 0, %s6, %s4
  // Predicated region
  $region2: #{_lambda_.36} parent=0 // pred_check
    _
  $region3: #{_lambda_.36} parent=0 // pred_check_branch
    %9 = sbr.rel (0) target = $region5
  $region4: #{_lambda_.36} parent=0 // pred_region
    _
  $region5: #{_lambda_.36} parent=0 // pred_fallthru
    _
  // Predicated region
  $region6: #{_lambda_.36} parent=0 // pred_check
    _
  $region7: #{_lambda_.36} parent=0 // pred_check_branch
    %11 = sbr.rel (0) target = $region9
  $region8: #{_lambda_.36} parent=0 // pred_region
    _
  $region9: #{_lambda_.36} parent=0 // pred_fallthru
    _
  // Predicated region
  $region10: #{_lambda_.36} parent=0 // pred_check
    _
  $region11: #{_lambda_.36} parent=0 // pred_check_branch
    %13 = sbr.rel (0) target = $region13
  $region12: #{_lambda_.36} parent=0 // pred_region
    _
  $region13: #{_lambda_.36} parent=0 // pred_fallthru
    _
  %v15 = vld [vmem:[%s0] sm:$0xff]
  %v16 = vld [vmem:[%s0 + $0x8] sm:$0xff]
  %v17 = vld [vmem:[%s0 + $0x10] sm:$0xf]
  %v18 = vld [vmem:[%s1] sm:$0xf]
  %v19 = vld [vmem:[%s1 + $0x4] sm:$0xf]
  %v20 = vld [vmem:[%s1 + $0x8] sm:$0xf]
  %v21 = vld [vmem:[%s1 + $0xc] sm:$0xf]
  %v22 = vld [vmem:[%s1 + $0x10] sm:$0xf]
  %v23 = vld [vmem:[%s1 + $0x14] sm:$0xf]
  %v24 = vld [vmem:[%s1 + $0x18] sm:$0xf]
  %v25 = vld [vmem:[%s1 + $0x1c] sm:$0xf]
  %v26 = vld [vmem:[%s1 + $0x20] sm:$0xf]
  %v27 = vld [vmem:[%s1 + $0x24] sm:$0xf]
  %v28 = vld [vmem:[%s1 + $0x28] sm:$0xf]
  %v29 = vld [vmem:[%s1 + $0x2c] sm:$0xf]
  %v30 = vld [vmem:[%s1 + $0x30] sm:$0xf]
  %v31 = vld [vmem:[%s1 + $0x34] sm:$0xf]
  %v32 = vld [vmem:[%s1 + $0x38] sm:$0xf]
  %v33 = vld [vmem:[%s1 + $0x3c] sm:$0xf]
  %v34 = vld [vmem:[%s1 + $0x40] sm:$0xf]
  %v35 = vld [vmem:[%s1 + $0x44] sm:$0xf]
  %v36 = vld [vmem:[%s1 + $0x48] sm:$0xf]
  %v37 = vld [vmem:[%s1 + $0x4c] sm:$0xf]
  %v38 = vld [vmem:[%s1 + $0x50] sm:$0xf]
  %v39 = vld [vmem:[%s1 + $0x54] sm:$0xf]
  %v40 = vld [vmem:[%s1 + $0x58] sm:$0xf]
  %v41 = vld [vmem:[%s1 + $0x5c] sm:$0xf]
  %v42 = vld [vmem:[%s1 + $0x60] sm:$0xf]
  %v43 = vld [vmem:[%s1 + $0x64] sm:$0xf]
  %v44 = vld [vmem:[%s1 + $0x68] sm:$0xf]
  %v45 = vld [vmem:[%s1 + $0x6c] sm:$0xf]
  %v46 = vld [vmem:[%s1 + $0x70] sm:$0xf]
  %v47 = vld [vmem:[%s1 + $0x74] sm:$0xf]
  %v48 = vld [vmem:[%s1 + $0x78] sm:$0xf]
  %v49 = vld [vmem:[%s1 + $0x7c] sm:$0xf]
  %v50 = vld [vmem:[%s1 + $0x80] sm:$0xf]
  %v51 = vld [vmem:[%s1 + $0x84] sm:$0xf]
  %v52 = vld [vmem:[%s1 + $0x88] sm:$0xf]
  %v53 = vld [vmem:[%s1 + $0x8c] sm:$0xf]
  %v54 = vld [vmem:[%s1 + $0x90] sm:$0xf]
  %v55 = vld [vmem:[%s1 + $0x94] sm:$0xf]
  %v56 = vld [vmem:[%s1 + $0x98] sm:$0xf]
  %v57 = vld [vmem:[%s1 + $0x9c] sm:$0xf]
  %v58 = vld [vmem:[%s1 + $0xa0] sm:$0xf]
  %v59 = vld [vmem:[%s1 + $0xa4] sm:$0xf]
  %v60 = vld [vmem:[%s1 + $0xa8] sm:$0xf]
  %v61 = vld [vmem:[%s1 + $0xac] sm:$0xf]
  %v62 = vld [vmem:[%s1 + $0xb0] sm:$0xf]
  %v63 = vld [vmem:[%s1 + $0xb4] sm:$0xf]
  %v64 = vld [vmem:[%s1 + $0xb8] sm:$0xf]
  %v65 = vld [vmem:[%s1 + $0xbc] sm:$0xf]
  %v66 = vld [vmem:[%s1 + $0xc0] sm:$0xf]
  %v67 = vld [vmem:[%s1 + $0xc4] sm:$0xf]
  %v68 = vld [vmem:[%s1 + $0xc8] sm:$0xf]
  %v69 = vld [vmem:[%s1 + $0xcc] sm:$0xf]
  %v70 = vld [vmem:[%s1 + $0xd0] sm:$0xf]
  %v71 = vld [vmem:[%s1 + $0xd4] sm:$0xf]
  %v72 = vld [vmem:[%s1 + $0xd8] sm:$0xf]
  %v73 = vld [vmem:[%s1 + $0xdc] sm:$0xf]
  %v74 = vld [vmem:[%s1 + $0xe0] sm:$0xf]
  %v75 = vld [vmem:[%s1 + $0xe4] sm:$0xf]
  %v76 = vld [vmem:[%s1 + $0xe8] sm:$0xf]
  %v77 = vld [vmem:[%s1 + $0xec] sm:$0xf]
  %v78 = vld [vmem:[%s1 + $0xf0] sm:$0xf]
  %v79 = vld [vmem:[%s1 + $0xf4] sm:$0xf]
  %v80 = vld [vmem:[%s1 + $0xf8] sm:$0xf]
  %v81 = vld [vmem:[%s1 + $0xfc] sm:$0xf]
  %v82 = vld [vmem:[%s1 + $0x100] sm:$0xf]
  %v83 = vld [vmem:[%s1 + $0x104] sm:$0xf]
  %v84 = vld [vmem:[%s1 + $0x108] sm:$0xf]
  %v85 = vld [vmem:[%s1 + $0x10c] sm:$0xf]
  %v86 = vld [vmem:[%s1 + $0x110] sm:$0xf]
  %v87 = vld [vmem:[%s1 + $0x114] sm:$0xf]
  %v88 = vld [vmem:[%s1 + $0x118] sm:$0xf]
  %v89 = vld [vmem:[%s1 + $0x11c] sm:$0xf]
  %v90 = vld [vmem:[%s2] sm:$0x1]
  %v92 = vlaneseq
  %v93 = vshrl.u32 %v92, 7
  %v94 = vsub.s32 0, %v93
  %v95 = vrot.slane %v90, %v94
  %v100 = vunpack.c.l.b16 %v15
  %v101 = vunpack.c.h.b16 %v15
  %v102 = vunpack.c.l.b16 %v16
  %v103 = vunpack.c.h.b16 %v16
  %v104 = vunpack.c.l.b16 %v17
  %v105 = vpack.c.b16 %v100, %v100
  %v106 = vpack.c.b16 %v101, %v101
  %v107 = vpack.c.b16 %v102, %v102
  %v108 = vpack.c.b16 %v103, %v103
  %v109 = vpack.c.b16 %v104, %v104
  %v186 = vunpack.c.l.b16 %v18
  %v187 = vunpack.c.l.b16 %v19
  %v188 = vunpack.c.l.b16 %v20
  %v189 = vunpack.c.l.b16 %v21
  %v190 = vunpack.c.l.b16 %v22
  %v191 = vunpack.c.l.b16 %v23
  %v192 = vunpack.c.l.b16 %v24
  %v193 = vunpack.c.l.b16 %v25
  %v194 = vunpack.c.l.b16 %v26
  %v195 = vunpack.c.l.b16 %v27
  %v196 = vunpack.c.l.b16 %v28
  %v197 = vunpack.c.l.b16 %v29
  %v198 = vunpack.c.l.b16 %v30
  %v199 = vunpack.c.l.b16 %v31
  %v200 = vunpack.c.l.b16 %v32
  %v201 = vunpack.c.l.b16 %v33
  %v202 = vunpack.c.l.b16 %v34
  %v203 = vunpack.c.l.b16 %v35
  %v204 = vunpack.c.l.b16 %v36
  %v205 = vunpack.c.l.b16 %v37
  %v206 = vunpack.c.l.b16 %v38
  %v207 = vunpack.c.l.b16 %v39
  %v208 = vunpack.c.l.b16 %v40
  %v209 = vunpack.c.l.b16 %v41
  %v210 = vunpack.c.l.b16 %v42
  %v211 = vunpack.c.l.b16 %v43
  %v212 = vunpack.c.l.b16 %v44
  %v213 = vunpack.c.l.b16 %v45
  %v214 = vunpack.c.l.b16 %v46
  %v215 = vunpack.c.l.b16 %v47
  %v216 = vunpack.c.l.b16 %v48
  %v217 = vunpack.c.l.b16 %v49
  %v218 = vunpack.c.l.b16 %v50
  %v219 = vunpack.c.l.b16 %v51
  %v220 = vunpack.c.l.b16 %v52
  %v221 = vunpack.c.l.b16 %v53
  %v222 = vunpack.c.l.b16 %v54
  %v223 = vunpack.c.l.b16 %v55
  %v224 = vunpack.c.l.b16 %v56
  %v225 = vunpack.c.l.b16 %v57
  %v226 = vunpack.c.l.b16 %v58
  %v227 = vunpack.c.l.b16 %v59
  %v228 = vunpack.c.l.b16 %v60
  %v229 = vunpack.c.l.b16 %v61
  %v230 = vunpack.c.l.b16 %v62
  %v231 = vunpack.c.l.b16 %v63
  %v232 = vunpack.c.l.b16 %v64
  %v233 = vunpack.c.l.b16 %v65
  %v234 = vunpack.c.l.b16 %v66
  %v235 = vunpack.c.l.b16 %v67
  %v236 = vunpack.c.l.b16 %v68
  %v237 = vunpack.c.l.b16 %v69
  %v238 = vunpack.c.l.b16 %v70
  %v239 = vunpack.c.l.b16 %v71
  %v240 = vunpack.c.l.b16 %v72
  %v241 = vunpack.c.l.b16 %v73
  %v242 = vunpack.c.l.b16 %v74
  %v243 = vunpack.c.l.b16 %v75
  %v244 = vunpack.c.l.b16 %v76
  %v245 = vunpack.c.l.b16 %v77
  %v246 = vunpack.c.l.b16 %v78
  %v247 = vunpack.c.l.b16 %v79
  %v248 = vunpack.c.l.b16 %v80
  %v249 = vunpack.c.l.b16 %v81
  %v250 = vunpack.c.l.b16 %v82
  %v251 = vunpack.c.l.b16 %v83
  %v252 = vunpack.c.l.b16 %v84
  %v253 = vunpack.c.l.b16 %v85
  %v254 = vunpack.c.l.b16 %v86
  %v255 = vunpack.c.l.b16 %v87
  %v256 = vunpack.c.l.b16 %v88
  %v257 = vunpack.c.l.b16 %v89
  %v258 = vpack.c.b16 %v187, %v186
  %v259 = vpack.c.b16 %v189, %v188
  %v260 = vpack.c.b16 %v191, %v190
  %v261 = vpack.c.b16 %v193, %v192
  %v262 = vpack.c.b16 %v195, %v194
  %v263 = vpack.c.b16 %v197, %v196
  %v264 = vpack.c.b16 %v199, %v198
  %v265 = vpack.c.b16 %v201, %v200
  %v266 = vpack.c.b16 %v203, %v202
  %v267 = vpack.c.b16 %v205, %v204
  %v268 = vpack.c.b16 %v207, %v206
  %v269 = vpack.c.b16 %v209, %v208
  %v270 = vpack.c.b16 %v211, %v210
  %v271 = vpack.c.b16 %v213, %v212
  %v272 = vpack.c.b16 %v215, %v214
  %v273 = vpack.c.b16 %v217, %v216
  %v274 = vpack.c.b16 %v219, %v218
  %v275 = vpack.c.b16 %v221, %v220
  %v276 = vpack.c.b16 %v223, %v222
  %v277 = vpack.c.b16 %v225, %v224
  %v278 = vpack.c.b16 %v227, %v226
  %v279 = vpack.c.b16 %v229, %v228
  %v280 = vpack.c.b16 %v231, %v230
  %v281 = vpack.c.b16 %v233, %v232
  %v282 = vpack.c.b16 %v235, %v234
  %v283 = vpack.c.b16 %v237, %v236
  %v284 = vpack.c.b16 %v239, %v238
  %v285 = vpack.c.b16 %v241, %v240
  %v286 = vpack.c.b16 %v243, %v242
  %v287 = vpack.c.b16 %v245, %v244
  %v288 = vpack.c.b16 %v247, %v246
  %v289 = vpack.c.b16 %v249, %v248
  %v290 = vpack.c.b16 %v251, %v250
  %v291 = vpack.c.b16 %v253, %v252
  %v292 = vpack.c.b16 %v255, %v254
  %v293 = vpack.c.b16 %v257, %v256
  %vm330 = vcmask 523264
  %v332 = vsel %vm330, %v109, 0
  %334 = vmatprep.subr.bf16.mxu0 0
  %335 = vmatpush1.bf16.msra.mxu0 %v258
  %336 = vmatprep.subr.bf16.mxu0 0
  %337 = vmatpush1.bf16.msra.mxu0 %v259
  %338 = vmatprep.subr.bf16.mxu0 0
  %339 = vmatpush1.bf16.msra.mxu0 %v260
  %340 = vmatprep.subr.bf16.mxu0 0
  %341 = vmatpush1.bf16.msra.mxu0 %v261
  %342 = vmatprep.subr.bf16.mxu0 0
  %343 = vmatpush1.bf16.msra.mxu0 %v262
  %344 = vmatprep.subr.bf16.mxu0 0
  %345 = vmatpush1.bf16.msra.mxu0 %v263
  %346 = vmatprep.subr.bf16.mxu0 0
  %347 = vmatpush1.bf16.msra.mxu0 %v264
  %348 = vmatprep.subr.bf16.mxu0 0
  %349 = vmatpush1.bf16.msra.mxu0 %v265
  %350 = vmatprep.subr.bf16.mxu0 0
  %351 = vmatpush1.bf16.msra.mxu0 %v266
  %352 = vmatprep.subr.bf16.mxu0 0
  %353 = vmatpush1.bf16.msra.mxu0 %v267
  %354 = vmatprep.subr.bf16.mxu0 0
  %355 = vmatpush1.bf16.msra.mxu0 %v268
  %356 = vmatprep.subr.bf16.mxu0 0
  %357 = vmatpush1.bf16.msra.mxu0 %v269
  %358 = vmatprep.subr.bf16.mxu0 0
  %359 = vmatpush1.bf16.msra.mxu0 %v270
  %360 = vmatprep.subr.bf16.mxu0 0
  %361 = vmatpush1.bf16.msra.mxu0 %v271
  %362 = vmatprep.subr.bf16.mxu0 0
  %363 = vmatpush1.bf16.msra.mxu0 %v272
  %364 = vmatprep.subr.bf16.mxu0 0
  %365 = vmatpush1.bf16.msra.mxu0 %v273
  %366 = vmatprep.mubr.bf16.mxu0 %v106
  %367 = vmatmul.mubr.bf16.gmra.mrb[0].mxu0 %v105
  %v368 = vpop.f32.mrb[0].mxu0
  %v369 = vadd.f32 %v95, %v368
  %v370 = vpop.f32.mrb[0].mxu0
  %v371 = vpop.f32.mrb[0].mxu0
  %v372 = vpop.f32.mrb[0].mxu0
  %373 = vdwg.mxu0
  %374 = vmatprep.subr.bf16.mxu0 0
  %375 = vmatpush1.bf16.msra.mxu0 %v274
  %376 = vmatprep.subr.bf16.mxu0 0
  %377 = vmatpush1.bf16.msra.mxu0 %v275
  %378 = vmatprep.subr.bf16.mxu0 0
  %379 = vmatpush1.bf16.msra.mxu0 %v276
  %380 = vmatprep.subr.bf16.mxu0 0
  %381 = vmatpush1.bf16.msra.mxu0 %v277
  %382 = vmatprep.subr.bf16.mxu0 0
  %383 = vmatpush1.bf16.msra.mxu0 %v278
  %384 = vmatprep.subr.bf16.mxu0 0
  %385 = vmatpush1.bf16.msra.mxu0 %v279
  %386 = vmatprep.subr.bf16.mxu0 0
  %387 = vmatpush1.bf16.msra.mxu0 %v280
  %388 = vmatprep.subr.bf16.mxu0 0
  %389 = vmatpush1.bf16.msra.mxu0 %v281
  %390 = vmatprep.subr.bf16.mxu0 0
  %391 = vmatpush1.bf16.msra.mxu0 %v282
  %392 = vmatprep.subr.bf16.mxu0 0
  %393 = vmatpush1.bf16.msra.mxu0 %v283
  %394 = vmatprep.subr.bf16.mxu0 0
  %395 = vmatpush1.bf16.msra.mxu0 %v284
  %396 = vmatprep.subr.bf16.mxu0 0
  %397 = vmatpush1.bf16.msra.mxu0 %v285
  %398 = vmatprep.subr.bf16.mxu0 0
  %399 = vmatpush1.bf16.msra.mxu0 %v286
  %400 = vmatprep.subr.bf16.mxu0 0
  %401 = vmatpush1.bf16.msra.mxu0 %v287
  %402 = vmatprep.subr.bf16.mxu0 0
  %403 = vmatpush1.bf16.msra.mxu0 %v288
  %404 = vmatprep.subr.bf16.mxu0 0
  %405 = vmatpush1.bf16.msra.mxu0 %v289
  %406 = vmatprep.mubr.bf16.mxu0 %v108
  %407 = vmatmul.mubr.bf16.gmra.mrb[0].mxu0 %v107
  %v408 = vpop.f32.mrb[0].mxu0
  %v409 = vadd.f32 %v369, %v408
  %v410 = vpop.f32.mrb[0].mxu0
  %v411 = vpop.f32.mrb[0].mxu0
  %v412 = vpop.f32.mrb[0].mxu0
  %413 = vdwg.mxu0
  %414 = vmatprep.subr.bf16.mxu0 0
  %415 = vmatpush1.bf16.msra.mxu0 %v290
  %416 = vmatprep.subr.bf16.mxu0 0
  %417 = vmatpush1.bf16.msra.mxu0 %v291
  %418 = vmatprep.subr.bf16.mxu0 0
  %419 = vmatpush1.bf16.msra.mxu0 %v292
  %420 = vmatprep.subr.bf16.mxu0 0
  %421 = vmatpush1.bf16.msra.mxu0 %v293
  %422 = vmatprep.subr.bf16.mxu0 0
  %423 = vmatpush1.bf16.msra.mxu0 0
  %424 = vmatprep.subr.bf16.mxu0 0
  %425 = vmatpush1.bf16.msra.mxu0 0
  %426 = vmatprep.subr.bf16.mxu0 0
  %427 = vmatpush1.bf16.msra.mxu0 0
  %428 = vmatprep.subr.bf16.mxu0 0
  %429 = vmatpush1.bf16.msra.mxu0 0
  %430 = vmatprep.subr.bf16.mxu0 0
  %431 = vmatpush1.bf16.msra.mxu0 0
  %432 = vmatprep.subr.bf16.mxu0 0
  %433 = vmatpush1.bf16.msra.mxu0 0
  %434 = vmatprep.subr.bf16.mxu0 0
  %435 = vmatpush1.bf16.msra.mxu0 0
  %436 = vmatprep.subr.bf16.mxu0 0
  %437 = vmatpush1.bf16.msra.mxu0 0
  %438 = vmatprep.subr.bf16.mxu0 0
  %439 = vmatpush1.bf16.msra.mxu0 0
  %440 = vmatprep.subr.bf16.mxu0 0
  %441 = vmatpush1.bf16.msra.mxu0 0
  %442 = vmatprep.subr.bf16.mxu0 0
  %443 = vmatpush1.bf16.msra.mxu0 0
  %444 = vmatprep.subr.bf16.mxu0 0
  %445 = vmatpush1.bf16.msra.mxu0 0
  %446 = vmatprep.mubr.bf16.mxu0 0
  %447 = vmatmul.mubr.bf16.gmra.mrb[0].mxu0 %v332
  %v448 = vpop.f32.mrb[0].mxu0
  %v449 = vadd.f32 %v409, %v448
  %v450 = vpop.f32.mrb[0].mxu0
  %v451 = vpop.f32.mrb[0].mxu0
  %v452 = vpop.f32.mrb[0].mxu0
  %453 = vdwg.mxu0
  %v454 = vmax.f32 %v449, 0.0
  %v455 = vpack.c.bf16 %v454, %v454
  %vm456 = vcmask 519168
  %457 = vst.msk [vmem:[%s3] sm:$0xf] %vm456, %v455
  // Predicated region
  $region14: #{_lambda_.36} parent=0 // pred_check
    _
  $region15: #{_lambda_.36} parent=0 // pred_check_branch
    %459 = sbr.rel (0) target = $region17
  $region16: #{_lambda_.36} parent=0 // pred_region
    _
  $region17: #{_lambda_.36} parent=0 // pred_fallthru
    _
  // Predicated region
  $region18: #{_lambda_.36} parent=0 // pred_check
    _
  $region19: #{_lambda_.36} parent=0 // pred_check_branch
    %461 = sbr.rel (0) target = $region21
  $region20: #{_lambda_.36} parent=0 // pred_region
    _
  $region21: #{_lambda_.36} parent=0 // pred_fallthru
    _

// kernel: _lambda_.35
$region0: #{_lambda_.35}
  #allocation0 [shape = 'u32[]', space=smem, size = 0x4, offset = 0x4, fixed_abs, tag = 'smem constant byte address 0x4 - core index']
  #allocation1 [shape = 'u32[144,128]{1,0:T(1,128)}', space=vmem, size = 0x12000, scoped, tag = 'internal scratch']
  %s0 = inlined_call_operand.vmem [shape: bf16[8,576], index: 0, kind: input, shape index: {}]
  %s1 = inlined_call_operand.vmem [shape: bf16[576,64], index: 1, kind: input, shape index: {}]
  %s2 = inlined_call_operand.vmem [shape: f32[1,64], index: 2, kind: input, shape index: {}]
  %s3 = inlined_call_operand.vmem [shape: bf16[8,64], index: 3, kind: input, shape index: {}]
  %s4 = inlined_call_operand.vmem [shape: bf16[8,64], index: 4, kind: output, shape index: {}]
  %s5 = sld [smem:[#allocation0]]
  $region26: #{_lambda_.35} parent=0
    _
  %s7 = ssub.s32 1, %s5
  %s8 = scalar_select 0, %s7, %s5
  // Predicated region
  $region2: #{_lambda_.35} parent=0 // pred_check
    _
  $region3: #{_lambda_.35} parent=0 // pred_check_branch
    %10 = sbr.rel (0) target = $region5
  $region4: #{_lambda_.35} parent=0 // pred_region
    _
  $region5: #{_lambda_.35} parent=0 // pred_fallthru
    _
  // Predicated region
  $region6: #{_lambda_.35} parent=0 // pred_check
    _
  $region7: #{_lambda_.35} parent=0 // pred_check_branch
    %12 = sbr.rel (0) target = $region9
  $region8: #{_lambda_.35} parent=0 // pred_region
    _
  $region9: #{_lambda_.35} parent=0 // pred_fallthru
    _
  // Predicated region
  $region10: #{_lambda_.35} parent=0 // pred_check
    _
  $region11: #{_lambda_.35} parent=0 // pred_check_branch
    %14 = sbr.rel (0) target = $region13
  $region12: #{_lambda_.35} parent=0 // pred_region
    _
  $region13: #{_lambda_.35} parent=0 // pred_fallthru
    _
  // Predicated region
  $region14: #{_lambda_.35} parent=0 // pred_check
    _
  $region15: #{_lambda_.35} parent=0 // pred_check_branch
    %16 = sbr.rel (0) target = $region17
  $region16: #{_lambda_.35} parent=0 // pred_region
    _
  $region17: #{_lambda_.35} parent=0 // pred_fallthru
    _
  %v18 = vld [vmem:[%s0] sm:$0xff]
  %v19 = vld [vmem:[%s0 + $0x8] sm:$0xff]
  %v20 = vld [vmem:[%s0 + $0x10] sm:$0xf]
  %v21 = vld [vmem:[%s1] sm:$0xf]
  %v22 = vld [vmem:[%s1 + $0x4] sm:$0xf]
  %v23 = vld [vmem:[%s1 + $0x8] sm:$0xf]
  %v24 = vld [vmem:[%s1 + $0xc] sm:$0xf]
  %v25 = vld [vmem:[%s1 + $0x10] sm:$0xf]
  %v26 = vld [vmem:[%s1 + $0x14] sm:$0xf]
  %v27 = vld [vmem:[%s1 + $0x18] sm:$0xf]
  %v28 = vld [vmem:[%s1 + $0x1c] sm:$0xf]
  %v29 = vld [vmem:[%s1 + $0x20] sm:$0xf]
  %v30 = vld [vmem:[%s1 + $0x24] sm:$0xf]
  %v31 = vld [vmem:[%s1 + $0x28] sm:$0xf]
  %v32 = vld [vmem:[%s1 + $0x2c] sm:$0xf]
  %v33 = vld [vmem:[%s1 + $0x30] sm:$0xf]
  %v34 = vld [vmem:[%s1 + $0x34] sm:$0xf]
  %v35 = vld [vmem:[%s1 + $0x38] sm:$0xf]
  %v36 = vld [vmem:[%s1 + $0x3c] sm:$0xf]
  %v37 = vld [vmem:[%s1 + $0x40] sm:$0xf]
  %v38 = vld [vmem:[%s1 + $0x44] sm:$0xf]
  %v39 = vld [vmem:[%s1 + $0x48] sm:$0xf]
  %v40 = vld [vmem:[%s1 + $0x4c] sm:$0xf]
  %v41 = vld [vmem:[%s1 + $0x50] sm:$0xf]
  %v42 = vld [vmem:[%s1 + $0x54] sm:$0xf]
  %v43 = vld [vmem:[%s1 + $0x58] sm:$0xf]
  %v44 = vld [vmem:[%s1 + $0x5c] sm:$0xf]
  %v45 = vld [vmem:[%s1 + $0x60] sm:$0xf]
  %v46 = vld [vmem:[%s1 + $0x64] sm:$0xf]
  %v47 = vld [vmem:[%s1 + $0x68] sm:$0xf]
  %v48 = vld [vmem:[%s1 + $0x6c] sm:$0xf]
  %v49 = vld [vmem:[%s1 + $0x70] sm:$0xf]
  %v50 = vld [vmem:[%s1 + $0x74] sm:$0xf]
  %v51 = vld [vmem:[%s1 + $0x78] sm:$0xf]
  %v52 = vld [vmem:[%s1 + $0x7c] sm:$0xf]
  %v53 = vld [vmem:[%s1 + $0x80] sm:$0xf]
  %v54 = vld [vmem:[%s1 + $0x84] sm:$0xf]
  %v55 = vld [vmem:[%s1 + $0x88] sm:$0xf]
  %v56 = vld [vmem:[%s1 + $0x8c] sm:$0xf]
  %v57 = vld [vmem:[%s1 + $0x90] sm:$0xf]
  %v58 = vld [vmem:[%s1 + $0x94] sm:$0xf]
  %v59 = vld [vmem:[%s1 + $0x98] sm:$0xf]
  %v60 = vld [vmem:[%s1 + $0x9c] sm:$0xf]
  %v61 = vld [vmem:[%s1 + $0xa0] sm:$0xf]
  %v62 = vld [vmem:[%s1 + $0xa4] sm:$0xf]
  %v63 = vld [vmem:[%s1 + $0xa8] sm:$0xf]
  %v64 = vld [vmem:[%s1 + $0xac] sm:$0xf]
  %v65 = vld [vmem:[%s1 + $0xb0] sm:$0xf]
  %v66 = vld [vmem:[%s1 + $0xb4] sm:$0xf]
  %v67 = vld [vmem:[%s1 + $0xb8] sm:$0xf]
  %v68 = vld [vmem:[%s1 + $0xbc] sm:$0xf]
  %v69 = vld [vmem:[%s1 + $0xc0] sm:$0xf]
  %v70 = vld [vmem:[%s1 + $0xc4] sm:$0xf]
  %v71 = vld [vmem:[%s1 + $0xc8] sm:$0xf]
  %v72 = vld [vmem:[%s1 + $0xcc] sm:$0xf]
  %v73 = vld [vmem:[%s1 + $0xd0] sm:$0xf]
  %v74 = vld [vmem:[%s1 + $0xd4] sm:$0xf]
  %v75 = vld [vmem:[%s1 + $0xd8] sm:$0xf]
  %v76 = vld [vmem:[%s1 + $0xdc] sm:$0xf]
  %v77 = vld [vmem:[%s1 + $0xe0] sm:$0xf]
  %v78 = vld [vmem:[%s1 + $0xe4] sm:$0xf]
  %v79 = vld [vmem:[%s1 + $0xe8] sm:$0xf]
  %v80 = vld [vmem:[%s1 + $0xec] sm:$0xf]
  %v81 = vld [vmem:[%s1 + $0xf0] sm:$0xf]
  %v82 = vld [vmem:[%s1 + $0xf4] sm:$0xf]
  %v83 = vld [vmem:[%s1 + $0xf8] sm:$0xf]
  %v84 = vld [vmem:[%s1 + $0xfc] sm:$0xf]
  %v85 = vld [vmem:[%s1 + $0x100] sm:$0xf]
  %v86 = vld [vmem:[%s1 + $0x104] sm:$0xf]
  %v87 = vld [vmem:[%s1 + $0x108] sm:$0xf]
  %v88 = vld [vmem:[%s1 + $0x10c] sm:$0xf]
  %v89 = vld [vmem:[%s1 + $0x110] sm:$0xf]
  %v90 = vld [vmem:[%s1 + $0x114] sm:$0xf]
  %v91 = vld [vmem:[%s1 + $0x118] sm:$0xf]
  %v92 = vld [vmem:[%s1 + $0x11c] sm:$0xf]
  %v93 = vld [vmem:[%s2] sm:$0x1]
  %v95 = vlaneseq
  %v96 = vshrl.u32 %v95, 7
  %v97 = vsub.s32 0, %v96
  %v98 = vrot.slane %v93, %v97
  %v103 = vunpack.c.l.b16 %v18
  %v104 = vunpack.c.h.b16 %v18
  %v105 = vunpack.c.l.b16 %v19
  %v106 = vunpack.c.h.b16 %v19
  %v107 = vunpack.c.l.b16 %v20
  %v108 = vpack.c.b16 %v103, %v103
  %v109 = vpack.c.b16 %v104, %v104
  %v110 = vpack.c.b16 %v105, %v105
  %v111 = vpack.c.b16 %v106, %v106
  %v112 = vpack.c.b16 %v107, %v107
  %v189 = vunpack.c.l.b16 %v21
  %v190 = vunpack.c.l.b16 %v22
  %v191 = vunpack.c.l.b16 %v23
  %v192 = vunpack.c.l.b16 %v24
  %v193 = vunpack.c.l.b16 %v25
  %v194 = vunpack.c.l.b16 %v26
  %v195 = vunpack.c.l.b16 %v27
  %v196 = vunpack.c.l.b16 %v28
  %v197 = vunpack.c.l.b16 %v29
  %v198 = vunpack.c.l.b16 %v30
  %v199 = vunpack.c.l.b16 %v31
  %v200 = vunpack.c.l.b16 %v32
  %v201 = vunpack.c.l.b16 %v33
  %v202 = vunpack.c.l.b16 %v34
  %v203 = vunpack.c.l.b16 %v35
  %v204 = vunpack.c.l.b16 %v36
  %v205 = vunpack.c.l.b16 %v37
  %v206 = vunpack.c.l.b16 %v38
  %v207 = vunpack.c.l.b16 %v39
  %v208 = vunpack.c.l.b16 %v40
  %v209 = vunpack.c.l.b16 %v41
  %v210 = vunpack.c.l.b16 %v42
  %v211 = vunpack.c.l.b16 %v43
  %v212 = vunpack.c.l.b16 %v44
  %v213 = vunpack.c.l.b16 %v45
  %v214 = vunpack.c.l.b16 %v46
  %v215 = vunpack.c.l.b16 %v47
  %v216 = vunpack.c.l.b16 %v48
  %v217 = vunpack.c.l.b16 %v49
  %v218 = vunpack.c.l.b16 %v50
  %v219 = vunpack.c.l.b16 %v51
  %v220 = vunpack.c.l.b16 %v52
  %v221 = vunpack.c.l.b16 %v53
  %v222 = vunpack.c.l.b16 %v54
  %v223 = vunpack.c.l.b16 %v55
  %v224 = vunpack.c.l.b16 %v56
  %v225 = vunpack.c.l.b16 %v57
  %v226 = vunpack.c.l.b16 %v58
  %v227 = vunpack.c.l.b16 %v59
  %v228 = vunpack.c.l.b16 %v60
  %v229 = vunpack.c.l.b16 %v61
  %v230 = vunpack.c.l.b16 %v62
  %v231 = vunpack.c.l.b16 %v63
  %v232 = vunpack.c.l.b16 %v64
  %v233 = vunpack.c.l.b16 %v65
  %v234 = vunpack.c.l.b16 %v66
  %v235 = vunpack.c.l.b16 %v67
  %v236 = vunpack.c.l.b16 %v68
  %v237 = vunpack.c.l.b16 %v69
  %v238 = vunpack.c.l.b16 %v70
  %v239 = vunpack.c.l.b16 %v71
  %v240 = vunpack.c.l.b16 %v72
  %v241 = vunpack.c.l.b16 %v73
  %v242 = vunpack.c.l.b16 %v74
  %v243 = vunpack.c.l.b16 %v75
  %v244 = vunpack.c.l.b16 %v76
  %v245 = vunpack.c.l.b16 %v77
  %v246 = vunpack.c.l.b16 %v78
  %v247 = vunpack.c.l.b16 %v79
  %v248 = vunpack.c.l.b16 %v80
  %v249 = vunpack.c.l.b16 %v81
  %v250 = vunpack.c.l.b16 %v82
  %v251 = vunpack.c.l.b16 %v83
  %v252 = vunpack.c.l.b16 %v84
  %v253 = vunpack.c.l.b16 %v85
  %v254 = vunpack.c.l.b16 %v86
  %v255 = vunpack.c.l.b16 %v87
  %v256 = vunpack.c.l.b16 %v88
  %v257 = vunpack.c.l.b16 %v89
  %v258 = vunpack.c.l.b16 %v90
  %v259 = vunpack.c.l.b16 %v91
  %v260 = vunpack.c.l.b16 %v92
  %v261 = vpack.c.b16 %v190, %v189
  %v262 = vpack.c.b16 %v192, %v191
  %v263 = vpack.c.b16 %v194, %v193
  %v264 = vpack.c.b16 %v196, %v195
  %v265 = vpack.c.b16 %v198, %v197
  %v266 = vpack.c.b16 %v200, %v199
  %v267 = vpack.c.b16 %v202, %v201
  %v268 = vpack.c.b16 %v204, %v203
  %v269 = vpack.c.b16 %v206, %v205
  %v270 = vpack.c.b16 %v208, %v207
  %v271 = vpack.c.b16 %v210, %v209
  %v272 = vpack.c.b16 %v212, %v211
  %v273 = vpack.c.b16 %v214, %v213
  %v274 = vpack.c.b16 %v216, %v215
  %v275 = vpack.c.b16 %v218, %v217
  %v276 = vpack.c.b16 %v220, %v219
  %v277 = vpack.c.b16 %v222, %v221
  %v278 = vpack.c.b16 %v224, %v223
  %v279 = vpack.c.b16 %v226, %v225
  %v280 = vpack.c.b16 %v228, %v227
  %v281 = vpack.c.b16 %v230, %v229
  %v282 = vpack.c.b16 %v232, %v231
  %v283 = vpack.c.b16 %v234, %v233
  %v284 = vpack.c.b16 %v236, %v235
  %v285 = vpack.c.b16 %v238, %v237
  %v286 = vpack.c.b16 %v240, %v239
  %v287 = vpack.c.b16 %v242, %v241
  %v288 = vpack.c.b16 %v244, %v243
  %v289 = vpack.c.b16 %v246, %v245
  %v290 = vpack.c.b16 %v248, %v247
  %v291 = vpack.c.b16 %v250, %v249
  %v292 = vpack.c.b16 %v252, %v251
  %v293 = vpack.c.b16 %v254, %v253
  %v294 = vpack.c.b16 %v256, %v255
  %v295 = vpack.c.b16 %v258, %v257
  %v296 = vpack.c.b16 %v260, %v259
  %vm333 = vcmask 523264
  %v335 = vsel %vm333, %v112, 0
  %337 = vmatprep.subr.bf16.mxu0 0
  %338 = vmatpush1.bf16.msra.mxu0 %v261
  %339 = vmatprep.subr.bf16.mxu0 0
  %340 = vmatpush1.bf16.msra.mxu0 %v262
  %341 = vmatprep.subr.bf16.mxu0 0
  %342 = vmatpush1.bf16.msra.mxu0 %v263
  %343 = vmatprep.subr.bf16.mxu0 0
  %344 = vmatpush1.bf16.msra.mxu0 %v264
  %345 = vmatprep.subr.bf16.mxu0 0
  %346 = vmatpush1.bf16.msra.mxu0 %v265
  %347 = vmatprep.subr.bf16.mxu0 0
  %348 = vmatpush1.bf16.msra.mxu0 %v266
  %349 = vmatprep.subr.bf16.mxu0 0
  %350 = vmatpush1.bf16.msra.mxu0 %v267
  %351 = vmatprep.subr.bf16.mxu0 0
  %352 = vmatpush1.bf16.msra.mxu0 %v268
  %353 = vmatprep.subr.bf16.mxu0 0
  %354 = vmatpush1.bf16.msra.mxu0 %v269
  %355 = vmatprep.subr.bf16.mxu0 0
  %356 = vmatpush1.bf16.msra.mxu0 %v270
  %357 = vmatprep.subr.bf16.mxu0 0
  %358 = vmatpush1.bf16.msra.mxu0 %v271
  %359 = vmatprep.subr.bf16.mxu0 0
  %360 = vmatpush1.bf16.msra.mxu0 %v272
  %361 = vmatprep.subr.bf16.mxu0 0
  %362 = vmatpush1.bf16.msra.mxu0 %v273
  %363 = vmatprep.subr.bf16.mxu0 0
  %364 = vmatpush1.bf16.msra.mxu0 %v274
  %365 = vmatprep.subr.bf16.mxu0 0
  %366 = vmatpush1.bf16.msra.mxu0 %v275
  %367 = vmatprep.subr.bf16.mxu0 0
  %368 = vmatpush1.bf16.msra.mxu0 %v276
  %369 = vmatprep.mubr.bf16.mxu0 %v109
  %370 = vmatmul.mubr.bf16.gmra.mrb[0].mxu0 %v108
  %v371 = vpop.f32.mrb[0].mxu0
  %v372 = vadd.f32 %v98, %v371
  %v373 = vpop.f32.mrb[0].mxu0
  %v374 = vpop.f32.mrb[0].mxu0
  %v375 = vpop.f32.mrb[0].mxu0
  %376 = vdwg.mxu0
  %377 = vmatprep.subr.bf16.mxu0 0
  %378 = vmatpush1.bf16.msra.mxu0 %v277
  %379 = vmatprep.subr.bf16.mxu0 0
  %380 = vmatpush1.bf16.msra.mxu0 %v278
  %381 = vmatprep.subr.bf16.mxu0 0
  %382 = vmatpush1.bf16.msra.mxu0 %v279
  %383 = vmatprep.subr.bf16.mxu0 0
  %384 = vmatpush1.bf16.msra.mxu0 %v280
  %385 = vmatprep.subr.bf16.mxu0 0
  %386 = vmatpush1.bf16.msra.mxu0 %v281
  %387 = vmatprep.subr.bf16.mxu0 0
  %388 = vmatpush1.bf16.msra.mxu0 %v282
  %389 = vmatprep.subr.bf16.mxu0 0
  %390 = vmatpush1.bf16.msra.mxu0 %v283
  %391 = vmatprep.subr.bf16.mxu0 0
  %392 = vmatpush1.bf16.msra.mxu0 %v284
  %393 = vmatprep.subr.bf16.mxu0 0
  %394 = vmatpush1.bf16.msra.mxu0 %v285
  %395 = vmatprep.subr.bf16.mxu0 0
  %396 = vmatpush1.bf16.msra.mxu0 %v286
  %397 = vmatprep.subr.bf16.mxu0 0
  %398 = vmatpush1.bf16.msra.mxu0 %v287
  %399 = vmatprep.subr.bf16.mxu0 0
  %400 = vmatpush1.bf16.msra.mxu0 %v288
  %401 = vmatprep.subr.bf16.mxu0 0
  %402 = vmatpush1.bf16.msra.mxu0 %v289
  %403 = vmatprep.subr.bf16.mxu0 0
  %404 = vmatpush1.bf16.msra.mxu0 %v290
  %405 = vmatprep.subr.bf16.mxu0 0
  %406 = vmatpush1.bf16.msra.mxu0 %v291
  %407 = vmatprep.subr.bf16.mxu0 0
  %408 = vmatpush1.bf16.msra.mxu0 %v292
  %409 = vmatprep.mubr.bf16.mxu0 %v111
  %410 = vmatmul.mubr.bf16.gmra.mrb[0].mxu0 %v110
  %v411 = vpop.f32.mrb[0].mxu0
  %v412 = vadd.f32 %v372, %v411
  %v413 = vpop.f32.mrb[0].mxu0
  %v414 = vpop.f32.mrb[0].mxu0
  %v415 = vpop.f32.mrb[0].mxu0
  %416 = vdwg.mxu0
  %417 = vmatprep.subr.bf16.mxu0 0
  %418 = vmatpush1.bf16.msra.mxu0 %v293
  %419 = vmatprep.subr.bf16.mxu0 0
  %420 = vmatpush1.bf16.msra.mxu0 %v294
  %421 = vmatprep.subr.bf16.mxu0 0
  %422 = vmatpush1.bf16.msra.mxu0 %v295
  %423 = vmatprep.subr.bf16.mxu0 0
  %424 = vmatpush1.bf16.msra.mxu0 %v296
  %425 = vmatprep.subr.bf16.mxu0 0
  %426 = vmatpush1.bf16.msra.mxu0 0
  %427 = vmatprep.subr.bf16.mxu0 0
  %428 = vmatpush1.bf16.msra.mxu0 0
  %429 = vmatprep.subr.bf16.mxu0 0
  %430 = vmatpush1.bf16.msra.mxu0 0
  %431 = vmatprep.subr.bf16.mxu0 0
  %432 = vmatpush1.bf16.msra.mxu0 0
  %433 = vmatprep.subr.bf16.mxu0 0
  %434 = vmatpush1.bf16.msra.mxu0 0
  %435 = vmatprep.subr.bf16.mxu0 0
  %436 = vmatpush1.bf16.msra.mxu0 0
  %437 = vmatprep.subr.bf16.mxu0 0
  %438 = vmatpush1.bf16.msra.mxu0 0
  %439 = vmatprep.subr.bf16.mxu0 0
  %440 = vmatpush1.bf16.msra.mxu0 0
  %441 = vmatprep.subr.bf16.mxu0 0
  %442 = vmatpush1.bf16.msra.mxu0 0
  %443 = vmatprep.subr.bf16.mxu0 0
  %444 = vmatpush1.bf16.msra.mxu0 0
  %445 = vmatprep.subr.bf16.mxu0 0
  %446 = vmatpush1.bf16.msra.mxu0 0
  %447 = vmatprep.subr.bf16.mxu0 0
  %448 = vmatpush1.bf16.msra.mxu0 0
  %449 = vmatprep.mubr.bf16.mxu0 0
  %450 = vmatmul.mubr.bf16.gmra.mrb[0].mxu0 %v335
  %v451 = vpop.f32.mrb[0].mxu0
  %v452 = vadd.f32 %v412, %v451
  %v453 = vpop.f32.mrb[0].mxu0
  %v454 = vpop.f32.mrb[0].mxu0
  %v455 = vpop.f32.mrb[0].mxu0
  %456 = vdwg.mxu0
  %v457 = vld [vmem:[%s3] sm:$0xf]
  %v458 = vunpack.c.l.bf16 %v457
  %v459 = vadd.f32 %v452, %v458
  %v460 = vmax.f32 %v459, 0.0
  %v461 = vpack.c.bf16 %v460, %v460
  %vm462 = vcmask 519168
  %463 = vst.msk [vmem:[%s4] sm:$0xf] %vm462, %v461
  // Predicated region
  $region18: #{_lambda_.35} parent=0 // pred_check
    _
  $region19: #{_lambda_.35} parent=0 // pred_check_branch
    %465 = sbr.rel (0) target = $region21
  $region20: #{_lambda_.35} parent=0 // pred_region
    _
  $region21: #{_lambda_.35} parent=0 // pred_fallthru
    _
  // Predicated region
  $region22: #{_lambda_.35} parent=0 // pred_check
    _
  $region23: #{_lambda_.35} parent=0 // pred_check_branch
    %467 = sbr.rel (0) target = $region25
  $region24: #{_lambda_.35} parent=0 // pred_region
    _
  $region25: #{_lambda_.35} parent=0 // pred_fallthru
    _

// kernel: _lambda_.39
$region0: #{_lambda_.39}
  #allocation0 [shape = 'u32[]', space=smem, size = 0x4, offset = 0x4, fixed_abs, tag = 'smem constant byte address 0x4 - core index']
  #allocation1 [shape = 'u32[144,128]{1,0:T(1,128)}', space=vmem, size = 0x12000, scoped, tag = 'internal scratch']
  %s0 = inlined_call_operand.vmem [shape: bf16[8,64], index: 0, kind: input, shape index: {}]
  %s1 = inlined_call_operand.vmem [shape: bf16[64,128], index: 1, kind: input, shape index: {}]
  %s2 = inlined_call_operand.vmem [shape: f32[1,128], index: 2, kind: input, shape index: {}]
  %s3 = inlined_call_operand.vmem [shape: bf16[8,128], index: 3, kind: output, shape index: {}]
  %s4 = sld [smem:[#allocation0]]
  $region22: #{_lambda_.39} parent=0
    _
  %s6 = ssub.s32 1, %s4
  %s7 = scalar_select 0, %s6, %s4
  // Predicated region
  $region2: #{_lambda_.39} parent=0 // pred_check
    _
  $region3: #{_lambda_.39} parent=0 // pred_check_branch
    %9 = sbr.rel (0) target = $region5
  $region4: #{_lambda_.39} parent=0 // pred_region
    _
  $region5: #{_lambda_.39} parent=0 // pred_fallthru
    _
  // Predicated region
  $region6: #{_lambda_.39} parent=0 // pred_check
    _
  $region7: #{_lambda_.39} parent=0 // pred_check_branch
    %11 = sbr.rel (0) target = $region9
  $region8: #{_lambda_.39} parent=0 // pred_region
    _
  $region9: #{_lambda_.39} parent=0 // pred_fallthru
    _
  // Predicated region
  $region10: #{_lambda_.39} parent=0 // pred_check
    _
  $region11: #{_lambda_.39} parent=0 // pred_check_branch
    %13 = sbr.rel (0) target = $region13
  $region12: #{_lambda_.39} parent=0 // pred_region
    _
  $region13: #{_lambda_.39} parent=0 // pred_fallthru
    _
  %v15 = vld [vmem:[%s0] sm:$0xf]
  %v16 = vld [vmem:[%s1] sm:$0xf]
  %v17 = vld [vmem:[%s1 + $0x4] sm:$0xf]
  %v18 = vld [vmem:[%s1 + $0x8] sm:$0xf]
  %v19 = vld [vmem:[%s1 + $0xc] sm:$0xf]
  %v20 = vld [vmem:[%s1 + $0x10] sm:$0xf]
  %v21 = vld [vmem:[%s1 + $0x14] sm:$0xf]
  %v22 = vld [vmem:[%s1 + $0x18] sm:$0xf]
  %v23 = vld [vmem:[%s1 + $0x1c] sm:$0xf]
  %v24 = vld [vmem:[%s2] sm:$0x1]
  %v26 = vlaneseq
  %v27 = vshrl.u32 %v26, 7
  %v28 = vsub.s32 0, %v27
  %v29 = vrot.slane %v24, %v28
  %v39 = vunpack.c.l.b16 %v16
  %v40 = vunpack.c.l.b16 %v17
  %v41 = vunpack.c.l.b16 %v18
  %v42 = vunpack.c.l.b16 %v19
  %v43 = vunpack.c.l.b16 %v20
  %v44 = vunpack.c.l.b16 %v21
  %v45 = vunpack.c.l.b16 %v22
  %v46 = vunpack.c.l.b16 %v23
  %v47 = vpack.c.b16 %v40, %v39
  %v48 = vpack.c.b16 %v42, %v41
  %v49 = vpack.c.b16 %v44, %v43
  %v50 = vpack.c.b16 %v46, %v45
  %vm55 = vcmask 523264
  %v57 = vsel %vm55, %v15, 0
  %59 = vmatprep.subr.bf16.mxu0 0
  %60 = vmatpush1.bf16.msra.mxu0 %v47
  %61 = vmatprep.subr.bf16.mxu0 0
  %62 = vmatpush1.bf16.msra.mxu0 %v48
  %63 = vmatprep.subr.bf16.mxu0 0
  %64 = vmatpush1.bf16.msra.mxu0 %v49
  %65 = vmatprep.subr.bf16.mxu0 0
  %66 = vmatpush1.bf16.msra.mxu0 %v50
  %67 = vmatprep.subr.bf16.mxu0 0
  %68 = vmatpush1.bf16.msra.mxu0 0
  %69 = vmatprep.subr.bf16.mxu0 0
  %70 = vmatpush1.bf16.msra.mxu0 0
  %71 = vmatprep.subr.bf16.mxu0 0
  %72 = vmatpush1.bf16.msra.mxu0 0
  %73 = vmatprep.subr.bf16.mxu0 0
  %74 = vmatpush1.bf16.msra.mxu0 0
  %75 = vmatprep.subr.bf16.mxu0 0
  %76 = vmatpush1.bf16.msra.mxu0 0
  %77 = vmatprep.subr.bf16.mxu0 0
  %78 = vmatpush1.bf16.msra.mxu0 0
  %79 = vmatprep.subr.bf16.mxu0 0
  %80 = vmatpush1.bf16.msra.mxu0 0
  %81 = vmatprep.subr.bf16.mxu0 0
  %82 = vmatpush1.bf16.msra.mxu0 0
  %83 = vmatprep.subr.bf16.mxu0 0
  %84 = vmatpush1.bf16.msra.mxu0 0
  %85 = vmatprep.subr.bf16.mxu0 0
  %86 = vmatpush1.bf16.msra.mxu0 0
  %87 = vmatprep.subr.bf16.mxu0 0
  %88 = vmatpush1.bf16.msra.mxu0 0
  %89 = vmatprep.subr.bf16.mxu0 0
  %90 = vmatpush1.bf16.msra.mxu0 0
  %91 = vmatprep.mubr.bf16.mxu0 0
  %92 = vmatmul.mubr.bf16.gmra.mrb[0].mxu0 %v57
  %v93 = vpop.f32.mrb[0].mxu0
  %v94 = vadd.f32 %v29, %v93
  %v95 = vpop.f32.mrb[0].mxu0
  %v96 = vpop.f32.mrb[0].mxu0
  %v97 = vpop.f32.mrb[0].mxu0
  %98 = vdwg.mxu0
  %v99 = vpack.c.bf16 %v94, %v94
  %100 = vst [vmem:[%s3] sm:$0xf] %v99
  // Predicated region
  $region14: #{_lambda_.39} parent=0 // pred_check
    _
  $region15: #{_lambda_.39} parent=0 // pred_check_branch
    %102 = sbr.rel (0) target = $region17
  $region16: #{_lambda_.39} parent=0 // pred_region
    _
  $region17: #{_lambda_.39} parent=0 // pred_fallthru
    _
  // Predicated region
  $region18: #{_lambda_.39} parent=0 // pred_check
    _
  $region19: #{_lambda_.39} parent=0 // pred_check_branch
    %104 = sbr.rel (0) target = $region21
  $region20: #{_lambda_.39} parent=0 // pred_region
    _
  $region21: #{_lambda_.39} parent=0 // pred_fallthru
    _

// kernel: _lambda_.38
$region0: #{_lambda_.38}
  #allocation0 [shape = 'u32[]', space=smem, size = 0x4, offset = 0x4, fixed_abs, tag = 'smem constant byte address 0x4 - core index']
  #allocation1 [shape = 'u32[144,128]{1,0:T(1,128)}', space=vmem, size = 0x12000, scoped, tag = 'internal scratch']
  %s0 = inlined_call_operand.vmem [shape: bf16[8,576], index: 0, kind: input, shape index: {}]
  %s1 = inlined_call_operand.vmem [shape: bf16[576,128], index: 1, kind: input, shape index: {}]
  %s2 = inlined_call_operand.vmem [shape: f32[1,128], index: 2, kind: input, shape index: {}]
  %s3 = inlined_call_operand.vmem [shape: bf16[8,128], index: 3, kind: output, shape index: {}]
  %s4 = sld [smem:[#allocation0]]
  $region22: #{_lambda_.38} parent=0
    _
  %s6 = ssub.s32 1, %s4
  %s7 = scalar_select 0, %s6, %s4
  // Predicated region
  $region2: #{_lambda_.38} parent=0 // pred_check
    _
  $region3: #{_lambda_.38} parent=0 // pred_check_branch
    %9 = sbr.rel (0) target = $region5
  $region4: #{_lambda_.38} parent=0 // pred_region
    _
  $region5: #{_lambda_.38} parent=0 // pred_fallthru
    _
  // Predicated region
  $region6: #{_lambda_.38} parent=0 // pred_check
    _
  $region7: #{_lambda_.38} parent=0 // pred_check_branch
    %11 = sbr.rel (0) target = $region9
  $region8: #{_lambda_.38} parent=0 // pred_region
    _
  $region9: #{_lambda_.38} parent=0 // pred_fallthru
    _
  // Predicated region
  $region10: #{_lambda_.38} parent=0 // pred_check
    _
  $region11: #{_lambda_.38} parent=0 // pred_check_branch
    %13 = sbr.rel (0) target = $region13
  $region12: #{_lambda_.38} parent=0 // pred_region
    _
  $region13: #{_lambda_.38} parent=0 // pred_fallthru
    _
  %v15 = vld [vmem:[%s0] sm:$0xff]
  %v16 = vld [vmem:[%s0 + $0x8] sm:$0xff]
  %v17 = vld [vmem:[%s0 + $0x10] sm:$0xf]
  %v18 = vld [vmem:[%s1] sm:$0xf]
  %v19 = vld [vmem:[%s1 + $0x4] sm:$0xf]
  %v20 = vld [vmem:[%s1 + $0x8] sm:$0xf]
  %v21 = vld [vmem:[%s1 + $0xc] sm:$0xf]
  %v22 = vld [vmem:[%s1 + $0x10] sm:$0xf]
  %v23 = vld [vmem:[%s1 + $0x14] sm:$0xf]
  %v24 = vld [vmem:[%s1 + $0x18] sm:$0xf]
  %v25 = vld [vmem:[%s1 + $0x1c] sm:$0xf]
  %v26 = vld [vmem:[%s1 + $0x20] sm:$0xf]
  %v27 = vld [vmem:[%s1 + $0x24] sm:$0xf]
  %v28 = vld [vmem:[%s1 + $0x28] sm:$0xf]
  %v29 = vld [vmem:[%s1 + $0x2c] sm:$0xf]
  %v30 = vld [vmem:[%s1 + $0x30] sm:$0xf]
  %v31 = vld [vmem:[%s1 + $0x34] sm:$0xf]
  %v32 = vld [vmem:[%s1 + $0x38] sm:$0xf]
  %v33 = vld [vmem:[%s1 + $0x3c] sm:$0xf]
  %v34 = vld [vmem:[%s1 + $0x40] sm:$0xf]
  %v35 = vld [vmem:[%s1 + $0x44] sm:$0xf]
  %v36 = vld [vmem:[%s1 + $0x48] sm:$0xf]
  %v37 = vld [vmem:[%s1 + $0x4c] sm:$0xf]
  %v38 = vld [vmem:[%s1 + $0x50] sm:$0xf]
  %v39 = vld [vmem:[%s1 + $0x54] sm:$0xf]
  %v40 = vld [vmem:[%s1 + $0x58] sm:$0xf]
  %v41 = vld [vmem:[%s1 + $0x5c] sm:$0xf]
  %v42 = vld [vmem:[%s1 + $0x60] sm:$0xf]
  %v43 = vld [vmem:[%s1 + $0x64] sm:$0xf]
  %v44 = vld [vmem:[%s1 + $0x68] sm:$0xf]
  %v45 = vld [vmem:[%s1 + $0x6c] sm:$0xf]
  %v46 = vld [vmem:[%s1 + $0x70] sm:$0xf]
  %v47 = vld [vmem:[%s1 + $0x74] sm:$0xf]
  %v48 = vld [vmem:[%s1 + $0x78] sm:$0xf]
  %v49 = vld [vmem:[%s1 + $0x7c] sm:$0xf]
  %v50 = vld [vmem:[%s1 + $0x80] sm:$0xf]
  %v51 = vld [vmem:[%s1 + $0x84] sm:$0xf]
  %v52 = vld [vmem:[%s1 + $0x88] sm:$0xf]
  %v53 = vld [vmem:[%s1 + $0x8c] sm:$0xf]
  %v54 = vld [vmem:[%s1 + $0x90] sm:$0xf]
  %v55 = vld [vmem:[%s1 + $0x94] sm:$0xf]
  %v56 = vld [vmem:[%s1 + $0x98] sm:$0xf]
  %v57 = vld [vmem:[%s1 + $0x9c] sm:$0xf]
  %v58 = vld [vmem:[%s1 + $0xa0] sm:$0xf]
  %v59 = vld [vmem:[%s1 + $0xa4] sm:$0xf]
  %v60 = vld [vmem:[%s1 + $0xa8] sm:$0xf]
  %v61 = vld [vmem:[%s1 + $0xac] sm:$0xf]
  %v62 = vld [vmem:[%s1 + $0xb0] sm:$0xf]
  %v63 = vld [vmem:[%s1 + $0xb4] sm:$0xf]
  %v64 = vld [vmem:[%s1 + $0xb8] sm:$0xf]
  %v65 = vld [vmem:[%s1 + $0xbc] sm:$0xf]
  %v66 = vld [vmem:[%s1 + $0xc0] sm:$0xf]
  %v67 = vld [vmem:[%s1 + $0xc4] sm:$0xf]
  %v68 = vld [vmem:[%s1 + $0xc8] sm:$0xf]
  %v69 = vld [vmem:[%s1 + $0xcc] sm:$0xf]
  %v70 = vld [vmem:[%s1 + $0xd0] sm:$0xf]
  %v71 = vld [vmem:[%s1 + $0xd4] sm:$0xf]
  %v72 = vld [vmem:[%s1 + $0xd8] sm:$0xf]
  %v73 = vld [vmem:[%s1 + $0xdc] sm:$0xf]
  %v74 = vld [vmem:[%s1 + $0xe0] sm:$0xf]
  %v75 = vld [vmem:[%s1 + $0xe4] sm:$0xf]
  %v76 = vld [vmem:[%s1 + $0xe8] sm:$0xf]
  %v77 = vld [vmem:[%s1 + $0xec] sm:$0xf]
  %v78 = vld [vmem:[%s1 + $0xf0] sm:$0xf]
  %v79 = vld [vmem:[%s1 + $0xf4] sm:$0xf]
  %v80 = vld [vmem:[%s1 + $0xf8] sm:$0xf]
  %v81 = vld [vmem:[%s1 + $0xfc] sm:$0xf]
  %v82 = vld [vmem:[%s1 + $0x100] sm:$0xf]
  %v83 = vld [vmem:[%s1 + $0x104] sm:$0xf]
  %v84 = vld [vmem:[%s1 + $0x108] sm:$0xf]
  %v85 = vld [vmem:[%s1 + $0x10c] sm:$0xf]
  %v86 = vld [vmem:[%s1 + $0x110] sm:$0xf]
  %v87 = vld [vmem:[%s1 + $0x114] sm:$0xf]
  %v88 = vld [vmem:[%s1 + $0x118] sm:$0xf]
  %v89 = vld [vmem:[%s1 + $0x11c] sm:$0xf]
  %v90 = vld [vmem:[%s2] sm:$0x1]
  %v92 = vlaneseq
  %v93 = vshrl.u32 %v92, 7
  %v94 = vsub.s32 0, %v93
  %v95 = vrot.slane %v90, %v94
  %v100 = vunpack.c.l.b16 %v15
  %v101 = vunpack.c.h.b16 %v15
  %v102 = vunpack.c.l.b16 %v16
  %v103 = vunpack.c.h.b16 %v16
  %v104 = vunpack.c.l.b16 %v17
  %v105 = vpack.c.b16 %v100, %v100
  %v106 = vpack.c.b16 %v101, %v101
  %v107 = vpack.c.b16 %v102, %v102
  %v108 = vpack.c.b16 %v103, %v103
  %v109 = vpack.c.b16 %v104, %v104
  %v186 = vunpack.c.l.b16 %v18
  %v187 = vunpack.c.l.b16 %v19
  %v188 = vunpack.c.l.b16 %v20
  %v189 = vunpack.c.l.b16 %v21
  %v190 = vunpack.c.l.b16 %v22
  %v191 = vunpack.c.l.b16 %v23
  %v192 = vunpack.c.l.b16 %v24
  %v193 = vunpack.c.l.b16 %v25
  %v194 = vunpack.c.l.b16 %v26
  %v195 = vunpack.c.l.b16 %v27
  %v196 = vunpack.c.l.b16 %v28
  %v197 = vunpack.c.l.b16 %v29
  %v198 = vunpack.c.l.b16 %v30
  %v199 = vunpack.c.l.b16 %v31
  %v200 = vunpack.c.l.b16 %v32
  %v201 = vunpack.c.l.b16 %v33
  %v202 = vunpack.c.l.b16 %v34
  %v203 = vunpack.c.l.b16 %v35
  %v204 = vunpack.c.l.b16 %v36
  %v205 = vunpack.c.l.b16 %v37
  %v206 = vunpack.c.l.b16 %v38
  %v207 = vunpack.c.l.b16 %v39
  %v208 = vunpack.c.l.b16 %v40
  %v209 = vunpack.c.l.b16 %v41
  %v210 = vunpack.c.l.b16 %v42
  %v211 = vunpack.c.l.b16 %v43
  %v212 = vunpack.c.l.b16 %v44
  %v213 = vunpack.c.l.b16 %v45
  %v214 = vunpack.c.l.b16 %v46
  %v215 = vunpack.c.l.b16 %v47
  %v216 = vunpack.c.l.b16 %v48
  %v217 = vunpack.c.l.b16 %v49
  %v218 = vunpack.c.l.b16 %v50
  %v219 = vunpack.c.l.b16 %v51
  %v220 = vunpack.c.l.b16 %v52
  %v221 = vunpack.c.l.b16 %v53
  %v222 = vunpack.c.l.b16 %v54
  %v223 = vunpack.c.l.b16 %v55
  %v224 = vunpack.c.l.b16 %v56
  %v225 = vunpack.c.l.b16 %v57
  %v226 = vunpack.c.l.b16 %v58
  %v227 = vunpack.c.l.b16 %v59
  %v228 = vunpack.c.l.b16 %v60
  %v229 = vunpack.c.l.b16 %v61
  %v230 = vunpack.c.l.b16 %v62
  %v231 = vunpack.c.l.b16 %v63
  %v232 = vunpack.c.l.b16 %v64
  %v233 = vunpack.c.l.b16 %v65
  %v234 = vunpack.c.l.b16 %v66
  %v235 = vunpack.c.l.b16 %v67
  %v236 = vunpack.c.l.b16 %v68
  %v237 = vunpack.c.l.b16 %v69
  %v238 = vunpack.c.l.b16 %v70
  %v239 = vunpack.c.l.b16 %v71
  %v240 = vunpack.c.l.b16 %v72
  %v241 = vunpack.c.l.b16 %v73
  %v242 = vunpack.c.l.b16 %v74
  %v243 = vunpack.c.l.b16 %v75
  %v244 = vunpack.c.l.b16 %v76
  %v245 = vunpack.c.l.b16 %v77
  %v246 = vunpack.c.l.b16 %v78
  %v247 = vunpack.c.l.b16 %v79
  %v248 = vunpack.c.l.b16 %v80
  %v249 = vunpack.c.l.b16 %v81
  %v250 = vunpack.c.l.b16 %v82
  %v251 = vunpack.c.l.b16 %v83
  %v252 = vunpack.c.l.b16 %v84
  %v253 = vunpack.c.l.b16 %v85
  %v254 = vunpack.c.l.b16 %v86
  %v255 = vunpack.c.l.b16 %v87
  %v256 = vunpack.c.l.b16 %v88
  %v257 = vunpack.c.l.b16 %v89
  %v258 = vpack.c.b16 %v187, %v186
  %v259 = vpack.c.b16 %v189, %v188
  %v260 = vpack.c.b16 %v191, %v190
  %v261 = vpack.c.b16 %v193, %v192
  %v262 = vpack.c.b16 %v195, %v194
  %v263 = vpack.c.b16 %v197, %v196
  %v264 = vpack.c.b16 %v199, %v198
  %v265 = vpack.c.b16 %v201, %v200
  %v266 = vpack.c.b16 %v203, %v202
  %v267 = vpack.c.b16 %v205, %v204
  %v268 = vpack.c.b16 %v207, %v206
  %v269 = vpack.c.b16 %v209, %v208
  %v270 = vpack.c.b16 %v211, %v210
  %v271 = vpack.c.b16 %v213, %v212
  %v272 = vpack.c.b16 %v215, %v214
  %v273 = vpack.c.b16 %v217, %v216
  %v274 = vpack.c.b16 %v219, %v218
  %v275 = vpack.c.b16 %v221, %v220
  %v276 = vpack.c.b16 %v223, %v222
  %v277 = vpack.c.b16 %v225, %v224
  %v278 = vpack.c.b16 %v227, %v226
  %v279 = vpack.c.b16 %v229, %v228
  %v280 = vpack.c.b16 %v231, %v230
  %v281 = vpack.c.b16 %v233, %v232
  %v282 = vpack.c.b16 %v235, %v234
  %v283 = vpack.c.b16 %v237, %v236
  %v284 = vpack.c.b16 %v239, %v238
  %v285 = vpack.c.b16 %v241, %v240
  %v286 = vpack.c.b16 %v243, %v242
  %v287 = vpack.c.b16 %v245, %v244
  %v288 = vpack.c.b16 %v247, %v246
  %v289 = vpack.c.b16 %v249, %v248
  %v290 = vpack.c.b16 %v251, %v250
  %v291 = vpack.c.b16 %v253, %v252
  %v292 = vpack.c.b16 %v255, %v254
  %v293 = vpack.c.b16 %v257, %v256
  %vm330 = vcmask 523264
  %v332 = vsel %vm330, %v109, 0
  %334 = vmatprep.subr.bf16.mxu0 0
  %335 = vmatpush1.bf16.msra.mxu0 %v258
  %336 = vmatprep.subr.bf16.mxu0 0
  %337 = vmatpush1.bf16.msra.mxu0 %v259
  %338 = vmatprep.subr.bf16.mxu0 0
  %339 = vmatpush1.bf16.msra.mxu0 %v260
  %340 = vmatprep.subr.bf16.mxu0 0
  %341 = vmatpush1.bf16.msra.mxu0 %v261
  %342 = vmatprep.subr.bf16.mxu0 0
  %343 = vmatpush1.bf16.msra.mxu0 %v262
  %344 = vmatprep.subr.bf16.mxu0 0
  %345 = vmatpush1.bf16.msra.mxu0 %v263
  %346 = vmatprep.subr.bf16.mxu0 0
  %347 = vmatpush1.bf16.msra.mxu0 %v264
  %348 = vmatprep.subr.bf16.mxu0 0
  %349 = vmatpush1.bf16.msra.mxu0 %v265
  %350 = vmatprep.subr.bf16.mxu0 0
  %351 = vmatpush1.bf16.msra.mxu0 %v266
  %352 = vmatprep.subr.bf16.mxu0 0
  %353 = vmatpush1.bf16.msra.mxu0 %v267
  %354 = vmatprep.subr.bf16.mxu0 0
  %355 = vmatpush1.bf16.msra.mxu0 %v268
  %356 = vmatprep.subr.bf16.mxu0 0
  %357 = vmatpush1.bf16.msra.mxu0 %v269
  %358 = vmatprep.subr.bf16.mxu0 0
  %359 = vmatpush1.bf16.msra.mxu0 %v270
  %360 = vmatprep.subr.bf16.mxu0 0
  %361 = vmatpush1.bf16.msra.mxu0 %v271
  %362 = vmatprep.subr.bf16.mxu0 0
  %363 = vmatpush1.bf16.msra.mxu0 %v272
  %364 = vmatprep.subr.bf16.mxu0 0
  %365 = vmatpush1.bf16.msra.mxu0 %v273
  %366 = vmatprep.mubr.bf16.mxu0 %v106
  %367 = vmatmul.mubr.bf16.gmra.mrb[0].mxu0 %v105
  %v368 = vpop.f32.mrb[0].mxu0
  %v369 = vadd.f32 %v95, %v368
  %v370 = vpop.f32.mrb[0].mxu0
  %v371 = vpop.f32.mrb[0].mxu0
  %v372 = vpop.f32.mrb[0].mxu0
  %373 = vdwg.mxu0
  %374 = vmatprep.subr.bf16.mxu0 0
  %375 = vmatpush1.bf16.msra.mxu0 %v274
  %376 = vmatprep.subr.bf16.mxu0 0
  %377 = vmatpush1.bf16.msra.mxu0 %v275
  %378 = vmatprep.subr.bf16.mxu0 0
  %379 = vmatpush1.bf16.msra.mxu0 %v276
  %380 = vmatprep.subr.bf16.mxu0 0
  %381 = vmatpush1.bf16.msra.mxu0 %v277
  %382 = vmatprep.subr.bf16.mxu0 0
  %383 = vmatpush1.bf16.msra.mxu0 %v278
  %384 = vmatprep.subr.bf16.mxu0 0
  %385 = vmatpush1.bf16.msra.mxu0 %v279
  %386 = vmatprep.subr.bf16.mxu0 0
  %387 = vmatpush1.bf16.msra.mxu0 %v280
  %388 = vmatprep.subr.bf16.mxu0 0
  %389 = vmatpush1.bf16.msra.mxu0 %v281
  %390 = vmatprep.subr.bf16.mxu0 0
  %391 = vmatpush1.bf16.msra.mxu0 %v282
  %392 = vmatprep.subr.bf16.mxu0 0
  %393 = vmatpush1.bf16.msra.mxu0 %v283
  %394 = vmatprep.subr.bf16.mxu0 0
  %395 = vmatpush1.bf16.msra.mxu0 %v284
  %396 = vmatprep.subr.bf16.mxu0 0
  %397 = vmatpush1.bf16.msra.mxu0 %v285
  %398 = vmatprep.subr.bf16.mxu0 0
  %399 = vmatpush1.bf16.msra.mxu0 %v286
  %400 = vmatprep.subr.bf16.mxu0 0
  %401 = vmatpush1.bf16.msra.mxu0 %v287
  %402 = vmatprep.subr.bf16.mxu0 0
  %403 = vmatpush1.bf16.msra.mxu0 %v288
  %404 = vmatprep.subr.bf16.mxu0 0
  %405 = vmatpush1.bf16.msra.mxu0 %v289
  %406 = vmatprep.mubr.bf16.mxu0 %v108
  %407 = vmatmul.mubr.bf16.gmra.mrb[0].mxu0 %v107
  %v408 = vpop.f32.mrb[0].mxu0
  %v409 = vadd.f32 %v369, %v408
  %v410 = vpop.f32.mrb[0].mxu0
  %v411 = vpop.f32.mrb[0].mxu0
  %v412 = vpop.f32.mrb[0].mxu0
  %413 = vdwg.mxu0
  %414 = vmatprep.subr.bf16.mxu0 0
  %415 = vmatpush1.bf16.msra.mxu0 %v290
  %416 = vmatprep.subr.bf16.mxu0 0
  %417 = vmatpush1.bf16.msra.mxu0 %v291
  %418 = vmatprep.subr.bf16.mxu0 0
  %419 = vmatpush1.bf16.msra.mxu0 %v292
  %420 = vmatprep.subr.bf16.mxu0 0
  %421 = vmatpush1.bf16.msra.mxu0 %v293
  %422 = vmatprep.subr.bf16.mxu0 0
  %423 = vmatpush1.bf16.msra.mxu0 0
  %424 = vmatprep.subr.bf16.mxu0 0
  %425 = vmatpush1.bf16.msra.mxu0 0
  %426 = vmatprep.subr.bf16.mxu0 0
  %427 = vmatpush1.bf16.msra.mxu0 0
  %428 = vmatprep.subr.bf16.mxu0 0
  %429 = vmatpush1.bf16.msra.mxu0 0
  %430 = vmatprep.subr.bf16.mxu0 0
  %431 = vmatpush1.bf16.msra.mxu0 0
  %432 = vmatprep.subr.bf16.mxu0 0
  %433 = vmatpush1.bf16.msra.mxu0 0
  %434 = vmatprep.subr.bf16.mxu0 0
  %435 = vmatpush1.bf16.msra.mxu0 0
  %436 = vmatprep.subr.bf16.mxu0 0
  %437 = vmatpush1.bf16.msra.mxu0 0
  %438 = vmatprep.subr.bf16.mxu0 0
  %439 = vmatpush1.bf16.msra.mxu0 0
  %440 = vmatprep.subr.bf16.mxu0 0
  %441 = vmatpush1.bf16.msra.mxu0 0
  %442 = vmatprep.subr.bf16.mxu0 0
  %443 = vmatpush1.bf16.msra.mxu0 0
  %444 = vmatprep.subr.bf16.mxu0 0
  %445 = vmatpush1.bf16.msra.mxu0 0
  %446 = vmatprep.mubr.bf16.mxu0 0
  %447 = vmatmul.mubr.bf16.gmra.mrb[0].mxu0 %v332
  %v448 = vpop.f32.mrb[0].mxu0
  %v449 = vadd.f32 %v409, %v448
  %v450 = vpop.f32.mrb[0].mxu0
  %v451 = vpop.f32.mrb[0].mxu0
  %v452 = vpop.f32.mrb[0].mxu0
  %453 = vdwg.mxu0
  %v454 = vmax.f32 %v449, 0.0
  %v455 = vpack.c.bf16 %v454, %v454
  %456 = vst [vmem:[%s3] sm:$0xf] %v455
  // Predicated region
  $region14: #{_lambda_.38} parent=0 // pred_check
    _
  $region15: #{_lambda_.38} parent=0 // pred_check_branch
    %458 = sbr.rel (0) target = $region17
  $region16: #{_lambda_.38} parent=0 // pred_region
    _
  $region17: #{_lambda_.38} parent=0 // pred_fallthru
    _
  // Predicated region
  $region18: #{_lambda_.38} parent=0 // pred_check
    _
  $region19: #{_lambda_.38} parent=0 // pred_check_branch
    %460 = sbr.rel (0) target = $region21
  $region20: #{_lambda_.38} parent=0 // pred_region
    _
  $region21: #{_lambda_.38} parent=0 // pred_fallthru
    _

// kernel: _lambda_.40
$region0: #{_lambda_.40}
  #allocation0 [shape = 'u32[]', space=smem, size = 0x4, offset = 0x4, fixed_abs, tag = 'smem constant byte address 0x4 - core index']
  #allocation1 [shape = 'u32[144,128]{1,0:T(1,128)}', space=vmem, size = 0x12000, scoped, tag = 'internal scratch']
  %s0 = inlined_call_operand.vmem [shape: bf16[8,1152], index: 0, kind: input, shape index: {}]
  %s1 = inlined_call_operand.vmem [shape: bf16[1152,128], index: 1, kind: input, shape index: {}]
  %s2 = inlined_call_operand.vmem [shape: f32[1,128], index: 2, kind: input, shape index: {}]
  %s3 = inlined_call_operand.vmem [shape: bf16[8,128], index: 3, kind: input, shape index: {}]
  %s4 = inlined_call_operand.vmem [shape: bf16[8,128], index: 4, kind: output, shape index: {}]
  %s5 = sld [smem:[#allocation0]]
  $region26: #{_lambda_.40} parent=0
    _
  %s7 = ssub.s32 1, %s5
  %s8 = scalar_select 0, %s7, %s5
  // Predicated region
  $region2: #{_lambda_.40} parent=0 // pred_check
    _
  $region3: #{_lambda_.40} parent=0 // pred_check_branch
    %10 = sbr.rel (0) target = $region5
  $region4: #{_lambda_.40} parent=0 // pred_region
    _
  $region5: #{_lambda_.40} parent=0 // pred_fallthru
    _
  // Predicated region
  $region6: #{_lambda_.40} parent=0 // pred_check
    _
  $region7: #{_lambda_.40} parent=0 // pred_check_branch
    %12 = sbr.rel (0) target = $region9
  $region8: #{_lambda_.40} parent=0 // pred_region
    _
  $region9: #{_lambda_.40} parent=0 // pred_fallthru
    _
  // Predicated region
  $region10: #{_lambda_.40} parent=0 // pred_check
    _
  $region11: #{_lambda_.40} parent=0 // pred_check_branch
    %14 = sbr.rel (0) target = $region13
  $region12: #{_lambda_.40} parent=0 // pred_region
    _
  $region13: #{_lambda_.40} parent=0 // pred_fallthru
    _
  // Predicated region
  $region14: #{_lambda_.40} parent=0 // pred_check
    _
  $region15: #{_lambda_.40} parent=0 // pred_check_branch
    %16 = sbr.rel (0) target = $region17
  $region16: #{_lambda_.40} parent=0 // pred_region
    _
  $region17: #{_lambda_.40} parent=0 // pred_fallthru
    _
  %v18 = vld [vmem:[%s0] sm:$0xff]
  %v19 = vld [vmem:[%s0 + $0x8] sm:$0xff]
  %v20 = vld [vmem:[%s0 + $0x10] sm:$0xff]
  %v21 = vld [vmem:[%s0 + $0x18] sm:$0xff]
  %v22 = vld [vmem:[%s0 + $0x20] sm:$0xf]
  %v23 = vld [vmem:[%s1] sm:$0xf]
  %v24 = vld [vmem:[%s1 + $0x4] sm:$0xf]
  %v25 = vld [vmem:[%s1 + $0x8] sm:$0xf]
  %v26 = vld [vmem:[%s1 + $0xc] sm:$0xf]
  %v27 = vld [vmem:[%s1 + $0x10] sm:$0xf]
  %v28 = vld [vmem:[%s1 + $0x14] sm:$0xf]
  %v29 = vld [vmem:[%s1 + $0x18] sm:$0xf]
  %v30 = vld [vmem:[%s1 + $0x1c] sm:$0xf]
  %v31 = vld [vmem:[%s1 + $0x20] sm:$0xf]
  %v32 = vld [vmem:[%s1 + $0x24] sm:$0xf]
  %v33 = vld [vmem:[%s1 + $0x28] sm:$0xf]
  %v34 = vld [vmem:[%s1 + $0x2c] sm:$0xf]
  %v35 = vld [vmem:[%s1 + $0x30] sm:$0xf]
  %v36 = vld [vmem:[%s1 + $0x34] sm:$0xf]
  %v37 = vld [vmem:[%s1 + $0x38] sm:$0xf]
  %v38 = vld [vmem:[%s1 + $0x3c] sm:$0xf]
  %v39 = vld [vmem:[%s1 + $0x40] sm:$0xf]
  %v40 = vld [vmem:[%s1 + $0x44] sm:$0xf]
  %v41 = vld [vmem:[%s1 + $0x48] sm:$0xf]
  %v42 = vld [vmem:[%s1 + $0x4c] sm:$0xf]
  %v43 = vld [vmem:[%s1 + $0x50] sm:$0xf]
  %v44 = vld [vmem:[%s1 + $0x54] sm:$0xf]
  %v45 = vld [vmem:[%s1 + $0x58] sm:$0xf]
  %v46 = vld [vmem:[%s1 + $0x5c] sm:$0xf]
  %v47 = vld [vmem:[%s1 + $0x60] sm:$0xf]
  %v48 = vld [vmem:[%s1 + $0x64] sm:$0xf]
  %v49 = vld [vmem:[%s1 + $0x68] sm:$0xf]
  %v50 = vld [vmem:[%s1 + $0x6c] sm:$0xf]
  %v51 = vld [vmem:[%s1 + $0x70] sm:$0xf]
  %v52 = vld [vmem:[%s1 + $0x74] sm:$0xf]
  %v53 = vld [vmem:[%s1 + $0x78] sm:$0xf]
  %v54 = vld [vmem:[%s1 + $0x7c] sm:$0xf]
  %v55 = vld [vmem:[%s1 + $0x80] sm:$0xf]
  %v56 = vld [vmem:[%s1 + $0x84] sm:$0xf]
  %v57 = vld [vmem:[%s1 + $0x88] sm:$0xf]
  %v58 = vld [vmem:[%s1 + $0x8c] sm:$0xf]
  %v59 = vld [vmem:[%s1 + $0x90] sm:$0xf]
  %v60 = vld [vmem:[%s1 + $0x94] sm:$0xf]
  %v61 = vld [vmem:[%s1 + $0x98] sm:$0xf]
  %v62 = vld [vmem:[%s1 + $0x9c] sm:$0xf]
  %v63 = vld [vmem:[%s1 + $0xa0] sm:$0xf]
  %v64 = vld [vmem:[%s1 + $0xa4] sm:$0xf]
  %v65 = vld [vmem:[%s1 + $0xa8] sm:$0xf]
  %v66 = vld [vmem:[%s1 + $0xac] sm:$0xf]
  %v67 = vld [vmem:[%s1 + $0xb0] sm:$0xf]
  %v68 = vld [vmem:[%s1 + $0xb4] sm:$0xf]
  %v69 = vld [vmem:[%s1 + $0xb8] sm:$0xf]
  %v70 = vld [vmem:[%s1 + $0xbc] sm:$0xf]
  %v71 = vld [vmem:[%s1 + $0xc0] sm:$0xf]
  %v72 = vld [vmem:[%s1 + $0xc4] sm:$0xf]
  %v73 = vld [vmem:[%s1 + $0xc8] sm:$0xf]
  %v74 = vld [vmem:[%s1 + $0xcc] sm:$0xf]
  %v75 = vld [vmem:[%s1 + $0xd0] sm:$0xf]
  %v76 = vld [vmem:[%s1 + $0xd4] sm:$0xf]
  %v77 = vld [vmem:[%s1 + $0xd8] sm:$0xf]
  %v78 = vld [vmem:[%s1 + $0xdc] sm:$0xf]
  %v79 = vld [vmem:[%s1 + $0xe0] sm:$0xf]
  %v80 = vld [vmem:[%s1 + $0xe4] sm:$0xf]
  %v81 = vld [vmem:[%s1 + $0xe8] sm:$0xf]
  %v82 = vld [vmem:[%s1 + $0xec] sm:$0xf]
  %v83 = vld [vmem:[%s1 + $0xf0] sm:$0xf]
  %v84 = vld [vmem:[%s1 + $0xf4] sm:$0xf]
  %v85 = vld [vmem:[%s1 + $0xf8] sm:$0xf]
  %v86 = vld [vmem:[%s1 + $0xfc] sm:$0xf]
  %v87 = vld [vmem:[%s1 + $0x100] sm:$0xf]
  %v88 = vld [vmem:[%s1 + $0x104] sm:$0xf]
  %v89 = vld [vmem:[%s1 + $0x108] sm:$0xf]
  %v90 = vld [vmem:[%s1 + $0x10c] sm:$0xf]
  %v91 = vld [vmem:[%s1 + $0x110] sm:$0xf]
  %v92 = vld [vmem:[%s1 + $0x114] sm:$0xf]
  %v93 = vld [vmem:[%s1 + $0x118] sm:$0xf]
  %v94 = vld [vmem:[%s1 + $0x11c] sm:$0xf]
  %v95 = vld [vmem:[%s1 + $0x120] sm:$0xf]
  %v96 = vld [vmem:[%s1 + $0x124] sm:$0xf]
  %v97 = vld [vmem:[%s1 + $0x128] sm:$0xf]
  %v98 = vld [vmem:[%s1 + $0x12c] sm:$0xf]
  %v99 = vld [vmem:[%s1 + $0x130] sm:$0xf]
  %v100 = vld [vmem:[%s1 + $0x134] sm:$0xf]
  %v101 = vld [vmem:[%s1 + $0x138] sm:$0xf]
  %v102 = vld [vmem:[%s1 + $0x13c] sm:$0xf]
  %v103 = vld [vmem:[%s1 + $0x140] sm:$0xf]
  %v104 = vld [vmem:[%s1 + $0x144] sm:$0xf]
  %v105 = vld [vmem:[%s1 + $0x148] sm:$0xf]
  %v106 = vld [vmem:[%s1 + $0x14c] sm:$0xf]
  %v107 = vld [vmem:[%s1 + $0x150] sm:$0xf]
  %v108 = vld [vmem:[%s1 + $0x154] sm:$0xf]
  %v109 = vld [vmem:[%s1 + $0x158] sm:$0xf]
  %v110 = vld [vmem:[%s1 + $0x15c] sm:$0xf]
  %v111 = vld [vmem:[%s1 + $0x160] sm:$0xf]
  %v112 = vld [vmem:[%s1 + $0x164] sm:$0xf]
  %v113 = vld [vmem:[%s1 + $0x168] sm:$0xf]
  %v114 = vld [vmem:[%s1 + $0x16c] sm:$0xf]
  %v115 = vld [vmem:[%s1 + $0x170] sm:$0xf]
  %v116 = vld [vmem:[%s1 + $0x174] sm:$0xf]
  %v117 = vld [vmem:[%s1 + $0x178] sm:$0xf]
  %v118 = vld [vmem:[%s1 + $0x17c] sm:$0xf]
  %v119 = vld [vmem:[%s1 + $0x180] sm:$0xf]
  %v120 = vld [vmem:[%s1 + $0x184] sm:$0xf]
  %v121 = vld [vmem:[%s1 + $0x188] sm:$0xf]
  %v122 = vld [vmem:[%s1 + $0x18c] sm:$0xf]
  %v123 = vld [vmem:[%s1 + $0x190] sm:$0xf]
  %v124 = vld [vmem:[%s1 + $0x194] sm:$0xf]
  %v125 = vld [vmem:[%s1 + $0x198] sm:$0xf]
  %v126 = vld [vmem:[%s1 + $0x19c] sm:$0xf]
  %v127 = vld [vmem:[%s1 + $0x1a0] sm:$0xf]
  %v128 = vld [vmem:[%s1 + $0x1a4] sm:$0xf]
  %v129 = vld [vmem:[%s1 + $0x1a8] sm:$0xf]
  %v130 = vld [vmem:[%s1 + $0x1ac] sm:$0xf]
  %v131 = vld [vmem:[%s1 + $0x1b0] sm:$0xf]
  %v132 = vld [vmem:[%s1 + $0x1b4] sm:$0xf]
  %v133 = vld [vmem:[%s1 + $0x1b8] sm:$0xf]
  %v134 = vld [vmem:[%s1 + $0x1bc] sm:$0xf]
  %v135 = vld [vmem:[%s1 + $0x1c0] sm:$0xf]
  %v136 = vld [vmem:[%s1 + $0x1c4] sm:$0xf]
  %v137 = vld [vmem:[%s1 + $0x1c8] sm:$0xf]
  %v138 = vld [vmem:[%s1 + $0x1cc] sm:$0xf]
  %v139 = vld [vmem:[%s1 + $0x1d0] sm:$0xf]
  %v140 = vld [vmem:[%s1 + $0x1d4] sm:$0xf]
  %v141 = vld [vmem:[%s1 + $0x1d8] sm:$0xf]
  %v142 = vld [vmem:[%s1 + $0x1dc] sm:$0xf]
  %v143 = vld [vmem:[%s1 + $0x1e0] sm:$0xf]
  %v144 = vld [vmem:[%s1 + $0x1e4] sm:$0xf]
  %v145 = vld [vmem:[%s1 + $0x1e8] sm:$0xf]
  %v146 = vld [vmem:[%s1 + $0x1ec] sm:$0xf]
  %v147 = vld [vmem:[%s1 + $0x1f0] sm:$0xf]
  %v148 = vld [vmem:[%s1 + $0x1f4] sm:$0xf]
  %v149 = vld [vmem:[%s1 + $0x1f8] sm:$0xf]
  %v150 = vld [vmem:[%s1 + $0x1fc] sm:$0xf]
  %v151 = vld [vmem:[%s1 + $0x200] sm:$0xf]
  %v152 = vld [vmem:[%s1 + $0x204] sm:$0xf]
  %v153 = vld [vmem:[%s1 + $0x208] sm:$0xf]
  %v154 = vld [vmem:[%s1 + $0x20c] sm:$0xf]
  %v155 = vld [vmem:[%s1 + $0x210] sm:$0xf]
  %v156 = vld [vmem:[%s1 + $0x214] sm:$0xf]
  %v157 = vld [vmem:[%s1 + $0x218] sm:$0xf]
  %v158 = vld [vmem:[%s1 + $0x21c] sm:$0xf]
  %v159 = vld [vmem:[%s1 + $0x220] sm:$0xf]
  %v160 = vld [vmem:[%s1 + $0x224] sm:$0xf]
  %v161 = vld [vmem:[%s1 + $0x228] sm:$0xf]
  %v162 = vld [vmem:[%s1 + $0x22c] sm:$0xf]
  %v163 = vld [vmem:[%s1 + $0x230] sm:$0xf]
  %v164 = vld [vmem:[%s1 + $0x234] sm:$0xf]
  %v165 = vld [vmem:[%s1 + $0x238] sm:$0xf]
  %v166 = vld [vmem:[%s1 + $0x23c] sm:$0xf]
  %v167 = vld [vmem:[%s2] sm:$0x1]
  %v169 = vlaneseq
  %v170 = vshrl.u32 %v169, 7
  %v171 = vsub.s32 0, %v170
  %v172 = vrot.slane %v167, %v171
  %v179 = vunpack.c.l.b16 %v18
  %v180 = vunpack.c.h.b16 %v18
  %v181 = vunpack.c.l.b16 %v19
  %v182 = vunpack.c.h.b16 %v19
  %v183 = vunpack.c.l.b16 %v20
  %v184 = vunpack.c.h.b16 %v20
  %v185 = vunpack.c.l.b16 %v21
  %v186 = vunpack.c.h.b16 %v21
  %v187 = vunpack.c.l.b16 %v22
  %v188 = vpack.c.b16 %v179, %v179
  %v189 = vpack.c.b16 %v180, %v180
  %v190 = vpack.c.b16 %v181, %v181
  %v191 = vpack.c.b16 %v182, %v182
  %v192 = vpack.c.b16 %v183, %v183
  %v193 = vpack.c.b16 %v184, %v184
  %v194 = vpack.c.b16 %v185, %v185
  %v195 = vpack.c.b16 %v186, %v186
  %v196 = vpack.c.b16 %v187, %v187
  %v350 = vunpack.c.l.b16 %v23
  %v351 = vunpack.c.l.b16 %v24
  %v352 = vunpack.c.l.b16 %v25
  %v353 = vunpack.c.l.b16 %v26
  %v354 = vunpack.c.l.b16 %v27
  %v355 = vunpack.c.l.b16 %v28
  %v356 = vunpack.c.l.b16 %v29
  %v357 = vunpack.c.l.b16 %v30
  %v358 = vunpack.c.l.b16 %v31
  %v359 = vunpack.c.l.b16 %v32
  %v360 = vunpack.c.l.b16 %v33
  %v361 = vunpack.c.l.b16 %v34
  %v362 = vunpack.c.l.b16 %v35
  %v363 = vunpack.c.l.b16 %v36
  %v364 = vunpack.c.l.b16 %v37
  %v365 = vunpack.c.l.b16 %v38
  %v366 = vunpack.c.l.b16 %v39
  %v367 = vunpack.c.l.b16 %v40
  %v368 = vunpack.c.l.b16 %v41
  %v369 = vunpack.c.l.b16 %v42
  %v370 = vunpack.c.l.b16 %v43
  %v371 = vunpack.c.l.b16 %v44
  %v372 = vunpack.c.l.b16 %v45
  %v373 = vunpack.c.l.b16 %v46
  %v374 = vunpack.c.l.b16 %v47
  %v375 = vunpack.c.l.b16 %v48
  %v376 = vunpack.c.l.b16 %v49
  %v377 = vunpack.c.l.b16 %v50
  %v378 = vunpack.c.l.b16 %v51
  %v379 = vunpack.c.l.b16 %v52
  %v380 = vunpack.c.l.b16 %v53
  %v381 = vunpack.c.l.b16 %v54
  %v382 = vunpack.c.l.b16 %v55
  %v383 = vunpack.c.l.b16 %v56
  %v384 = vunpack.c.l.b16 %v57
  %v385 = vunpack.c.l.b16 %v58
  %v386 = vunpack.c.l.b16 %v59
  %v387 = vunpack.c.l.b16 %v60
  %v388 = vunpack.c.l.b16 %v61
  %v389 = vunpack.c.l.b16 %v62
  %v390 = vunpack.c.l.b16 %v63
  %v391 = vunpack.c.l.b16 %v64
  %v392 = vunpack.c.l.b16 %v65
  %v393 = vunpack.c.l.b16 %v66
  %v394 = vunpack.c.l.b16 %v67
  %v395 = vunpack.c.l.b16 %v68
  %v396 = vunpack.c.l.b16 %v69
  %v397 = vunpack.c.l.b16 %v70
  %v398 = vunpack.c.l.b16 %v71
  %v399 = vunpack.c.l.b16 %v72
  %v400 = vunpack.c.l.b16 %v73
  %v401 = vunpack.c.l.b16 %v74
  %v402 = vunpack.c.l.b16 %v75
  %v403 = vunpack.c.l.b16 %v76
  %v404 = vunpack.c.l.b16 %v77
  %v405 = vunpack.c.l.b16 %v78
  %v406 = vunpack.c.l.b16 %v79
  %v407 = vunpack.c.l.b16 %v80
  %v408 = vunpack.c.l.b16 %v81
  %v409 = vunpack.c.l.b16 %v82
  %v410 = vunpack.c.l.b16 %v83
  %v411 = vunpack.c.l.b16 %v84
  %v412 = vunpack.c.l.b16 %v85
  %v413 = vunpack.c.l.b16 %v86
  %v414 = vunpack.c.l.b16 %v87
  %v415 = vunpack.c.l.b16 %v88
  %v416 = vunpack.c.l.b16 %v89
  %v417 = vunpack.c.l.b16 %v90
  %v418 = vunpack.c.l.b16 %v91
  %v419 = vunpack.c.l.b16 %v92
  %v420 = vunpack.c.l.b16 %v93
  %v421 = vunpack.c.l.b16 %v94
  %v422 = vunpack.c.l.b16 %v95
  %v423 = vunpack.c.l.b16 %v96
  %v424 = vunpack.c.l.b16 %v97
  %v425 = vunpack.c.l.b16 %v98
  %v426 = vunpack.c.l.b16 %v99
  %v427 = vunpack.c.l.b16 %v100
  %v428 = vunpack.c.l.b16 %v101
  %v429 = vunpack.c.l.b16 %v102
  %v430 = vunpack.c.l.b16 %v103
  %v431 = vunpack.c.l.b16 %v104
  %v432 = vunpack.c.l.b16 %v105
  %v433 = vunpack.c.l.b16 %v106
  %v434 = vunpack.c.l.b16 %v107
  %v435 = vunpack.c.l.b16 %v108
  %v436 = vunpack.c.l.b16 %v109
  %v437 = vunpack.c.l.b16 %v110
  %v438 = vunpack.c.l.b16 %v111
  %v439 = vunpack.c.l.b16 %v112
  %v440 = vunpack.c.l.b16 %v113
  %v441 = vunpack.c.l.b16 %v114
  %v442 = vunpack.c.l.b16 %v115
  %v443 = vunpack.c.l.b16 %v116
  %v444 = vunpack.c.l.b16 %v117
  %v445 = vunpack.c.l.b16 %v118
  %v446 = vunpack.c.l.b16 %v119
  %v447 = vunpack.c.l.b16 %v120
  %v448 = vunpack.c.l.b16 %v121
  %v449 = vunpack.c.l.b16 %v122
  %v450 = vunpack.c.l.b16 %v123
  %v451 = vunpack.c.l.b16 %v124
  %v452 = vunpack.c.l.b16 %v125
  %v453 = vunpack.c.l.b16 %v126
  %v454 = vunpack.c.l.b16 %v127
  %v455 = vunpack.c.l.b16 %v128
  %v456 = vunpack.c.l.b16 %v129
  %v457 = vunpack.c.l.b16 %v130
  %v458 = vunpack.c.l.b16 %v131
  %v459 = vunpack.c.l.b16 %v132
  %v460 = vunpack.c.l.b16 %v133
  %v461 = vunpack.c.l.b16 %v134
  %v462 = vunpack.c.l.b16 %v135
  %v463 = vunpack.c.l.b16 %v136
  %v464 = vunpack.c.l.b16 %v137
  %v465 = vunpack.c.l.b16 %v138
  %v466 = vunpack.c.l.b16 %v139
  %v467 = vunpack.c.l.b16 %v140
  %v468 = vunpack.c.l.b16 %v141
  %v469 = vunpack.c.l.b16 %v142
  %v470 = vunpack.c.l.b16 %v143
  %v471 = vunpack.c.l.b16 %v144
  %v472 = vunpack.c.l.b16 %v145
  %v473 = vunpack.c.l.b16 %v146
  %v474 = vunpack.c.l.b16 %v147
  %v475 = vunpack.c.l.b16 %v148
  %v476 = vunpack.c.l.b16 %v149
  %v477 = vunpack.c.l.b16 %v150
  %v478 = vunpack.c.l.b16 %v151
  %v479 = vunpack.c.l.b16 %v152
  %v480 = vunpack.c.l.b16 %v153
  %v481 = vunpack.c.l.b16 %v154
  %v482 = vunpack.c.l.b16 %v155
  %v483 = vunpack.c.l.b16 %v156
  %v484 = vunpack.c.l.b16 %v157
  %v485 = vunpack.c.l.b16 %v158
  %v486 = vunpack.c.l.b16 %v159
  %v487 = vunpack.c.l.b16 %v160
  %v488 = vunpack.c.l.b16 %v161
  %v489 = vunpack.c.l.b16 %v162
  %v490 = vunpack.c.l.b16 %v163
  %v491 = vunpack.c.l.b16 %v164
  %v492 = vunpack.c.l.b16 %v165
  %v493 = vunpack.c.l.b16 %v166
  %v494 = vpack.c.b16 %v351, %v350
  %v495 = vpack.c.b16 %v353, %v352
  %v496 = vpack.c.b16 %v355, %v354
  %v497 = vpack.c.b16 %v357, %v356
  %v498 = vpack.c.b16 %v359, %v358
  %v499 = vpack.c.b16 %v361, %v360
  %v500 = vpack.c.b16 %v363, %v362
  %v501 = vpack.c.b16 %v365, %v364
  %v502 = vpack.c.b16 %v367, %v366
  %v503 = vpack.c.b16 %v369, %v368
  %v504 = vpack.c.b16 %v371, %v370
  %v505 = vpack.c.b16 %v373, %v372
  %v506 = vpack.c.b16 %v375, %v374
  %v507 = vpack.c.b16 %v377, %v376
  %v508 = vpack.c.b16 %v379, %v378
  %v509 = vpack.c.b16 %v381, %v380
  %v510 = vpack.c.b16 %v383, %v382
  %v511 = vpack.c.b16 %v385, %v384
  %v512 = vpack.c.b16 %v387, %v386
  %v513 = vpack.c.b16 %v389, %v388
  %v514 = vpack.c.b16 %v391, %v390
  %v515 = vpack.c.b16 %v393, %v392
  %v516 = vpack.c.b16 %v395, %v394
  %v517 = vpack.c.b16 %v397, %v396
  %v518 = vpack.c.b16 %v399, %v398
  %v519 = vpack.c.b16 %v401, %v400
  %v520 = vpack.c.b16 %v403, %v402
  %v521 = vpack.c.b16 %v405, %v404
  %v522 = vpack.c.b16 %v407, %v406
  %v523 = vpack.c.b16 %v409, %v408
  %v524 = vpack.c.b16 %v411, %v410
  %v525 = vpack.c.b16 %v413, %v412
  %v526 = vpack.c.b16 %v415, %v414
  %v527 = vpack.c.b16 %v417, %v416
  %v528 = vpack.c.b16 %v419, %v418
  %v529 = vpack.c.b16 %v421, %v420
  %v530 = vpack.c.b16 %v423, %v422
  %v531 = vpack.c.b16 %v425, %v424
  %v532 = vpack.c.b16 %v427, %v426
  %v533 = vpack.c.b16 %v429, %v428
  %v534 = vpack.c.b16 %v431, %v430
  %v535 = vpack.c.b16 %v433, %v432
  %v536 = vpack.c.b16 %v435, %v434
  %v537 = vpack.c.b16 %v437, %v436
  %v538 = vpack.c.b16 %v439, %v438
  %v539 = vpack.c.b16 %v441, %v440
  %v540 = vpack.c.b16 %v443, %v442
  %v541 = vpack.c.b16 %v445, %v444
  %v542 = vpack.c.b16 %v447, %v446
  %v543 = vpack.c.b16 %v449, %v448
  %v544 = vpack.c.b16 %v451, %v450
  %v545 = vpack.c.b16 %v453, %v452
  %v546 = vpack.c.b16 %v455, %v454
  %v547 = vpack.c.b16 %v457, %v456
  %v548 = vpack.c.b16 %v459, %v458
  %v549 = vpack.c.b16 %v461, %v460
  %v550 = vpack.c.b16 %v463, %v462
  %v551 = vpack.c.b16 %v465, %v464
  %v552 = vpack.c.b16 %v467, %v466
  %v553 = vpack.c.b16 %v469, %v468
  %v554 = vpack.c.b16 %v471, %v470
  %v555 = vpack.c.b16 %v473, %v472
  %v556 = vpack.c.b16 %v475, %v474
  %v557 = vpack.c.b16 %v477, %v476
  %v558 = vpack.c.b16 %v479, %v478
  %v559 = vpack.c.b16 %v481, %v480
  %v560 = vpack.c.b16 %v483, %v482
  %v561 = vpack.c.b16 %v485, %v484
  %v562 = vpack.c.b16 %v487, %v486
  %v563 = vpack.c.b16 %v489, %v488
  %v564 = vpack.c.b16 %v491, %v490
  %v565 = vpack.c.b16 %v493, %v492
  %638 = vmatprep.subr.bf16.mxu0 0
  %639 = vmatpush1.bf16.msra.mxu0 %v494
  %640 = vmatprep.subr.bf16.mxu0 0
  %641 = vmatpush1.bf16.msra.mxu0 %v495
  %642 = vmatprep.subr.bf16.mxu0 0
  %643 = vmatpush1.bf16.msra.mxu0 %v496
  %644 = vmatprep.subr.bf16.mxu0 0
  %645 = vmatpush1.bf16.msra.mxu0 %v497
  %646 = vmatprep.subr.bf16.mxu0 0
  %647 = vmatpush1.bf16.msra.mxu0 %v498
  %648 = vmatprep.subr.bf16.mxu0 0
  %649 = vmatpush1.bf16.msra.mxu0 %v499
  %650 = vmatprep.subr.bf16.mxu0 0
  %651 = vmatpush1.bf16.msra.mxu0 %v500
  %652 = vmatprep.subr.bf16.mxu0 0
  %653 = vmatpush1.bf16.msra.mxu0 %v501
  %654 = vmatprep.subr.bf16.mxu0 0
  %655 = vmatpush1.bf16.msra.mxu0 %v502
  %656 = vmatprep.subr.bf16.mxu0 0
  %657 = vmatpush1.bf16.msra.mxu0 %v503
  %658 = vmatprep.subr.bf16.mxu0 0
  %659 = vmatpush1.bf16.msra.mxu0 %v504
  %660 = vmatprep.subr.bf16.mxu0 0
  %661 = vmatpush1.bf16.msra.mxu0 %v505
  %662 = vmatprep.subr.bf16.mxu0 0
  %663 = vmatpush1.bf16.msra.mxu0 %v506
  %664 = vmatprep.subr.bf16.mxu0 0
  %665 = vmatpush1.bf16.msra.mxu0 %v507
  %666 = vmatprep.subr.bf16.mxu0 0
  %667 = vmatpush1.bf16.msra.mxu0 %v508
  %668 = vmatprep.subr.bf16.mxu0 0
  %669 = vmatpush1.bf16.msra.mxu0 %v509
  %670 = vmatprep.mubr.bf16.mxu0 %v189
  %671 = vmatmul.mubr.bf16.gmra.mrb[0].mxu0 %v188
  %v672 = vpop.f32.mrb[0].mxu0
  %v673 = vadd.f32 %v172, %v672
  %v674 = vpop.f32.mrb[0].mxu0
  %v675 = vpop.f32.mrb[0].mxu0
  %v676 = vpop.f32.mrb[0].mxu0
  %677 = vdwg.mxu0
  %678 = vmatprep.subr.bf16.mxu0 0
  %679 = vmatpush1.bf16.msra.mxu0 %v510
  %680 = vmatprep.subr.bf16.mxu0 0
  %681 = vmatpush1.bf16.msra.mxu0 %v511
  %682 = vmatprep.subr.bf16.mxu0 0
  %683 = vmatpush1.bf16.msra.mxu0 %v512
  %684 = vmatprep.subr.bf16.mxu0 0
  %685 = vmatpush1.bf16.msra.mxu0 %v513
  %686 = vmatprep.subr.bf16.mxu0 0
  %687 = vmatpush1.bf16.msra.mxu0 %v514
  %688 = vmatprep.subr.bf16.mxu0 0
  %689 = vmatpush1.bf16.msra.mxu0 %v515
  %690 = vmatprep.subr.bf16.mxu0 0
  %691 = vmatpush1.bf16.msra.mxu0 %v516
  %692 = vmatprep.subr.bf16.mxu0 0
  %693 = vmatpush1.bf16.msra.mxu0 %v517
  %694 = vmatprep.subr.bf16.mxu0 0
  %695 = vmatpush1.bf16.msra.mxu0 %v518
  %696 = vmatprep.subr.bf16.mxu0 0
  %697 = vmatpush1.bf16.msra.mxu0 %v519
  %698 = vmatprep.subr.bf16.mxu0 0
  %699 = vmatpush1.bf16.msra.mxu0 %v520
  %700 = vmatprep.subr.bf16.mxu0 0
  %701 = vmatpush1.bf16.msra.mxu0 %v521
  %702 = vmatprep.subr.bf16.mxu0 0
  %703 = vmatpush1.bf16.msra.mxu0 %v522
  %704 = vmatprep.subr.bf16.mxu0 0
  %705 = vmatpush1.bf16.msra.mxu0 %v523
  %706 = vmatprep.subr.bf16.mxu0 0
  %707 = vmatpush1.bf16.msra.mxu0 %v524
  %708 = vmatprep.subr.bf16.mxu0 0
  %709 = vmatpush1.bf16.msra.mxu0 %v525
  %710 = vmatprep.mubr.bf16.mxu0 %v191
  %711 = vmatmul.mubr.bf16.gmra.mrb[0].mxu0 %v190
  %v712 = vpop.f32.mrb[0].mxu0
  %v713 = vadd.f32 %v673, %v712
  %v714 = vpop.f32.mrb[0].mxu0
  %v715 = vpop.f32.mrb[0].mxu0
  %v716 = vpop.f32.mrb[0].mxu0
  %717 = vdwg.mxu0
  %718 = vmatprep.subr.bf16.mxu0 0
  %719 = vmatpush1.bf16.msra.mxu0 %v526
  %720 = vmatprep.subr.bf16.mxu0 0
  %721 = vmatpush1.bf16.msra.mxu0 %v527
  %722 = vmatprep.subr.bf16.mxu0 0
  %723 = vmatpush1.bf16.msra.mxu0 %v528
  %724 = vmatprep.subr.bf16.mxu0 0
  %725 = vmatpush1.bf16.msra.mxu0 %v529
  %726 = vmatprep.subr.bf16.mxu0 0
  %727 = vmatpush1.bf16.msra.mxu0 %v530
  %728 = vmatprep.subr.bf16.mxu0 0
  %729 = vmatpush1.bf16.msra.mxu0 %v531
  %730 = vmatprep.subr.bf16.mxu0 0
  %731 = vmatpush1.bf16.msra.mxu0 %v532
  %732 = vmatprep.subr.bf16.mxu0 0
  %733 = vmatpush1.bf16.msra.mxu0 %v533
  %734 = vmatprep.subr.bf16.mxu0 0
  %735 = vmatpush1.bf16.msra.mxu0 %v534
  %736 = vmatprep.subr.bf16.mxu0 0
  %737 = vmatpush1.bf16.msra.mxu0 %v535
  %738 = vmatprep.subr.bf16.mxu0 0
  %739 = vmatpush1.bf16.msra.mxu0 %v536
  %740 = vmatprep.subr.bf16.mxu0 0
  %741 = vmatpush1.bf16.msra.mxu0 %v537
  %742 = vmatprep.subr.bf16.mxu0 0
  %743 = vmatpush1.bf16.msra.mxu0 %v538
  %744 = vmatprep.subr.bf16.mxu0 0
  %745 = vmatpush1.bf16.msra.mxu0 %v539
  %746 = vmatprep.subr.bf16.mxu0 0
  %747 = vmatpush1.bf16.msra.mxu0 %v540
  %748 = vmatprep.subr.bf16.mxu0 0
  %749 = vmatpush1.bf16.msra.mxu0 %v541
  %750 = vmatprep.mubr.bf16.mxu0 %v193
  %751 = vmatmul.mubr.bf16.gmra.mrb[0].mxu0 %v192
  %v752 = vpop.f32.mrb[0].mxu0
  %v753 = vadd.f32 %v713, %v752
  %v754 = vpop.f32.mrb[0].mxu0
  %v755 = vpop.f32.mrb[0].mxu0
  %v756 = vpop.f32.mrb[0].mxu0
  %757 = vdwg.mxu0
  %758 = vmatprep.subr.bf16.mxu0 0
  %759 = vmatpush1.bf16.msra.mxu0 %v542
  %760 = vmatprep.subr.bf16.mxu0 0
  %761 = vmatpush1.bf16.msra.mxu0 %v543
  %762 = vmatprep.subr.bf16.mxu0 0
  %763 = vmatpush1.bf16.msra.mxu0 %v544
  %764 = vmatprep.subr.bf16.mxu0 0
  %765 = vmatpush1.bf16.msra.mxu0 %v545
  %766 = vmatprep.subr.bf16.mxu0 0
  %767 = vmatpush1.bf16.msra.mxu0 %v546
  %768 = vmatprep.subr.bf16.mxu0 0
  %769 = vmatpush1.bf16.msra.mxu0 %v547
  %770 = vmatprep.subr.bf16.mxu0 0
  %771 = vmatpush1.bf16.msra.mxu0 %v548
  %772 = vmatprep.subr.bf16.mxu0 0
  %773 = vmatpush1.bf16.msra.mxu0 %v549
  %774 = vmatprep.subr.bf16.mxu0 0
  %775 = vmatpush1.bf16.msra.mxu0 %v550
  %776 = vmatprep.subr.bf16.mxu0 0
  %777 = vmatpush1.bf16.msra.mxu0 %v551
  %778 = vmatprep.subr.bf16.mxu0 0
  %779 = vmatpush1.bf16.msra.mxu0 %v552
  %780 = vmatprep.subr.bf16.mxu0 0
  %781 = vmatpush1.bf16.msra.mxu0 %v553
  %782 = vmatprep.subr.bf16.mxu0 0
  %783 = vmatpush1.bf16.msra.mxu0 %v554
  %784 = vmatprep.subr.bf16.mxu0 0
  %785 = vmatpush1.bf16.msra.mxu0 %v555
  %786 = vmatprep.subr.bf16.mxu0 0
  %787 = vmatpush1.bf16.msra.mxu0 %v556
  %788 = vmatprep.subr.bf16.mxu0 0
  %789 = vmatpush1.bf16.msra.mxu0 %v557
  %790 = vmatprep.mubr.bf16.mxu0 %v195
  %791 = vmatmul.mubr.bf16.gmra.mrb[0].mxu0 %v194
  %v792 = vpop.f32.mrb[0].mxu0
  %v793 = vadd.f32 %v753, %v792
  %v794 = vpop.f32.mrb[0].mxu0
  %v795 = vpop.f32.mrb[0].mxu0
  %v796 = vpop.f32.mrb[0].mxu0
  %797 = vdwg.mxu0
  %798 = vmatprep.subr.bf16.mxu0 0
  %799 = vmatpush1.bf16.msra.mxu0 %v558
  %800 = vmatprep.subr.bf16.mxu0 0
  %801 = vmatpush1.bf16.msra.mxu0 %v559
  %802 = vmatprep.subr.bf16.mxu0 0
  %803 = vmatpush1.bf16.msra.mxu0 %v560
  %804 = vmatprep.subr.bf16.mxu0 0
  %805 = vmatpush1.bf16.msra.mxu0 %v561
  %806 = vmatprep.subr.bf16.mxu0 0
  %807 = vmatpush1.bf16.msra.mxu0 %v562
  %808 = vmatprep.subr.bf16.mxu0 0
  %809 = vmatpush1.bf16.msra.mxu0 %v563
  %810 = vmatprep.subr.bf16.mxu0 0
  %811 = vmatpush1.bf16.msra.mxu0 %v564
  %812 = vmatprep.subr.bf16.mxu0 0
  %813 = vmatpush1.bf16.msra.mxu0 %v565
  %814 = vmatprep.subr.bf16.mxu0 0
  %815 = vmatpush1.bf16.msra.mxu0 0
  %816 = vmatprep.subr.bf16.mxu0 0
  %817 = vmatpush1.bf16.msra.mxu0 0
  %818 = vmatprep.subr.bf16.mxu0 0
  %819 = vmatpush1.bf16.msra.mxu0 0
  %820 = vmatprep.subr.bf16.mxu0 0
  %821 = vmatpush1.bf16.msra.mxu0 0
  %822 = vmatprep.subr.bf16.mxu0 0
  %823 = vmatpush1.bf16.msra.mxu0 0
  %824 = vmatprep.subr.bf16.mxu0 0
  %825 = vmatpush1.bf16.msra.mxu0 0
  %826 = vmatprep.subr.bf16.mxu0 0
  %827 = vmatpush1.bf16.msra.mxu0 0
  %828 = vmatprep.subr.bf16.mxu0 0
  %829 = vmatpush1.bf16.msra.mxu0 0
  %830 = vmatprep.mubr.bf16.mxu0 0
  %831 = vmatmul.mubr.bf16.gmra.mrb[0].mxu0 %v196
  %v832 = vpop.f32.mrb[0].mxu0
  %v833 = vadd.f32 %v793, %v832
  %v834 = vpop.f32.mrb[0].mxu0
  %v835 = vpop.f32.mrb[0].mxu0
  %v836 = vpop.f32.mrb[0].mxu0
  %837 = vdwg.mxu0
  %v838 = vld [vmem:[%s3] sm:$0xf]
  %v839 = vunpack.c.l.bf16 %v838
  %v840 = vadd.f32 %v833, %v839
  %v841 = vmax.f32 %v840, 0.0
  %v842 = vpack.c.bf16 %v841, %v841
  %843 = vst [vmem:[%s4] sm:$0xf] %v842
  // Predicated region
  $region18: #{_lambda_.40} parent=0 // pred_check
    _
  $region19: #{_lambda_.40} parent=0 // pred_check_branch
    %845 = sbr.rel (0) target = $region21
  $region20: #{_lambda_.40} parent=0 // pred_region
    _
  $region21: #{_lambda_.40} parent=0 // pred_fallthru
    _
  // Predicated region
  $region22: #{_lambda_.40} parent=0 // pred_check
    _
  $region23: #{_lambda_.40} parent=0 // pred_check_branch
    %847 = sbr.rel (0) target = $region25
  $region24: #{_lambda_.40} parent=0 // pred_region
    _
  $region25: #{_lambda_.40} parent=0 // pred_fallthru
    _

// kernel: _lambda_.43
$region0: #{_lambda_.43}
  #allocation0 [shape = 'u32[]', space=smem, size = 0x4, offset = 0x4, fixed_abs, tag = 'smem constant byte address 0x4 - core index']
  #allocation1 [shape = 'u32[144,128]{1,0:T(1,128)}', space=vmem, size = 0x12000, scoped, tag = 'internal scratch']
  %s0 = inlined_call_operand.vmem [shape: bf16[2,1,128], index: 0, kind: input, shape index: {}]
  %s1 = inlined_call_operand.vmem [shape: f32[128,2], index: 1, kind: input, shape index: {}]
  %s2 = inlined_call_operand.vmem [shape: f32[1,2], index: 2, kind: input, shape index: {}]
  %s3 = inlined_call_operand.hbm [shape: f32[2,2], index: 3, kind: output, shape index: {}]
  %s4 = sld [smem:[#allocation0]]
  $region22: #{_lambda_.43} parent=0
    _
  %s6 = ssub.s32 1, %s4
  %s7 = scalar_select 0, %s6, %s4
  $region1: #{_lambda_.43} parent=0
    #allocation2 [shape = 'u8[1024]{0}', space=vmem, size = 0x400, scoped, tag = 'output window, operand 0, single buffered']
    #allocation3 [shape = 's32[1]{0}', space=sflag, size = 0x4, scoped, tag = 'scoped memory for _lambda_.43']
    %8 = vsyncpa [#allocation3], 0
    // Predicated region
    $region2: #{_lambda_.43} parent=1 // pred_check
      _
    $region3: #{_lambda_.43} parent=1 // pred_check_branch
      %10 = sbr.rel (0) target = $region5
    $region4: #{_lambda_.43} parent=1 // pred_region
      _
    $region5: #{_lambda_.43} parent=1 // pred_fallthru
      _
    // Predicated region
    $region6: #{_lambda_.43} parent=1 // pred_check
      _
    $region7: #{_lambda_.43} parent=1 // pred_check_branch
      %12 = sbr.rel (0) target = $region9
    $region8: #{_lambda_.43} parent=1 // pred_region
      _
    $region9: #{_lambda_.43} parent=1 // pred_fallthru
      _
    // Predicated region
    $region10: #{_lambda_.43} parent=1 // pred_check
      _
    $region11: #{_lambda_.43} parent=1 // pred_check_branch
      %14 = sbr.rel (0) target = $region13
    $region12: #{_lambda_.43} parent=1 // pred_region
      _
    $region13: #{_lambda_.43} parent=1 // pred_fallthru
      _
    %v15 = vld [vmem:[%s0] sm:$0x1]
    %v16 = vld [vmem:[%s0 + $0x1] sm:$0x1]
    %v17 = vunpack.c.l.bf16 %v15
    %v18 = vunpack.c.l.bf16 %v16
    %v19 = vadd.f32 %v17, 0.0
    %v20 = vadd.f32 %v18, 0.0
    %v21 = vld [vmem:[%s1] sm:$0xff]
    %v22 = vld [vmem:[%s1 + $0x8] sm:$0xff]
    %v23 = vld [vmem:[%s1 + $0x10] sm:$0xff]
    %v24 = vld [vmem:[%s1 + $0x18] sm:$0xff]
    %v25 = vld [vmem:[%s1 + $0x20] sm:$0xff]
    %v26 = vld [vmem:[%s1 + $0x28] sm:$0xff]
    %v27 = vld [vmem:[%s1 + $0x30] sm:$0xff]
    %v28 = vld [vmem:[%s1 + $0x38] sm:$0xff]
    %v29 = vld [vmem:[%s1 + $0x40] sm:$0xff]
    %v30 = vld [vmem:[%s1 + $0x48] sm:$0xff]
    %v31 = vld [vmem:[%s1 + $0x50] sm:$0xff]
    %v32 = vld [vmem:[%s1 + $0x58] sm:$0xff]
    %v33 = vld [vmem:[%s1 + $0x60] sm:$0xff]
    %v34 = vld [vmem:[%s1 + $0x68] sm:$0xff]
    %v35 = vld [vmem:[%s1 + $0x70] sm:$0xff]
    %v36 = vld [vmem:[%s1 + $0x78] sm:$0xff]
    %v37 = vld [vmem:[%s2] sm:$0x1]
    %v39 = vlaneseq
    %v40 = vshrl.u32 %v39, 7
    %v41 = vsub.s32 0, %v40
    %v42 = vrot.slane %v37, %v41
    %v46 = vlaneseq
    %v47 = vshrl.u32 %v46, 7
    %v48 = vsub.s32 0, %v47
    %v49 = vrot.slane %v19, %v48
    %v50 = vlaneseq
    %v51 = vshrl.u32 %v50, 7
    %v52 = vsub.s32 0, %v51
    %v53 = vrot.slane %v20, %v52
    %vm54 = vcmask 1041409
    %v55 = vsel %vm54, %v53, %v49
    %57 = vmatprep.subr.mxu0 0.0
    %58 = vmatpush1.msra.mxu0 %v21
    %59 = vmatprep.subr.mxu0 0.0
    %60 = vmatpush1.msra.mxu0 %v22
    %61 = vmatprep.subr.mxu0 0.0
    %62 = vmatpush1.msra.mxu0 %v23
    %63 = vmatprep.subr.mxu0 0.0
    %64 = vmatpush1.msra.mxu0 %v24
    %65 = vmatprep.subr.mxu0 0.0
    %66 = vmatpush1.msra.mxu0 %v25
    %67 = vmatprep.subr.mxu0 0.0
    %68 = vmatpush1.msra.mxu0 %v26
    %69 = vmatprep.subr.mxu0 0.0
    %70 = vmatpush1.msra.mxu0 %v27
    %71 = vmatprep.subr.mxu0 0.0
    %72 = vmatpush1.msra.mxu0 %v28
    %73 = vmatprep.subr.mxu0 0.0
    %74 = vmatpush1.msra.mxu0 %v29
    %75 = vmatprep.subr.mxu0 0.0
    %76 = vmatpush1.msra.mxu0 %v30
    %77 = vmatprep.subr.mxu0 0.0
    %78 = vmatpush1.msra.mxu0 %v31
    %79 = vmatprep.subr.mxu0 0.0
    %80 = vmatpush1.msra.mxu0 %v32
    %81 = vmatprep.subr.mxu0 0.0
    %82 = vmatpush1.msra.mxu0 %v33
    %83 = vmatprep.subr.mxu0 0.0
    %84 = vmatpush1.msra.mxu0 %v34
    %85 = vmatprep.subr.mxu0 0.0
    %86 = vmatpush1.msra.mxu0 %v35
    %87 = vmatprep.subr.mxu0 0.0
    %88 = vmatpush1.msra.mxu0 %v36
    %89 = vmatprep.subr.mxu0 0.0
    %90 = vmatpush1.msra.mxu0 0.0
    %91 = vmatprep.subr.mxu0 0.0
    %92 = vmatpush1.msra.mxu0 0.0
    %93 = vmatprep.subr.mxu0 0.0
    %94 = vmatpush1.msra.mxu0 0.0
    %95 = vmatprep.subr.mxu0 0.0
    %96 = vmatpush1.msra.mxu0 0.0
    %97 = vmatprep.subr.mxu0 0.0
    %98 = vmatpush1.msra.mxu0 0.0
    %99 = vmatprep.subr.mxu0 0.0
    %100 = vmatpush1.msra.mxu0 0.0
    %101 = vmatprep.subr.mxu0 0.0
    %102 = vmatpush1.msra.mxu0 0.0
    %103 = vmatprep.subr.mxu0 0.0
    %104 = vmatpush1.msra.mxu0 0.0
    %105 = vmatprep.subr.mxu0 0.0
    %106 = vmatpush1.msra.mxu0 0.0
    %107 = vmatprep.subr.mxu0 0.0
    %108 = vmatpush1.msra.mxu0 0.0
    %109 = vmatprep.subr.mxu0 0.0
    %110 = vmatpush1.msra.mxu0 0.0
    %111 = vmatprep.subr.mxu0 0.0
    %112 = vmatpush1.msra.mxu0 0.0
    %113 = vmatprep.subr.mxu0 0.0
    %114 = vmatpush1.msra.mxu0 0.0
    %115 = vmatprep.subr.mxu0 0.0
    %116 = vmatpush1.msra.mxu0 0.0
    %117 = vmatprep.subr.mxu0 0.0
    %118 = vmatpush1.msra.mxu0 0.0
    %119 = vmatprep.subr.mxu0 0.0
    %120 = vmatpush1.msra.mxu0 0.0
    %121 = vmatprep.mubr.f32.mxu0 0.0
    %122 = vmatmul.mubr.f32.gmra.mrb[0].mxu0 %v55
    %v123 = vpop.f32.mrb[0].mxu0
    %v124 = vadd.f32 %v42, %v123
    %v125 = vpop.f32.mrb[0].mxu0
    %126 = vdwg.mxu0
    %vm127 = vcmask 9216
    %128 = vst.msk [vmem:[#allocation2] sm:$0x3] %vm127, %v124
    // Predicated region
    $region14: #{_lambda_.43} parent=1 // pred_check
      _
    $region15: #{_lambda_.43} parent=1 // pred_check_branch
      %130 = sbr.rel (0) target = $region17
    $region16: #{_lambda_.43} parent=1 // pred_region
      %s132 = ssub.s32 32, 32
      %133 = vsyncadd [#allocation3], %s132
      %s135 = sshll.u32 [#allocation2], 4
      %s136 = int_to_ptr.vmem [resolvable:$true] %s135
      %138 = dma.vmem_to_hbm [thread:$0]  %s136, 32, %s3, [#allocation3]
    $region17: #{_lambda_.43} parent=1 // pred_fallthru
      _
    // Predicated region
    $region18: #{_lambda_.43} parent=1 // pred_check
      _
    $region19: #{_lambda_.43} parent=1 // pred_check_branch
      %140 = sbr.rel (0) target = $region21
    $region20: #{_lambda_.43} parent=1 // pred_region
      %141 = dma.done [#allocation3], 32
    $region21: #{_lambda_.43} parent=1 // pred_fallthru
      _
    %142 = vsyncpa [#allocation3], 1

// kernel: _lambda_.41
$region0: #{_lambda_.41}
  #allocation0 [shape = 'u32[]', space=smem, size = 0x4, offset = 0x4, fixed_abs, tag = 'smem constant byte address 0x4 - core index']
  #allocation1 [shape = 'u32[144,128]{1,0:T(1,128)}', space=vmem, size = 0x12000, scoped, tag = 'internal scratch']
  %s0 = inlined_call_operand.vmem [shape: bf16[8,1152], index: 0, kind: input, shape index: {}]
  %s1 = inlined_call_operand.vmem [shape: bf16[1152,128], index: 1, kind: input, shape index: {}]
  %s2 = inlined_call_operand.vmem [shape: f32[1,128], index: 2, kind: input, shape index: {}]
  %s3 = inlined_call_operand.vmem [shape: bf16[8,128], index: 3, kind: output, shape index: {}]
  %s4 = sld [smem:[#allocation0]]
  $region22: #{_lambda_.41} parent=0
    _
  %s6 = ssub.s32 1, %s4
  %s7 = scalar_select 0, %s6, %s4
  // Predicated region
  $region2: #{_lambda_.41} parent=0 // pred_check
    _
  $region3: #{_lambda_.41} parent=0 // pred_check_branch
    %9 = sbr.rel (0) target = $region5
  $region4: #{_lambda_.41} parent=0 // pred_region
    _
  $region5: #{_lambda_.41} parent=0 // pred_fallthru
    _
  // Predicated region
  $region6: #{_lambda_.41} parent=0 // pred_check
    _
  $region7: #{_lambda_.41} parent=0 // pred_check_branch
    %11 = sbr.rel (0) target = $region9
  $region8: #{_lambda_.41} parent=0 // pred_region
    _
  $region9: #{_lambda_.41} parent=0 // pred_fallthru
    _
  // Predicated region
  $region10: #{_lambda_.41} parent=0 // pred_check
    _
  $region11: #{_lambda_.41} parent=0 // pred_check_branch
    %13 = sbr.rel (0) target = $region13
  $region12: #{_lambda_.41} parent=0 // pred_region
    _
  $region13: #{_lambda_.41} parent=0 // pred_fallthru
    _
  %v15 = vld [vmem:[%s0] sm:$0xff]
  %v16 = vld [vmem:[%s0 + $0x8] sm:$0xff]
  %v17 = vld [vmem:[%s0 + $0x10] sm:$0xff]
  %v18 = vld [vmem:[%s0 + $0x18] sm:$0xff]
  %v19 = vld [vmem:[%s0 + $0x20] sm:$0xf]
  %v20 = vld [vmem:[%s1] sm:$0xf]
  %v21 = vld [vmem:[%s1 + $0x4] sm:$0xf]
  %v22 = vld [vmem:[%s1 + $0x8] sm:$0xf]
  %v23 = vld [vmem:[%s1 + $0xc] sm:$0xf]
  %v24 = vld [vmem:[%s1 + $0x10] sm:$0xf]
  %v25 = vld [vmem:[%s1 + $0x14] sm:$0xf]
  %v26 = vld [vmem:[%s1 + $0x18] sm:$0xf]
  %v27 = vld [vmem:[%s1 + $0x1c] sm:$0xf]
  %v28 = vld [vmem:[%s1 + $0x20] sm:$0xf]
  %v29 = vld [vmem:[%s1 + $0x24] sm:$0xf]
  %v30 = vld [vmem:[%s1 + $0x28] sm:$0xf]
  %v31 = vld [vmem:[%s1 + $0x2c] sm:$0xf]
  %v32 = vld [vmem:[%s1 + $0x30] sm:$0xf]
  %v33 = vld [vmem:[%s1 + $0x34] sm:$0xf]
  %v34 = vld [vmem:[%s1 + $0x38] sm:$0xf]
  %v35 = vld [vmem:[%s1 + $0x3c] sm:$0xf]
  %v36 = vld [vmem:[%s1 + $0x40] sm:$0xf]
  %v37 = vld [vmem:[%s1 + $0x44] sm:$0xf]
  %v38 = vld [vmem:[%s1 + $0x48] sm:$0xf]
  %v39 = vld [vmem:[%s1 + $0x4c] sm:$0xf]
  %v40 = vld [vmem:[%s1 + $0x50] sm:$0xf]
  %v41 = vld [vmem:[%s1 + $0x54] sm:$0xf]
  %v42 = vld [vmem:[%s1 + $0x58] sm:$0xf]
  %v43 = vld [vmem:[%s1 + $0x5c] sm:$0xf]
  %v44 = vld [vmem:[%s1 + $0x60] sm:$0xf]
  %v45 = vld [vmem:[%s1 + $0x64] sm:$0xf]
  %v46 = vld [vmem:[%s1 + $0x68] sm:$0xf]
  %v47 = vld [vmem:[%s1 + $0x6c] sm:$0xf]
  %v48 = vld [vmem:[%s1 + $0x70] sm:$0xf]
  %v49 = vld [vmem:[%s1 + $0x74] sm:$0xf]
  %v50 = vld [vmem:[%s1 + $0x78] sm:$0xf]
  %v51 = vld [vmem:[%s1 + $0x7c] sm:$0xf]
  %v52 = vld [vmem:[%s1 + $0x80] sm:$0xf]
  %v53 = vld [vmem:[%s1 + $0x84] sm:$0xf]
  %v54 = vld [vmem:[%s1 + $0x88] sm:$0xf]
  %v55 = vld [vmem:[%s1 + $0x8c] sm:$0xf]
  %v56 = vld [vmem:[%s1 + $0x90] sm:$0xf]
  %v57 = vld [vmem:[%s1 + $0x94] sm:$0xf]
  %v58 = vld [vmem:[%s1 + $0x98] sm:$0xf]
  %v59 = vld [vmem:[%s1 + $0x9c] sm:$0xf]
  %v60 = vld [vmem:[%s1 + $0xa0] sm:$0xf]
  %v61 = vld [vmem:[%s1 + $0xa4] sm:$0xf]
  %v62 = vld [vmem:[%s1 + $0xa8] sm:$0xf]
  %v63 = vld [vmem:[%s1 + $0xac] sm:$0xf]
  %v64 = vld [vmem:[%s1 + $0xb0] sm:$0xf]
  %v65 = vld [vmem:[%s1 + $0xb4] sm:$0xf]
  %v66 = vld [vmem:[%s1 + $0xb8] sm:$0xf]
  %v67 = vld [vmem:[%s1 + $0xbc] sm:$0xf]
  %v68 = vld [vmem:[%s1 + $0xc0] sm:$0xf]
  %v69 = vld [vmem:[%s1 + $0xc4] sm:$0xf]
  %v70 = vld [vmem:[%s1 + $0xc8] sm:$0xf]
  %v71 = vld [vmem:[%s1 + $0xcc] sm:$0xf]
  %v72 = vld [vmem:[%s1 + $0xd0] sm:$0xf]
  %v73 = vld [vmem:[%s1 + $0xd4] sm:$0xf]
  %v74 = vld [vmem:[%s1 + $0xd8] sm:$0xf]
  %v75 = vld [vmem:[%s1 + $0xdc] sm:$0xf]
  %v76 = vld [vmem:[%s1 + $0xe0] sm:$0xf]
  %v77 = vld [vmem:[%s1 + $0xe4] sm:$0xf]
  %v78 = vld [vmem:[%s1 + $0xe8] sm:$0xf]
  %v79 = vld [vmem:[%s1 + $0xec] sm:$0xf]
  %v80 = vld [vmem:[%s1 + $0xf0] sm:$0xf]
  %v81 = vld [vmem:[%s1 + $0xf4] sm:$0xf]
  %v82 = vld [vmem:[%s1 + $0xf8] sm:$0xf]
  %v83 = vld [vmem:[%s1 + $0xfc] sm:$0xf]
  %v84 = vld [vmem:[%s1 + $0x100] sm:$0xf]
  %v85 = vld [vmem:[%s1 + $0x104] sm:$0xf]
  %v86 = vld [vmem:[%s1 + $0x108] sm:$0xf]
  %v87 = vld [vmem:[%s1 + $0x10c] sm:$0xf]
  %v88 = vld [vmem:[%s1 + $0x110] sm:$0xf]
  %v89 = vld [vmem:[%s1 + $0x114] sm:$0xf]
  %v90 = vld [vmem:[%s1 + $0x118] sm:$0xf]
  %v91 = vld [vmem:[%s1 + $0x11c] sm:$0xf]
  %v92 = vld [vmem:[%s1 + $0x120] sm:$0xf]
  %v93 = vld [vmem:[%s1 + $0x124] sm:$0xf]
  %v94 = vld [vmem:[%s1 + $0x128] sm:$0xf]
  %v95 = vld [vmem:[%s1 + $0x12c] sm:$0xf]
  %v96 = vld [vmem:[%s1 + $0x130] sm:$0xf]
  %v97 = vld [vmem:[%s1 + $0x134] sm:$0xf]
  %v98 = vld [vmem:[%s1 + $0x138] sm:$0xf]
  %v99 = vld [vmem:[%s1 + $0x13c] sm:$0xf]
  %v100 = vld [vmem:[%s1 + $0x140] sm:$0xf]
  %v101 = vld [vmem:[%s1 + $0x144] sm:$0xf]
  %v102 = vld [vmem:[%s1 + $0x148] sm:$0xf]
  %v103 = vld [vmem:[%s1 + $0x14c] sm:$0xf]
  %v104 = vld [vmem:[%s1 + $0x150] sm:$0xf]
  %v105 = vld [vmem:[%s1 + $0x154] sm:$0xf]
  %v106 = vld [vmem:[%s1 + $0x158] sm:$0xf]
  %v107 = vld [vmem:[%s1 + $0x15c] sm:$0xf]
  %v108 = vld [vmem:[%s1 + $0x160] sm:$0xf]
  %v109 = vld [vmem:[%s1 + $0x164] sm:$0xf]
  %v110 = vld [vmem:[%s1 + $0x168] sm:$0xf]
  %v111 = vld [vmem:[%s1 + $0x16c] sm:$0xf]
  %v112 = vld [vmem:[%s1 + $0x170] sm:$0xf]
  %v113 = vld [vmem:[%s1 + $0x174] sm:$0xf]
  %v114 = vld [vmem:[%s1 + $0x178] sm:$0xf]
  %v115 = vld [vmem:[%s1 + $0x17c] sm:$0xf]
  %v116 = vld [vmem:[%s1 + $0x180] sm:$0xf]
  %v117 = vld [vmem:[%s1 + $0x184] sm:$0xf]
  %v118 = vld [vmem:[%s1 + $0x188] sm:$0xf]
  %v119 = vld [vmem:[%s1 + $0x18c] sm:$0xf]
  %v120 = vld [vmem:[%s1 + $0x190] sm:$0xf]
  %v121 = vld [vmem:[%s1 + $0x194] sm:$0xf]
  %v122 = vld [vmem:[%s1 + $0x198] sm:$0xf]
  %v123 = vld [vmem:[%s1 + $0x19c] sm:$0xf]
  %v124 = vld [vmem:[%s1 + $0x1a0] sm:$0xf]
  %v125 = vld [vmem:[%s1 + $0x1a4] sm:$0xf]
  %v126 = vld [vmem:[%s1 + $0x1a8] sm:$0xf]
  %v127 = vld [vmem:[%s1 + $0x1ac] sm:$0xf]
  %v128 = vld [vmem:[%s1 + $0x1b0] sm:$0xf]
  %v129 = vld [vmem:[%s1 + $0x1b4] sm:$0xf]
  %v130 = vld [vmem:[%s1 + $0x1b8] sm:$0xf]
  %v131 = vld [vmem:[%s1 + $0x1bc] sm:$0xf]
  %v132 = vld [vmem:[%s1 + $0x1c0] sm:$0xf]
  %v133 = vld [vmem:[%s1 + $0x1c4] sm:$0xf]
  %v134 = vld [vmem:[%s1 + $0x1c8] sm:$0xf]
  %v135 = vld [vmem:[%s1 + $0x1cc] sm:$0xf]
  %v136 = vld [vmem:[%s1 + $0x1d0] sm:$0xf]
  %v137 = vld [vmem:[%s1 + $0x1d4] sm:$0xf]
  %v138 = vld [vmem:[%s1 + $0x1d8] sm:$0xf]
  %v139 = vld [vmem:[%s1 + $0x1dc] sm:$0xf]
  %v140 = vld [vmem:[%s1 + $0x1e0] sm:$0xf]
  %v141 = vld [vmem:[%s1 + $0x1e4] sm:$0xf]
  %v142 = vld [vmem:[%s1 + $0x1e8] sm:$0xf]
  %v143 = vld [vmem:[%s1 + $0x1ec] sm:$0xf]
  %v144 = vld [vmem:[%s1 + $0x1f0] sm:$0xf]
  %v145 = vld [vmem:[%s1 + $0x1f4] sm:$0xf]
  %v146 = vld [vmem:[%s1 + $0x1f8] sm:$0xf]
  %v147 = vld [vmem:[%s1 + $0x1fc] sm:$0xf]
  %v148 = vld [vmem:[%s1 + $0x200] sm:$0xf]
  %v149 = vld [vmem:[%s1 + $0x204] sm:$0xf]
  %v150 = vld [vmem:[%s1 + $0x208] sm:$0xf]
  %v151 = vld [vmem:[%s1 + $0x20c] sm:$0xf]
  %v152 = vld [vmem:[%s1 + $0x210] sm:$0xf]
  %v153 = vld [vmem:[%s1 + $0x214] sm:$0xf]
  %v154 = vld [vmem:[%s1 + $0x218] sm:$0xf]
  %v155 = vld [vmem:[%s1 + $0x21c] sm:$0xf]
  %v156 = vld [vmem:[%s1 + $0x220] sm:$0xf]
  %v157 = vld [vmem:[%s1 + $0x224] sm:$0xf]
  %v158 = vld [vmem:[%s1 + $0x228] sm:$0xf]
  %v159 = vld [vmem:[%s1 + $0x22c] sm:$0xf]
  %v160 = vld [vmem:[%s1 + $0x230] sm:$0xf]
  %v161 = vld [vmem:[%s1 + $0x234] sm:$0xf]
  %v162 = vld [vmem:[%s1 + $0x238] sm:$0xf]
  %v163 = vld [vmem:[%s1 + $0x23c] sm:$0xf]
  %v164 = vld [vmem:[%s2] sm:$0x1]
  %v166 = vlaneseq
  %v167 = vshrl.u32 %v166, 7
  %v168 = vsub.s32 0, %v167
  %v169 = vrot.slane %v164, %v168
  %v176 = vunpack.c.l.b16 %v15
  %v177 = vunpack.c.h.b16 %v15
  %v178 = vunpack.c.l.b16 %v16
  %v179 = vunpack.c.h.b16 %v16
  %v180 = vunpack.c.l.b16 %v17
  %v181 = vunpack.c.h.b16 %v17
  %v182 = vunpack.c.l.b16 %v18
  %v183 = vunpack.c.h.b16 %v18
  %v184 = vunpack.c.l.b16 %v19
  %v185 = vpack.c.b16 %v176, %v176
  %v186 = vpack.c.b16 %v177, %v177
  %v187 = vpack.c.b16 %v178, %v178
  %v188 = vpack.c.b16 %v179, %v179
  %v189 = vpack.c.b16 %v180, %v180
  %v190 = vpack.c.b16 %v181, %v181
  %v191 = vpack.c.b16 %v182, %v182
  %v192 = vpack.c.b16 %v183, %v183
  %v193 = vpack.c.b16 %v184, %v184
  %v347 = vunpack.c.l.b16 %v20
  %v348 = vunpack.c.l.b16 %v21
  %v349 = vunpack.c.l.b16 %v22
  %v350 = vunpack.c.l.b16 %v23
  %v351 = vunpack.c.l.b16 %v24
  %v352 = vunpack.c.l.b16 %v25
  %v353 = vunpack.c.l.b16 %v26
  %v354 = vunpack.c.l.b16 %v27
  %v355 = vunpack.c.l.b16 %v28
  %v356 = vunpack.c.l.b16 %v29
  %v357 = vunpack.c.l.b16 %v30
  %v358 = vunpack.c.l.b16 %v31
  %v359 = vunpack.c.l.b16 %v32
  %v360 = vunpack.c.l.b16 %v33
  %v361 = vunpack.c.l.b16 %v34
  %v362 = vunpack.c.l.b16 %v35
  %v363 = vunpack.c.l.b16 %v36
  %v364 = vunpack.c.l.b16 %v37
  %v365 = vunpack.c.l.b16 %v38
  %v366 = vunpack.c.l.b16 %v39
  %v367 = vunpack.c.l.b16 %v40
  %v368 = vunpack.c.l.b16 %v41
  %v369 = vunpack.c.l.b16 %v42
  %v370 = vunpack.c.l.b16 %v43
  %v371 = vunpack.c.l.b16 %v44
  %v372 = vunpack.c.l.b16 %v45
  %v373 = vunpack.c.l.b16 %v46
  %v374 = vunpack.c.l.b16 %v47
  %v375 = vunpack.c.l.b16 %v48
  %v376 = vunpack.c.l.b16 %v49
  %v377 = vunpack.c.l.b16 %v50
  %v378 = vunpack.c.l.b16 %v51
  %v379 = vunpack.c.l.b16 %v52
  %v380 = vunpack.c.l.b16 %v53
  %v381 = vunpack.c.l.b16 %v54
  %v382 = vunpack.c.l.b16 %v55
  %v383 = vunpack.c.l.b16 %v56
  %v384 = vunpack.c.l.b16 %v57
  %v385 = vunpack.c.l.b16 %v58
  %v386 = vunpack.c.l.b16 %v59
  %v387 = vunpack.c.l.b16 %v60
  %v388 = vunpack.c.l.b16 %v61
  %v389 = vunpack.c.l.b16 %v62
  %v390 = vunpack.c.l.b16 %v63
  %v391 = vunpack.c.l.b16 %v64
  %v392 = vunpack.c.l.b16 %v65
  %v393 = vunpack.c.l.b16 %v66
  %v394 = vunpack.c.l.b16 %v67
  %v395 = vunpack.c.l.b16 %v68
  %v396 = vunpack.c.l.b16 %v69
  %v397 = vunpack.c.l.b16 %v70
  %v398 = vunpack.c.l.b16 %v71
  %v399 = vunpack.c.l.b16 %v72
  %v400 = vunpack.c.l.b16 %v73
  %v401 = vunpack.c.l.b16 %v74
  %v402 = vunpack.c.l.b16 %v75
  %v403 = vunpack.c.l.b16 %v76
  %v404 = vunpack.c.l.b16 %v77
  %v405 = vunpack.c.l.b16 %v78
  %v406 = vunpack.c.l.b16 %v79
  %v407 = vunpack.c.l.b16 %v80
  %v408 = vunpack.c.l.b16 %v81
  %v409 = vunpack.c.l.b16 %v82
  %v410 = vunpack.c.l.b16 %v83
  %v411 = vunpack.c.l.b16 %v84
  %v412 = vunpack.c.l.b16 %v85
  %v413 = vunpack.c.l.b16 %v86
  %v414 = vunpack.c.l.b16 %v87
  %v415 = vunpack.c.l.b16 %v88
  %v416 = vunpack.c.l.b16 %v89
  %v417 = vunpack.c.l.b16 %v90
  %v418 = vunpack.c.l.b16 %v91
  %v419 = vunpack.c.l.b16 %v92
  %v420 = vunpack.c.l.b16 %v93
  %v421 = vunpack.c.l.b16 %v94
  %v422 = vunpack.c.l.b16 %v95
  %v423 = vunpack.c.l.b16 %v96
  %v424 = vunpack.c.l.b16 %v97
  %v425 = vunpack.c.l.b16 %v98
  %v426 = vunpack.c.l.b16 %v99
  %v427 = vunpack.c.l.b16 %v100
  %v428 = vunpack.c.l.b16 %v101
  %v429 = vunpack.c.l.b16 %v102
  %v430 = vunpack.c.l.b16 %v103
  %v431 = vunpack.c.l.b16 %v104
  %v432 = vunpack.c.l.b16 %v105
  %v433 = vunpack.c.l.b16 %v106
  %v434 = vunpack.c.l.b16 %v107
  %v435 = vunpack.c.l.b16 %v108
  %v436 = vunpack.c.l.b16 %v109
  %v437 = vunpack.c.l.b16 %v110
  %v438 = vunpack.c.l.b16 %v111
  %v439 = vunpack.c.l.b16 %v112
  %v440 = vunpack.c.l.b16 %v113
  %v441 = vunpack.c.l.b16 %v114
  %v442 = vunpack.c.l.b16 %v115
  %v443 = vunpack.c.l.b16 %v116
  %v444 = vunpack.c.l.b16 %v117
  %v445 = vunpack.c.l.b16 %v118
  %v446 = vunpack.c.l.b16 %v119
  %v447 = vunpack.c.l.b16 %v120
  %v448 = vunpack.c.l.b16 %v121
  %v449 = vunpack.c.l.b16 %v122
  %v450 = vunpack.c.l.b16 %v123
  %v451 = vunpack.c.l.b16 %v124
  %v452 = vunpack.c.l.b16 %v125
  %v453 = vunpack.c.l.b16 %v126
  %v454 = vunpack.c.l.b16 %v127
  %v455 = vunpack.c.l.b16 %v128
  %v456 = vunpack.c.l.b16 %v129
  %v457 = vunpack.c.l.b16 %v130
  %v458 = vunpack.c.l.b16 %v131
  %v459 = vunpack.c.l.b16 %v132
  %v460 = vunpack.c.l.b16 %v133
  %v461 = vunpack.c.l.b16 %v134
  %v462 = vunpack.c.l.b16 %v135
  %v463 = vunpack.c.l.b16 %v136
  %v464 = vunpack.c.l.b16 %v137
  %v465 = vunpack.c.l.b16 %v138
  %v466 = vunpack.c.l.b16 %v139
  %v467 = vunpack.c.l.b16 %v140
  %v468 = vunpack.c.l.b16 %v141
  %v469 = vunpack.c.l.b16 %v142
  %v470 = vunpack.c.l.b16 %v143
  %v471 = vunpack.c.l.b16 %v144
  %v472 = vunpack.c.l.b16 %v145
  %v473 = vunpack.c.l.b16 %v146
  %v474 = vunpack.c.l.b16 %v147
  %v475 = vunpack.c.l.b16 %v148
  %v476 = vunpack.c.l.b16 %v149
  %v477 = vunpack.c.l.b16 %v150
  %v478 = vunpack.c.l.b16 %v151
  %v479 = vunpack.c.l.b16 %v152
  %v480 = vunpack.c.l.b16 %v153
  %v481 = vunpack.c.l.b16 %v154
  %v482 = vunpack.c.l.b16 %v155
  %v483 = vunpack.c.l.b16 %v156
  %v484 = vunpack.c.l.b16 %v157
  %v485 = vunpack.c.l.b16 %v158
  %v486 = vunpack.c.l.b16 %v159
  %v487 = vunpack.c.l.b16 %v160
  %v488 = vunpack.c.l.b16 %v161
  %v489 = vunpack.c.l.b16 %v162
  %v490 = vunpack.c.l.b16 %v163
  %v491 = vpack.c.b16 %v348, %v347
  %v492 = vpack.c.b16 %v350, %v349
  %v493 = vpack.c.b16 %v352, %v351
  %v494 = vpack.c.b16 %v354, %v353
  %v495 = vpack.c.b16 %v356, %v355
  %v496 = vpack.c.b16 %v358, %v357
  %v497 = vpack.c.b16 %v360, %v359
  %v498 = vpack.c.b16 %v362, %v361
  %v499 = vpack.c.b16 %v364, %v363
  %v500 = vpack.c.b16 %v366, %v365
  %v501 = vpack.c.b16 %v368, %v367
  %v502 = vpack.c.b16 %v370, %v369
  %v503 = vpack.c.b16 %v372, %v371
  %v504 = vpack.c.b16 %v374, %v373
  %v505 = vpack.c.b16 %v376, %v375
  %v506 = vpack.c.b16 %v378, %v377
  %v507 = vpack.c.b16 %v380, %v379
  %v508 = vpack.c.b16 %v382, %v381
  %v509 = vpack.c.b16 %v384, %v383
  %v510 = vpack.c.b16 %v386, %v385
  %v511 = vpack.c.b16 %v388, %v387
  %v512 = vpack.c.b16 %v390, %v389
  %v513 = vpack.c.b16 %v392, %v391
  %v514 = vpack.c.b16 %v394, %v393
  %v515 = vpack.c.b16 %v396, %v395
  %v516 = vpack.c.b16 %v398, %v397
  %v517 = vpack.c.b16 %v400, %v399
  %v518 = vpack.c.b16 %v402, %v401
  %v519 = vpack.c.b16 %v404, %v403
  %v520 = vpack.c.b16 %v406, %v405
  %v521 = vpack.c.b16 %v408, %v407
  %v522 = vpack.c.b16 %v410, %v409
  %v523 = vpack.c.b16 %v412, %v411
  %v524 = vpack.c.b16 %v414, %v413
  %v525 = vpack.c.b16 %v416, %v415
  %v526 = vpack.c.b16 %v418, %v417
  %v527 = vpack.c.b16 %v420, %v419
  %v528 = vpack.c.b16 %v422, %v421
  %v529 = vpack.c.b16 %v424, %v423
  %v530 = vpack.c.b16 %v426, %v425
  %v531 = vpack.c.b16 %v428, %v427
  %v532 = vpack.c.b16 %v430, %v429
  %v533 = vpack.c.b16 %v432, %v431
  %v534 = vpack.c.b16 %v434, %v433
  %v535 = vpack.c.b16 %v436, %v435
  %v536 = vpack.c.b16 %v438, %v437
  %v537 = vpack.c.b16 %v440, %v439
  %v538 = vpack.c.b16 %v442, %v441
  %v539 = vpack.c.b16 %v444, %v443
  %v540 = vpack.c.b16 %v446, %v445
  %v541 = vpack.c.b16 %v448, %v447
  %v542 = vpack.c.b16 %v450, %v449
  %v543 = vpack.c.b16 %v452, %v451
  %v544 = vpack.c.b16 %v454, %v453
  %v545 = vpack.c.b16 %v456, %v455
  %v546 = vpack.c.b16 %v458, %v457
  %v547 = vpack.c.b16 %v460, %v459
  %v548 = vpack.c.b16 %v462, %v461
  %v549 = vpack.c.b16 %v464, %v463
  %v550 = vpack.c.b16 %v466, %v465
  %v551 = vpack.c.b16 %v468, %v467
  %v552 = vpack.c.b16 %v470, %v469
  %v553 = vpack.c.b16 %v472, %v471
  %v554 = vpack.c.b16 %v474, %v473
  %v555 = vpack.c.b16 %v476, %v475
  %v556 = vpack.c.b16 %v478, %v477
  %v557 = vpack.c.b16 %v480, %v479
  %v558 = vpack.c.b16 %v482, %v481
  %v559 = vpack.c.b16 %v484, %v483
  %v560 = vpack.c.b16 %v486, %v485
  %v561 = vpack.c.b16 %v488, %v487
  %v562 = vpack.c.b16 %v490, %v489
  %635 = vmatprep.subr.bf16.mxu0 0
  %636 = vmatpush1.bf16.msra.mxu0 %v491
  %637 = vmatprep.subr.bf16.mxu0 0
  %638 = vmatpush1.bf16.msra.mxu0 %v492
  %639 = vmatprep.subr.bf16.mxu0 0
  %640 = vmatpush1.bf16.msra.mxu0 %v493
  %641 = vmatprep.subr.bf16.mxu0 0
  %642 = vmatpush1.bf16.msra.mxu0 %v494
  %643 = vmatprep.subr.bf16.mxu0 0
  %644 = vmatpush1.bf16.msra.mxu0 %v495
  %645 = vmatprep.subr.bf16.mxu0 0
  %646 = vmatpush1.bf16.msra.mxu0 %v496
  %647 = vmatprep.subr.bf16.mxu0 0
  %648 = vmatpush1.bf16.msra.mxu0 %v497
  %649 = vmatprep.subr.bf16.mxu0 0
  %650 = vmatpush1.bf16.msra.mxu0 %v498
  %651 = vmatprep.subr.bf16.mxu0 0
  %652 = vmatpush1.bf16.msra.mxu0 %v499
  %653 = vmatprep.subr.bf16.mxu0 0
  %654 = vmatpush1.bf16.msra.mxu0 %v500
  %655 = vmatprep.subr.bf16.mxu0 0
  %656 = vmatpush1.bf16.msra.mxu0 %v501
  %657 = vmatprep.subr.bf16.mxu0 0
  %658 = vmatpush1.bf16.msra.mxu0 %v502
  %659 = vmatprep.subr.bf16.mxu0 0
  %660 = vmatpush1.bf16.msra.mxu0 %v503
  %661 = vmatprep.subr.bf16.mxu0 0
  %662 = vmatpush1.bf16.msra.mxu0 %v504
  %663 = vmatprep.subr.bf16.mxu0 0
  %664 = vmatpush1.bf16.msra.mxu0 %v505
  %665 = vmatprep.subr.bf16.mxu0 0
  %666 = vmatpush1.bf16.msra.mxu0 %v506
  %667 = vmatprep.mubr.bf16.mxu0 %v186
  %668 = vmatmul.mubr.bf16.gmra.mrb[0].mxu0 %v185
  %v669 = vpop.f32.mrb[0].mxu0
  %v670 = vadd.f32 %v169, %v669
  %v671 = vpop.f32.mrb[0].mxu0
  %v672 = vpop.f32.mrb[0].mxu0
  %v673 = vpop.f32.mrb[0].mxu0
  %674 = vdwg.mxu0
  %675 = vmatprep.subr.bf16.mxu0 0
  %676 = vmatpush1.bf16.msra.mxu0 %v507
  %677 = vmatprep.subr.bf16.mxu0 0
  %678 = vmatpush1.bf16.msra.mxu0 %v508
  %679 = vmatprep.subr.bf16.mxu0 0
  %680 = vmatpush1.bf16.msra.mxu0 %v509
  %681 = vmatprep.subr.bf16.mxu0 0
  %682 = vmatpush1.bf16.msra.mxu0 %v510
  %683 = vmatprep.subr.bf16.mxu0 0
  %684 = vmatpush1.bf16.msra.mxu0 %v511
  %685 = vmatprep.subr.bf16.mxu0 0
  %686 = vmatpush1.bf16.msra.mxu0 %v512
  %687 = vmatprep.subr.bf16.mxu0 0
  %688 = vmatpush1.bf16.msra.mxu0 %v513
  %689 = vmatprep.subr.bf16.mxu0 0
  %690 = vmatpush1.bf16.msra.mxu0 %v514
  %691 = vmatprep.subr.bf16.mxu0 0
  %692 = vmatpush1.bf16.msra.mxu0 %v515
  %693 = vmatprep.subr.bf16.mxu0 0
  %694 = vmatpush1.bf16.msra.mxu0 %v516
  %695 = vmatprep.subr.bf16.mxu0 0
  %696 = vmatpush1.bf16.msra.mxu0 %v517
  %697 = vmatprep.subr.bf16.mxu0 0
  %698 = vmatpush1.bf16.msra.mxu0 %v518
  %699 = vmatprep.subr.bf16.mxu0 0
  %700 = vmatpush1.bf16.msra.mxu0 %v519
  %701 = vmatprep.subr.bf16.mxu0 0
  %702 = vmatpush1.bf16.msra.mxu0 %v520
  %703 = vmatprep.subr.bf16.mxu0 0
  %704 = vmatpush1.bf16.msra.mxu0 %v521
  %705 = vmatprep.subr.bf16.mxu0 0
  %706 = vmatpush1.bf16.msra.mxu0 %v522
  %707 = vmatprep.mubr.bf16.mxu0 %v188
  %708 = vmatmul.mubr.bf16.gmra.mrb[0].mxu0 %v187
  %v709 = vpop.f32.mrb[0].mxu0
  %v710 = vadd.f32 %v670, %v709
  %v711 = vpop.f32.mrb[0].mxu0
  %v712 = vpop.f32.mrb[0].mxu0
  %v713 = vpop.f32.mrb[0].mxu0
  %714 = vdwg.mxu0
  %715 = vmatprep.subr.bf16.mxu0 0
  %716 = vmatpush1.bf16.msra.mxu0 %v523
  %717 = vmatprep.subr.bf16.mxu0 0
  %718 = vmatpush1.bf16.msra.mxu0 %v524
  %719 = vmatprep.subr.bf16.mxu0 0
  %720 = vmatpush1.bf16.msra.mxu0 %v525
  %721 = vmatprep.subr.bf16.mxu0 0
  %722 = vmatpush1.bf16.msra.mxu0 %v526
  %723 = vmatprep.subr.bf16.mxu0 0
  %724 = vmatpush1.bf16.msra.mxu0 %v527
  %725 = vmatprep.subr.bf16.mxu0 0
  %726 = vmatpush1.bf16.msra.mxu0 %v528
  %727 = vmatprep.subr.bf16.mxu0 0
  %728 = vmatpush1.bf16.msra.mxu0 %v529
  %729 = vmatprep.subr.bf16.mxu0 0
  %730 = vmatpush1.bf16.msra.mxu0 %v530
  %731 = vmatprep.subr.bf16.mxu0 0
  %732 = vmatpush1.bf16.msra.mxu0 %v531
  %733 = vmatprep.subr.bf16.mxu0 0
  %734 = vmatpush1.bf16.msra.mxu0 %v532
  %735 = vmatprep.subr.bf16.mxu0 0
  %736 = vmatpush1.bf16.msra.mxu0 %v533
  %737 = vmatprep.subr.bf16.mxu0 0
  %738 = vmatpush1.bf16.msra.mxu0 %v534
  %739 = vmatprep.subr.bf16.mxu0 0
  %740 = vmatpush1.bf16.msra.mxu0 %v535
  %741 = vmatprep.subr.bf16.mxu0 0
  %742 = vmatpush1.bf16.msra.mxu0 %v536
  %743 = vmatprep.subr.bf16.mxu0 0
  %744 = vmatpush1.bf16.msra.mxu0 %v537
  %745 = vmatprep.subr.bf16.mxu0 0
  %746 = vmatpush1.bf16.msra.mxu0 %v538
  %747 = vmatprep.mubr.bf16.mxu0 %v190
  %748 = vmatmul.mubr.bf16.gmra.mrb[0].mxu0 %v189
  %v749 = vpop.f32.mrb[0].mxu0
  %v750 = vadd.f32 %v710, %v749
  %v751 = vpop.f32.mrb[0].mxu0
  %v752 = vpop.f32.mrb[0].mxu0
  %v753 = vpop.f32.mrb[0].mxu0
  %754 = vdwg.mxu0
  %755 = vmatprep.subr.bf16.mxu0 0
  %756 = vmatpush1.bf16.msra.mxu0 %v539
  %757 = vmatprep.subr.bf16.mxu0 0
  %758 = vmatpush1.bf16.msra.mxu0 %v540
  %759 = vmatprep.subr.bf16.mxu0 0
  %760 = vmatpush1.bf16.msra.mxu0 %v541
  %761 = vmatprep.subr.bf16.mxu0 0
  %762 = vmatpush1.bf16.msra.mxu0 %v542
  %763 = vmatprep.subr.bf16.mxu0 0
  %764 = vmatpush1.bf16.msra.mxu0 %v543
  %765 = vmatprep.subr.bf16.mxu0 0
  %766 = vmatpush1.bf16.msra.mxu0 %v544
  %767 = vmatprep.subr.bf16.mxu0 0
  %768 = vmatpush1.bf16.msra.mxu0 %v545
  %769 = vmatprep.subr.bf16.mxu0 0
  %770 = vmatpush1.bf16.msra.mxu0 %v546
  %771 = vmatprep.subr.bf16.mxu0 0
  %772 = vmatpush1.bf16.msra.mxu0 %v547
  %773 = vmatprep.subr.bf16.mxu0 0
  %774 = vmatpush1.bf16.msra.mxu0 %v548
  %775 = vmatprep.subr.bf16.mxu0 0
  %776 = vmatpush1.bf16.msra.mxu0 %v549
  %777 = vmatprep.subr.bf16.mxu0 0
  %778 = vmatpush1.bf16.msra.mxu0 %v550
  %779 = vmatprep.subr.bf16.mxu0 0
  %780 = vmatpush1.bf16.msra.mxu0 %v551
  %781 = vmatprep.subr.bf16.mxu0 0
  %782 = vmatpush1.bf16.msra.mxu0 %v552
  %783 = vmatprep.subr.bf16.mxu0 0
  %784 = vmatpush1.bf16.msra.mxu0 %v553
  %785 = vmatprep.subr.bf16.mxu0 0
  %786 = vmatpush1.bf16.msra.mxu0 %v554
  %787 = vmatprep.mubr.bf16.mxu0 %v192
  %788 = vmatmul.mubr.bf16.gmra.mrb[0].mxu0 %v191
  %v789 = vpop.f32.mrb[0].mxu0
  %v790 = vadd.f32 %v750, %v789
  %v791 = vpop.f32.mrb[0].mxu0
  %v792 = vpop.f32.mrb[0].mxu0
  %v793 = vpop.f32.mrb[0].mxu0
  %794 = vdwg.mxu0
  %795 = vmatprep.subr.bf16.mxu0 0
  %796 = vmatpush1.bf16.msra.mxu0 %v555
  %797 = vmatprep.subr.bf16.mxu0 0
  %798 = vmatpush1.bf16.msra.mxu0 %v556
  %799 = vmatprep.subr.bf16.mxu0 0
  %800 = vmatpush1.bf16.msra.mxu0 %v557
  %801 = vmatprep.subr.bf16.mxu0 0
  %802 = vmatpush1.bf16.msra.mxu0 %v558
  %803 = vmatprep.subr.bf16.mxu0 0
  %804 = vmatpush1.bf16.msra.mxu0 %v559
  %805 = vmatprep.subr.bf16.mxu0 0
  %806 = vmatpush1.bf16.msra.mxu0 %v560
  %807 = vmatprep.subr.bf16.mxu0 0
  %808 = vmatpush1.bf16.msra.mxu0 %v561
  %809 = vmatprep.subr.bf16.mxu0 0
  %810 = vmatpush1.bf16.msra.mxu0 %v562
  %811 = vmatprep.subr.bf16.mxu0 0
  %812 = vmatpush1.bf16.msra.mxu0 0
  %813 = vmatprep.subr.bf16.mxu0 0
  %814 = vmatpush1.bf16.msra.mxu0 0
  %815 = vmatprep.subr.bf16.mxu0 0
  %816 = vmatpush1.bf16.msra.mxu0 0
  %817 = vmatprep.subr.bf16.mxu0 0
  %818 = vmatpush1.bf16.msra.mxu0 0
  %819 = vmatprep.subr.bf16.mxu0 0
  %820 = vmatpush1.bf16.msra.mxu0 0
  %821 = vmatprep.subr.bf16.mxu0 0
  %822 = vmatpush1.bf16.msra.mxu0 0
  %823 = vmatprep.subr.bf16.mxu0 0
  %824 = vmatpush1.bf16.msra.mxu0 0
  %825 = vmatprep.subr.bf16.mxu0 0
  %826 = vmatpush1.bf16.msra.mxu0 0
  %827 = vmatprep.mubr.bf16.mxu0 0
  %828 = vmatmul.mubr.bf16.gmra.mrb[0].mxu0 %v193
  %v829 = vpop.f32.mrb[0].mxu0
  %v830 = vadd.f32 %v790, %v829
  %v831 = vpop.f32.mrb[0].mxu0
  %v832 = vpop.f32.mrb[0].mxu0
  %v833 = vpop.f32.mrb[0].mxu0
  %834 = vdwg.mxu0
  %v835 = vmax.f32 %v830, 0.0
  %v836 = vpack.c.bf16 %v835, %v835
  %837 = vst [vmem:[%s3] sm:$0xf] %v836
  // Predicated region
  $region14: #{_lambda_.41} parent=0 // pred_check
    _
  $region15: #{_lambda_.41} parent=0 // pred_check_branch
    %839 = sbr.rel (0) target = $region17
  $region16: #{_lambda_.41} parent=0 // pred_region
    _
  $region17: #{_lambda_.41} parent=0 // pred_fallthru
    _
  // Predicated region
  $region18: #{_lambda_.41} parent=0 // pred_check
    _
  $region19: #{_lambda_.41} parent=0 // pred_check_branch
    %841 = sbr.rel (0) target = $region21
  $region20: #{_lambda_.41} parent=0 // pred_region
    _
  $region21: #{_lambda_.41} parent=0 // pred_fallthru
    _

</llo_original>
